<compile_context>
chip_gen: v7x
topology: tpu7x:2x2x1
jax: 0.10.0
libtpu: 0.0.40
codegen_flags: <defaults>
</compile_context>

<pallas_src>
import functools
import math

import jax
import jax.numpy as jnp
from jax.experimental import pallas as pl
from jax.experimental.pallas import tpu as pltpu

_HAS_BUFFERED = hasattr(pl, "Buffered")


def _layernorm(y, w, b, eps=1e-5):
    mean = jnp.mean(y, axis=-1, keepdims=True)
    var = jnp.mean((y - mean) ** 2, axis=-1, keepdims=True)
    return (y - mean) * jax.lax.rsqrt(var + eps) * w + b


def make_encoder_kernel(d_model, nhead):
    D, H = d_model, nhead
    hd = d_model // nhead

    def kernel(x_ref,
               wqkv_ref, bqkv_ref,      # (D, 3D) bf16 (scale folded into q), (1, 3D) f32
               wo_ref, bo_ref,          # (H, hd, D) bf16, (1, D) f32
               ln1_w_ref, ln1_b_ref,    # (1, D), (1, D) f32
               w1_ref, b1_ref,          # (D, F) bf16, (1, F) f32
               w2_ref, b2_ref,          # (F, D) bf16, (1, D) f32
               ln2_w_ref, ln2_b_ref,    # (1, D), (1, D) f32
               o_ref):
        x = x_ref[0]                                   # (S, D) f32
        x_bf = x.astype(jnp.bfloat16)

        # --- QKV projection: one wide MXU matmul (no per-head broadcast of x) ---
        qkv = jnp.dot(x_bf, wqkv_ref[...], preferred_element_type=jnp.float32)
        qkv = (qkv + bqkv_ref[...]).astype(jnp.bfloat16)          # (S, 3D) bf16

        # --- per-head attention; out-projection accumulated over heads ---
        # (static lane slices; hd % 128 == 0 keeps them lane-tile aligned)
        attn = None
        for h in range(H):
            q_h = qkv[:, h * hd:(h + 1) * hd]                       # (S, hd)
            k_h = qkv[:, D + h * hd:D + (h + 1) * hd]               # (S, hd)
            v_h = qkv[:, 2 * D + h * hd:2 * D + (h + 1) * hd]       # (S, hd)

            # scale already folded into the q weights/bias on the host
            s = jnp.einsum("qd,kd->qk", q_h, k_h,
                           preferred_element_type=jnp.float32)      # (S, S) f32
            p = jnp.exp(s - jnp.max(s, axis=-1, keepdims=True))     # in (0, 1]
            inv = pl.reciprocal(jnp.sum(p, axis=-1, keepdims=True), approx=True)

            ctx = jnp.dot(p.astype(jnp.bfloat16), v_h,
                          preferred_element_type=jnp.float32)       # (S, hd) un-normalized
            ctx = ctx * inv                                          # normalize AFTER PV

            part = jnp.dot(ctx.astype(jnp.bfloat16), wo_ref[h],
                           preferred_element_type=jnp.float32)       # (S, D)
            attn = part if attn is None else attn + part
        attn = attn + bo_ref[...]

        # --- residual + norm1 (dropout1 == identity in eval) ---
        y = _layernorm(x + attn, ln1_w_ref[0], ln1_b_ref[0])

        # --- feed-forward: linear1 -> relu -> linear2 ---
        h1 = jnp.dot(y.astype(jnp.bfloat16), w1_ref[...],
                     preferred_element_type=jnp.float32) + b1_ref[...]
        h1 = jnp.maximum(h1, 0.0)
        h2 = jnp.dot(h1.astype(jnp.bfloat16), w2_ref[...],
                     preferred_element_type=jnp.float32) + b2_ref[...]

        # --- residual + norm2 (dropout2 == identity in eval) ---
        z = _layernorm(y + h2, ln2_w_ref[0], ln2_b_ref[0])
        o_ref[0] = z.astype(o_ref.dtype)

    return kernel


def _vmem_limit_bytes(S, D, F, H, weight_buffers):
    """Accurate working-set estimate (bytes), clamped to the chip's VMEM capacity."""
    bf16, f32 = 2, 4
    hd = D // H
    weights = (3 * D * D + D * D + 2 * D * F) * bf16 * weight_buffers \
        + (3 * D + D + F + D + 4 * D) * f32                       # biases + LN params
    io_blocks = 2 * (2 * S * D * f32)                             # x/out blocks, double-buffered
    acts = (S * 3 * D * (f32 + bf16)                              # qkv f32 + bf16
            + 2 * S * S * f32 + S * hd * (f32 + bf16)             # per-head scores/probs + ctx
            + 3 * S * D * f32                                     # attn acc, y, z
            + S * F * (f32 + bf16) + S * D * f32                  # ffn hidden + h2
            + S * D * (f32 + bf16))                               # x + x_bf
    est = int(1.25 * (weights + io_blocks + acts))
    try:
        cap = int(pltpu.get_tpu_info().vmem_capacity_bytes)       # 128 MiB v5e/v6e, 64 MiB v7x
    except Exception:
        cap = 64 * 2 ** 20
    ceiling = int(0.85 * cap)
    return max(32 * 2 ** 20, min(est, ceiling))


def _weight_spec(shape, single_buffer):
    """Replicated (constant-index) weight spec; single-buffered when supported."""
    zeros = (0,) * len(shape)
    index_map = lambda b, _z=zeros: _z
    if single_buffer and _HAS_BUFFERED:
        try:
            return pl.BlockSpec(shape, index_map, pipeline_mode=pl.Buffered(1))
        except TypeError:
            pass
    return pl.BlockSpec(shape, index_map)


@functools.partial(jax.jit, static_argnames=("nhead", "single_buffer_weights"))
def transformer_encoder_layer(src, params, nhead, single_buffer_weights=True):
    """src: (S, B, D) float32, as in PyTorch (seq-first). Returns (S, B, D)."""
    S, B, D = src.shape
    F = params["lin1_w"].shape[0]
    hd = D // nhead
    scale = 1.0 / math.sqrt(hd)

    # ---- one-time host/XLA-side weight prep (no in-kernel transposes) ----
    in_w, in_b = params["in_w"], params["in_b"]
    # torch in_proj (3D, D) -> packed (D, 3D) = [q | k | v]; 1/sqrt(hd) folded into q.
    wqkv = jnp.concatenate([in_w[:D].T * scale, in_w[D:2 * D].T, in_w[2 * D:].T],
                           axis=1).astype(jnp.bfloat16)                 # (D, 3D)
    bqkv = jnp.concatenate([in_b[:, :D] * scale, in_b[:, D:2 * D], in_b[:, 2 * D:]],
                           axis=1).astype(jnp.float32)                  # (1, 3D)
    wo = params["out_w"].T.reshape(nhead, hd, D).astype(jnp.bfloat16)   # (H, hd, D)
    w1 = params["lin1_w"].T.astype(jnp.bfloat16)                        # (D, F)
    w2 = params["lin2_w"].T.astype(jnp.bfloat16)                        # (F, D)

    # TODO(synk): absorb this (S,B,D)<->(B,S,D) transpose pair into the BlockSpecs
    # (block (S, 1, D), index_map lambda b: (0, b, 0)) once Mosaic accepts a
    # second-minor block size of 1 when B < 8 (the (8,128) tiling rule blocks it today).
    x = jnp.transpose(src, (1, 0, 2))                                   # (B, S, D)

    sb = single_buffer_weights
    in_specs = [
        pl.BlockSpec((1, S, D), lambda b: (b, 0, 0)),      # x
        _weight_spec((D, 3 * D), sb), _weight_spec((1, 3 * D), sb),   # qkv proj
        _weight_spec((nhead, hd, D), sb), _weight_spec((1, D), sb),   # out proj
        _weight_spec((1, D), sb), _weight_spec((1, D), sb),           # norm1
        _weight_spec((D, F), sb), _weight_spec((1, F), sb),           # linear1
        _weight_spec((F, D), sb), _weight_spec((1, D), sb),           # linear2
        _weight_spec((1, D), sb), _weight_spec((1, D), sb),           # norm2
    ]

    # TODO(synk): for long S / large d_model (esp. v7x's 64 MiB VMEM), add a query-tile
    # grid axis with online softmax and stream linear1/linear2 over an F-tile axis.
    # TODO(synk): on v7x, optionally hold w1/w2 (and wqkv/wo) in fp8 for the MXU.
    out = pl.pallas_call(
        make_encoder_kernel(D, nhead),
        out_shape=jax.ShapeDtypeStruct((B, S, D), jnp.float32),
        grid_spec=pltpu.PrefetchScalarGridSpec(
            num_scalar_prefetch=0,
            grid=(B,),
            in_specs=in_specs,
            out_specs=pl.BlockSpec((1, S, D), lambda b: (b, 0, 0)),
        ),
        compiler_params=pltpu.CompilerParams(
            dimension_semantics=("parallel",),
            vmem_limit_bytes=_vmem_limit_bytes(
                S, D, F, nhead, 1 if (sb and _HAS_BUFFERED) else 2),
        ),
    )(x,
      wqkv, bqkv,
      wo, params["out_b"],
      params["ln1_w"], params["ln1_b"],
      w1, params["lin1_b"],
      w2, params["lin2_b"],
      params["ln2_w"], params["ln2_b"])

    return jnp.transpose(out, (1, 0, 2))  # back to (S, B, D)


def reference_forward(src, params, nhead, matmul_dtype=jnp.float32):
    """Pure-JAX reference mirroring PyTorch eval-mode forward.

    matmul_dtype=float32   -> exact original (f32) semantics.
    matmul_dtype=bfloat16  -> mirrors the kernel's mixed-precision matmuls.
    """
    S, B, D = src.shape
    hd = D // nhead
    scale = 1.0 / math.sqrt(hd)
    f32, md = jnp.float32, matmul_dtype

    x = jnp.transpose(src, (1, 0, 2))                          # (B, S, D) f32

    qkv = jnp.dot(x.astype(md), params["in_w"].T.astype(md),
                  preferred_element_type=f32) + params["in_b"][0]
    qkv = qkv.astype(md)                                       # (B, S, 3D)

    def split(t):                                              # (B,S,D)->(B,H,S,hd)
        return t.reshape(B, S, nhead, hd).transpose(0, 2, 1, 3)

    q = split(qkv[..., :D])
    k = split(qkv[..., D:2 * D])
    v = split(qkv[..., 2 * D:])
    s = jnp.einsum("bhqd,bhkd->bhqk", q, k, preferred_element_type=f32) * scale
    p = jax.nn.softmax(s, axis=-1)
    ctx = jnp.einsum("bhqk,bhkd->bhqd", p.astype(md), v, preferred_element_type=f32)
    ctx = ctx.transpose(0, 2, 1, 3).reshape(B, S, D).astype(md)
    attn = jnp.dot(ctx, params["out_w"].T.astype(md),
                   preferred_element_type=f32) + params["out_b"][0]

    y = _layernorm(x + attn, params["ln1_w"][0], params["ln1_b"][0])
    h1 = jnp.maximum(jnp.dot(y.astype(md), params["lin1_w"].T.astype(md),
                             preferred_element_type=f32) + params["lin1_b"][0], 0.0)
    h2 = jnp.dot(h1.astype(md), params["lin2_w"].T.astype(md),
                 preferred_element_type=f32) + params["lin2_b"][0]
    z = _layernorm(y + h2, params["ln2_w"][0], params["ln2_b"][0])
    return jnp.transpose(z, (1, 0, 2))


if __name__ == "__main__":
    # Small but lane/sublane-aligned shapes: seq=128, batch=2, d_model=256,
    # nhead=2 (head_dim=128), dim_feedforward=512.
    S, B, D, H, FF = 128, 2, 256, 2, 512
    key = jax.random.PRNGKey(0)
    ks = jax.random.split(key, 13)

    params = {
        "in_w":   0.05 * jax.random.normal(ks[0], (3 * D, D), jnp.float32),
        "in_b":   0.1 * jax.random.normal(ks[1], (1, 3 * D), jnp.float32),
        "out_w":  0.05 * jax.random.normal(ks[2], (D, D), jnp.float32),
        "out_b":  0.1 * jax.random.normal(ks[3], (1, D), jnp.float32),
        "ln1_w":  1.0 + 0.1 * jax.random.normal(ks[4], (1, D), jnp.float32),
        "ln1_b":  0.1 * jax.random.normal(ks[5], (1, D), jnp.float32),
        "lin1_w": 0.05 * jax.random.normal(ks[6], (FF, D), jnp.float32),
        "lin1_b": 0.1 * jax.random.normal(ks[7], (1, FF), jnp.float32),
        "lin2_w": 0.05 * jax.random.normal(ks[8], (D, FF), jnp.float32),
        "lin2_b": 0.1 * jax.random.normal(ks[9], (1, D), jnp.float32),
        "ln2_w":  1.0 + 0.1 * jax.random.normal(ks[10], (1, D), jnp.float32),
        "ln2_b":  0.1 * jax.random.normal(ks[11], (1, D), jnp.float32),
    }

    src = jax.random.normal(ks[12], (S, B, D), jnp.float32)

    try:
        out = jax.block_until_ready(transformer_encoder_layer(src, params, nhead=H))
    except Exception:
        # Fallback: identical kernel, default (double-buffered) weight specs.
        out = jax.block_until_ready(
            transformer_encoder_layer(src, params, nhead=H, single_buffer_weights=False))
    assert out.shape == (S, B, D)

    # Primary check: mirrors the kernel's mixed-precision (bf16 matmul, f32 accumulate)
    # math -> tight tolerance (approx-reciprocal softmax + scale folding included).
    ref_mixed = reference_forward(src, params, H, matmul_dtype=jnp.bfloat16)
    assert jnp.allclose(out, ref_mixed, atol=2e-2, rtol=2e-2), \
        "mismatch vs mixed-precision reference"

    # Sanity check against the original full-f32 PyTorch semantics (looser tolerance
    # to absorb the intentional bf16 MXU precision).
    ref_f32 = reference_forward(src, params, H, matmul_dtype=jnp.float32)
    assert jnp.allclose(out, ref_f32, atol=1.5e-1, rtol=1.5e-1), \
        "mismatch vs f32 reference"

    print("KERNEL_OK")
</pallas_src>

<mosaic_0001>
module attributes {stable_mosaic.version = 11 : i64} {
  func.func @kernel(%arg0: i32, %arg1: memref<1x128x256xf32, #tpu.memory_space<vmem>>, %arg2: memref<256x768xbf16, #tpu.memory_space<vmem>>, %arg3: memref<1x768xf32, #tpu.memory_space<vmem>>, %arg4: memref<2x128x256xbf16, #tpu.memory_space<vmem>>, %arg5: memref<1x256xf32, #tpu.memory_space<vmem>>, %arg6: memref<1x256xf32, #tpu.memory_space<vmem>>, %arg7: memref<1x256xf32, #tpu.memory_space<vmem>>, %arg8: memref<256x512xbf16, #tpu.memory_space<vmem>>, %arg9: memref<1x512xf32, #tpu.memory_space<vmem>>, %arg10: memref<512x256xbf16, #tpu.memory_space<vmem>>, %arg11: memref<1x256xf32, #tpu.memory_space<vmem>>, %arg12: memref<1x256xf32, #tpu.memory_space<vmem>>, %arg13: memref<1x256xf32, #tpu.memory_space<vmem>>, %arg14: memref<1x128x256xf32, #tpu.memory_space<vmem>>) attributes {dimension_semantics = [#tpu.dimension_semantics<parallel>], iteration_bounds = array<i64: 2>, scalar_prefetch = 0 : i64, scratch_operands = 0 : i64, tpu.core_type = #tpu.core_type<tc>, window_params = [{transform_indices = @transform_0, window_bounds = array<i64: 1, 128, 256>}, {pipeline_mode = #tpu.pipeline_mode<synchronous>, transform_indices = @transform_1, window_bounds = array<i64: 256, 768>}, {pipeline_mode = #tpu.pipeline_mode<synchronous>, transform_indices = @transform_2, window_bounds = array<i64: 1, 768>}, {pipeline_mode = #tpu.pipeline_mode<synchronous>, transform_indices = @transform_3, window_bounds = array<i64: 2, 128, 256>}, {pipeline_mode = #tpu.pipeline_mode<synchronous>, transform_indices = @transform_4, window_bounds = array<i64: 1, 256>}, {pipeline_mode = #tpu.pipeline_mode<synchronous>, transform_indices = @transform_5, window_bounds = array<i64: 1, 256>}, {pipeline_mode = #tpu.pipeline_mode<synchronous>, transform_indices = @transform_6, window_bounds = array<i64: 1, 256>}, {pipeline_mode = #tpu.pipeline_mode<synchronous>, transform_indices = @transform_7, window_bounds = array<i64: 256, 512>}, {pipeline_mode = #tpu.pipeline_mode<synchronous>, transform_indices = @transform_8, window_bounds = array<i64: 1, 512>}, {pipeline_mode = #tpu.pipeline_mode<synchronous>, transform_indices = @transform_9, window_bounds = array<i64: 512, 256>}, {pipeline_mode = #tpu.pipeline_mode<synchronous>, transform_indices = @transform_10, window_bounds = array<i64: 1, 256>}, {pipeline_mode = #tpu.pipeline_mode<synchronous>, transform_indices = @transform_11, window_bounds = array<i64: 1, 256>}, {pipeline_mode = #tpu.pipeline_mode<synchronous>, transform_indices = @transform_12, window_bounds = array<i64: 1, 256>}, {transform_indices = @transform_13, window_bounds = array<i64: 1, 128, 256>}]} {
    %c0 = arith.constant 0 : index
    %c0_0 = arith.constant 0 : index
    %c0_1 = arith.constant 0 : index
    %0 = vector.load %arg1[%c0, %c0_0, %c0_1] : memref<1x128x256xf32, #tpu.memory_space<vmem>>, vector<1x128x256xf32>
    %1 = vector.shape_cast %0 : vector<1x128x256xf32> to vector<128x256xf32>
    %2 = arith.truncf %1 : vector<128x256xf32> to vector<128x256xbf16>
    %c0_2 = arith.constant 0 : index
    %c0_3 = arith.constant 0 : index
    %3 = vector.load %arg2[%c0_2, %c0_3] : memref<256x768xbf16, #tpu.memory_space<vmem>>, vector<256x768xbf16>
    %cst = arith.constant dense<0.000000e+00> : vector<128x768xf32>
    %4 = tpu.matmul %2, %3, %cst {dimension_numbers = #tpu.dot_dimension_numbers<[1], [0], [0], [1], [0, 0, 1, 1], [], []>} : vector<128x256xbf16>, vector<256x768xbf16>, vector<128x768xf32> -> vector<128x768xf32>
    %c0_4 = arith.constant 0 : index
    %c0_5 = arith.constant 0 : index
    %5 = vector.load %arg3[%c0_4, %c0_5] : memref<1x768xf32, #tpu.memory_space<vmem>>, vector<1x768xf32>
    %6 = vector.broadcast %5 : vector<1x768xf32> to vector<128x768xf32>
    %7 = arith.addf %4, %6 : vector<128x768xf32>
    %8 = arith.truncf %7 : vector<128x768xf32> to vector<128x768xbf16>
    %9 = vector.extract_strided_slice %8 {offsets = [0, 0], sizes = [128, 128], strides = [1, 1]} : vector<128x768xbf16> to vector<128x128xbf16>
    %10 = vector.extract_strided_slice %8 {offsets = [0, 256], sizes = [128, 128], strides = [1, 1]} : vector<128x768xbf16> to vector<128x128xbf16>
    %11 = vector.extract_strided_slice %8 {offsets = [0, 512], sizes = [128, 128], strides = [1, 1]} : vector<128x768xbf16> to vector<128x128xbf16>
    "tpu.trace_start"() <{level = 10 : i32, message = "qd,kd->qk"}> : () -> ()
    %cst_6 = arith.constant dense<0.000000e+00> : vector<128x128xf32>
    %12 = tpu.matmul %9, %10, %cst_6 {dimension_numbers = #tpu.dot_dimension_numbers<[1], [1], [0], [0], [0, 0, 1, 0], [], []>} : vector<128x128xbf16>, vector<128x128xbf16>, vector<128x128xf32> -> vector<128x128xf32>
    "tpu.trace_stop"() : () -> ()
    %cst_7 = arith.constant dense<0xFF800000> : vector<128xf32>
    %13 = vector.multi_reduction <maximumf>, %12, %cst_7 [1] : vector<128x128xf32> to vector<128xf32>
    %14 = vector.shape_cast %13 : vector<128xf32> to vector<128x1xf32>
    %15 = vector.broadcast %14 : vector<128x1xf32> to vector<128x128xf32>
    %16 = arith.subf %12, %15 : vector<128x128xf32>
    %17 = math.exp %16 : vector<128x128xf32>
    %cst_8 = arith.constant dense<0.000000e+00> : vector<128xf32>
    %18 = vector.multi_reduction <add>, %17, %cst_8 [1] : vector<128x128xf32> to vector<128xf32>
    %19 = vector.shape_cast %18 : vector<128xf32> to vector<128x1xf32>
    %20 = tpu.reciprocal %19 {approx = true} : vector<128x1xf32> -> vector<128x1xf32>
    %21 = arith.truncf %17 : vector<128x128xf32> to vector<128x128xbf16>
    %cst_9 = arith.constant dense<0.000000e+00> : vector<128x128xf32>
    %22 = tpu.matmul %21, %11, %cst_9 {dimension_numbers = #tpu.dot_dimension_numbers<[1], [0], [0], [1], [0, 0, 1, 1], [], []>} : vector<128x128xbf16>, vector<128x128xbf16>, vector<128x128xf32> -> vector<128x128xf32>
    %23 = vector.broadcast %20 : vector<128x1xf32> to vector<128x128xf32>
    %24 = arith.mulf %22, %23 : vector<128x128xf32>
    %25 = arith.truncf %24 : vector<128x128xf32> to vector<128x128xbf16>
    %c0_10 = arith.constant 0 : index
    %c0_11 = arith.constant 0 : index
    %c0_12 = arith.constant 0 : index
    %26 = vector.load %arg4[%c0_10, %c0_11, %c0_12] : memref<2x128x256xbf16, #tpu.memory_space<vmem>>, vector<1x128x256xbf16>
    %27 = vector.shape_cast %26 : vector<1x128x256xbf16> to vector<128x256xbf16>
    %cst_13 = arith.constant dense<0.000000e+00> : vector<128x256xf32>
    %28 = tpu.matmul %25, %27, %cst_13 {dimension_numbers = #tpu.dot_dimension_numbers<[1], [0], [0], [1], [0, 0, 1, 1], [], []>} : vector<128x128xbf16>, vector<128x256xbf16>, vector<128x256xf32> -> vector<128x256xf32>
    %29 = vector.extract_strided_slice %8 {offsets = [0, 128], sizes = [128, 128], strides = [1, 1]} : vector<128x768xbf16> to vector<128x128xbf16>
    %30 = vector.extract_strided_slice %8 {offsets = [0, 384], sizes = [128, 128], strides = [1, 1]} : vector<128x768xbf16> to vector<128x128xbf16>
    %31 = vector.extract_strided_slice %8 {offsets = [0, 640], sizes = [128, 128], strides = [1, 1]} : vector<128x768xbf16> to vector<128x128xbf16>
    "tpu.trace_start"() <{level = 10 : i32, message = "qd,kd->qk"}> : () -> ()
    %cst_14 = arith.constant dense<0.000000e+00> : vector<128x128xf32>
    %32 = tpu.matmul %29, %30, %cst_14 {dimension_numbers = #tpu.dot_dimension_numbers<[1], [1], [0], [0], [0, 0, 1, 0], [], []>} : vector<128x128xbf16>, vector<128x128xbf16>, vector<128x128xf32> -> vector<128x128xf32>
    "tpu.trace_stop"() : () -> ()
    %cst_15 = arith.constant dense<0xFF800000> : vector<128xf32>
    %33 = vector.multi_reduction <maximumf>, %32, %cst_15 [1] : vector<128x128xf32> to vector<128xf32>
    %34 = vector.shape_cast %33 : vector<128xf32> to vector<128x1xf32>
    %35 = vector.broadcast %34 : vector<128x1xf32> to vector<128x128xf32>
    %36 = arith.subf %32, %35 : vector<128x128xf32>
    %37 = math.exp %36 : vector<128x128xf32>
    %cst_16 = arith.constant dense<0.000000e+00> : vector<128xf32>
    %38 = vector.multi_reduction <add>, %37, %cst_16 [1] : vector<128x128xf32> to vector<128xf32>
    %39 = vector.shape_cast %38 : vector<128xf32> to vector<128x1xf32>
    %40 = tpu.reciprocal %39 {approx = true} : vector<128x1xf32> -> vector<128x1xf32>
    %41 = arith.truncf %37 : vector<128x128xf32> to vector<128x128xbf16>
    %cst_17 = arith.constant dense<0.000000e+00> : vector<128x128xf32>
    %42 = tpu.matmul %41, %31, %cst_17 {dimension_numbers = #tpu.dot_dimension_numbers<[1], [0], [0], [1], [0, 0, 1, 1], [], []>} : vector<128x128xbf16>, vector<128x128xbf16>, vector<128x128xf32> -> vector<128x128xf32>
    %43 = vector.broadcast %40 : vector<128x1xf32> to vector<128x128xf32>
    %44 = arith.mulf %42, %43 : vector<128x128xf32>
    %45 = arith.truncf %44 : vector<128x128xf32> to vector<128x128xbf16>
    %c1 = arith.constant 1 : index
    %c0_18 = arith.constant 0 : index
    %c0_19 = arith.constant 0 : index
    %46 = vector.load %arg4[%c1, %c0_18, %c0_19] : memref<2x128x256xbf16, #tpu.memory_space<vmem>>, vector<1x128x256xbf16>
    %47 = vector.shape_cast %46 : vector<1x128x256xbf16> to vector<128x256xbf16>
    %cst_20 = arith.constant dense<0.000000e+00> : vector<128x256xf32>
    %48 = tpu.matmul %45, %47, %cst_20 {dimension_numbers = #tpu.dot_dimension_numbers<[1], [0], [0], [1], [0, 0, 1, 1], [], []>} : vector<128x128xbf16>, vector<128x256xbf16>, vector<128x256xf32> -> vector<128x256xf32>
    %49 = arith.addf %28, %48 : vector<128x256xf32>
    %c0_21 = arith.constant 0 : index
    %c0_22 = arith.constant 0 : index
    %50 = vector.load %arg5[%c0_21, %c0_22] : memref<1x256xf32, #tpu.memory_space<vmem>>, vector<1x256xf32>
    %51 = vector.broadcast %50 : vector<1x256xf32> to vector<128x256xf32>
    %52 = arith.addf %49, %51 : vector<128x256xf32>
    %53 = arith.addf %1, %52 : vector<128x256xf32>
    %c0_23 = arith.constant 0 : index
    %c0_24 = arith.constant 0 : index
    %54 = vector.load %arg6[%c0_23, %c0_24] : memref<1x256xf32, #tpu.memory_space<vmem>>, vector<1x256xf32>
    %55 = vector.shape_cast %54 : vector<1x256xf32> to vector<256xf32>
    %c0_25 = arith.constant 0 : index
    %c0_26 = arith.constant 0 : index
    %56 = vector.load %arg7[%c0_25, %c0_26] : memref<1x256xf32, #tpu.memory_space<vmem>>, vector<1x256xf32>
    %57 = vector.shape_cast %56 : vector<1x256xf32> to vector<256xf32>
    %cst_27 = arith.constant dense<0.000000e+00> : vector<128xf32>
    %58 = vector.multi_reduction <add>, %53, %cst_27 [1] : vector<128x256xf32> to vector<128xf32>
    %59 = vector.shape_cast %58 : vector<128xf32> to vector<128x1xf32>
    %cst_28 = arith.constant 2.560000e+02 : f32
    %60 = vector.broadcast %cst_28 : f32 to vector<128x1xf32>
    %61 = arith.divf %59, %60 : vector<128x1xf32>
    %62 = vector.broadcast %61 : vector<128x1xf32> to vector<128x256xf32>
    %63 = arith.subf %53, %62 : vector<128x256xf32>
    %64 = arith.mulf %63, %63 : vector<128x256xf32>
    %cst_29 = arith.constant dense<0.000000e+00> : vector<128xf32>
    %65 = vector.multi_reduction <add>, %64, %cst_29 [1] : vector<128x256xf32> to vector<128xf32>
    %66 = vector.shape_cast %65 : vector<128xf32> to vector<128x1xf32>
    %cst_30 = arith.constant 2.560000e+02 : f32
    %67 = vector.broadcast %cst_30 : f32 to vector<128x1xf32>
    %68 = arith.divf %66, %67 : vector<128x1xf32>
    %69 = vector.broadcast %61 : vector<128x1xf32> to vector<128x256xf32>
    %70 = arith.subf %53, %69 : vector<128x256xf32>
    %cst_31 = arith.constant 9.99999974E-6 : f32
    %71 = vector.broadcast %cst_31 : f32 to vector<128x1xf32>
    %72 = arith.addf %68, %71 : vector<128x1xf32>
    %73 = math.rsqrt %72 : vector<128x1xf32>
    %74 = vector.broadcast %73 : vector<128x1xf32> to vector<128x256xf32>
    %75 = arith.mulf %70, %74 : vector<128x256xf32>
    %76 = vector.shape_cast %55 : vector<256xf32> to vector<1x256xf32>
    %77 = vector.broadcast %76 : vector<1x256xf32> to vector<128x256xf32>
    %78 = arith.mulf %75, %77 : vector<128x256xf32>
    %79 = vector.shape_cast %57 : vector<256xf32> to vector<1x256xf32>
    %80 = vector.broadcast %79 : vector<1x256xf32> to vector<128x256xf32>
    %81 = arith.addf %78, %80 : vector<128x256xf32>
    %82 = arith.truncf %81 : vector<128x256xf32> to vector<128x256xbf16>
    %c0_32 = arith.constant 0 : index
    %c0_33 = arith.constant 0 : index
    %83 = vector.load %arg8[%c0_32, %c0_33] : memref<256x512xbf16, #tpu.memory_space<vmem>>, vector<256x512xbf16>
    %cst_34 = arith.constant dense<0.000000e+00> : vector<128x512xf32>
    %84 = tpu.matmul %82, %83, %cst_34 {dimension_numbers = #tpu.dot_dimension_numbers<[1], [0], [0], [1], [0, 0, 1, 1], [], []>} : vector<128x256xbf16>, vector<256x512xbf16>, vector<128x512xf32> -> vector<128x512xf32>
    %c0_35 = arith.constant 0 : index
    %c0_36 = arith.constant 0 : index
    %85 = vector.load %arg9[%c0_35, %c0_36] : memref<1x512xf32, #tpu.memory_space<vmem>>, vector<1x512xf32>
    %86 = vector.broadcast %85 : vector<1x512xf32> to vector<128x512xf32>
    %87 = arith.addf %84, %86 : vector<128x512xf32>
    %cst_37 = arith.constant 0.000000e+00 : f32
    %88 = vector.broadcast %cst_37 : f32 to vector<128x512xf32>
    %89 = arith.maximumf %87, %88 : vector<128x512xf32>
    %90 = arith.truncf %89 : vector<128x512xf32> to vector<128x512xbf16>
    %c0_38 = arith.constant 0 : index
    %c0_39 = arith.constant 0 : index
    %91 = vector.load %arg10[%c0_38, %c0_39] : memref<512x256xbf16, #tpu.memory_space<vmem>>, vector<512x256xbf16>
    %cst_40 = arith.constant dense<0.000000e+00> : vector<128x256xf32>
    %92 = tpu.matmul %90, %91, %cst_40 {dimension_numbers = #tpu.dot_dimension_numbers<[1], [0], [0], [1], [0, 0, 1, 1], [], []>} : vector<128x512xbf16>, vector<512x256xbf16>, vector<128x256xf32> -> vector<128x256xf32>
    %c0_41 = arith.constant 0 : index
    %c0_42 = arith.constant 0 : index
    %93 = vector.load %arg11[%c0_41, %c0_42] : memref<1x256xf32, #tpu.memory_space<vmem>>, vector<1x256xf32>
    %94 = vector.broadcast %93 : vector<1x256xf32> to vector<128x256xf32>
    %95 = arith.addf %92, %94 : vector<128x256xf32>
    %96 = arith.addf %81, %95 : vector<128x256xf32>
    %c0_43 = arith.constant 0 : index
    %c0_44 = arith.constant 0 : index
    %97 = vector.load %arg12[%c0_43, %c0_44] : memref<1x256xf32, #tpu.memory_space<vmem>>, vector<1x256xf32>
    %98 = vector.shape_cast %97 : vector<1x256xf32> to vector<256xf32>
    %c0_45 = arith.constant 0 : index
    %c0_46 = arith.constant 0 : index
    %99 = vector.load %arg13[%c0_45, %c0_46] : memref<1x256xf32, #tpu.memory_space<vmem>>, vector<1x256xf32>
    %100 = vector.shape_cast %99 : vector<1x256xf32> to vector<256xf32>
    %cst_47 = arith.constant dense<0.000000e+00> : vector<128xf32>
    %101 = vector.multi_reduction <add>, %96, %cst_47 [1] : vector<128x256xf32> to vector<128xf32>
    %102 = vector.shape_cast %101 : vector<128xf32> to vector<128x1xf32>
    %cst_48 = arith.constant 2.560000e+02 : f32
    %103 = vector.broadcast %cst_48 : f32 to vector<128x1xf32>
    %104 = arith.divf %102, %103 : vector<128x1xf32>
    %105 = vector.broadcast %104 : vector<128x1xf32> to vector<128x256xf32>
    %106 = arith.subf %96, %105 : vector<128x256xf32>
    %107 = arith.mulf %106, %106 : vector<128x256xf32>
    %cst_49 = arith.constant dense<0.000000e+00> : vector<128xf32>
    %108 = vector.multi_reduction <add>, %107, %cst_49 [1] : vector<128x256xf32> to vector<128xf32>
    %109 = vector.shape_cast %108 : vector<128xf32> to vector<128x1xf32>
    %cst_50 = arith.constant 2.560000e+02 : f32
    %110 = vector.broadcast %cst_50 : f32 to vector<128x1xf32>
    %111 = arith.divf %109, %110 : vector<128x1xf32>
    %112 = vector.broadcast %104 : vector<128x1xf32> to vector<128x256xf32>
    %113 = arith.subf %96, %112 : vector<128x256xf32>
    %cst_51 = arith.constant 9.99999974E-6 : f32
    %114 = vector.broadcast %cst_51 : f32 to vector<128x1xf32>
    %115 = arith.addf %111, %114 : vector<128x1xf32>
    %116 = math.rsqrt %115 : vector<128x1xf32>
    %117 = vector.broadcast %116 : vector<128x1xf32> to vector<128x256xf32>
    %118 = arith.mulf %113, %117 : vector<128x256xf32>
    %119 = vector.shape_cast %98 : vector<256xf32> to vector<1x256xf32>
    %120 = vector.broadcast %119 : vector<1x256xf32> to vector<128x256xf32>
    %121 = arith.mulf %118, %120 : vector<128x256xf32>
    %122 = vector.shape_cast %100 : vector<256xf32> to vector<1x256xf32>
    %123 = vector.broadcast %122 : vector<1x256xf32> to vector<128x256xf32>
    %124 = arith.addf %121, %123 : vector<128x256xf32>
    %c0_52 = arith.constant 0 : index
    %c0_53 = arith.constant 0 : index
    %c0_54 = arith.constant 0 : index
    %125 = vector.load %arg14[%c0_52, %c0_53, %c0_54] : memref<1x128x256xf32, #tpu.memory_space<vmem>>, vector<1x128x256xf32>
    %126 = vector.shape_cast %125 : vector<1x128x256xf32> to vector<128x256xf32>
    %127 = vector.shape_cast %124 : vector<128x256xf32> to vector<1x128x256xf32>
    tpu.vector_store %arg14[%c0_52, %c0_53, %c0_54], %127 {strides = array<i32>} : memref<1x128x256xf32, #tpu.memory_space<vmem>>, vector<1x128x256xf32>,
    return
  }
  func.func @transform_0(%arg0: i32) -> (i32, i32, i32) {
    %c0_i32 = arith.constant 0 : i32
    %c0_i32_0 = arith.constant 0 : i32
    %c0_i32_1 = arith.constant 0 : i32
    return %arg0, %c0_i32, %c0_i32_0 : i32, i32, i32
  }
  func.func @transform_1(%arg0: i32) -> (i32, i32) {
    %c0_i32 = arith.constant 0 : i32
    %c0_i32_0 = arith.constant 0 : i32
    %c0_i32_1 = arith.constant 0 : i32
    return %c0_i32, %c0_i32_0 : i32, i32
  }
  func.func @transform_2(%arg0: i32) -> (i32, i32) {
    %c0_i32 = arith.constant 0 : i32
    %c0_i32_0 = arith.constant 0 : i32
    %c0_i32_1 = arith.constant 0 : i32
    return %c0_i32, %c0_i32_0 : i32, i32
  }
  func.func @transform_3(%arg0: i32) -> (i32, i32, i32) {
    %c0_i32 = arith.constant 0 : i32
    %c0_i32_0 = arith.constant 0 : i32
    %c0_i32_1 = arith.constant 0 : i32
    %c0_i32_2 = arith.constant 0 : i32
    return %c0_i32, %c0_i32_0, %c0_i32_1 : i32, i32, i32
  }
  func.func @transform_4(%arg0: i32) -> (i32, i32) {
    %c0_i32 = arith.constant 0 : i32
    %c0_i32_0 = arith.constant 0 : i32
    %c0_i32_1 = arith.constant 0 : i32
    return %c0_i32, %c0_i32_0 : i32, i32
  }
  func.func @transform_5(%arg0: i32) -> (i32, i32) {
    %c0_i32 = arith.constant 0 : i32
    %c0_i32_0 = arith.constant 0 : i32
    %c0_i32_1 = arith.constant 0 : i32
    return %c0_i32, %c0_i32_0 : i32, i32
  }
  func.func @transform_6(%arg0: i32) -> (i32, i32) {
    %c0_i32 = arith.constant 0 : i32
    %c0_i32_0 = arith.constant 0 : i32
    %c0_i32_1 = arith.constant 0 : i32
    return %c0_i32, %c0_i32_0 : i32, i32
  }
  func.func @transform_7(%arg0: i32) -> (i32, i32) {
    %c0_i32 = arith.constant 0 : i32
    %c0_i32_0 = arith.constant 0 : i32
    %c0_i32_1 = arith.constant 0 : i32
    return %c0_i32, %c0_i32_0 : i32, i32
  }
  func.func @transform_8(%arg0: i32) -> (i32, i32) {
    %c0_i32 = arith.constant 0 : i32
    %c0_i32_0 = arith.constant 0 : i32
    %c0_i32_1 = arith.constant 0 : i32
    return %c0_i32, %c0_i32_0 : i32, i32
  }
  func.func @transform_9(%arg0: i32) -> (i32, i32) {
    %c0_i32 = arith.constant 0 : i32
    %c0_i32_0 = arith.constant 0 : i32
    %c0_i32_1 = arith.constant 0 : i32
    return %c0_i32, %c0_i32_0 : i32, i32
  }
  func.func @transform_10(%arg0: i32) -> (i32, i32) {
    %c0_i32 = arith.constant 0 : i32
    %c0_i32_0 = arith.constant 0 : i32
    %c0_i32_1 = arith.constant 0 : i32
    return %c0_i32, %c0_i32_0 : i32, i32
  }
  func.func @transform_11(%arg0: i32) -> (i32, i32) {
    %c0_i32 = arith.constant 0 : i32
    %c0_i32_0 = arith.constant 0 : i32
    %c0_i32_1 = arith.constant 0 : i32
    return %c0_i32, %c0_i32_0 : i32, i32
  }
  func.func @transform_12(%arg0: i32) -> (i32, i32) {
    %c0_i32 = arith.constant 0 : i32
    %c0_i32_0 = arith.constant 0 : i32
    %c0_i32_1 = arith.constant 0 : i32
    return %c0_i32, %c0_i32_0 : i32, i32
  }
  func.func @transform_13(%arg0: i32) -> (i32, i32, i32) {
    %c0_i32 = arith.constant 0 : i32
    %c0_i32_0 = arith.constant 0 : i32
    %c0_i32_1 = arith.constant 0 : i32
    return %arg0, %c0_i32, %c0_i32_0 : i32, i32, i32
  }
}

module attributes {stable_mosaic.version = 11 : i64} {
  func.func @kernel(%arg0: i32, %arg1: memref<1x128x256xf32, #tpu.memory_space<vmem>>, %arg2: memref<256x768xbf16, #tpu.memory_space<vmem>>, %arg3: memref<1x768xf32, #tpu.memory_space<vmem>>, %arg4: memref<2x128x256xbf16, #tpu.memory_space<vmem>>, %arg5: memref<1x256xf32, #tpu.memory_space<vmem>>, %arg6: memref<1x256xf32, #tpu.memory_space<vmem>>, %arg7: memref<1x256xf32, #tpu.memory_space<vmem>>, %arg8: memref<256x512xbf16, #tpu.memory_space<vmem>>, %arg9: memref<1x512xf32, #tpu.memory_space<vmem>>, %arg10: memref<512x256xbf16, #tpu.memory_space<vmem>>, %arg11: memref<1x256xf32, #tpu.memory_space<vmem>>, %arg12: memref<1x256xf32, #tpu.memory_space<vmem>>, %arg13: memref<1x256xf32, #tpu.memory_space<vmem>>, %arg14: memref<1x128x256xf32, #tpu.memory_space<vmem>>) attributes {dimension_semantics = [#tpu.dimension_semantics<parallel>], iteration_bounds = array<i64: 2>, scalar_prefetch = 0 : i64, scratch_operands = 0 : i64, tpu.core_type = #tpu.core_type<tc>, window_params = [{transform_indices = @transform_0, window_bounds = array<i64: 1, 128, 256>}, {pipeline_mode = #tpu.pipeline_mode<synchronous>, transform_indices = @transform_1, window_bounds = array<i64: 256, 768>}, {pipeline_mode = #tpu.pipeline_mode<synchronous>, transform_indices = @transform_2, window_bounds = array<i64: 1, 768>}, {pipeline_mode = #tpu.pipeline_mode<synchronous>, transform_indices = @transform_3, window_bounds = array<i64: 2, 128, 256>}, {pipeline_mode = #tpu.pipeline_mode<synchronous>, transform_indices = @transform_4, window_bounds = array<i64: 1, 256>}, {pipeline_mode = #tpu.pipeline_mode<synchronous>, transform_indices = @transform_5, window_bounds = array<i64: 1, 256>}, {pipeline_mode = #tpu.pipeline_mode<synchronous>, transform_indices = @transform_6, window_bounds = array<i64: 1, 256>}, {pipeline_mode = #tpu.pipeline_mode<synchronous>, transform_indices = @transform_7, window_bounds = array<i64: 256, 512>}, {pipeline_mode = #tpu.pipeline_mode<synchronous>, transform_indices = @transform_8, window_bounds = array<i64: 1, 512>}, {pipeline_mode = #tpu.pipeline_mode<synchronous>, transform_indices = @transform_9, window_bounds = array<i64: 512, 256>}, {pipeline_mode = #tpu.pipeline_mode<synchronous>, transform_indices = @transform_10, window_bounds = array<i64: 1, 256>}, {pipeline_mode = #tpu.pipeline_mode<synchronous>, transform_indices = @transform_11, window_bounds = array<i64: 1, 256>}, {pipeline_mode = #tpu.pipeline_mode<synchronous>, transform_indices = @transform_12, window_bounds = array<i64: 1, 256>}, {transform_indices = @transform_13, window_bounds = array<i64: 1, 128, 256>}]} {
    %c0 = arith.constant 0 : index
    %c0_0 = arith.constant 0 : index
    %c0_1 = arith.constant 0 : index
    %0 = vector.load %arg1[%c0, %c0_0, %c0_1] : memref<1x128x256xf32, #tpu.memory_space<vmem>>, vector<1x128x256xf32>
    %1 = vector.shape_cast %0 : vector<1x128x256xf32> to vector<128x256xf32>
    %2 = arith.truncf %1 : vector<128x256xf32> to vector<128x256xbf16>
    %c0_2 = arith.constant 0 : index
    %c0_3 = arith.constant 0 : index
    %3 = vector.load %arg2[%c0_2, %c0_3] : memref<256x768xbf16, #tpu.memory_space<vmem>>, vector<256x768xbf16>
    %cst = arith.constant dense<0.000000e+00> : vector<128x768xf32>
    %4 = tpu.matmul %2, %3, %cst {dimension_numbers = #tpu.dot_dimension_numbers<[1], [0], [0], [1], [0, 0, 1, 1], [], []>} : vector<128x256xbf16>, vector<256x768xbf16>, vector<128x768xf32> -> vector<128x768xf32>
    %c0_4 = arith.constant 0 : index
    %c0_5 = arith.constant 0 : index
    %5 = vector.load %arg3[%c0_4, %c0_5] : memref<1x768xf32, #tpu.memory_space<vmem>>, vector<1x768xf32>
    %6 = vector.broadcast %5 : vector<1x768xf32> to vector<128x768xf32>
    %7 = arith.addf %4, %6 : vector<128x768xf32>
    %8 = arith.truncf %7 : vector<128x768xf32> to vector<128x768xbf16>
    %9 = vector.extract_strided_slice %8 {offsets = [0, 0], sizes = [128, 128], strides = [1, 1]} : vector<128x768xbf16> to vector<128x128xbf16>
    %10 = vector.extract_strided_slice %8 {offsets = [0, 256], sizes = [128, 128], strides = [1, 1]} : vector<128x768xbf16> to vector<128x128xbf16>
    %11 = vector.extract_strided_slice %8 {offsets = [0, 512], sizes = [128, 128], strides = [1, 1]} : vector<128x768xbf16> to vector<128x128xbf16>
    "tpu.trace_start"() <{level = 10 : i32, message = "qd,kd->qk"}> : () -> ()
    %cst_6 = arith.constant dense<0.000000e+00> : vector<128x128xf32>
    %12 = tpu.matmul %9, %10, %cst_6 {dimension_numbers = #tpu.dot_dimension_numbers<[1], [1], [0], [0], [0, 0, 1, 0], [], []>} : vector<128x128xbf16>, vector<128x128xbf16>, vector<128x128xf32> -> vector<128x128xf32>
    "tpu.trace_stop"() : () -> ()
    %cst_7 = arith.constant dense<0xFF800000> : vector<128xf32>
    %13 = vector.multi_reduction <maximumf>, %12, %cst_7 [1] : vector<128x128xf32> to vector<128xf32>
    %14 = vector.shape_cast %13 : vector<128xf32> to vector<128x1xf32>
    %15 = vector.broadcast %14 : vector<128x1xf32> to vector<128x128xf32>
    %16 = arith.subf %12, %15 : vector<128x128xf32>
    %17 = math.exp %16 : vector<128x128xf32>
    %cst_8 = arith.constant dense<0.000000e+00> : vector<128xf32>
    %18 = vector.multi_reduction <add>, %17, %cst_8 [1] : vector<128x128xf32> to vector<128xf32>
    %19 = vector.shape_cast %18 : vector<128xf32> to vector<128x1xf32>
    %20 = tpu.reciprocal %19 {approx = true} : vector<128x1xf32> -> vector<128x1xf32>
    %21 = arith.truncf %17 : vector<128x128xf32> to vector<128x128xbf16>
    %cst_9 = arith.constant dense<0.000000e+00> : vector<128x128xf32>
    %22 = tpu.matmul %21, %11, %cst_9 {dimension_numbers = #tpu.dot_dimension_numbers<[1], [0], [0], [1], [0, 0, 1, 1], [], []>} : vector<128x128xbf16>, vector<128x128xbf16>, vector<128x128xf32> -> vector<128x128xf32>
    %23 = vector.broadcast %20 : vector<128x1xf32> to vector<128x128xf32>
    %24 = arith.mulf %22, %23 : vector<128x128xf32>
    %25 = arith.truncf %24 : vector<128x128xf32> to vector<128x128xbf16>
    %c0_10 = arith.constant 0 : index
    %c0_11 = arith.constant 0 : index
    %c0_12 = arith.constant 0 : index
    %26 = vector.load %arg4[%c0_10, %c0_11, %c0_12] : memref<2x128x256xbf16, #tpu.memory_space<vmem>>, vector<1x128x256xbf16>
    %27 = vector.shape_cast %26 : vector<1x128x256xbf16> to vector<128x256xbf16>
    %cst_13 = arith.constant dense<0.000000e+00> : vector<128x256xf32>
    %28 = tpu.matmul %25, %27, %cst_13 {dimension_numbers = #tpu.dot_dimension_numbers<[1], [0], [0], [1], [0, 0, 1, 1], [], []>} : vector<128x128xbf16>, vector<128x256xbf16>, vector<128x256xf32> -> vector<128x256xf32>
    %29 = vector.extract_strided_slice %8 {offsets = [0, 128], sizes = [128, 128], strides = [1, 1]} : vector<128x768xbf16> to vector<128x128xbf16>
    %30 = vector.extract_strided_slice %8 {offsets = [0, 384], sizes = [128, 128], strides = [1, 1]} : vector<128x768xbf16> to vector<128x128xbf16>
    %31 = vector.extract_strided_slice %8 {offsets = [0, 640], sizes = [128, 128], strides = [1, 1]} : vector<128x768xbf16> to vector<128x128xbf16>
    "tpu.trace_start"() <{level = 10 : i32, message = "qd,kd->qk"}> : () -> ()
    %cst_14 = arith.constant dense<0.000000e+00> : vector<128x128xf32>
    %32 = tpu.matmul %29, %30, %cst_14 {dimension_numbers = #tpu.dot_dimension_numbers<[1], [1], [0], [0], [0, 0, 1, 0], [], []>} : vector<128x128xbf16>, vector<128x128xbf16>, vector<128x128xf32> -> vector<128x128xf32>
    "tpu.trace_stop"() : () -> ()
    %cst_15 = arith.constant dense<0xFF800000> : vector<128xf32>
    %33 = vector.multi_reduction <maximumf>, %32, %cst_15 [1] : vector<128x128xf32> to vector<128xf32>
    %34 = vector.shape_cast %33 : vector<128xf32> to vector<128x1xf32>
    %35 = vector.broadcast %34 : vector<128x1xf32> to vector<128x128xf32>
    %36 = arith.subf %32, %35 : vector<128x128xf32>
    %37 = math.exp %36 : vector<128x128xf32>
    %cst_16 = arith.constant dense<0.000000e+00> : vector<128xf32>
    %38 = vector.multi_reduction <add>, %37, %cst_16 [1] : vector<128x128xf32> to vector<128xf32>
    %39 = vector.shape_cast %38 : vector<128xf32> to vector<128x1xf32>
    %40 = tpu.reciprocal %39 {approx = true} : vector<128x1xf32> -> vector<128x1xf32>
    %41 = arith.truncf %37 : vector<128x128xf32> to vector<128x128xbf16>
    %cst_17 = arith.constant dense<0.000000e+00> : vector<128x128xf32>
    %42 = tpu.matmul %41, %31, %cst_17 {dimension_numbers = #tpu.dot_dimension_numbers<[1], [0], [0], [1], [0, 0, 1, 1], [], []>} : vector<128x128xbf16>, vector<128x128xbf16>, vector<128x128xf32> -> vector<128x128xf32>
    %43 = vector.broadcast %40 : vector<128x1xf32> to vector<128x128xf32>
    %44 = arith.mulf %42, %43 : vector<128x128xf32>
    %45 = arith.truncf %44 : vector<128x128xf32> to vector<128x128xbf16>
    %c1 = arith.constant 1 : index
    %c0_18 = arith.constant 0 : index
    %c0_19 = arith.constant 0 : index
    %46 = vector.load %arg4[%c1, %c0_18, %c0_19] : memref<2x128x256xbf16, #tpu.memory_space<vmem>>, vector<1x128x256xbf16>
    %47 = vector.shape_cast %46 : vector<1x128x256xbf16> to vector<128x256xbf16>
    %cst_20 = arith.constant dense<0.000000e+00> : vector<128x256xf32>
    %48 = tpu.matmul %45, %47, %cst_20 {dimension_numbers = #tpu.dot_dimension_numbers<[1], [0], [0], [1], [0, 0, 1, 1], [], []>} : vector<128x128xbf16>, vector<128x256xbf16>, vector<128x256xf32> -> vector<128x256xf32>
    %49 = arith.addf %28, %48 : vector<128x256xf32>
    %c0_21 = arith.constant 0 : index
    %c0_22 = arith.constant 0 : index
    %50 = vector.load %arg5[%c0_21, %c0_22] : memref<1x256xf32, #tpu.memory_space<vmem>>, vector<1x256xf32>
    %51 = vector.broadcast %50 : vector<1x256xf32> to vector<128x256xf32>
    %52 = arith.addf %49, %51 : vector<128x256xf32>
    %53 = arith.addf %1, %52 : vector<128x256xf32>
    %c0_23 = arith.constant 0 : index
    %c0_24 = arith.constant 0 : index
    %54 = vector.load %arg6[%c0_23, %c0_24] : memref<1x256xf32, #tpu.memory_space<vmem>>, vector<1x256xf32>
    %55 = vector.shape_cast %54 : vector<1x256xf32> to vector<256xf32>
    %c0_25 = arith.constant 0 : index
    %c0_26 = arith.constant 0 : index
    %56 = vector.load %arg7[%c0_25, %c0_26] : memref<1x256xf32, #tpu.memory_space<vmem>>, vector<1x256xf32>
    %57 = vector.shape_cast %56 : vector<1x256xf32> to vector<256xf32>
    %cst_27 = arith.constant dense<0.000000e+00> : vector<128xf32>
    %58 = vector.multi_reduction <add>, %53, %cst_27 [1] : vector<128x256xf32> to vector<128xf32>
    %59 = vector.shape_cast %58 : vector<128xf32> to vector<128x1xf32>
    %cst_28 = arith.constant 2.560000e+02 : f32
    %60 = vector.broadcast %cst_28 : f32 to vector<128x1xf32>
    %61 = arith.divf %59, %60 : vector<128x1xf32>
    %62 = vector.broadcast %61 : vector<128x1xf32> to vector<128x256xf32>
    %63 = arith.subf %53, %62 : vector<128x256xf32>
    %64 = arith.mulf %63, %63 : vector<128x256xf32>
    %cst_29 = arith.constant dense<0.000000e+00> : vector<128xf32>
    %65 = vector.multi_reduction <add>, %64, %cst_29 [1] : vector<128x256xf32> to vector<128xf32>
    %66 = vector.shape_cast %65 : vector<128xf32> to vector<128x1xf32>
    %cst_30 = arith.constant 2.560000e+02 : f32
    %67 = vector.broadcast %cst_30 : f32 to vector<128x1xf32>
    %68 = arith.divf %66, %67 : vector<128x1xf32>
    %69 = vector.broadcast %61 : vector<128x1xf32> to vector<128x256xf32>
    %70 = arith.subf %53, %69 : vector<128x256xf32>
    %cst_31 = arith.constant 9.99999974E-6 : f32
    %71 = vector.broadcast %cst_31 : f32 to vector<128x1xf32>
    %72 = arith.addf %68, %71 : vector<128x1xf32>
    %73 = math.rsqrt %72 : vector<128x1xf32>
    %74 = vector.broadcast %73 : vector<128x1xf32> to vector<128x256xf32>
    %75 = arith.mulf %70, %74 : vector<128x256xf32>
    %76 = vector.shape_cast %55 : vector<256xf32> to vector<1x256xf32>
    %77 = vector.broadcast %76 : vector<1x256xf32> to vector<128x256xf32>
    %78 = arith.mulf %75, %77 : vector<128x256xf32>
    %79 = vector.shape_cast %57 : vector<256xf32> to vector<1x256xf32>
    %80 = vector.broadcast %79 : vector<1x256xf32> to vector<128x256xf32>
    %81 = arith.addf %78, %80 : vector<128x256xf32>
    %82 = arith.truncf %81 : vector<128x256xf32> to vector<128x256xbf16>
    %c0_32 = arith.constant 0 : index
    %c0_33 = arith.constant 0 : index
    %83 = vector.load %arg8[%c0_32, %c0_33] : memref<256x512xbf16, #tpu.memory_space<vmem>>, vector<256x512xbf16>
    %cst_34 = arith.constant dense<0.000000e+00> : vector<128x512xf32>
    %84 = tpu.matmul %82, %83, %cst_34 {dimension_numbers = #tpu.dot_dimension_numbers<[1], [0], [0], [1], [0, 0, 1, 1], [], []>} : vector<128x256xbf16>, vector<256x512xbf16>, vector<128x512xf32> -> vector<128x512xf32>
    %c0_35 = arith.constant 0 : index
    %c0_36 = arith.constant 0 : index
    %85 = vector.load %arg9[%c0_35, %c0_36] : memref<1x512xf32, #tpu.memory_space<vmem>>, vector<1x512xf32>
    %86 = vector.broadcast %85 : vector<1x512xf32> to vector<128x512xf32>
    %87 = arith.addf %84, %86 : vector<128x512xf32>
    %cst_37 = arith.constant 0.000000e+00 : f32
    %88 = vector.broadcast %cst_37 : f32 to vector<128x512xf32>
    %89 = arith.maximumf %87, %88 : vector<128x512xf32>
    %90 = arith.truncf %89 : vector<128x512xf32> to vector<128x512xbf16>
    %c0_38 = arith.constant 0 : index
    %c0_39 = arith.constant 0 : index
    %91 = vector.load %arg10[%c0_38, %c0_39] : memref<512x256xbf16, #tpu.memory_space<vmem>>, vector<512x256xbf16>
    %cst_40 = arith.constant dense<0.000000e+00> : vector<128x256xf32>
    %92 = tpu.matmul %90, %91, %cst_40 {dimension_numbers = #tpu.dot_dimension_numbers<[1], [0], [0], [1], [0, 0, 1, 1], [], []>} : vector<128x512xbf16>, vector<512x256xbf16>, vector<128x256xf32> -> vector<128x256xf32>
    %c0_41 = arith.constant 0 : index
    %c0_42 = arith.constant 0 : index
    %93 = vector.load %arg11[%c0_41, %c0_42] : memref<1x256xf32, #tpu.memory_space<vmem>>, vector<1x256xf32>
    %94 = vector.broadcast %93 : vector<1x256xf32> to vector<128x256xf32>
    %95 = arith.addf %92, %94 : vector<128x256xf32>
    %96 = arith.addf %81, %95 : vector<128x256xf32>
    %c0_43 = arith.constant 0 : index
    %c0_44 = arith.constant 0 : index
    %97 = vector.load %arg12[%c0_43, %c0_44] : memref<1x256xf32, #tpu.memory_space<vmem>>, vector<1x256xf32>
    %98 = vector.shape_cast %97 : vector<1x256xf32> to vector<256xf32>
    %c0_45 = arith.constant 0 : index
    %c0_46 = arith.constant 0 : index
    %99 = vector.load %arg13[%c0_45, %c0_46] : memref<1x256xf32, #tpu.memory_space<vmem>>, vector<1x256xf32>
    %100 = vector.shape_cast %99 : vector<1x256xf32> to vector<256xf32>
    %cst_47 = arith.constant dense<0.000000e+00> : vector<128xf32>
    %101 = vector.multi_reduction <add>, %96, %cst_47 [1] : vector<128x256xf32> to vector<128xf32>
    %102 = vector.shape_cast %101 : vector<128xf32> to vector<128x1xf32>
    %cst_48 = arith.constant 2.560000e+02 : f32
    %103 = vector.broadcast %cst_48 : f32 to vector<128x1xf32>
    %104 = arith.divf %102, %103 : vector<128x1xf32>
    %105 = vector.broadcast %104 : vector<128x1xf32> to vector<128x256xf32>
    %106 = arith.subf %96, %105 : vector<128x256xf32>
    %107 = arith.mulf %106, %106 : vector<128x256xf32>
    %cst_49 = arith.constant dense<0.000000e+00> : vector<128xf32>
    %108 = vector.multi_reduction <add>, %107, %cst_49 [1] : vector<128x256xf32> to vector<128xf32>
    %109 = vector.shape_cast %108 : vector<128xf32> to vector<128x1xf32>
    %cst_50 = arith.constant 2.560000e+02 : f32
    %110 = vector.broadcast %cst_50 : f32 to vector<128x1xf32>
    %111 = arith.divf %109, %110 : vector<128x1xf32>
    %112 = vector.broadcast %104 : vector<128x1xf32> to vector<128x256xf32>
    %113 = arith.subf %96, %112 : vector<128x256xf32>
    %cst_51 = arith.constant 9.99999974E-6 : f32
    %114 = vector.broadcast %cst_51 : f32 to vector<128x1xf32>
    %115 = arith.addf %111, %114 : vector<128x1xf32>
    %116 = math.rsqrt %115 : vector<128x1xf32>
    %117 = vector.broadcast %116 : vector<128x1xf32> to vector<128x256xf32>
    %118 = arith.mulf %113, %117 : vector<128x256xf32>
    %119 = vector.shape_cast %98 : vector<256xf32> to vector<1x256xf32>
    %120 = vector.broadcast %119 : vector<1x256xf32> to vector<128x256xf32>
    %121 = arith.mulf %118, %120 : vector<128x256xf32>
    %122 = vector.shape_cast %100 : vector<256xf32> to vector<1x256xf32>
    %123 = vector.broadcast %122 : vector<1x256xf32> to vector<128x256xf32>
    %124 = arith.addf %121, %123 : vector<128x256xf32>
    %c0_52 = arith.constant 0 : index
    %c0_53 = arith.constant 0 : index
    %c0_54 = arith.constant 0 : index
    %125 = vector.load %arg14[%c0_52, %c0_53, %c0_54] : memref<1x128x256xf32, #tpu.memory_space<vmem>>, vector<1x128x256xf32>
    %126 = vector.shape_cast %125 : vector<1x128x256xf32> to vector<128x256xf32>
    %127 = vector.shape_cast %124 : vector<128x256xf32> to vector<1x128x256xf32>
    tpu.vector_store %arg14[%c0_52, %c0_53, %c0_54], %127 {strides = array<i32>} : memref<1x128x256xf32, #tpu.memory_space<vmem>>, vector<1x128x256xf32>,
    return
  }
  func.func @transform_0(%arg0: i32) -> (i32, i32, i32) {
    %c0_i32 = arith.constant 0 : i32
    %c0_i32_0 = arith.constant 0 : i32
    %c0_i32_1 = arith.constant 0 : i32
    return %arg0, %c0_i32, %c0_i32_0 : i32, i32, i32
  }
  func.func @transform_1(%arg0: i32) -> (i32, i32) {
    %c0_i32 = arith.constant 0 : i32
    %c0_i32_0 = arith.constant 0 : i32
    %c0_i32_1 = arith.constant 0 : i32
    return %c0_i32, %c0_i32_0 : i32, i32
  }
  func.func @transform_2(%arg0: i32) -> (i32, i32) {
    %c0_i32 = arith.constant 0 : i32
    %c0_i32_0 = arith.constant 0 : i32
    %c0_i32_1 = arith.constant 0 : i32
    return %c0_i32, %c0_i32_0 : i32, i32
  }
  func.func @transform_3(%arg0: i32) -> (i32, i32, i32) {
    %c0_i32 = arith.constant 0 : i32
    %c0_i32_0 = arith.constant 0 : i32
    %c0_i32_1 = arith.constant 0 : i32
    %c0_i32_2 = arith.constant 0 : i32
    return %c0_i32, %c0_i32_0, %c0_i32_1 : i32, i32, i32
  }
  func.func @transform_4(%arg0: i32) -> (i32, i32) {
    %c0_i32 = arith.constant 0 : i32
    %c0_i32_0 = arith.constant 0 : i32
    %c0_i32_1 = arith.constant 0 : i32
    return %c0_i32, %c0_i32_0 : i32, i32
  }
  func.func @transform_5(%arg0: i32) -> (i32, i32) {
    %c0_i32 = arith.constant 0 : i32
    %c0_i32_0 = arith.constant 0 : i32
    %c0_i32_1 = arith.constant 0 : i32
    return %c0_i32, %c0_i32_0 : i32, i32
  }
  func.func @transform_6(%arg0: i32) -> (i32, i32) {
    %c0_i32 = arith.constant 0 : i32
    %c0_i32_0 = arith.constant 0 : i32
    %c0_i32_1 = arith.constant 0 : i32
    return %c0_i32, %c0_i32_0 : i32, i32
  }
  func.func @transform_7(%arg0: i32) -> (i32, i32) {
    %c0_i32 = arith.constant 0 : i32
    %c0_i32_0 = arith.constant 0 : i32
    %c0_i32_1 = arith.constant 0 : i32
    return %c0_i32, %c0_i32_0 : i32, i32
  }
  func.func @transform_8(%arg0: i32) -> (i32, i32) {
    %c0_i32 = arith.constant 0 : i32
    %c0_i32_0 = arith.constant 0 : i32
    %c0_i32_1 = arith.constant 0 : i32
    return %c0_i32, %c0_i32_0 : i32, i32
  }
  func.func @transform_9(%arg0: i32) -> (i32, i32) {
    %c0_i32 = arith.constant 0 : i32
    %c0_i32_0 = arith.constant 0 : i32
    %c0_i32_1 = arith.constant 0 : i32
    return %c0_i32, %c0_i32_0 : i32, i32
  }
  func.func @transform_10(%arg0: i32) -> (i32, i32) {
    %c0_i32 = arith.constant 0 : i32
    %c0_i32_0 = arith.constant 0 : i32
    %c0_i32_1 = arith.constant 0 : i32
    return %c0_i32, %c0_i32_0 : i32, i32
  }
  func.func @transform_11(%arg0: i32) -> (i32, i32) {
    %c0_i32 = arith.constant 0 : i32
    %c0_i32_0 = arith.constant 0 : i32
    %c0_i32_1 = arith.constant 0 : i32
    return %c0_i32, %c0_i32_0 : i32, i32
  }
  func.func @transform_12(%arg0: i32) -> (i32, i32) {
    %c0_i32 = arith.constant 0 : i32
    %c0_i32_0 = arith.constant 0 : i32
    %c0_i32_1 = arith.constant 0 : i32
    return %c0_i32, %c0_i32_0 : i32, i32
  }
  func.func @transform_13(%arg0: i32) -> (i32, i32, i32) {
    %c0_i32 = arith.constant 0 : i32
    %c0_i32_0 = arith.constant 0 : i32
    %c0_i32_1 = arith.constant 0 : i32
    return %arg0, %c0_i32, %c0_i32_0 : i32, i32, i32
  }
}

</mosaic_0001>

<llo_original>
// kernel: transformer_encoder_layer.1
$region0: #{transformer_encoder_layer.1}
  #allocation0 [shape = 'u32[]', space=smem, size = 0x4, offset = 0x4, fixed_abs, tag = 'smem constant byte address 0x4 - core index']
  #allocation1 [shape = 'u32[144,128]{1,0:T(1,128)}', space=vmem, size = 0x12000, scoped, tag = 'internal scratch']
  %s0 = inlined_call_operand.vmem [shape: f32[2,128,256], index: 0, kind: input, shape index: {}]
  %s1 = inlined_call_operand.vmem [shape: bf16[256,768], index: 1, kind: input, shape index: {}]
  %s2 = inlined_call_operand.vmem [shape: f32[1,768], index: 2, kind: input, shape index: {}]
  %s3 = inlined_call_operand.vmem [shape: bf16[2,128,256], index: 3, kind: input, shape index: {}]
  %s4 = inlined_call_operand.vmem [shape: f32[1,256], index: 4, kind: input, shape index: {}]
  %s5 = inlined_call_operand.vmem [shape: f32[1,256], index: 5, kind: input, shape index: {}]
  %s6 = inlined_call_operand.vmem [shape: f32[1,256], index: 6, kind: input, shape index: {}]
  %s7 = inlined_call_operand.vmem [shape: bf16[256,512], index: 7, kind: input, shape index: {}]
  %s8 = inlined_call_operand.vmem [shape: f32[1,512], index: 8, kind: input, shape index: {}]
  %s9 = inlined_call_operand.vmem [shape: bf16[512,256], index: 9, kind: input, shape index: {}]
  %s10 = inlined_call_operand.vmem [shape: f32[1,256], index: 10, kind: input, shape index: {}]
  %s11 = inlined_call_operand.vmem [shape: f32[1,256], index: 11, kind: input, shape index: {}]
  %s12 = inlined_call_operand.vmem [shape: f32[1,256], index: 12, kind: input, shape index: {}]
  %s13 = inlined_call_operand.vmem [shape: f32[2,128,256], index: 13, kind: output, shape index: {}]
  %s14 = sld [smem:[#allocation0]]
  $region85: #{transformer_encoder_layer.1} parent=0
    _
  %s16 = ssub.s32 1, %s14
  %s17 = scalar_select 0, %s16, %s14
  loop: start=0, step=1, limit=4
  $region2: #{transformer_encoder_layer.1} parent=0 // loop_pre_header
    _
  $region3: #{transformer_encoder_layer.1} parent=0 // loop_header
    %s19 = sphi 0, %s23
    %p20 = scmp.ge.s32.totalorder %s19, 4
    %s29 = sphi 0, %s31
    %s32 = sphi 0, %s29
    %s33 = sphi 0, %s32
    %s49 = sphi 0, %s33
    %s53 = sphi 0, %s53
    %s55 = sphi 0, %s53
    %s56 = sphi 0, %s55
    %s70 = sphi 0, %s56
    %s74 = sphi 0, %s74
    %s76 = sphi 0, %s74
    %s77 = sphi 0, %s76
    %s91 = sphi 0, %s77
    %s95 = sphi 0, %s95
    %s97 = sphi 0, %s95
    %s98 = sphi 0, %s97
    %s112 = sphi 0, %s98
    %s116 = sphi 0, %s116
    %s118 = sphi 0, %s116
    %s119 = sphi 0, %s118
    %s133 = sphi 0, %s119
    %s137 = sphi 0, %s137
    %s139 = sphi 0, %s137
    %s140 = sphi 0, %s139
    %s154 = sphi 0, %s140
    %s158 = sphi 0, %s158
    %s160 = sphi 0, %s158
    %s161 = sphi 0, %s160
    %s175 = sphi 0, %s161
    %s179 = sphi 0, %s179
    %s181 = sphi 0, %s179
    %s182 = sphi 0, %s181
    %s196 = sphi 0, %s182
    %s200 = sphi 0, %s200
    %s202 = sphi 0, %s200
    %s203 = sphi 0, %s202
    %s217 = sphi 0, %s203
    %s221 = sphi 0, %s221
    %s223 = sphi 0, %s221
    %s224 = sphi 0, %s223
    %s238 = sphi 0, %s224
    %s242 = sphi 0, %s242
    %s244 = sphi 0, %s242
    %s245 = sphi 0, %s244
    %s259 = sphi 0, %s245
    %s263 = sphi 0, %s263
    %s265 = sphi 0, %s263
    %s266 = sphi 0, %s265
    %s280 = sphi 0, %s266
    %s284 = sphi 0, %s284
    %s286 = sphi 0, %s284
    %s287 = sphi 0, %s286
    %s301 = sphi 0, %s287
    %s307 = sphi 0, %s309
    %s310 = sphi 0, %s307
    %s311 = sphi 0, %s310
    %s327 = sphi 0, %s311
  $region4: #{transformer_encoder_layer.1} parent=0 // loop_header_branch
    %22 = sbr.rel (%p20) target = $region8
  $region5: #{transformer_encoder_layer.1} parent=0 // loop_body
    %s24 = ssub.s32 %s19, 1
    %s25 = ssub.s32 %s19, 2
    %s26 = sadd.s32 %s19, 1
    %s27 = ssub.s32 %s19, %s26
    %p28 = scmp.eq.s32.totalorder %s27, 0
    %s30 = sadd.s32 %s29, 1
    %s31 = scalar_select %p28, %s29, %s30
    %p34 = pneg %p28
    %p35 = scmp.eq.s32.totalorder %s19, 1
    %p36 = por %p34, %p35
    %p37 = scmp.ne.s32.totalorder %s29, %s32
    %p38 = scmp.eq.s32.totalorder %s19, 0
    %p39 = por %p37, %p38
    %p40 = scmp.ne.s32.totalorder %s29, %s32
    %p41 = scmp.eq.s32.totalorder %s24, 1
    %p42 = por %p40, %p41
    %p43 = scmp.ne.s32.totalorder %s32, %s33
    %p44 = scmp.eq.s32.totalorder %s24, 0
    %p45 = por %p43, %p44
    %p46 = scmp.ne.s32.totalorder %s32, %s33
    %p47 = scmp.eq.s32.totalorder %s25, 1
    %p48 = por %p46, %p47
    %p50 = scmp.ne.s32.totalorder %s33, %s49
    %p51 = scmp.eq.s32.totalorder %s25, 0
    %p52 = por %p50, %p51
    %s54 = sadd.s32 %s53, 1
    %p57 = scmp.eq.s32.totalorder %s19, 1
    %p58 = scmp.ne.s32.totalorder %s53, %s55
    %p59 = scmp.eq.s32.totalorder %s19, 0
    %p60 = por %p58, %p59
    %p61 = scmp.ne.s32.totalorder %s53, %s55
    %p62 = scmp.eq.s32.totalorder %s24, 1
    %p63 = por %p61, %p62
    %p64 = scmp.ne.s32.totalorder %s55, %s56
    %p65 = scmp.eq.s32.totalorder %s24, 0
    %p66 = por %p64, %p65
    %p67 = scmp.ne.s32.totalorder %s55, %s56
    %p68 = scmp.eq.s32.totalorder %s25, 1
    %p69 = por %p67, %p68
    %p71 = scmp.ne.s32.totalorder %s56, %s70
    %p72 = scmp.eq.s32.totalorder %s25, 0
    %p73 = por %p71, %p72
    %s75 = sadd.s32 %s74, 1
    %p78 = scmp.eq.s32.totalorder %s19, 1
    %p79 = scmp.ne.s32.totalorder %s74, %s76
    %p80 = scmp.eq.s32.totalorder %s19, 0
    %p81 = por %p79, %p80
    %p82 = scmp.ne.s32.totalorder %s74, %s76
    %p83 = scmp.eq.s32.totalorder %s24, 1
    %p84 = por %p82, %p83
    %p85 = scmp.ne.s32.totalorder %s76, %s77
    %p86 = scmp.eq.s32.totalorder %s24, 0
    %p87 = por %p85, %p86
    %p88 = scmp.ne.s32.totalorder %s76, %s77
    %p89 = scmp.eq.s32.totalorder %s25, 1
    %p90 = por %p88, %p89
    %p92 = scmp.ne.s32.totalorder %s77, %s91
    %p93 = scmp.eq.s32.totalorder %s25, 0
    %p94 = por %p92, %p93
    %s96 = sadd.s32 %s95, 1
    %p99 = scmp.eq.s32.totalorder %s19, 1
    %p100 = scmp.ne.s32.totalorder %s95, %s97
    %p101 = scmp.eq.s32.totalorder %s19, 0
    %p102 = por %p100, %p101
    %p103 = scmp.ne.s32.totalorder %s95, %s97
    %p104 = scmp.eq.s32.totalorder %s24, 1
    %p105 = por %p103, %p104
    %p106 = scmp.ne.s32.totalorder %s97, %s98
    %p107 = scmp.eq.s32.totalorder %s24, 0
    %p108 = por %p106, %p107
    %p109 = scmp.ne.s32.totalorder %s97, %s98
    %p110 = scmp.eq.s32.totalorder %s25, 1
    %p111 = por %p109, %p110
    %p113 = scmp.ne.s32.totalorder %s98, %s112
    %p114 = scmp.eq.s32.totalorder %s25, 0
    %p115 = por %p113, %p114
    %s117 = sadd.s32 %s116, 1
    %p120 = scmp.eq.s32.totalorder %s19, 1
    %p121 = scmp.ne.s32.totalorder %s116, %s118
    %p122 = scmp.eq.s32.totalorder %s19, 0
    %p123 = por %p121, %p122
    %p124 = scmp.ne.s32.totalorder %s116, %s118
    %p125 = scmp.eq.s32.totalorder %s24, 1
    %p126 = por %p124, %p125
    %p127 = scmp.ne.s32.totalorder %s118, %s119
    %p128 = scmp.eq.s32.totalorder %s24, 0
    %p129 = por %p127, %p128
    %p130 = scmp.ne.s32.totalorder %s118, %s119
    %p131 = scmp.eq.s32.totalorder %s25, 1
    %p132 = por %p130, %p131
    %p134 = scmp.ne.s32.totalorder %s119, %s133
    %p135 = scmp.eq.s32.totalorder %s25, 0
    %p136 = por %p134, %p135
    %s138 = sadd.s32 %s137, 1
    %p141 = scmp.eq.s32.totalorder %s19, 1
    %p142 = scmp.ne.s32.totalorder %s137, %s139
    %p143 = scmp.eq.s32.totalorder %s19, 0
    %p144 = por %p142, %p143
    %p145 = scmp.ne.s32.totalorder %s137, %s139
    %p146 = scmp.eq.s32.totalorder %s24, 1
    %p147 = por %p145, %p146
    %p148 = scmp.ne.s32.totalorder %s139, %s140
    %p149 = scmp.eq.s32.totalorder %s24, 0
    %p150 = por %p148, %p149
    %p151 = scmp.ne.s32.totalorder %s139, %s140
    %p152 = scmp.eq.s32.totalorder %s25, 1
    %p153 = por %p151, %p152
    %p155 = scmp.ne.s32.totalorder %s140, %s154
    %p156 = scmp.eq.s32.totalorder %s25, 0
    %p157 = por %p155, %p156
    %s159 = sadd.s32 %s158, 1
    %p162 = scmp.eq.s32.totalorder %s19, 1
    %p163 = scmp.ne.s32.totalorder %s158, %s160
    %p164 = scmp.eq.s32.totalorder %s19, 0
    %p165 = por %p163, %p164
    %p166 = scmp.ne.s32.totalorder %s158, %s160
    %p167 = scmp.eq.s32.totalorder %s24, 1
    %p168 = por %p166, %p167
    %p169 = scmp.ne.s32.totalorder %s160, %s161
    %p170 = scmp.eq.s32.totalorder %s24, 0
    %p171 = por %p169, %p170
    %p172 = scmp.ne.s32.totalorder %s160, %s161
    %p173 = scmp.eq.s32.totalorder %s25, 1
    %p174 = por %p172, %p173
    %p176 = scmp.ne.s32.totalorder %s161, %s175
    %p177 = scmp.eq.s32.totalorder %s25, 0
    %p178 = por %p176, %p177
    %s180 = sadd.s32 %s179, 1
    %p183 = scmp.eq.s32.totalorder %s19, 1
    %p184 = scmp.ne.s32.totalorder %s179, %s181
    %p185 = scmp.eq.s32.totalorder %s19, 0
    %p186 = por %p184, %p185
    %p187 = scmp.ne.s32.totalorder %s179, %s181
    %p188 = scmp.eq.s32.totalorder %s24, 1
    %p189 = por %p187, %p188
    %p190 = scmp.ne.s32.totalorder %s181, %s182
    %p191 = scmp.eq.s32.totalorder %s24, 0
    %p192 = por %p190, %p191
    %p193 = scmp.ne.s32.totalorder %s181, %s182
    %p194 = scmp.eq.s32.totalorder %s25, 1
    %p195 = por %p193, %p194
    %p197 = scmp.ne.s32.totalorder %s182, %s196
    %p198 = scmp.eq.s32.totalorder %s25, 0
    %p199 = por %p197, %p198
    %s201 = sadd.s32 %s200, 1
    %p204 = scmp.eq.s32.totalorder %s19, 1
    %p205 = scmp.ne.s32.totalorder %s200, %s202
    %p206 = scmp.eq.s32.totalorder %s19, 0
    %p207 = por %p205, %p206
    %p208 = scmp.ne.s32.totalorder %s200, %s202
    %p209 = scmp.eq.s32.totalorder %s24, 1
    %p210 = por %p208, %p209
    %p211 = scmp.ne.s32.totalorder %s202, %s203
    %p212 = scmp.eq.s32.totalorder %s24, 0
    %p213 = por %p211, %p212
    %p214 = scmp.ne.s32.totalorder %s202, %s203
    %p215 = scmp.eq.s32.totalorder %s25, 1
    %p216 = por %p214, %p215
    %p218 = scmp.ne.s32.totalorder %s203, %s217
    %p219 = scmp.eq.s32.totalorder %s25, 0
    %p220 = por %p218, %p219
    %s222 = sadd.s32 %s221, 1
    %p225 = scmp.eq.s32.totalorder %s19, 1
    %p226 = scmp.ne.s32.totalorder %s221, %s223
    %p227 = scmp.eq.s32.totalorder %s19, 0
    %p228 = por %p226, %p227
    %p229 = scmp.ne.s32.totalorder %s221, %s223
    %p230 = scmp.eq.s32.totalorder %s24, 1
    %p231 = por %p229, %p230
    %p232 = scmp.ne.s32.totalorder %s223, %s224
    %p233 = scmp.eq.s32.totalorder %s24, 0
    %p234 = por %p232, %p233
    %p235 = scmp.ne.s32.totalorder %s223, %s224
    %p236 = scmp.eq.s32.totalorder %s25, 1
    %p237 = por %p235, %p236
    %p239 = scmp.ne.s32.totalorder %s224, %s238
    %p240 = scmp.eq.s32.totalorder %s25, 0
    %p241 = por %p239, %p240
    %s243 = sadd.s32 %s242, 1
    %p246 = scmp.eq.s32.totalorder %s19, 1
    %p247 = scmp.ne.s32.totalorder %s242, %s244
    %p248 = scmp.eq.s32.totalorder %s19, 0
    %p249 = por %p247, %p248
    %p250 = scmp.ne.s32.totalorder %s242, %s244
    %p251 = scmp.eq.s32.totalorder %s24, 1
    %p252 = por %p250, %p251
    %p253 = scmp.ne.s32.totalorder %s244, %s245
    %p254 = scmp.eq.s32.totalorder %s24, 0
    %p255 = por %p253, %p254
    %p256 = scmp.ne.s32.totalorder %s244, %s245
    %p257 = scmp.eq.s32.totalorder %s25, 1
    %p258 = por %p256, %p257
    %p260 = scmp.ne.s32.totalorder %s245, %s259
    %p261 = scmp.eq.s32.totalorder %s25, 0
    %p262 = por %p260, %p261
    %s264 = sadd.s32 %s263, 1
    %p267 = scmp.eq.s32.totalorder %s19, 1
    %p268 = scmp.ne.s32.totalorder %s263, %s265
    %p269 = scmp.eq.s32.totalorder %s19, 0
    %p270 = por %p268, %p269
    %p271 = scmp.ne.s32.totalorder %s263, %s265
    %p272 = scmp.eq.s32.totalorder %s24, 1
    %p273 = por %p271, %p272
    %p274 = scmp.ne.s32.totalorder %s265, %s266
    %p275 = scmp.eq.s32.totalorder %s24, 0
    %p276 = por %p274, %p275
    %p277 = scmp.ne.s32.totalorder %s265, %s266
    %p278 = scmp.eq.s32.totalorder %s25, 1
    %p279 = por %p277, %p278
    %p281 = scmp.ne.s32.totalorder %s266, %s280
    %p282 = scmp.eq.s32.totalorder %s25, 0
    %p283 = por %p281, %p282
    %s285 = sadd.s32 %s284, 1
    %p288 = scmp.eq.s32.totalorder %s19, 1
    %p289 = scmp.ne.s32.totalorder %s284, %s286
    %p290 = scmp.eq.s32.totalorder %s19, 0
    %p291 = por %p289, %p290
    %p292 = scmp.ne.s32.totalorder %s284, %s286
    %p293 = scmp.eq.s32.totalorder %s24, 1
    %p294 = por %p292, %p293
    %p295 = scmp.ne.s32.totalorder %s286, %s287
    %p296 = scmp.eq.s32.totalorder %s24, 0
    %p297 = por %p295, %p296
    %p298 = scmp.ne.s32.totalorder %s286, %s287
    %p299 = scmp.eq.s32.totalorder %s25, 1
    %p300 = por %p298, %p299
    %p302 = scmp.ne.s32.totalorder %s287, %s301
    %p303 = scmp.eq.s32.totalorder %s25, 0
    %p304 = por %p302, %p303
    %s305 = ssub.s32 %s19, %s26
    %p306 = scmp.eq.s32.totalorder %s305, 0
    %s308 = sadd.s32 %s307, 1
    %s309 = scalar_select %p306, %s307, %s308
    %p312 = pneg %p306
    %p313 = scmp.eq.s32.totalorder %s19, 1
    %p314 = por %p312, %p313
    %p315 = scmp.ne.s32.totalorder %s307, %s310
    %p316 = scmp.eq.s32.totalorder %s19, 0
    %p317 = por %p315, %p316
    %p318 = scmp.ne.s32.totalorder %s307, %s310
    %p319 = scmp.eq.s32.totalorder %s24, 1
    %p320 = por %p318, %p319
    %p321 = scmp.ne.s32.totalorder %s310, %s311
    %p322 = scmp.eq.s32.totalorder %s24, 0
    %p323 = por %p321, %p322
    %p324 = scmp.ne.s32.totalorder %s310, %s311
    %p325 = scmp.eq.s32.totalorder %s25, 1
    %p326 = por %p324, %p325
    %p328 = scmp.ne.s32.totalorder %s311, %s327
    %p329 = scmp.eq.s32.totalorder %s25, 0
    %p330 = por %p328, %p329
    %p331 = scmp.le.s32.totalorder 1, %s19
    %p332 = scmp.lt.s32.totalorder %s19, 3
    %p333 = pnand %p331, %p332
    %p334 = pneg %p333
    // Predicated region
    $region9: #{transformer_encoder_layer.1} parent=5 // pred_check
      _
    $region10: #{transformer_encoder_layer.1} parent=5 // pred_check_branch
      %336 = sbr.rel (%p333) target = $region12
    $region11: #{transformer_encoder_layer.1} parent=5 // pred_region
      %s337 = ssub.s32 %s19, 1
      // Predicated region
      $region13: #{transformer_encoder_layer.1} parent=11 // pred_check
        %p338 = pneg %p66
      $region14: #{transformer_encoder_layer.1} parent=11 // pred_check_branch
        %340 = sbr.rel (%p338) target = $region16
      $region15: #{transformer_encoder_layer.1} parent=11 // pred_region
        _
      $region16: #{transformer_encoder_layer.1} parent=11 // pred_fallthru
        _
      // Predicated region
      $region17: #{transformer_encoder_layer.1} parent=11 // pred_check
        %p341 = pneg %p87
      $region18: #{transformer_encoder_layer.1} parent=11 // pred_check_branch
        %343 = sbr.rel (%p341) target = $region20
      $region19: #{transformer_encoder_layer.1} parent=11 // pred_region
        _
      $region20: #{transformer_encoder_layer.1} parent=11 // pred_fallthru
        _
      // Predicated region
      $region21: #{transformer_encoder_layer.1} parent=11 // pred_check
        %p344 = pneg %p108
      $region22: #{transformer_encoder_layer.1} parent=11 // pred_check_branch
        %346 = sbr.rel (%p344) target = $region24
      $region23: #{transformer_encoder_layer.1} parent=11 // pred_region
        _
      $region24: #{transformer_encoder_layer.1} parent=11 // pred_fallthru
        _
      // Predicated region
      $region25: #{transformer_encoder_layer.1} parent=11 // pred_check
        %p347 = pneg %p129
      $region26: #{transformer_encoder_layer.1} parent=11 // pred_check_branch
        %349 = sbr.rel (%p347) target = $region28
      $region27: #{transformer_encoder_layer.1} parent=11 // pred_region
        _
      $region28: #{transformer_encoder_layer.1} parent=11 // pred_fallthru
        _
      // Predicated region
      $region29: #{transformer_encoder_layer.1} parent=11 // pred_check
        %p350 = pneg %p150
      $region30: #{transformer_encoder_layer.1} parent=11 // pred_check_branch
        %352 = sbr.rel (%p350) target = $region32
      $region31: #{transformer_encoder_layer.1} parent=11 // pred_region
        _
      $region32: #{transformer_encoder_layer.1} parent=11 // pred_fallthru
        _
      // Predicated region
      $region33: #{transformer_encoder_layer.1} parent=11 // pred_check
        %p353 = pneg %p171
      $region34: #{transformer_encoder_layer.1} parent=11 // pred_check_branch
        %355 = sbr.rel (%p353) target = $region36
      $region35: #{transformer_encoder_layer.1} parent=11 // pred_region
        _
      $region36: #{transformer_encoder_layer.1} parent=11 // pred_fallthru
        _
      // Predicated region
      $region37: #{transformer_encoder_layer.1} parent=11 // pred_check
        %p356 = pneg %p192
      $region38: #{transformer_encoder_layer.1} parent=11 // pred_check_branch
        %358 = sbr.rel (%p356) target = $region40
      $region39: #{transformer_encoder_layer.1} parent=11 // pred_region
        _
      $region40: #{transformer_encoder_layer.1} parent=11 // pred_fallthru
        _
      // Predicated region
      $region41: #{transformer_encoder_layer.1} parent=11 // pred_check
        %p359 = pneg %p213
      $region42: #{transformer_encoder_layer.1} parent=11 // pred_check_branch
        %361 = sbr.rel (%p359) target = $region44
      $region43: #{transformer_encoder_layer.1} parent=11 // pred_region
        _
      $region44: #{transformer_encoder_layer.1} parent=11 // pred_fallthru
        _
      // Predicated region
      $region45: #{transformer_encoder_layer.1} parent=11 // pred_check
        %p362 = pneg %p234
      $region46: #{transformer_encoder_layer.1} parent=11 // pred_check_branch
        %364 = sbr.rel (%p362) target = $region48
      $region47: #{transformer_encoder_layer.1} parent=11 // pred_region
        _
      $region48: #{transformer_encoder_layer.1} parent=11 // pred_fallthru
        _
      // Predicated region
      $region49: #{transformer_encoder_layer.1} parent=11 // pred_check
        %p365 = pneg %p255
      $region50: #{transformer_encoder_layer.1} parent=11 // pred_check_branch
        %367 = sbr.rel (%p365) target = $region52
      $region51: #{transformer_encoder_layer.1} parent=11 // pred_region
        _
      $region52: #{transformer_encoder_layer.1} parent=11 // pred_fallthru
        _
      // Predicated region
      $region53: #{transformer_encoder_layer.1} parent=11 // pred_check
        %p368 = pneg %p276
      $region54: #{transformer_encoder_layer.1} parent=11 // pred_check_branch
        %370 = sbr.rel (%p368) target = $region56
      $region55: #{transformer_encoder_layer.1} parent=11 // pred_region
        _
      $region56: #{transformer_encoder_layer.1} parent=11 // pred_fallthru
        _
      // Predicated region
      $region57: #{transformer_encoder_layer.1} parent=11 // pred_check
        %p371 = pneg %p297
      $region58: #{transformer_encoder_layer.1} parent=11 // pred_check_branch
        %373 = sbr.rel (%p371) target = $region60
      $region59: #{transformer_encoder_layer.1} parent=11 // pred_region
        _
      $region60: #{transformer_encoder_layer.1} parent=11 // pred_fallthru
        _
    $region12: #{transformer_encoder_layer.1} parent=5 // pred_fallthru
      _
    %p374 = scmp.lt.s32.totalorder %s19, 2
    // Predicated region
    $region61: #{transformer_encoder_layer.1} parent=5 // pred_check
      %p375 = pneg %p374
    $region62: #{transformer_encoder_layer.1} parent=5 // pred_check_branch
      %377 = sbr.rel (%p375) target = $region64
    $region63: #{transformer_encoder_layer.1} parent=5 // pred_region
      // Predicated region
      $region65: #{transformer_encoder_layer.1} parent=63 // pred_check
        %p378 = pneg %p39
      $region66: #{transformer_encoder_layer.1} parent=63 // pred_check_branch
        %380 = sbr.rel (%p378) target = $region68
      $region67: #{transformer_encoder_layer.1} parent=63 // pred_region
        %p381 = scmp.lt.s32.totalorder %s19, 1
        %s382 = scalar_select %p381, %s19, 1
        %s383 = smul.addr %s382, 32
        %s384 = smul.addr %s383, 8
        %s385 = scalar_lea.vmem %s0, %s384
      $region68: #{transformer_encoder_layer.1} parent=63 // pred_fallthru
        _
    $region64: #{transformer_encoder_layer.1} parent=5 // pred_fallthru
      _
    %p386 = scmp.le.s32.totalorder 1, %s19
    %p387 = scmp.lt.s32.totalorder %s19, 3
    %p388 = pnand %p386, %p387
    %p389 = pneg %p388
    // Predicated region
    $region69: #{transformer_encoder_layer.1} parent=5 // pred_check
      _
    $region70: #{transformer_encoder_layer.1} parent=5 // pred_check_branch
      %391 = sbr.rel (%p388) target = $region72
    $region71: #{transformer_encoder_layer.1} parent=5 // pred_region
      %s392 = ssub.s32 %s19, 1
      %p393 = scmp.lt.s32.totalorder %s24, 1
      %s394 = scalar_select %p393, %s24, 1
      %s395 = smul.addr %s394, 32
      %s396 = smul.addr %s395, 8
      %s397 = scalar_lea.vmem %s0, %s396
      %p398 = pneg %p45
      %p399 = pneg %p42
      %p400 = pneg %p66
      %p401 = pneg %p63
      %p402 = pneg %p87
      %p403 = pneg %p84
      %p404 = pneg %p108
      %p405 = pneg %p105
      %p406 = pneg %p129
      %p407 = pneg %p126
      %p408 = pneg %p150
      %p409 = pneg %p147
      %p410 = pneg %p171
      %p411 = pneg %p168
      %p412 = pneg %p192
      %p413 = pneg %p189
      %p414 = pneg %p213
      %p415 = pneg %p210
      %p416 = pneg %p234
      %p417 = pneg %p231
      %p418 = pneg %p255
      %p419 = pneg %p252
      %p420 = pneg %p276
      %p421 = pneg %p273
      %p422 = pneg %p297
      %p423 = pneg %p294
      %p424 = pneg %p323
      %p425 = pneg %p320
      %p426 = scmp.lt.s32.totalorder %s24, 1
      %s427 = scalar_select %p426, %s24, 1
      %s428 = smul.addr %s427, 32
      %s429 = smul.addr %s428, 8
      %s430 = scalar_lea.vmem %s13, %s429
      %p431 = scmp.lt.s32.totalorder %s24, 1
      %s432 = scalar_select %p431, %s24, 1
      %s433 = smul.addr %s432, 32
      %s434 = smul.addr %s433, 8
      %s435 = scalar_lea.vmem %s0, %s434
      %p436 = scmp.lt.s32.totalorder %s24, 1
      %s437 = scalar_select %p436, %s24, 1
      %s438 = smul.addr %s437, 32
      %s439 = smul.addr %s438, 8
      %s440 = scalar_lea.vmem %s13, %s439
      %v442 = vld [vmem:[%s435] sm:$0xff]
      %v443 = vld [vmem:[%s435 + $0x8] sm:$0xff]
      %v444 = vld [vmem:[%s435 + $0x10] sm:$0xff]
      %v445 = vld [vmem:[%s435 + $0x18] sm:$0xff]
      %v446 = vld [vmem:[%s435 + $0x20] sm:$0xff]
      %v447 = vld [vmem:[%s435 + $0x28] sm:$0xff]
      %v448 = vld [vmem:[%s435 + $0x30] sm:$0xff]
      %v449 = vld [vmem:[%s435 + $0x38] sm:$0xff]
      %v450 = vld [vmem:[%s435 + $0x40] sm:$0xff]
      %v451 = vld [vmem:[%s435 + $0x48] sm:$0xff]
      %v452 = vld [vmem:[%s435 + $0x50] sm:$0xff]
      %v453 = vld [vmem:[%s435 + $0x58] sm:$0xff]
      %v454 = vld [vmem:[%s435 + $0x60] sm:$0xff]
      %v455 = vld [vmem:[%s435 + $0x68] sm:$0xff]
      %v456 = vld [vmem:[%s435 + $0x70] sm:$0xff]
      %v457 = vld [vmem:[%s435 + $0x78] sm:$0xff]
      %v458 = vld [vmem:[%s435 + $0x80] sm:$0xff]
      %v459 = vld [vmem:[%s435 + $0x88] sm:$0xff]
      %v460 = vld [vmem:[%s435 + $0x90] sm:$0xff]
      %v461 = vld [vmem:[%s435 + $0x98] sm:$0xff]
      %v462 = vld [vmem:[%s435 + $0xa0] sm:$0xff]
      %v463 = vld [vmem:[%s435 + $0xa8] sm:$0xff]
      %v464 = vld [vmem:[%s435 + $0xb0] sm:$0xff]
      %v465 = vld [vmem:[%s435 + $0xb8] sm:$0xff]
      %v466 = vld [vmem:[%s435 + $0xc0] sm:$0xff]
      %v467 = vld [vmem:[%s435 + $0xc8] sm:$0xff]
      %v468 = vld [vmem:[%s435 + $0xd0] sm:$0xff]
      %v469 = vld [vmem:[%s435 + $0xd8] sm:$0xff]
      %v470 = vld [vmem:[%s435 + $0xe0] sm:$0xff]
      %v471 = vld [vmem:[%s435 + $0xe8] sm:$0xff]
      %v472 = vld [vmem:[%s435 + $0xf0] sm:$0xff]
      %v473 = vld [vmem:[%s435 + $0xf8] sm:$0xff]
      %v474 = vpack.c.bf16 %v444, %v442
      %v475 = vpack.c.bf16 %v445, %v443
      %v476 = vpack.c.bf16 %v448, %v446
      %v477 = vpack.c.bf16 %v449, %v447
      %v478 = vpack.c.bf16 %v452, %v450
      %v479 = vpack.c.bf16 %v453, %v451
      %v480 = vpack.c.bf16 %v456, %v454
      %v481 = vpack.c.bf16 %v457, %v455
      %v482 = vpack.c.bf16 %v460, %v458
      %v483 = vpack.c.bf16 %v461, %v459
      %v484 = vpack.c.bf16 %v464, %v462
      %v485 = vpack.c.bf16 %v465, %v463
      %v486 = vpack.c.bf16 %v468, %v466
      %v487 = vpack.c.bf16 %v469, %v467
      %v488 = vpack.c.bf16 %v472, %v470
      %v489 = vpack.c.bf16 %v473, %v471
      %v490 = vld [vmem:[%s1] sm:$0xff]
      %v491 = vld [vmem:[%s1 + $0x8] sm:$0xff]
      %v492 = vld [vmem:[%s1 + $0x10] sm:$0xff]
      %v493 = vld [vmem:[%s1 + $0x18] sm:$0xff]
      %v494 = vld [vmem:[%s1 + $0x20] sm:$0xff]
      %v495 = vld [vmem:[%s1 + $0x28] sm:$0xff]
      %v496 = vld [vmem:[%s1 + $0x30] sm:$0xff]
      %v497 = vld [vmem:[%s1 + $0x38] sm:$0xff]
      %v498 = vld [vmem:[%s1 + $0x40] sm:$0xff]
      %v499 = vld [vmem:[%s1 + $0x48] sm:$0xff]
      %v500 = vld [vmem:[%s1 + $0x50] sm:$0xff]
      %v501 = vld [vmem:[%s1 + $0x58] sm:$0xff]
      %v502 = vld [vmem:[%s1 + $0x60] sm:$0xff]
      %v503 = vld [vmem:[%s1 + $0x68] sm:$0xff]
      %v504 = vld [vmem:[%s1 + $0x70] sm:$0xff]
      %v505 = vld [vmem:[%s1 + $0x78] sm:$0xff]
      %v506 = vld [vmem:[%s1 + $0x80] sm:$0xff]
      %v507 = vld [vmem:[%s1 + $0x88] sm:$0xff]
      %v508 = vld [vmem:[%s1 + $0x90] sm:$0xff]
      %v509 = vld [vmem:[%s1 + $0x98] sm:$0xff]
      %v510 = vld [vmem:[%s1 + $0xa0] sm:$0xff]
      %v511 = vld [vmem:[%s1 + $0xa8] sm:$0xff]
      %v512 = vld [vmem:[%s1 + $0xb0] sm:$0xff]
      %v513 = vld [vmem:[%s1 + $0xb8] sm:$0xff]
      %v514 = vld [vmem:[%s1 + $0xc0] sm:$0xff]
      %v515 = vld [vmem:[%s1 + $0xc8] sm:$0xff]
      %v516 = vld [vmem:[%s1 + $0xd0] sm:$0xff]
      %v517 = vld [vmem:[%s1 + $0xd8] sm:$0xff]
      %v518 = vld [vmem:[%s1 + $0xe0] sm:$0xff]
      %v519 = vld [vmem:[%s1 + $0xe8] sm:$0xff]
      %v520 = vld [vmem:[%s1 + $0xf0] sm:$0xff]
      %v521 = vld [vmem:[%s1 + $0xf8] sm:$0xff]
      %v522 = vld [vmem:[%s1 + $0x100] sm:$0xff]
      %v523 = vld [vmem:[%s1 + $0x108] sm:$0xff]
      %v524 = vld [vmem:[%s1 + $0x110] sm:$0xff]
      %v525 = vld [vmem:[%s1 + $0x118] sm:$0xff]
      %v526 = vld [vmem:[%s1 + $0x120] sm:$0xff]
      %v527 = vld [vmem:[%s1 + $0x128] sm:$0xff]
      %v528 = vld [vmem:[%s1 + $0x130] sm:$0xff]
      %v529 = vld [vmem:[%s1 + $0x138] sm:$0xff]
      %v530 = vld [vmem:[%s1 + $0x140] sm:$0xff]
      %v531 = vld [vmem:[%s1 + $0x148] sm:$0xff]
      %v532 = vld [vmem:[%s1 + $0x150] sm:$0xff]
      %v533 = vld [vmem:[%s1 + $0x158] sm:$0xff]
      %v534 = vld [vmem:[%s1 + $0x160] sm:$0xff]
      %v535 = vld [vmem:[%s1 + $0x168] sm:$0xff]
      %v536 = vld [vmem:[%s1 + $0x170] sm:$0xff]
      %v537 = vld [vmem:[%s1 + $0x178] sm:$0xff]
      %v538 = vld [vmem:[%s1 + $0x180] sm:$0xff]
      %v539 = vld [vmem:[%s1 + $0x188] sm:$0xff]
      %v540 = vld [vmem:[%s1 + $0x190] sm:$0xff]
      %v541 = vld [vmem:[%s1 + $0x198] sm:$0xff]
      %v542 = vld [vmem:[%s1 + $0x1a0] sm:$0xff]
      %v543 = vld [vmem:[%s1 + $0x1a8] sm:$0xff]
      %v544 = vld [vmem:[%s1 + $0x1b0] sm:$0xff]
      %v545 = vld [vmem:[%s1 + $0x1b8] sm:$0xff]
      %v546 = vld [vmem:[%s1 + $0x1c0] sm:$0xff]
      %v547 = vld [vmem:[%s1 + $0x1c8] sm:$0xff]
      %v548 = vld [vmem:[%s1 + $0x1d0] sm:$0xff]
      %v549 = vld [vmem:[%s1 + $0x1d8] sm:$0xff]
      %v550 = vld [vmem:[%s1 + $0x1e0] sm:$0xff]
      %v551 = vld [vmem:[%s1 + $0x1e8] sm:$0xff]
      %v552 = vld [vmem:[%s1 + $0x1f0] sm:$0xff]
      %v553 = vld [vmem:[%s1 + $0x1f8] sm:$0xff]
      %v554 = vld [vmem:[%s1 + $0x200] sm:$0xff]
      %v555 = vld [vmem:[%s1 + $0x208] sm:$0xff]
      %v556 = vld [vmem:[%s1 + $0x210] sm:$0xff]
      %v557 = vld [vmem:[%s1 + $0x218] sm:$0xff]
      %v558 = vld [vmem:[%s1 + $0x220] sm:$0xff]
      %v559 = vld [vmem:[%s1 + $0x228] sm:$0xff]
      %v560 = vld [vmem:[%s1 + $0x230] sm:$0xff]
      %v561 = vld [vmem:[%s1 + $0x238] sm:$0xff]
      %v562 = vld [vmem:[%s1 + $0x240] sm:$0xff]
      %v563 = vld [vmem:[%s1 + $0x248] sm:$0xff]
      %v564 = vld [vmem:[%s1 + $0x250] sm:$0xff]
      %v565 = vld [vmem:[%s1 + $0x258] sm:$0xff]
      %v566 = vld [vmem:[%s1 + $0x260] sm:$0xff]
      %v567 = vld [vmem:[%s1 + $0x268] sm:$0xff]
      %v568 = vld [vmem:[%s1 + $0x270] sm:$0xff]
      %v569 = vld [vmem:[%s1 + $0x278] sm:$0xff]
      %v570 = vld [vmem:[%s1 + $0x280] sm:$0xff]
      %v571 = vld [vmem:[%s1 + $0x288] sm:$0xff]
      %v572 = vld [vmem:[%s1 + $0x290] sm:$0xff]
      %v573 = vld [vmem:[%s1 + $0x298] sm:$0xff]
      %v574 = vld [vmem:[%s1 + $0x2a0] sm:$0xff]
      %v575 = vld [vmem:[%s1 + $0x2a8] sm:$0xff]
      %v576 = vld [vmem:[%s1 + $0x2b0] sm:$0xff]
      %v577 = vld [vmem:[%s1 + $0x2b8] sm:$0xff]
      %v578 = vld [vmem:[%s1 + $0x2c0] sm:$0xff]
      %v579 = vld [vmem:[%s1 + $0x2c8] sm:$0xff]
      %v580 = vld [vmem:[%s1 + $0x2d0] sm:$0xff]
      %v581 = vld [vmem:[%s1 + $0x2d8] sm:$0xff]
      %v582 = vld [vmem:[%s1 + $0x2e0] sm:$0xff]
      %v583 = vld [vmem:[%s1 + $0x2e8] sm:$0xff]
      %v584 = vld [vmem:[%s1 + $0x2f0] sm:$0xff]
      %v585 = vld [vmem:[%s1 + $0x2f8] sm:$0xff]
      %v586 = vld [vmem:[%s2] sm:$0x3f]
      %v588 = vlaneseq
      %v589 = vshrl.u32 %v588, 7
      %v590 = vsub.s32 0, %v589
      %v591 = vrot.slane %v586, %v590
      %v592 = vlaneseq
      %v593 = vshrl.u32 %v592, 7
      %v594 = vsub.s32 1, %v593
      %v595 = vrot.slane %v586, %v594
      %v596 = vlaneseq
      %v597 = vshrl.u32 %v596, 7
      %v598 = vsub.s32 2, %v597
      %v599 = vrot.slane %v586, %v598
      %v600 = vlaneseq
      %v601 = vshrl.u32 %v600, 7
      %v602 = vsub.s32 3, %v601
      %v603 = vrot.slane %v586, %v602
      %v604 = vlaneseq
      %v605 = vshrl.u32 %v604, 7
      %v606 = vsub.s32 4, %v605
      %v607 = vrot.slane %v586, %v606
      %v608 = vlaneseq
      %v609 = vshrl.u32 %v608, 7
      %v610 = vsub.s32 5, %v609
      %v611 = vrot.slane %v586, %v610
      %v714 = vunpack.c.l.b16 %v490
      %v715 = vunpack.c.h.b16 %v490
      %v716 = vunpack.c.l.b16 %v491
      %v717 = vunpack.c.h.b16 %v491
      %v718 = vunpack.c.l.b16 %v492
      %v719 = vunpack.c.h.b16 %v492
      %v720 = vunpack.c.l.b16 %v493
      %v721 = vunpack.c.h.b16 %v493
      %v722 = vunpack.c.l.b16 %v494
      %v723 = vunpack.c.h.b16 %v494
      %v724 = vunpack.c.l.b16 %v495
      %v725 = vunpack.c.h.b16 %v495
      %v726 = vunpack.c.l.b16 %v496
      %v727 = vunpack.c.h.b16 %v496
      %v728 = vunpack.c.l.b16 %v497
      %v729 = vunpack.c.h.b16 %v497
      %v730 = vunpack.c.l.b16 %v498
      %v731 = vunpack.c.h.b16 %v498
      %v732 = vunpack.c.l.b16 %v499
      %v733 = vunpack.c.h.b16 %v499
      %v734 = vunpack.c.l.b16 %v500
      %v735 = vunpack.c.h.b16 %v500
      %v736 = vunpack.c.l.b16 %v501
      %v737 = vunpack.c.h.b16 %v501
      %v738 = vunpack.c.l.b16 %v502
      %v739 = vunpack.c.h.b16 %v502
      %v740 = vunpack.c.l.b16 %v503
      %v741 = vunpack.c.h.b16 %v503
      %v742 = vunpack.c.l.b16 %v504
      %v743 = vunpack.c.h.b16 %v504
      %v744 = vunpack.c.l.b16 %v505
      %v745 = vunpack.c.h.b16 %v505
      %v746 = vunpack.c.l.b16 %v506
      %v747 = vunpack.c.h.b16 %v506
      %v748 = vunpack.c.l.b16 %v507
      %v749 = vunpack.c.h.b16 %v507
      %v750 = vunpack.c.l.b16 %v508
      %v751 = vunpack.c.h.b16 %v508
      %v752 = vunpack.c.l.b16 %v509
      %v753 = vunpack.c.h.b16 %v509
      %v754 = vunpack.c.l.b16 %v510
      %v755 = vunpack.c.h.b16 %v510
      %v756 = vunpack.c.l.b16 %v511
      %v757 = vunpack.c.h.b16 %v511
      %v758 = vunpack.c.l.b16 %v512
      %v759 = vunpack.c.h.b16 %v512
      %v760 = vunpack.c.l.b16 %v513
      %v761 = vunpack.c.h.b16 %v513
      %v762 = vunpack.c.l.b16 %v514
      %v763 = vunpack.c.h.b16 %v514
      %v764 = vunpack.c.l.b16 %v515
      %v765 = vunpack.c.h.b16 %v515
      %v766 = vunpack.c.l.b16 %v516
      %v767 = vunpack.c.h.b16 %v516
      %v768 = vunpack.c.l.b16 %v517
      %v769 = vunpack.c.h.b16 %v517
      %v770 = vunpack.c.l.b16 %v518
      %v771 = vunpack.c.h.b16 %v518
      %v772 = vunpack.c.l.b16 %v519
      %v773 = vunpack.c.h.b16 %v519
      %v774 = vunpack.c.l.b16 %v520
      %v775 = vunpack.c.h.b16 %v520
      %v776 = vunpack.c.l.b16 %v521
      %v777 = vunpack.c.h.b16 %v521
      %v778 = vunpack.c.l.b16 %v522
      %v779 = vunpack.c.h.b16 %v522
      %v780 = vunpack.c.l.b16 %v523
      %v781 = vunpack.c.h.b16 %v523
      %v782 = vunpack.c.l.b16 %v524
      %v783 = vunpack.c.h.b16 %v524
      %v784 = vunpack.c.l.b16 %v525
      %v785 = vunpack.c.h.b16 %v525
      %v786 = vunpack.c.l.b16 %v526
      %v787 = vunpack.c.h.b16 %v526
      %v788 = vunpack.c.l.b16 %v527
      %v789 = vunpack.c.h.b16 %v527
      %v790 = vunpack.c.l.b16 %v528
      %v791 = vunpack.c.h.b16 %v528
      %v792 = vunpack.c.l.b16 %v529
      %v793 = vunpack.c.h.b16 %v529
      %v794 = vunpack.c.l.b16 %v530
      %v795 = vunpack.c.h.b16 %v530
      %v796 = vunpack.c.l.b16 %v531
      %v797 = vunpack.c.h.b16 %v531
      %v798 = vunpack.c.l.b16 %v532
      %v799 = vunpack.c.h.b16 %v532
      %v800 = vunpack.c.l.b16 %v533
      %v801 = vunpack.c.h.b16 %v533
      %v802 = vunpack.c.l.b16 %v534
      %v803 = vunpack.c.h.b16 %v534
      %v804 = vunpack.c.l.b16 %v535
      %v805 = vunpack.c.h.b16 %v535
      %v806 = vunpack.c.l.b16 %v536
      %v807 = vunpack.c.h.b16 %v536
      %v808 = vunpack.c.l.b16 %v537
      %v809 = vunpack.c.h.b16 %v537
      %v810 = vunpack.c.l.b16 %v538
      %v811 = vunpack.c.h.b16 %v538
      %v812 = vunpack.c.l.b16 %v539
      %v813 = vunpack.c.h.b16 %v539
      %v814 = vunpack.c.l.b16 %v540
      %v815 = vunpack.c.h.b16 %v540
      %v816 = vunpack.c.l.b16 %v541
      %v817 = vunpack.c.h.b16 %v541
      %v818 = vunpack.c.l.b16 %v542
      %v819 = vunpack.c.h.b16 %v542
      %v820 = vunpack.c.l.b16 %v543
      %v821 = vunpack.c.h.b16 %v543
      %v822 = vunpack.c.l.b16 %v544
      %v823 = vunpack.c.h.b16 %v544
      %v824 = vunpack.c.l.b16 %v545
      %v825 = vunpack.c.h.b16 %v545
      %v826 = vunpack.c.l.b16 %v546
      %v827 = vunpack.c.h.b16 %v546
      %v828 = vunpack.c.l.b16 %v547
      %v829 = vunpack.c.h.b16 %v547
      %v830 = vunpack.c.l.b16 %v548
      %v831 = vunpack.c.h.b16 %v548
      %v832 = vunpack.c.l.b16 %v549
      %v833 = vunpack.c.h.b16 %v549
      %v834 = vunpack.c.l.b16 %v550
      %v835 = vunpack.c.h.b16 %v550
      %v836 = vunpack.c.l.b16 %v551
      %v837 = vunpack.c.h.b16 %v551
      %v838 = vunpack.c.l.b16 %v552
      %v839 = vunpack.c.h.b16 %v552
      %v840 = vunpack.c.l.b16 %v553
      %v841 = vunpack.c.h.b16 %v553
      %v842 = vunpack.c.l.b16 %v554
      %v843 = vunpack.c.h.b16 %v554
      %v844 = vunpack.c.l.b16 %v555
      %v845 = vunpack.c.h.b16 %v555
      %v846 = vunpack.c.l.b16 %v556
      %v847 = vunpack.c.h.b16 %v556
      %v848 = vunpack.c.l.b16 %v557
      %v849 = vunpack.c.h.b16 %v557
      %v850 = vunpack.c.l.b16 %v558
      %v851 = vunpack.c.h.b16 %v558
      %v852 = vunpack.c.l.b16 %v559
      %v853 = vunpack.c.h.b16 %v559
      %v854 = vunpack.c.l.b16 %v560
      %v855 = vunpack.c.h.b16 %v560
      %v856 = vunpack.c.l.b16 %v561
      %v857 = vunpack.c.h.b16 %v561
      %v858 = vunpack.c.l.b16 %v562
      %v859 = vunpack.c.h.b16 %v562
      %v860 = vunpack.c.l.b16 %v563
      %v861 = vunpack.c.h.b16 %v563
      %v862 = vunpack.c.l.b16 %v564
      %v863 = vunpack.c.h.b16 %v564
      %v864 = vunpack.c.l.b16 %v565
      %v865 = vunpack.c.h.b16 %v565
      %v866 = vunpack.c.l.b16 %v566
      %v867 = vunpack.c.h.b16 %v566
      %v868 = vunpack.c.l.b16 %v567
      %v869 = vunpack.c.h.b16 %v567
      %v870 = vunpack.c.l.b16 %v568
      %v871 = vunpack.c.h.b16 %v568
      %v872 = vunpack.c.l.b16 %v569
      %v873 = vunpack.c.h.b16 %v569
      %v874 = vunpack.c.l.b16 %v570
      %v875 = vunpack.c.h.b16 %v570
      %v876 = vunpack.c.l.b16 %v571
      %v877 = vunpack.c.h.b16 %v571
      %v878 = vunpack.c.l.b16 %v572
      %v879 = vunpack.c.h.b16 %v572
      %v880 = vunpack.c.l.b16 %v573
      %v881 = vunpack.c.h.b16 %v573
      %v882 = vunpack.c.l.b16 %v574
      %v883 = vunpack.c.h.b16 %v574
      %v884 = vunpack.c.l.b16 %v575
      %v885 = vunpack.c.h.b16 %v575
      %v886 = vunpack.c.l.b16 %v576
      %v887 = vunpack.c.h.b16 %v576
      %v888 = vunpack.c.l.b16 %v577
      %v889 = vunpack.c.h.b16 %v577
      %v890 = vunpack.c.l.b16 %v578
      %v891 = vunpack.c.h.b16 %v578
      %v892 = vunpack.c.l.b16 %v579
      %v893 = vunpack.c.h.b16 %v579
      %v894 = vunpack.c.l.b16 %v580
      %v895 = vunpack.c.h.b16 %v580
      %v896 = vunpack.c.l.b16 %v581
      %v897 = vunpack.c.h.b16 %v581
      %v898 = vunpack.c.l.b16 %v582
      %v899 = vunpack.c.h.b16 %v582
      %v900 = vunpack.c.l.b16 %v583
      %v901 = vunpack.c.h.b16 %v583
      %v902 = vunpack.c.l.b16 %v584
      %v903 = vunpack.c.h.b16 %v584
      %v904 = vunpack.c.l.b16 %v585
      %v905 = vunpack.c.h.b16 %v585
      %v906 = vpack.c.b16 %v720, %v714
      %v907 = vpack.c.b16 %v721, %v715
      %v908 = vpack.c.b16 %v722, %v716
      %v909 = vpack.c.b16 %v723, %v717
      %v910 = vpack.c.b16 %v724, %v718
      %v911 = vpack.c.b16 %v725, %v719
      %v912 = vpack.c.b16 %v732, %v726
      %v913 = vpack.c.b16 %v733, %v727
      %v914 = vpack.c.b16 %v734, %v728
      %v915 = vpack.c.b16 %v735, %v729
      %v916 = vpack.c.b16 %v736, %v730
      %v917 = vpack.c.b16 %v737, %v731
      %v918 = vpack.c.b16 %v744, %v738
      %v919 = vpack.c.b16 %v745, %v739
      %v920 = vpack.c.b16 %v746, %v740
      %v921 = vpack.c.b16 %v747, %v741
      %v922 = vpack.c.b16 %v748, %v742
      %v923 = vpack.c.b16 %v749, %v743
      %v924 = vpack.c.b16 %v756, %v750
      %v925 = vpack.c.b16 %v757, %v751
      %v926 = vpack.c.b16 %v758, %v752
      %v927 = vpack.c.b16 %v759, %v753
      %v928 = vpack.c.b16 %v760, %v754
      %v929 = vpack.c.b16 %v761, %v755
      %v930 = vpack.c.b16 %v768, %v762
      %v931 = vpack.c.b16 %v769, %v763
      %v932 = vpack.c.b16 %v770, %v764
      %v933 = vpack.c.b16 %v771, %v765
      %v934 = vpack.c.b16 %v772, %v766
      %v935 = vpack.c.b16 %v773, %v767
      %v936 = vpack.c.b16 %v780, %v774
      %v937 = vpack.c.b16 %v781, %v775
      %v938 = vpack.c.b16 %v782, %v776
      %v939 = vpack.c.b16 %v783, %v777
      %v940 = vpack.c.b16 %v784, %v778
      %v941 = vpack.c.b16 %v785, %v779
      %v942 = vpack.c.b16 %v792, %v786
      %v943 = vpack.c.b16 %v793, %v787
      %v944 = vpack.c.b16 %v794, %v788
      %v945 = vpack.c.b16 %v795, %v789
      %v946 = vpack.c.b16 %v796, %v790
      %v947 = vpack.c.b16 %v797, %v791
      %v948 = vpack.c.b16 %v804, %v798
      %v949 = vpack.c.b16 %v805, %v799
      %v950 = vpack.c.b16 %v806, %v800
      %v951 = vpack.c.b16 %v807, %v801
      %v952 = vpack.c.b16 %v808, %v802
      %v953 = vpack.c.b16 %v809, %v803
      %v954 = vpack.c.b16 %v816, %v810
      %v955 = vpack.c.b16 %v817, %v811
      %v956 = vpack.c.b16 %v818, %v812
      %v957 = vpack.c.b16 %v819, %v813
      %v958 = vpack.c.b16 %v820, %v814
      %v959 = vpack.c.b16 %v821, %v815
      %v960 = vpack.c.b16 %v828, %v822
      %v961 = vpack.c.b16 %v829, %v823
      %v962 = vpack.c.b16 %v830, %v824
      %v963 = vpack.c.b16 %v831, %v825
      %v964 = vpack.c.b16 %v832, %v826
      %v965 = vpack.c.b16 %v833, %v827
      %v966 = vpack.c.b16 %v840, %v834
      %v967 = vpack.c.b16 %v841, %v835
      %v968 = vpack.c.b16 %v842, %v836
      %v969 = vpack.c.b16 %v843, %v837
      %v970 = vpack.c.b16 %v844, %v838
      %v971 = vpack.c.b16 %v845, %v839
      %v972 = vpack.c.b16 %v852, %v846
      %v973 = vpack.c.b16 %v853, %v847
      %v974 = vpack.c.b16 %v854, %v848
      %v975 = vpack.c.b16 %v855, %v849
      %v976 = vpack.c.b16 %v856, %v850
      %v977 = vpack.c.b16 %v857, %v851
      %v978 = vpack.c.b16 %v864, %v858
      %v979 = vpack.c.b16 %v865, %v859
      %v980 = vpack.c.b16 %v866, %v860
      %v981 = vpack.c.b16 %v867, %v861
      %v982 = vpack.c.b16 %v868, %v862
      %v983 = vpack.c.b16 %v869, %v863
      %v984 = vpack.c.b16 %v876, %v870
      %v985 = vpack.c.b16 %v877, %v871
      %v986 = vpack.c.b16 %v878, %v872
      %v987 = vpack.c.b16 %v879, %v873
      %v988 = vpack.c.b16 %v880, %v874
      %v989 = vpack.c.b16 %v881, %v875
      %v990 = vpack.c.b16 %v888, %v882
      %v991 = vpack.c.b16 %v889, %v883
      %v992 = vpack.c.b16 %v890, %v884
      %v993 = vpack.c.b16 %v891, %v885
      %v994 = vpack.c.b16 %v892, %v886
      %v995 = vpack.c.b16 %v893, %v887
      %v996 = vpack.c.b16 %v900, %v894
      %v997 = vpack.c.b16 %v901, %v895
      %v998 = vpack.c.b16 %v902, %v896
      %v999 = vpack.c.b16 %v903, %v897
      %v1000 = vpack.c.b16 %v904, %v898
      %v1001 = vpack.c.b16 %v905, %v899
      %1098 = vmatprep.subr.bf16.mxu0 %v907
      %1099 = vmatpush1.bf16.msra.mxu0 %v906
      %1100 = vmatprep.subr.bf16.mxu0 %v913
      %1101 = vmatpush1.bf16.msra.mxu0 %v912
      %1102 = vmatprep.subr.bf16.mxu0 %v919
      %1103 = vmatpush1.bf16.msra.mxu0 %v918
      %1104 = vmatprep.subr.bf16.mxu0 %v925
      %1105 = vmatpush1.bf16.msra.mxu0 %v924
      %1106 = vmatprep.subr.bf16.mxu0 %v931
      %1107 = vmatpush1.bf16.msra.mxu0 %v930
      %1108 = vmatprep.subr.bf16.mxu0 %v937
      %1109 = vmatpush1.bf16.msra.mxu0 %v936
      %1110 = vmatprep.subr.bf16.mxu0 %v943
      %1111 = vmatpush1.bf16.msra.mxu0 %v942
      %1112 = vmatprep.subr.bf16.mxu0 %v949
      %1113 = vmatpush1.bf16.msra.mxu0 %v948
      %1114 = vmatprep.subr.bf16.mxu0 %v955
      %1115 = vmatpush1.bf16.msra.mxu0 %v954
      %1116 = vmatprep.subr.bf16.mxu0 %v961
      %1117 = vmatpush1.bf16.msra.mxu0 %v960
      %1118 = vmatprep.subr.bf16.mxu0 %v967
      %1119 = vmatpush1.bf16.msra.mxu0 %v966
      %1120 = vmatprep.subr.bf16.mxu0 %v973
      %1121 = vmatpush1.bf16.msra.mxu0 %v972
      %1122 = vmatprep.subr.bf16.mxu0 %v979
      %1123 = vmatpush1.bf16.msra.mxu0 %v978
      %1124 = vmatprep.subr.bf16.mxu0 %v985
      %1125 = vmatpush1.bf16.msra.mxu0 %v984
      %1126 = vmatprep.subr.bf16.mxu0 %v991
      %1127 = vmatpush1.bf16.msra.mxu0 %v990
      %1128 = vmatprep.subr.bf16.mxu0 %v997
      %1129 = vmatpush1.bf16.msra.mxu0 %v996
      %1130 = vmatprep.mubr.bf16.mxu0 %v475
      %1131 = vmatmul.mubr.bf16.gmra.mrb[0].mxu0 %v474
      %v1132 = vpop.f32.mrb[0].mxu0
      %v1133 = vadd.f32 %v591, %v1132
      %v1134 = vpop.f32.mrb[0].mxu0
      %v1135 = vadd.f32 %v595, %v1134
      %v1136 = vpop.f32.mrb[0].mxu0
      %v1137 = vadd.f32 %v591, %v1136
      %v1138 = vpop.f32.mrb[0].mxu0
      %v1139 = vadd.f32 %v595, %v1138
      %1140 = vmatprep.mubr.bf16.mxu0 %v477
      %1141 = vmatmul.mubr.bf16.gmra.mrb[0].mxu0 %v476
      %v1142 = vpop.f32.mrb[0].mxu0
      %v1143 = vadd.f32 %v591, %v1142
      %v1144 = vpop.f32.mrb[0].mxu0
      %v1145 = vadd.f32 %v595, %v1144
      %v1146 = vpop.f32.mrb[0].mxu0
      %v1147 = vadd.f32 %v591, %v1146
      %v1148 = vpop.f32.mrb[0].mxu0
      %v1149 = vadd.f32 %v595, %v1148
      %1150 = vmatprep.mubr.bf16.mxu0 %v479
      %1151 = vmatmul.mubr.bf16.gmra.mrb[0].mxu0 %v478
      %v1152 = vpop.f32.mrb[0].mxu0
      %v1153 = vadd.f32 %v591, %v1152
      %v1154 = vpop.f32.mrb[0].mxu0
      %v1155 = vadd.f32 %v595, %v1154
      %v1156 = vpop.f32.mrb[0].mxu0
      %v1157 = vadd.f32 %v591, %v1156
      %v1158 = vpop.f32.mrb[0].mxu0
      %v1159 = vadd.f32 %v595, %v1158
      %1160 = vmatprep.mubr.bf16.mxu0 %v481
      %1161 = vmatmul.mubr.bf16.gmra.mrb[0].mxu0 %v480
      %v1162 = vpop.f32.mrb[0].mxu0
      %v1163 = vadd.f32 %v591, %v1162
      %v1164 = vpop.f32.mrb[0].mxu0
      %v1165 = vadd.f32 %v595, %v1164
      %v1166 = vpop.f32.mrb[0].mxu0
      %v1167 = vadd.f32 %v591, %v1166
      %v1168 = vpop.f32.mrb[0].mxu0
      %v1169 = vadd.f32 %v595, %v1168
      %1170 = vmatprep.mubr.bf16.mxu0 %v483
      %1171 = vmatmul.mubr.bf16.gmra.mrb[0].mxu0 %v482
      %v1172 = vpop.f32.mrb[0].mxu0
      %v1173 = vadd.f32 %v591, %v1172
      %v1174 = vpop.f32.mrb[0].mxu0
      %v1175 = vadd.f32 %v595, %v1174
      %v1176 = vpop.f32.mrb[0].mxu0
      %v1177 = vadd.f32 %v591, %v1176
      %v1178 = vpop.f32.mrb[0].mxu0
      %v1179 = vadd.f32 %v595, %v1178
      %1180 = vmatprep.mubr.bf16.mxu0 %v485
      %1181 = vmatmul.mubr.bf16.gmra.mrb[0].mxu0 %v484
      %v1182 = vpop.f32.mrb[0].mxu0
      %v1183 = vadd.f32 %v591, %v1182
      %v1184 = vpop.f32.mrb[0].mxu0
      %v1185 = vadd.f32 %v595, %v1184
      %v1186 = vpop.f32.mrb[0].mxu0
      %v1187 = vadd.f32 %v591, %v1186
      %v1188 = vpop.f32.mrb[0].mxu0
      %v1189 = vadd.f32 %v595, %v1188
      %1190 = vmatprep.mubr.bf16.mxu0 %v487
      %1191 = vmatmul.mubr.bf16.gmra.mrb[0].mxu0 %v486
      %v1192 = vpop.f32.mrb[0].mxu0
      %v1193 = vadd.f32 %v591, %v1192
      %v1194 = vpop.f32.mrb[0].mxu0
      %v1195 = vadd.f32 %v595, %v1194
      %v1196 = vpop.f32.mrb[0].mxu0
      %v1197 = vadd.f32 %v591, %v1196
      %v1198 = vpop.f32.mrb[0].mxu0
      %v1199 = vadd.f32 %v595, %v1198
      %1200 = vmatprep.mubr.bf16.mxu0 %v489
      %1201 = vmatmul.mubr.bf16.gmra.mrb[0].mxu0 %v488
      %v1202 = vpop.f32.mrb[0].mxu0
      %v1203 = vadd.f32 %v591, %v1202
      %v1204 = vpop.f32.mrb[0].mxu0
      %v1205 = vadd.f32 %v595, %v1204
      %v1206 = vpop.f32.mrb[0].mxu0
      %v1207 = vadd.f32 %v591, %v1206
      %v1208 = vpop.f32.mrb[0].mxu0
      %v1209 = vadd.f32 %v595, %v1208
      %1210 = vdwg.mxu0
      %1211 = vmatprep.subr.bf16.mxu0 %v909
      %1212 = vmatpush1.bf16.msra.mxu0 %v908
      %1213 = vmatprep.subr.bf16.mxu0 %v915
      %1214 = vmatpush1.bf16.msra.mxu0 %v914
      %1215 = vmatprep.subr.bf16.mxu0 %v921
      %1216 = vmatpush1.bf16.msra.mxu0 %v920
      %1217 = vmatprep.subr.bf16.mxu0 %v927
      %1218 = vmatpush1.bf16.msra.mxu0 %v926
      %1219 = vmatprep.subr.bf16.mxu0 %v933
      %1220 = vmatpush1.bf16.msra.mxu0 %v932
      %1221 = vmatprep.subr.bf16.mxu0 %v939
      %1222 = vmatpush1.bf16.msra.mxu0 %v938
      %1223 = vmatprep.subr.bf16.mxu0 %v945
      %1224 = vmatpush1.bf16.msra.mxu0 %v944
      %1225 = vmatprep.subr.bf16.mxu0 %v951
      %1226 = vmatpush1.bf16.msra.mxu0 %v950
      %1227 = vmatprep.subr.bf16.mxu0 %v957
      %1228 = vmatpush1.bf16.msra.mxu0 %v956
      %1229 = vmatprep.subr.bf16.mxu0 %v963
      %1230 = vmatpush1.bf16.msra.mxu0 %v962
      %1231 = vmatprep.subr.bf16.mxu0 %v969
      %1232 = vmatpush1.bf16.msra.mxu0 %v968
      %1233 = vmatprep.subr.bf16.mxu0 %v975
      %1234 = vmatpush1.bf16.msra.mxu0 %v974
      %1235 = vmatprep.subr.bf16.mxu0 %v981
      %1236 = vmatpush1.bf16.msra.mxu0 %v980
      %1237 = vmatprep.subr.bf16.mxu0 %v987
      %1238 = vmatpush1.bf16.msra.mxu0 %v986
      %1239 = vmatprep.subr.bf16.mxu0 %v993
      %1240 = vmatpush1.bf16.msra.mxu0 %v992
      %1241 = vmatprep.subr.bf16.mxu0 %v999
      %1242 = vmatpush1.bf16.msra.mxu0 %v998
      %1243 = vmatprep.mubr.bf16.mxu0 %v475
      %1244 = vmatmul.mubr.bf16.gmra.mrb[0].mxu0 %v474
      %v1245 = vpop.f32.mrb[0].mxu0
      %v1246 = vadd.f32 %v599, %v1245
      %v1247 = vpop.f32.mrb[0].mxu0
      %v1248 = vadd.f32 %v603, %v1247
      %v1249 = vpop.f32.mrb[0].mxu0
      %v1250 = vadd.f32 %v599, %v1249
      %v1251 = vpop.f32.mrb[0].mxu0
      %v1252 = vadd.f32 %v603, %v1251
      %1253 = vmatprep.mubr.bf16.mxu0 %v477
      %1254 = vmatmul.mubr.bf16.gmra.mrb[0].mxu0 %v476
      %v1255 = vpop.f32.mrb[0].mxu0
      %v1256 = vadd.f32 %v599, %v1255
      %v1257 = vpop.f32.mrb[0].mxu0
      %v1258 = vadd.f32 %v603, %v1257
      %v1259 = vpop.f32.mrb[0].mxu0
      %v1260 = vadd.f32 %v599, %v1259
      %v1261 = vpop.f32.mrb[0].mxu0
      %v1262 = vadd.f32 %v603, %v1261
      %1263 = vmatprep.mubr.bf16.mxu0 %v479
      %1264 = vmatmul.mubr.bf16.gmra.mrb[0].mxu0 %v478
      %v1265 = vpop.f32.mrb[0].mxu0
      %v1266 = vadd.f32 %v599, %v1265
      %v1267 = vpop.f32.mrb[0].mxu0
      %v1268 = vadd.f32 %v603, %v1267
      %v1269 = vpop.f32.mrb[0].mxu0
      %v1270 = vadd.f32 %v599, %v1269
      %v1271 = vpop.f32.mrb[0].mxu0
      %v1272 = vadd.f32 %v603, %v1271
      %1273 = vmatprep.mubr.bf16.mxu0 %v481
      %1274 = vmatmul.mubr.bf16.gmra.mrb[0].mxu0 %v480
      %v1275 = vpop.f32.mrb[0].mxu0
      %v1276 = vadd.f32 %v599, %v1275
      %v1277 = vpop.f32.mrb[0].mxu0
      %v1278 = vadd.f32 %v603, %v1277
      %v1279 = vpop.f32.mrb[0].mxu0
      %v1280 = vadd.f32 %v599, %v1279
      %v1281 = vpop.f32.mrb[0].mxu0
      %v1282 = vadd.f32 %v603, %v1281
      %1283 = vmatprep.mubr.bf16.mxu0 %v483
      %1284 = vmatmul.mubr.bf16.gmra.mrb[0].mxu0 %v482
      %v1285 = vpop.f32.mrb[0].mxu0
      %v1286 = vadd.f32 %v599, %v1285
      %v1287 = vpop.f32.mrb[0].mxu0
      %v1288 = vadd.f32 %v603, %v1287
      %v1289 = vpop.f32.mrb[0].mxu0
      %v1290 = vadd.f32 %v599, %v1289
      %v1291 = vpop.f32.mrb[0].mxu0
      %v1292 = vadd.f32 %v603, %v1291
      %1293 = vmatprep.mubr.bf16.mxu0 %v485
      %1294 = vmatmul.mubr.bf16.gmra.mrb[0].mxu0 %v484
      %v1295 = vpop.f32.mrb[0].mxu0
      %v1296 = vadd.f32 %v599, %v1295
      %v1297 = vpop.f32.mrb[0].mxu0
      %v1298 = vadd.f32 %v603, %v1297
      %v1299 = vpop.f32.mrb[0].mxu0
      %v1300 = vadd.f32 %v599, %v1299
      %v1301 = vpop.f32.mrb[0].mxu0
      %v1302 = vadd.f32 %v603, %v1301
      %1303 = vmatprep.mubr.bf16.mxu0 %v487
      %1304 = vmatmul.mubr.bf16.gmra.mrb[0].mxu0 %v486
      %v1305 = vpop.f32.mrb[0].mxu0
      %v1306 = vadd.f32 %v599, %v1305
      %v1307 = vpop.f32.mrb[0].mxu0
      %v1308 = vadd.f32 %v603, %v1307
      %v1309 = vpop.f32.mrb[0].mxu0
      %v1310 = vadd.f32 %v599, %v1309
      %v1311 = vpop.f32.mrb[0].mxu0
      %v1312 = vadd.f32 %v603, %v1311
      %1313 = vmatprep.mubr.bf16.mxu0 %v489
      %1314 = vmatmul.mubr.bf16.gmra.mrb[0].mxu0 %v488
      %v1315 = vpop.f32.mrb[0].mxu0
      %v1316 = vadd.f32 %v599, %v1315
      %v1317 = vpop.f32.mrb[0].mxu0
      %v1318 = vadd.f32 %v603, %v1317
      %v1319 = vpop.f32.mrb[0].mxu0
      %v1320 = vadd.f32 %v599, %v1319
      %v1321 = vpop.f32.mrb[0].mxu0
      %v1322 = vadd.f32 %v603, %v1321
      %1323 = vdwg.mxu0
      %1324 = vmatprep.subr.bf16.mxu0 %v911
      %1325 = vmatpush1.bf16.msra.mxu0 %v910
      %1326 = vmatprep.subr.bf16.mxu0 %v917
      %1327 = vmatpush1.bf16.msra.mxu0 %v916
      %1328 = vmatprep.subr.bf16.mxu0 %v923
      %1329 = vmatpush1.bf16.msra.mxu0 %v922
      %1330 = vmatprep.subr.bf16.mxu0 %v929
      %1331 = vmatpush1.bf16.msra.mxu0 %v928
      %1332 = vmatprep.subr.bf16.mxu0 %v935
      %1333 = vmatpush1.bf16.msra.mxu0 %v934
      %1334 = vmatprep.subr.bf16.mxu0 %v941
      %1335 = vmatpush1.bf16.msra.mxu0 %v940
      %1336 = vmatprep.subr.bf16.mxu0 %v947
      %1337 = vmatpush1.bf16.msra.mxu0 %v946
      %1338 = vmatprep.subr.bf16.mxu0 %v953
      %1339 = vmatpush1.bf16.msra.mxu0 %v952
      %1340 = vmatprep.subr.bf16.mxu0 %v959
      %1341 = vmatpush1.bf16.msra.mxu0 %v958
      %1342 = vmatprep.subr.bf16.mxu0 %v965
      %1343 = vmatpush1.bf16.msra.mxu0 %v964
      %1344 = vmatprep.subr.bf16.mxu0 %v971
      %1345 = vmatpush1.bf16.msra.mxu0 %v970
      %1346 = vmatprep.subr.bf16.mxu0 %v977
      %1347 = vmatpush1.bf16.msra.mxu0 %v976
      %1348 = vmatprep.subr.bf16.mxu0 %v983
      %1349 = vmatpush1.bf16.msra.mxu0 %v982
      %1350 = vmatprep.subr.bf16.mxu0 %v989
      %1351 = vmatpush1.bf16.msra.mxu0 %v988
      %1352 = vmatprep.subr.bf16.mxu0 %v995
      %1353 = vmatpush1.bf16.msra.mxu0 %v994
      %1354 = vmatprep.subr.bf16.mxu0 %v1001
      %1355 = vmatpush1.bf16.msra.mxu0 %v1000
      %1356 = vmatprep.mubr.bf16.mxu0 %v475
      %1357 = vmatmul.mubr.bf16.gmra.mrb[0].mxu0 %v474
      %v1358 = vpop.f32.mrb[0].mxu0
      %v1359 = vadd.f32 %v607, %v1358
      %v1360 = vpop.f32.mrb[0].mxu0
      %v1361 = vadd.f32 %v611, %v1360
      %v1362 = vpop.f32.mrb[0].mxu0
      %v1363 = vadd.f32 %v607, %v1362
      %v1364 = vpop.f32.mrb[0].mxu0
      %v1365 = vadd.f32 %v611, %v1364
      %1366 = vmatprep.mubr.bf16.mxu0 %v477
      %1367 = vmatmul.mubr.bf16.gmra.mrb[0].mxu0 %v476
      %v1368 = vpop.f32.mrb[0].mxu0
      %v1369 = vadd.f32 %v607, %v1368
      %v1370 = vpop.f32.mrb[0].mxu0
      %v1371 = vadd.f32 %v611, %v1370
      %v1372 = vpop.f32.mrb[0].mxu0
      %v1373 = vadd.f32 %v607, %v1372
      %v1374 = vpop.f32.mrb[0].mxu0
      %v1375 = vadd.f32 %v611, %v1374
      %1376 = vmatprep.mubr.bf16.mxu0 %v479
      %1377 = vmatmul.mubr.bf16.gmra.mrb[0].mxu0 %v478
      %v1378 = vpop.f32.mrb[0].mxu0
      %v1379 = vadd.f32 %v607, %v1378
      %v1380 = vpop.f32.mrb[0].mxu0
      %v1381 = vadd.f32 %v611, %v1380
      %v1382 = vpop.f32.mrb[0].mxu0
      %v1383 = vadd.f32 %v607, %v1382
      %v1384 = vpop.f32.mrb[0].mxu0
      %v1385 = vadd.f32 %v611, %v1384
      %1386 = vmatprep.mubr.bf16.mxu0 %v481
      %1387 = vmatmul.mubr.bf16.gmra.mrb[0].mxu0 %v480
      %v1388 = vpop.f32.mrb[0].mxu0
      %v1389 = vadd.f32 %v607, %v1388
      %v1390 = vpop.f32.mrb[0].mxu0
      %v1391 = vadd.f32 %v611, %v1390
      %v1392 = vpop.f32.mrb[0].mxu0
      %v1393 = vadd.f32 %v607, %v1392
      %v1394 = vpop.f32.mrb[0].mxu0
      %v1395 = vadd.f32 %v611, %v1394
      %1396 = vmatprep.mubr.bf16.mxu0 %v483
      %1397 = vmatmul.mubr.bf16.gmra.mrb[0].mxu0 %v482
      %v1398 = vpop.f32.mrb[0].mxu0
      %v1399 = vadd.f32 %v607, %v1398
      %v1400 = vpop.f32.mrb[0].mxu0
      %v1401 = vadd.f32 %v611, %v1400
      %v1402 = vpop.f32.mrb[0].mxu0
      %v1403 = vadd.f32 %v607, %v1402
      %v1404 = vpop.f32.mrb[0].mxu0
      %v1405 = vadd.f32 %v611, %v1404
      %1406 = vmatprep.mubr.bf16.mxu0 %v485
      %1407 = vmatmul.mubr.bf16.gmra.mrb[0].mxu0 %v484
      %v1408 = vpop.f32.mrb[0].mxu0
      %v1409 = vadd.f32 %v607, %v1408
      %v1410 = vpop.f32.mrb[0].mxu0
      %v1411 = vadd.f32 %v611, %v1410
      %v1412 = vpop.f32.mrb[0].mxu0
      %v1413 = vadd.f32 %v607, %v1412
      %v1414 = vpop.f32.mrb[0].mxu0
      %v1415 = vadd.f32 %v611, %v1414
      %1416 = vmatprep.mubr.bf16.mxu0 %v487
      %1417 = vmatmul.mubr.bf16.gmra.mrb[0].mxu0 %v486
      %v1418 = vpop.f32.mrb[0].mxu0
      %v1419 = vadd.f32 %v607, %v1418
      %v1420 = vpop.f32.mrb[0].mxu0
      %v1421 = vadd.f32 %v611, %v1420
      %v1422 = vpop.f32.mrb[0].mxu0
      %v1423 = vadd.f32 %v607, %v1422
      %v1424 = vpop.f32.mrb[0].mxu0
      %v1425 = vadd.f32 %v611, %v1424
      %1426 = vmatprep.mubr.bf16.mxu0 %v489
      %1427 = vmatmul.mubr.bf16.gmra.mrb[0].mxu0 %v488
      %v1428 = vpop.f32.mrb[0].mxu0
      %v1429 = vadd.f32 %v607, %v1428
      %v1430 = vpop.f32.mrb[0].mxu0
      %v1431 = vadd.f32 %v611, %v1430
      %v1432 = vpop.f32.mrb[0].mxu0
      %v1433 = vadd.f32 %v607, %v1432
      %v1434 = vpop.f32.mrb[0].mxu0
      %v1435 = vadd.f32 %v611, %v1434
      %1436 = vdwg.mxu0
      %v1437 = vpack.c.bf16 %v1137, %v1133
      %v1438 = vpack.c.bf16 %v1139, %v1135
      %v1439 = vpack.c.bf16 %v1250, %v1246
      %v1440 = vpack.c.bf16 %v1252, %v1248
      %v1441 = vpack.c.bf16 %v1363, %v1359
      %v1442 = vpack.c.bf16 %v1365, %v1361
      %v1443 = vpack.c.bf16 %v1147, %v1143
      %v1444 = vpack.c.bf16 %v1149, %v1145
      %v1445 = vpack.c.bf16 %v1260, %v1256
      %v1446 = vpack.c.bf16 %v1262, %v1258
      %v1447 = vpack.c.bf16 %v1373, %v1369
      %v1448 = vpack.c.bf16 %v1375, %v1371
      %v1449 = vpack.c.bf16 %v1157, %v1153
      %v1450 = vpack.c.bf16 %v1159, %v1155
      %v1451 = vpack.c.bf16 %v1270, %v1266
      %v1452 = vpack.c.bf16 %v1272, %v1268
      %v1453 = vpack.c.bf16 %v1383, %v1379
      %v1454 = vpack.c.bf16 %v1385, %v1381
      %v1455 = vpack.c.bf16 %v1167, %v1163
      %v1456 = vpack.c.bf16 %v1169, %v1165
      %v1457 = vpack.c.bf16 %v1280, %v1276
      %v1458 = vpack.c.bf16 %v1282, %v1278
      %v1459 = vpack.c.bf16 %v1393, %v1389
      %v1460 = vpack.c.bf16 %v1395, %v1391
      %v1461 = vpack.c.bf16 %v1177, %v1173
      %v1462 = vpack.c.bf16 %v1179, %v1175
      %v1463 = vpack.c.bf16 %v1290, %v1286
      %v1464 = vpack.c.bf16 %v1292, %v1288
      %v1465 = vpack.c.bf16 %v1403, %v1399
      %v1466 = vpack.c.bf16 %v1405, %v1401
      %v1467 = vpack.c.bf16 %v1187, %v1183
      %v1468 = vpack.c.bf16 %v1189, %v1185
      %v1469 = vpack.c.bf16 %v1300, %v1296
      %v1470 = vpack.c.bf16 %v1302, %v1298
      %v1471 = vpack.c.bf16 %v1413, %v1409
      %v1472 = vpack.c.bf16 %v1415, %v1411
      %v1473 = vpack.c.bf16 %v1197, %v1193
      %v1474 = vpack.c.bf16 %v1199, %v1195
      %v1475 = vpack.c.bf16 %v1310, %v1306
      %v1476 = vpack.c.bf16 %v1312, %v1308
      %v1477 = vpack.c.bf16 %v1423, %v1419
      %v1478 = vpack.c.bf16 %v1425, %v1421
      %v1479 = vpack.c.bf16 %v1207, %v1203
      %v1480 = vpack.c.bf16 %v1209, %v1205
      %v1481 = vpack.c.bf16 %v1320, %v1316
      %v1482 = vpack.c.bf16 %v1322, %v1318
      %v1483 = vpack.c.bf16 %v1433, %v1429
      %v1484 = vpack.c.bf16 %v1435, %v1431
      %1485 = vmatprep.subr.bf16.mxu0 0
      %1486 = vmatpush1.bf16.xpose.msra.mxu0 %v1439
      %1487 = vmatprep.subr.bf16.mxu0 0
      %1488 = vmatpush1.bf16.xpose.msra.mxu0 %v1445
      %1489 = vmatprep.subr.bf16.mxu0 0
      %1490 = vmatpush1.bf16.xpose.msra.mxu0 %v1451
      %1491 = vmatprep.subr.bf16.mxu0 0
      %1492 = vmatpush1.bf16.xpose.msra.mxu0 %v1457
      %1493 = vmatprep.subr.bf16.mxu0 0
      %1494 = vmatpush1.bf16.xpose.msra.mxu0 %v1463
      %1495 = vmatprep.subr.bf16.mxu0 0
      %1496 = vmatpush1.bf16.xpose.msra.mxu0 %v1469
      %1497 = vmatprep.subr.bf16.mxu0 0
      %1498 = vmatpush1.bf16.xpose.msra.mxu0 %v1475
      %1499 = vmatprep.subr.bf16.mxu0 0
      %1500 = vmatpush1.bf16.xpose.msra.mxu0 %v1481
      %1501 = vmatprep.subr.bf16.mxu0 0
      %1502 = vmatpush1.bf16.xpose.msra.mxu0 0
      %1503 = vmatprep.subr.bf16.mxu0 0
      %1504 = vmatpush1.bf16.xpose.msra.mxu0 0
      %1505 = vmatprep.subr.bf16.mxu0 0
      %1506 = vmatpush1.bf16.xpose.msra.mxu0 0
      %1507 = vmatprep.subr.bf16.mxu0 0
      %1508 = vmatpush1.bf16.xpose.msra.mxu0 0
      %1509 = vmatprep.subr.bf16.mxu0 0
      %1510 = vmatpush1.bf16.xpose.msra.mxu0 0
      %1511 = vmatprep.subr.bf16.mxu0 0
      %1512 = vmatpush1.bf16.xpose.msra.mxu0 0
      %1513 = vmatprep.subr.bf16.mxu0 0
      %1514 = vmatpush1.bf16.xpose.msra.mxu0 0
      %1515 = vmatprep.subr.bf16.mxu0 0
      %1516 = vmatpush1.bf16.xpose.msra.mxu0 0
      %1517 = vmatprep.mubr.bf16.mxu0 0
      %1518 = vmatmul.mubr.bf16.gmra.mrb[0].mxu0 %v1437
      %v1519 = vpop.f32.mrb[0].mxu0
      %v1520 = vadd.f32 0.0, %v1519
      %v1521 = vpop.f32.mrb[0].mxu0
      %v1522 = vpop.f32.mrb[0].mxu0
      %v1523 = vadd.f32 0.0, %v1522
      %v1524 = vpop.f32.mrb[0].mxu0
      %1525 = vmatprep.mubr.bf16.mxu0 0
      %1526 = vmatmul.mubr.bf16.gmra.mrb[0].mxu0 %v1443
      %v1527 = vpop.f32.mrb[0].mxu0
      %v1528 = vadd.f32 0.0, %v1527
      %v1529 = vpop.f32.mrb[0].mxu0
      %v1530 = vpop.f32.mrb[0].mxu0
      %v1531 = vadd.f32 0.0, %v1530
      %v1532 = vpop.f32.mrb[0].mxu0
      %1533 = vmatprep.mubr.bf16.mxu0 0
      %1534 = vmatmul.mubr.bf16.gmra.mrb[0].mxu0 %v1449
      %v1535 = vpop.f32.mrb[0].mxu0
      %v1536 = vadd.f32 0.0, %v1535
      %v1537 = vpop.f32.mrb[0].mxu0
      %v1538 = vpop.f32.mrb[0].mxu0
      %v1539 = vadd.f32 0.0, %v1538
      %v1540 = vpop.f32.mrb[0].mxu0
      %1541 = vmatprep.mubr.bf16.mxu0 0
      %1542 = vmatmul.mubr.bf16.gmra.mrb[0].mxu0 %v1455
      %v1543 = vpop.f32.mrb[0].mxu0
      %v1544 = vadd.f32 0.0, %v1543
      %v1545 = vpop.f32.mrb[0].mxu0
      %v1546 = vpop.f32.mrb[0].mxu0
      %v1547 = vadd.f32 0.0, %v1546
      %v1548 = vpop.f32.mrb[0].mxu0
      %1549 = vmatprep.mubr.bf16.mxu0 0
      %1550 = vmatmul.mubr.bf16.gmra.mrb[0].mxu0 %v1461
      %v1551 = vpop.f32.mrb[0].mxu0
      %v1552 = vadd.f32 0.0, %v1551
      %v1553 = vpop.f32.mrb[0].mxu0
      %v1554 = vpop.f32.mrb[0].mxu0
      %v1555 = vadd.f32 0.0, %v1554
      %v1556 = vpop.f32.mrb[0].mxu0
      %1557 = vmatprep.mubr.bf16.mxu0 0
      %1558 = vmatmul.mubr.bf16.gmra.mrb[0].mxu0 %v1467
      %v1559 = vpop.f32.mrb[0].mxu0
      %v1560 = vadd.f32 0.0, %v1559
      %v1561 = vpop.f32.mrb[0].mxu0
      %v1562 = vpop.f32.mrb[0].mxu0
      %v1563 = vadd.f32 0.0, %v1562
      %v1564 = vpop.f32.mrb[0].mxu0
      %1565 = vmatprep.mubr.bf16.mxu0 0
      %1566 = vmatmul.mubr.bf16.gmra.mrb[0].mxu0 %v1473
      %v1567 = vpop.f32.mrb[0].mxu0
      %v1568 = vadd.f32 0.0, %v1567
      %v1569 = vpop.f32.mrb[0].mxu0
      %v1570 = vpop.f32.mrb[0].mxu0
      %v1571 = vadd.f32 0.0, %v1570
      %v1572 = vpop.f32.mrb[0].mxu0
      %1573 = vmatprep.mubr.bf16.mxu0 0
      %1574 = vmatmul.mubr.bf16.gmra.mrb[0].mxu0 %v1479
      %v1575 = vpop.f32.mrb[0].mxu0
      %v1576 = vadd.f32 0.0, %v1575
      %v1577 = vpop.f32.mrb[0].mxu0
      %v1578 = vpop.f32.mrb[0].mxu0
      %v1579 = vadd.f32 0.0, %v1578
      %v1580 = vpop.f32.mrb[0].mxu0
      %1581 = vdwg.mxu0
      %1582 = vmax.xlane.f32.xlu0 %v1520
      %v1583 = vpop.xlane.xlu0 %1582
      %1584 = vmax.xlane.f32.xlu0 %v1523
      %v1585 = vpop.xlane.xlu0 %1584
      %1586 = vmax.xlane.f32.xlu0 %v1528
      %v1587 = vpop.xlane.xlu0 %1586
      %1588 = vmax.xlane.f32.xlu0 %v1531
      %v1589 = vpop.xlane.xlu0 %1588
      %1590 = vmax.xlane.f32.xlu0 %v1536
      %v1591 = vpop.xlane.xlu0 %1590
      %1592 = vmax.xlane.f32.xlu0 %v1539
      %v1593 = vpop.xlane.xlu0 %1592
      %1594 = vmax.xlane.f32.xlu0 %v1544
      %v1595 = vpop.xlane.xlu0 %1594
      %1596 = vmax.xlane.f32.xlu0 %v1547
      %v1597 = vpop.xlane.xlu0 %1596
      %1598 = vmax.xlane.f32.xlu0 %v1552
      %v1599 = vpop.xlane.xlu0 %1598
      %1600 = vmax.xlane.f32.xlu0 %v1555
      %v1601 = vpop.xlane.xlu0 %1600
      %1602 = vmax.xlane.f32.xlu0 %v1560
      %v1603 = vpop.xlane.xlu0 %1602
      %1604 = vmax.xlane.f32.xlu0 %v1563
      %v1605 = vpop.xlane.xlu0 %1604
      %1606 = vmax.xlane.f32.xlu0 %v1568
      %v1607 = vpop.xlane.xlu0 %1606
      %1608 = vmax.xlane.f32.xlu0 %v1571
      %v1609 = vpop.xlane.xlu0 %1608
      %1610 = vmax.xlane.f32.xlu0 %v1576
      %v1611 = vpop.xlane.xlu0 %1610
      %1612 = vmax.xlane.f32.xlu0 %v1579
      %v1613 = vpop.xlane.xlu0 %1612
      %v1614 = vsub.f32 %v1520, %v1583
      %v1615 = vsub.f32 %v1523, %v1585
      %v1616 = vsub.f32 %v1528, %v1587
      %v1617 = vsub.f32 %v1531, %v1589
      %v1618 = vsub.f32 %v1536, %v1591
      %v1619 = vsub.f32 %v1539, %v1593
      %v1620 = vsub.f32 %v1544, %v1595
      %v1621 = vsub.f32 %v1547, %v1597
      %v1622 = vsub.f32 %v1552, %v1599
      %v1623 = vsub.f32 %v1555, %v1601
      %v1624 = vsub.f32 %v1560, %v1603
      %v1625 = vsub.f32 %v1563, %v1605
      %v1626 = vsub.f32 %v1568, %v1607
      %v1627 = vsub.f32 %v1571, %v1609
      %v1628 = vsub.f32 %v1576, %v1611
      %v1629 = vsub.f32 %v1579, %v1613
      %v1630 = vmul.f32 %v1614, 1.442695
      %v1631 = vpow.pop %v1630
      %v1632 = vmul.f32 %v1615, 1.442695
      %v1633 = vpow.pop %v1632
      %v1634 = vmul.f32 %v1616, 1.442695
      %v1635 = vpow.pop %v1634
      %v1636 = vmul.f32 %v1617, 1.442695
      %v1637 = vpow.pop %v1636
      %v1638 = vmul.f32 %v1618, 1.442695
      %v1639 = vpow.pop %v1638
      %v1640 = vmul.f32 %v1619, 1.442695
      %v1641 = vpow.pop %v1640
      %v1642 = vmul.f32 %v1620, 1.442695
      %v1643 = vpow.pop %v1642
      %v1644 = vmul.f32 %v1621, 1.442695
      %v1645 = vpow.pop %v1644
      %v1646 = vmul.f32 %v1622, 1.442695
      %v1647 = vpow.pop %v1646
      %v1648 = vmul.f32 %v1623, 1.442695
      %v1649 = vpow.pop %v1648
      %v1650 = vmul.f32 %v1624, 1.442695
      %v1651 = vpow.pop %v1650
      %v1652 = vmul.f32 %v1625, 1.442695
      %v1653 = vpow.pop %v1652
      %v1654 = vmul.f32 %v1626, 1.442695
      %v1655 = vpow.pop %v1654
      %v1656 = vmul.f32 %v1627, 1.442695
      %v1657 = vpow.pop %v1656
      %v1658 = vmul.f32 %v1628, 1.442695
      %v1659 = vpow.pop %v1658
      %v1660 = vmul.f32 %v1629, 1.442695
      %v1661 = vpow.pop %v1660
      %1662 = vadd.xlane.f32.xlu0 %v1631
      %v1663 = vpop.xlane.xlu0 %1662
      %1664 = vadd.xlane.f32.xlu0 %v1633
      %v1665 = vpop.xlane.xlu0 %1664
      %1666 = vadd.xlane.f32.xlu0 %v1635
      %v1667 = vpop.xlane.xlu0 %1666
      %1668 = vadd.xlane.f32.xlu0 %v1637
      %v1669 = vpop.xlane.xlu0 %1668
      %1670 = vadd.xlane.f32.xlu0 %v1639
      %v1671 = vpop.xlane.xlu0 %1670
      %1672 = vadd.xlane.f32.xlu0 %v1641
      %v1673 = vpop.xlane.xlu0 %1672
      %1674 = vadd.xlane.f32.xlu0 %v1643
      %v1675 = vpop.xlane.xlu0 %1674
      %1676 = vadd.xlane.f32.xlu0 %v1645
      %v1677 = vpop.xlane.xlu0 %1676
      %1678 = vadd.xlane.f32.xlu0 %v1647
      %v1679 = vpop.xlane.xlu0 %1678
      %1680 = vadd.xlane.f32.xlu0 %v1649
      %v1681 = vpop.xlane.xlu0 %1680
      %1682 = vadd.xlane.f32.xlu0 %v1651
      %v1683 = vpop.xlane.xlu0 %1682
      %1684 = vadd.xlane.f32.xlu0 %v1653
      %v1685 = vpop.xlane.xlu0 %1684
      %1686 = vadd.xlane.f32.xlu0 %v1655
      %v1687 = vpop.xlane.xlu0 %1686
      %1688 = vadd.xlane.f32.xlu0 %v1657
      %v1689 = vpop.xlane.xlu0 %1688
      %1690 = vadd.xlane.f32.xlu0 %v1659
      %v1691 = vpop.xlane.xlu0 %1690
      %1692 = vadd.xlane.f32.xlu0 %v1661
      %v1693 = vpop.xlane.xlu0 %1692
      %v1694 = vrcp.pop %v1663
      %v1695 = vrcp.pop %v1665
      %v1696 = vrcp.pop %v1667
      %v1697 = vrcp.pop %v1669
      %v1698 = vrcp.pop %v1671
      %v1699 = vrcp.pop %v1673
      %v1700 = vrcp.pop %v1675
      %v1701 = vrcp.pop %v1677
      %v1702 = vrcp.pop %v1679
      %v1703 = vrcp.pop %v1681
      %v1704 = vrcp.pop %v1683
      %v1705 = vrcp.pop %v1685
      %v1706 = vrcp.pop %v1687
      %v1707 = vrcp.pop %v1689
      %v1708 = vrcp.pop %v1691
      %v1709 = vrcp.pop %v1693
      %v1710 = vpack.c.bf16 %v1633, %v1631
      %v1711 = vpack.c.bf16 %v1637, %v1635
      %v1712 = vpack.c.bf16 %v1641, %v1639
      %v1713 = vpack.c.bf16 %v1645, %v1643
      %v1714 = vpack.c.bf16 %v1649, %v1647
      %v1715 = vpack.c.bf16 %v1653, %v1651
      %v1716 = vpack.c.bf16 %v1657, %v1655
      %v1717 = vpack.c.bf16 %v1661, %v1659
      %1718 = vmatprep.subr.bf16.mxu0 0
      %1719 = vmatpush1.bf16.msra.mxu0 %v1441
      %1720 = vmatprep.subr.bf16.mxu0 0
      %1721 = vmatpush1.bf16.msra.mxu0 %v1447
      %1722 = vmatprep.subr.bf16.mxu0 0
      %1723 = vmatpush1.bf16.msra.mxu0 %v1453
      %1724 = vmatprep.subr.bf16.mxu0 0
      %1725 = vmatpush1.bf16.msra.mxu0 %v1459
      %1726 = vmatprep.subr.bf16.mxu0 0
      %1727 = vmatpush1.bf16.msra.mxu0 %v1465
      %1728 = vmatprep.subr.bf16.mxu0 0
      %1729 = vmatpush1.bf16.msra.mxu0 %v1471
      %1730 = vmatprep.subr.bf16.mxu0 0
      %1731 = vmatpush1.bf16.msra.mxu0 %v1477
      %1732 = vmatprep.subr.bf16.mxu0 0
      %1733 = vmatpush1.bf16.msra.mxu0 %v1483
      %1734 = vmatprep.subr.bf16.mxu0 0
      %1735 = vmatpush1.bf16.msra.mxu0 0
      %1736 = vmatprep.subr.bf16.mxu0 0
      %1737 = vmatpush1.bf16.msra.mxu0 0
      %1738 = vmatprep.subr.bf16.mxu0 0
      %1739 = vmatpush1.bf16.msra.mxu0 0
      %1740 = vmatprep.subr.bf16.mxu0 0
      %1741 = vmatpush1.bf16.msra.mxu0 0
      %1742 = vmatprep.subr.bf16.mxu0 0
      %1743 = vmatpush1.bf16.msra.mxu0 0
      %1744 = vmatprep.subr.bf16.mxu0 0
      %1745 = vmatpush1.bf16.msra.mxu0 0
      %1746 = vmatprep.subr.bf16.mxu0 0
      %1747 = vmatpush1.bf16.msra.mxu0 0
      %1748 = vmatprep.subr.bf16.mxu0 0
      %1749 = vmatpush1.bf16.msra.mxu0 0
      %1750 = vmatprep.mubr.bf16.mxu0 0
      %1751 = vmatmul.mubr.bf16.gmra.mrb[0].mxu0 %v1710
      %v1752 = vpop.f32.mrb[0].mxu0
      %v1753 = vadd.f32 0.0, %v1752
      %v1754 = vpop.f32.mrb[0].mxu0
      %v1755 = vpop.f32.mrb[0].mxu0
      %v1756 = vadd.f32 0.0, %v1755
      %v1757 = vpop.f32.mrb[0].mxu0
      %1758 = vmatprep.mubr.bf16.mxu0 0
      %1759 = vmatmul.mubr.bf16.gmra.mrb[0].mxu0 %v1711
      %v1760 = vpop.f32.mrb[0].mxu0
      %v1761 = vadd.f32 0.0, %v1760
      %v1762 = vpop.f32.mrb[0].mxu0
      %v1763 = vpop.f32.mrb[0].mxu0
      %v1764 = vadd.f32 0.0, %v1763
      %v1765 = vpop.f32.mrb[0].mxu0
      %1766 = vmatprep.mubr.bf16.mxu0 0
      %1767 = vmatmul.mubr.bf16.gmra.mrb[0].mxu0 %v1712
      %v1768 = vpop.f32.mrb[0].mxu0
      %v1769 = vadd.f32 0.0, %v1768
      %v1770 = vpop.f32.mrb[0].mxu0
      %v1771 = vpop.f32.mrb[0].mxu0
      %v1772 = vadd.f32 0.0, %v1771
      %v1773 = vpop.f32.mrb[0].mxu0
      %1774 = vmatprep.mubr.bf16.mxu0 0
      %1775 = vmatmul.mubr.bf16.gmra.mrb[0].mxu0 %v1713
      %v1776 = vpop.f32.mrb[0].mxu0
      %v1777 = vadd.f32 0.0, %v1776
      %v1778 = vpop.f32.mrb[0].mxu0
      %v1779 = vpop.f32.mrb[0].mxu0
      %v1780 = vadd.f32 0.0, %v1779
      %v1781 = vpop.f32.mrb[0].mxu0
      %1782 = vmatprep.mubr.bf16.mxu0 0
      %1783 = vmatmul.mubr.bf16.gmra.mrb[0].mxu0 %v1714
      %v1784 = vpop.f32.mrb[0].mxu0
      %v1785 = vadd.f32 0.0, %v1784
      %v1786 = vpop.f32.mrb[0].mxu0
      %v1787 = vpop.f32.mrb[0].mxu0
      %v1788 = vadd.f32 0.0, %v1787
      %v1789 = vpop.f32.mrb[0].mxu0
      %1790 = vmatprep.mubr.bf16.mxu0 0
      %1791 = vmatmul.mubr.bf16.gmra.mrb[0].mxu0 %v1715
      %v1792 = vpop.f32.mrb[0].mxu0
      %v1793 = vadd.f32 0.0, %v1792
      %v1794 = vpop.f32.mrb[0].mxu0
      %v1795 = vpop.f32.mrb[0].mxu0
      %v1796 = vadd.f32 0.0, %v1795
      %v1797 = vpop.f32.mrb[0].mxu0
      %1798 = vmatprep.mubr.bf16.mxu0 0
      %1799 = vmatmul.mubr.bf16.gmra.mrb[0].mxu0 %v1716
      %v1800 = vpop.f32.mrb[0].mxu0
      %v1801 = vadd.f32 0.0, %v1800
      %v1802 = vpop.f32.mrb[0].mxu0
      %v1803 = vpop.f32.mrb[0].mxu0
      %v1804 = vadd.f32 0.0, %v1803
      %v1805 = vpop.f32.mrb[0].mxu0
      %1806 = vmatprep.mubr.bf16.mxu0 0
      %1807 = vmatmul.mubr.bf16.gmra.mrb[0].mxu0 %v1717
      %v1808 = vpop.f32.mrb[0].mxu0
      %v1809 = vadd.f32 0.0, %v1808
      %v1810 = vpop.f32.mrb[0].mxu0
      %v1811 = vpop.f32.mrb[0].mxu0
      %v1812 = vadd.f32 0.0, %v1811
      %v1813 = vpop.f32.mrb[0].mxu0
      %1814 = vdwg.mxu0
      %v1815 = vmul.f32 %v1753, %v1694
      %v1816 = vmul.f32 %v1756, %v1695
      %v1817 = vmul.f32 %v1761, %v1696
      %v1818 = vmul.f32 %v1764, %v1697
      %v1819 = vmul.f32 %v1769, %v1698
      %v1820 = vmul.f32 %v1772, %v1699
      %v1821 = vmul.f32 %v1777, %v1700
      %v1822 = vmul.f32 %v1780, %v1701
      %v1823 = vmul.f32 %v1785, %v1702
      %v1824 = vmul.f32 %v1788, %v1703
      %v1825 = vmul.f32 %v1793, %v1704
      %v1826 = vmul.f32 %v1796, %v1705
      %v1827 = vmul.f32 %v1801, %v1706
      %v1828 = vmul.f32 %v1804, %v1707
      %v1829 = vmul.f32 %v1809, %v1708
      %v1830 = vmul.f32 %v1812, %v1709
      %v1831 = vpack.c.bf16 %v1816, %v1815
      %v1832 = vpack.c.bf16 %v1818, %v1817
      %v1833 = vpack.c.bf16 %v1820, %v1819
      %v1834 = vpack.c.bf16 %v1822, %v1821
      %v1835 = vpack.c.bf16 %v1824, %v1823
      %v1836 = vpack.c.bf16 %v1826, %v1825
      %v1837 = vpack.c.bf16 %v1828, %v1827
      %v1838 = vpack.c.bf16 %v1830, %v1829
      %v1839 = vld [vmem:[%s3] sm:$0xff]
      %v1840 = vld [vmem:[%s3 + $0x8] sm:$0xff]
      %v1841 = vld [vmem:[%s3 + $0x10] sm:$0xff]
      %v1842 = vld [vmem:[%s3 + $0x18] sm:$0xff]
      %v1843 = vld [vmem:[%s3 + $0x20] sm:$0xff]
      %v1844 = vld [vmem:[%s3 + $0x28] sm:$0xff]
      %v1845 = vld [vmem:[%s3 + $0x30] sm:$0xff]
      %v1846 = vld [vmem:[%s3 + $0x38] sm:$0xff]
      %v1847 = vld [vmem:[%s3 + $0x40] sm:$0xff]
      %v1848 = vld [vmem:[%s3 + $0x48] sm:$0xff]
      %v1849 = vld [vmem:[%s3 + $0x50] sm:$0xff]
      %v1850 = vld [vmem:[%s3 + $0x58] sm:$0xff]
      %v1851 = vld [vmem:[%s3 + $0x60] sm:$0xff]
      %v1852 = vld [vmem:[%s3 + $0x68] sm:$0xff]
      %v1853 = vld [vmem:[%s3 + $0x70] sm:$0xff]
      %v1854 = vld [vmem:[%s3 + $0x78] sm:$0xff]
      %1855 = vmatprep.subr.bf16.mxu0 0
      %1856 = vmatpush1.bf16.xpose.msra.mxu0 %v1440
      %1857 = vmatprep.subr.bf16.mxu0 0
      %1858 = vmatpush1.bf16.xpose.msra.mxu0 %v1446
      %1859 = vmatprep.subr.bf16.mxu0 0
      %1860 = vmatpush1.bf16.xpose.msra.mxu0 %v1452
      %1861 = vmatprep.subr.bf16.mxu0 0
      %1862 = vmatpush1.bf16.xpose.msra.mxu0 %v1458
      %1863 = vmatprep.subr.bf16.mxu0 0
      %1864 = vmatpush1.bf16.xpose.msra.mxu0 %v1464
      %1865 = vmatprep.subr.bf16.mxu0 0
      %1866 = vmatpush1.bf16.xpose.msra.mxu0 %v1470
      %1867 = vmatprep.subr.bf16.mxu0 0
      %1868 = vmatpush1.bf16.xpose.msra.mxu0 %v1476
      %1869 = vmatprep.subr.bf16.mxu0 0
      %1870 = vmatpush1.bf16.xpose.msra.mxu0 %v1482
      %1871 = vmatprep.subr.bf16.mxu0 0
      %1872 = vmatpush1.bf16.xpose.msra.mxu0 0
      %1873 = vmatprep.subr.bf16.mxu0 0
      %1874 = vmatpush1.bf16.xpose.msra.mxu0 0
      %1875 = vmatprep.subr.bf16.mxu0 0
      %1876 = vmatpush1.bf16.xpose.msra.mxu0 0
      %1877 = vmatprep.subr.bf16.mxu0 0
      %1878 = vmatpush1.bf16.xpose.msra.mxu0 0
      %1879 = vmatprep.subr.bf16.mxu0 0
      %1880 = vmatpush1.bf16.xpose.msra.mxu0 0
      %1881 = vmatprep.subr.bf16.mxu0 0
      %1882 = vmatpush1.bf16.xpose.msra.mxu0 0
      %1883 = vmatprep.subr.bf16.mxu0 0
      %1884 = vmatpush1.bf16.xpose.msra.mxu0 0
      %1885 = vmatprep.subr.bf16.mxu0 0
      %1886 = vmatpush1.bf16.xpose.msra.mxu0 0
      %1887 = vmatprep.mubr.bf16.mxu0 0
      %1888 = vmatmul.mubr.bf16.gmra.mrb[0].mxu0 %v1438
      %v1889 = vpop.f32.mrb[0].mxu0
      %v1890 = vadd.f32 0.0, %v1889
      %v1891 = vpop.f32.mrb[0].mxu0
      %v1892 = vpop.f32.mrb[0].mxu0
      %v1893 = vadd.f32 0.0, %v1892
      %v1894 = vpop.f32.mrb[0].mxu0
      %1895 = vmatprep.mubr.bf16.mxu0 0
      %1896 = vmatmul.mubr.bf16.gmra.mrb[0].mxu0 %v1444
      %v1897 = vpop.f32.mrb[0].mxu0
      %v1898 = vadd.f32 0.0, %v1897
      %v1899 = vpop.f32.mrb[0].mxu0
      %v1900 = vpop.f32.mrb[0].mxu0
      %v1901 = vadd.f32 0.0, %v1900
      %v1902 = vpop.f32.mrb[0].mxu0
      %1903 = vmatprep.mubr.bf16.mxu0 0
      %1904 = vmatmul.mubr.bf16.gmra.mrb[0].mxu0 %v1450
      %v1905 = vpop.f32.mrb[0].mxu0
      %v1906 = vadd.f32 0.0, %v1905
      %v1907 = vpop.f32.mrb[0].mxu0
      %v1908 = vpop.f32.mrb[0].mxu0
      %v1909 = vadd.f32 0.0, %v1908
      %v1910 = vpop.f32.mrb[0].mxu0
      %1911 = vmatprep.mubr.bf16.mxu0 0
      %1912 = vmatmul.mubr.bf16.gmra.mrb[0].mxu0 %v1456
      %v1913 = vpop.f32.mrb[0].mxu0
      %v1914 = vadd.f32 0.0, %v1913
      %v1915 = vpop.f32.mrb[0].mxu0
      %v1916 = vpop.f32.mrb[0].mxu0
      %v1917 = vadd.f32 0.0, %v1916
      %v1918 = vpop.f32.mrb[0].mxu0
      %1919 = vmatprep.mubr.bf16.mxu0 0
      %1920 = vmatmul.mubr.bf16.gmra.mrb[0].mxu0 %v1462
      %v1921 = vpop.f32.mrb[0].mxu0
      %v1922 = vadd.f32 0.0, %v1921
      %v1923 = vpop.f32.mrb[0].mxu0
      %v1924 = vpop.f32.mrb[0].mxu0
      %v1925 = vadd.f32 0.0, %v1924
      %v1926 = vpop.f32.mrb[0].mxu0
      %1927 = vmatprep.mubr.bf16.mxu0 0
      %1928 = vmatmul.mubr.bf16.gmra.mrb[0].mxu0 %v1468
      %v1929 = vpop.f32.mrb[0].mxu0
      %v1930 = vadd.f32 0.0, %v1929
      %v1931 = vpop.f32.mrb[0].mxu0
      %v1932 = vpop.f32.mrb[0].mxu0
      %v1933 = vadd.f32 0.0, %v1932
      %v1934 = vpop.f32.mrb[0].mxu0
      %1935 = vmatprep.mubr.bf16.mxu0 0
      %1936 = vmatmul.mubr.bf16.gmra.mrb[0].mxu0 %v1474
      %v1937 = vpop.f32.mrb[0].mxu0
      %v1938 = vadd.f32 0.0, %v1937
      %v1939 = vpop.f32.mrb[0].mxu0
      %v1940 = vpop.f32.mrb[0].mxu0
      %v1941 = vadd.f32 0.0, %v1940
      %v1942 = vpop.f32.mrb[0].mxu0
      %1943 = vmatprep.mubr.bf16.mxu0 0
      %1944 = vmatmul.mubr.bf16.gmra.mrb[0].mxu0 %v1480
      %v1945 = vpop.f32.mrb[0].mxu0
      %v1946 = vadd.f32 0.0, %v1945
      %v1947 = vpop.f32.mrb[0].mxu0
      %v1948 = vpop.f32.mrb[0].mxu0
      %v1949 = vadd.f32 0.0, %v1948
      %v1950 = vpop.f32.mrb[0].mxu0
      %1951 = vdwg.mxu0
      %1952 = vmax.xlane.f32.xlu0 %v1890
      %v1953 = vpop.xlane.xlu0 %1952
      %1954 = vmax.xlane.f32.xlu0 %v1893
      %v1955 = vpop.xlane.xlu0 %1954
      %1956 = vmax.xlane.f32.xlu0 %v1898
      %v1957 = vpop.xlane.xlu0 %1956
      %1958 = vmax.xlane.f32.xlu0 %v1901
      %v1959 = vpop.xlane.xlu0 %1958
      %1960 = vmax.xlane.f32.xlu0 %v1906
      %v1961 = vpop.xlane.xlu0 %1960
      %1962 = vmax.xlane.f32.xlu0 %v1909
      %v1963 = vpop.xlane.xlu0 %1962
      %1964 = vmax.xlane.f32.xlu0 %v1914
      %v1965 = vpop.xlane.xlu0 %1964
      %1966 = vmax.xlane.f32.xlu0 %v1917
      %v1967 = vpop.xlane.xlu0 %1966
      %1968 = vmax.xlane.f32.xlu0 %v1922
      %v1969 = vpop.xlane.xlu0 %1968
      %1970 = vmax.xlane.f32.xlu0 %v1925
      %v1971 = vpop.xlane.xlu0 %1970
      %1972 = vmax.xlane.f32.xlu0 %v1930
      %v1973 = vpop.xlane.xlu0 %1972
      %1974 = vmax.xlane.f32.xlu0 %v1933
      %v1975 = vpop.xlane.xlu0 %1974
      %1976 = vmax.xlane.f32.xlu0 %v1938
      %v1977 = vpop.xlane.xlu0 %1976
      %1978 = vmax.xlane.f32.xlu0 %v1941
      %v1979 = vpop.xlane.xlu0 %1978
      %1980 = vmax.xlane.f32.xlu0 %v1946
      %v1981 = vpop.xlane.xlu0 %1980
      %1982 = vmax.xlane.f32.xlu0 %v1949
      %v1983 = vpop.xlane.xlu0 %1982
      %v1984 = vsub.f32 %v1890, %v1953
      %v1985 = vsub.f32 %v1893, %v1955
      %v1986 = vsub.f32 %v1898, %v1957
      %v1987 = vsub.f32 %v1901, %v1959
      %v1988 = vsub.f32 %v1906, %v1961
      %v1989 = vsub.f32 %v1909, %v1963
      %v1990 = vsub.f32 %v1914, %v1965
      %v1991 = vsub.f32 %v1917, %v1967
      %v1992 = vsub.f32 %v1922, %v1969
      %v1993 = vsub.f32 %v1925, %v1971
      %v1994 = vsub.f32 %v1930, %v1973
      %v1995 = vsub.f32 %v1933, %v1975
      %v1996 = vsub.f32 %v1938, %v1977
      %v1997 = vsub.f32 %v1941, %v1979
      %v1998 = vsub.f32 %v1946, %v1981
      %v1999 = vsub.f32 %v1949, %v1983
      %v2000 = vmul.f32 %v1984, 1.442695
      %v2001 = vpow.pop %v2000
      %v2002 = vmul.f32 %v1985, 1.442695
      %v2003 = vpow.pop %v2002
      %v2004 = vmul.f32 %v1986, 1.442695
      %v2005 = vpow.pop %v2004
      %v2006 = vmul.f32 %v1987, 1.442695
      %v2007 = vpow.pop %v2006
      %v2008 = vmul.f32 %v1988, 1.442695
      %v2009 = vpow.pop %v2008
      %v2010 = vmul.f32 %v1989, 1.442695
      %v2011 = vpow.pop %v2010
      %v2012 = vmul.f32 %v1990, 1.442695
      %v2013 = vpow.pop %v2012
      %v2014 = vmul.f32 %v1991, 1.442695
      %v2015 = vpow.pop %v2014
      %v2016 = vmul.f32 %v1992, 1.442695
      %v2017 = vpow.pop %v2016
      %v2018 = vmul.f32 %v1993, 1.442695
      %v2019 = vpow.pop %v2018
      %v2020 = vmul.f32 %v1994, 1.442695
      %v2021 = vpow.pop %v2020
      %v2022 = vmul.f32 %v1995, 1.442695
      %v2023 = vpow.pop %v2022
      %v2024 = vmul.f32 %v1996, 1.442695
      %v2025 = vpow.pop %v2024
      %v2026 = vmul.f32 %v1997, 1.442695
      %v2027 = vpow.pop %v2026
      %v2028 = vmul.f32 %v1998, 1.442695
      %v2029 = vpow.pop %v2028
      %v2030 = vmul.f32 %v1999, 1.442695
      %v2031 = vpow.pop %v2030
      %2032 = vadd.xlane.f32.xlu0 %v2001
      %v2033 = vpop.xlane.xlu0 %2032
      %2034 = vadd.xlane.f32.xlu0 %v2003
      %v2035 = vpop.xlane.xlu0 %2034
      %2036 = vadd.xlane.f32.xlu0 %v2005
      %v2037 = vpop.xlane.xlu0 %2036
      %2038 = vadd.xlane.f32.xlu0 %v2007
      %v2039 = vpop.xlane.xlu0 %2038
      %2040 = vadd.xlane.f32.xlu0 %v2009
      %v2041 = vpop.xlane.xlu0 %2040
      %2042 = vadd.xlane.f32.xlu0 %v2011
      %v2043 = vpop.xlane.xlu0 %2042
      %2044 = vadd.xlane.f32.xlu0 %v2013
      %v2045 = vpop.xlane.xlu0 %2044
      %2046 = vadd.xlane.f32.xlu0 %v2015
      %v2047 = vpop.xlane.xlu0 %2046
      %2048 = vadd.xlane.f32.xlu0 %v2017
      %v2049 = vpop.xlane.xlu0 %2048
      %2050 = vadd.xlane.f32.xlu0 %v2019
      %v2051 = vpop.xlane.xlu0 %2050
      %2052 = vadd.xlane.f32.xlu0 %v2021
      %v2053 = vpop.xlane.xlu0 %2052
      %2054 = vadd.xlane.f32.xlu0 %v2023
      %v2055 = vpop.xlane.xlu0 %2054
      %2056 = vadd.xlane.f32.xlu0 %v2025
      %v2057 = vpop.xlane.xlu0 %2056
      %2058 = vadd.xlane.f32.xlu0 %v2027
      %v2059 = vpop.xlane.xlu0 %2058
      %2060 = vadd.xlane.f32.xlu0 %v2029
      %v2061 = vpop.xlane.xlu0 %2060
      %2062 = vadd.xlane.f32.xlu0 %v2031
      %v2063 = vpop.xlane.xlu0 %2062
      %v2064 = vrcp.pop %v2033
      %v2065 = vrcp.pop %v2035
      %v2066 = vrcp.pop %v2037
      %v2067 = vrcp.pop %v2039
      %v2068 = vrcp.pop %v2041
      %v2069 = vrcp.pop %v2043
      %v2070 = vrcp.pop %v2045
      %v2071 = vrcp.pop %v2047
      %v2072 = vrcp.pop %v2049
      %v2073 = vrcp.pop %v2051
      %v2074 = vrcp.pop %v2053
      %v2075 = vrcp.pop %v2055
      %v2076 = vrcp.pop %v2057
      %v2077 = vrcp.pop %v2059
      %v2078 = vrcp.pop %v2061
      %v2079 = vrcp.pop %v2063
      %v2080 = vpack.c.bf16 %v2003, %v2001
      %v2081 = vpack.c.bf16 %v2007, %v2005
      %v2082 = vpack.c.bf16 %v2011, %v2009
      %v2083 = vpack.c.bf16 %v2015, %v2013
      %v2084 = vpack.c.bf16 %v2019, %v2017
      %v2085 = vpack.c.bf16 %v2023, %v2021
      %v2086 = vpack.c.bf16 %v2027, %v2025
      %v2087 = vpack.c.bf16 %v2031, %v2029
      %2088 = vmatprep.subr.bf16.mxu0 0
      %2089 = vmatpush1.bf16.msra.mxu0 %v1442
      %2090 = vmatprep.subr.bf16.mxu0 0
      %2091 = vmatpush1.bf16.msra.mxu0 %v1448
      %2092 = vmatprep.subr.bf16.mxu0 0
      %2093 = vmatpush1.bf16.msra.mxu0 %v1454
      %2094 = vmatprep.subr.bf16.mxu0 0
      %2095 = vmatpush1.bf16.msra.mxu0 %v1460
      %2096 = vmatprep.subr.bf16.mxu0 0
      %2097 = vmatpush1.bf16.msra.mxu0 %v1466
      %2098 = vmatprep.subr.bf16.mxu0 0
      %2099 = vmatpush1.bf16.msra.mxu0 %v1472
      %2100 = vmatprep.subr.bf16.mxu0 0
      %2101 = vmatpush1.bf16.msra.mxu0 %v1478
      %2102 = vmatprep.subr.bf16.mxu0 0
      %2103 = vmatpush1.bf16.msra.mxu0 %v1484
      %2104 = vmatprep.subr.bf16.mxu0 0
      %2105 = vmatpush1.bf16.msra.mxu0 0
      %2106 = vmatprep.subr.bf16.mxu0 0
      %2107 = vmatpush1.bf16.msra.mxu0 0
      %2108 = vmatprep.subr.bf16.mxu0 0
      %2109 = vmatpush1.bf16.msra.mxu0 0
      %2110 = vmatprep.subr.bf16.mxu0 0
      %2111 = vmatpush1.bf16.msra.mxu0 0
      %2112 = vmatprep.subr.bf16.mxu0 0
      %2113 = vmatpush1.bf16.msra.mxu0 0
      %2114 = vmatprep.subr.bf16.mxu0 0
      %2115 = vmatpush1.bf16.msra.mxu0 0
      %2116 = vmatprep.subr.bf16.mxu0 0
      %2117 = vmatpush1.bf16.msra.mxu0 0
      %2118 = vmatprep.subr.bf16.mxu0 0
      %2119 = vmatpush1.bf16.msra.mxu0 0
      %2120 = vmatprep.mubr.bf16.mxu0 0
      %2121 = vmatmul.mubr.bf16.gmra.mrb[0].mxu0 %v2080
      %v2122 = vpop.f32.mrb[0].mxu0
      %v2123 = vadd.f32 0.0, %v2122
      %v2124 = vpop.f32.mrb[0].mxu0
      %v2125 = vpop.f32.mrb[0].mxu0
      %v2126 = vadd.f32 0.0, %v2125
      %v2127 = vpop.f32.mrb[0].mxu0
      %2128 = vmatprep.mubr.bf16.mxu0 0
      %2129 = vmatmul.mubr.bf16.gmra.mrb[0].mxu0 %v2081
      %v2130 = vpop.f32.mrb[0].mxu0
      %v2131 = vadd.f32 0.0, %v2130
      %v2132 = vpop.f32.mrb[0].mxu0
      %v2133 = vpop.f32.mrb[0].mxu0
      %v2134 = vadd.f32 0.0, %v2133
      %v2135 = vpop.f32.mrb[0].mxu0
      %2136 = vmatprep.mubr.bf16.mxu0 0
      %2137 = vmatmul.mubr.bf16.gmra.mrb[0].mxu0 %v2082
      %v2138 = vpop.f32.mrb[0].mxu0
      %v2139 = vadd.f32 0.0, %v2138
      %v2140 = vpop.f32.mrb[0].mxu0
      %v2141 = vpop.f32.mrb[0].mxu0
      %v2142 = vadd.f32 0.0, %v2141
      %v2143 = vpop.f32.mrb[0].mxu0
      %2144 = vmatprep.mubr.bf16.mxu0 0
      %2145 = vmatmul.mubr.bf16.gmra.mrb[0].mxu0 %v2083
      %v2146 = vpop.f32.mrb[0].mxu0
      %v2147 = vadd.f32 0.0, %v2146
      %v2148 = vpop.f32.mrb[0].mxu0
      %v2149 = vpop.f32.mrb[0].mxu0
      %v2150 = vadd.f32 0.0, %v2149
      %v2151 = vpop.f32.mrb[0].mxu0
      %2152 = vmatprep.mubr.bf16.mxu0 0
      %2153 = vmatmul.mubr.bf16.gmra.mrb[0].mxu0 %v2084
      %v2154 = vpop.f32.mrb[0].mxu0
      %v2155 = vadd.f32 0.0, %v2154
      %v2156 = vpop.f32.mrb[0].mxu0
      %v2157 = vpop.f32.mrb[0].mxu0
      %v2158 = vadd.f32 0.0, %v2157
      %v2159 = vpop.f32.mrb[0].mxu0
      %2160 = vmatprep.mubr.bf16.mxu0 0
      %2161 = vmatmul.mubr.bf16.gmra.mrb[0].mxu0 %v2085
      %v2162 = vpop.f32.mrb[0].mxu0
      %v2163 = vadd.f32 0.0, %v2162
      %v2164 = vpop.f32.mrb[0].mxu0
      %v2165 = vpop.f32.mrb[0].mxu0
      %v2166 = vadd.f32 0.0, %v2165
      %v2167 = vpop.f32.mrb[0].mxu0
      %2168 = vmatprep.mubr.bf16.mxu0 0
      %2169 = vmatmul.mubr.bf16.gmra.mrb[0].mxu0 %v2086
      %v2170 = vpop.f32.mrb[0].mxu0
      %v2171 = vadd.f32 0.0, %v2170
      %v2172 = vpop.f32.mrb[0].mxu0
      %v2173 = vpop.f32.mrb[0].mxu0
      %v2174 = vadd.f32 0.0, %v2173
      %v2175 = vpop.f32.mrb[0].mxu0
      %2176 = vmatprep.mubr.bf16.mxu0 0
      %2177 = vmatmul.mubr.bf16.gmra.mrb[0].mxu0 %v2087
      %v2178 = vpop.f32.mrb[0].mxu0
      %v2179 = vadd.f32 0.0, %v2178
      %v2180 = vpop.f32.mrb[0].mxu0
      %v2181 = vpop.f32.mrb[0].mxu0
      %v2182 = vadd.f32 0.0, %v2181
      %v2183 = vpop.f32.mrb[0].mxu0
      %2184 = vdwg.mxu0
      %v2185 = vmul.f32 %v2123, %v2064
      %v2186 = vmul.f32 %v2126, %v2065
      %v2187 = vmul.f32 %v2131, %v2066
      %v2188 = vmul.f32 %v2134, %v2067
      %v2189 = vmul.f32 %v2139, %v2068
      %v2190 = vmul.f32 %v2142, %v2069
      %v2191 = vmul.f32 %v2147, %v2070
      %v2192 = vmul.f32 %v2150, %v2071
      %v2193 = vmul.f32 %v2155, %v2072
      %v2194 = vmul.f32 %v2158, %v2073
      %v2195 = vmul.f32 %v2163, %v2074
      %v2196 = vmul.f32 %v2166, %v2075
      %v2197 = vmul.f32 %v2171, %v2076
      %v2198 = vmul.f32 %v2174, %v2077
      %v2199 = vmul.f32 %v2179, %v2078
      %v2200 = vmul.f32 %v2182, %v2079
      %v2201 = vpack.c.bf16 %v2186, %v2185
      %v2202 = vpack.c.bf16 %v2188, %v2187
      %v2203 = vpack.c.bf16 %v2190, %v2189
      %v2204 = vpack.c.bf16 %v2192, %v2191
      %v2205 = vpack.c.bf16 %v2194, %v2193
      %v2206 = vpack.c.bf16 %v2196, %v2195
      %v2207 = vpack.c.bf16 %v2198, %v2197
      %v2208 = vpack.c.bf16 %v2200, %v2199
      %s2209 = scalar_lea.vmem %s3, 128
      %v2210 = vld [vmem:[%s2209] sm:$0xff]
      %v2211 = vld [vmem:[%s2209 + $0x8] sm:$0xff]
      %v2212 = vld [vmem:[%s2209 + $0x10] sm:$0xff]
      %v2213 = vld [vmem:[%s2209 + $0x18] sm:$0xff]
      %v2214 = vld [vmem:[%s2209 + $0x20] sm:$0xff]
      %v2215 = vld [vmem:[%s2209 + $0x28] sm:$0xff]
      %v2216 = vld [vmem:[%s2209 + $0x30] sm:$0xff]
      %v2217 = vld [vmem:[%s2209 + $0x38] sm:$0xff]
      %v2218 = vld [vmem:[%s2209 + $0x40] sm:$0xff]
      %v2219 = vld [vmem:[%s2209 + $0x48] sm:$0xff]
      %v2220 = vld [vmem:[%s2209 + $0x50] sm:$0xff]
      %v2221 = vld [vmem:[%s2209 + $0x58] sm:$0xff]
      %v2222 = vld [vmem:[%s2209 + $0x60] sm:$0xff]
      %v2223 = vld [vmem:[%s2209 + $0x68] sm:$0xff]
      %v2224 = vld [vmem:[%s2209 + $0x70] sm:$0xff]
      %v2225 = vld [vmem:[%s2209 + $0x78] sm:$0xff]
      %v2242 = vunpack.c.l.b16 %v2210
      %v2243 = vunpack.c.h.b16 %v2210
      %v2244 = vunpack.c.l.b16 %v2211
      %v2245 = vunpack.c.h.b16 %v2211
      %v2246 = vunpack.c.l.b16 %v2212
      %v2247 = vunpack.c.h.b16 %v2212
      %v2248 = vunpack.c.l.b16 %v2213
      %v2249 = vunpack.c.h.b16 %v2213
      %v2250 = vunpack.c.l.b16 %v2214
      %v2251 = vunpack.c.h.b16 %v2214
      %v2252 = vunpack.c.l.b16 %v2215
      %v2253 = vunpack.c.h.b16 %v2215
      %v2254 = vunpack.c.l.b16 %v2216
      %v2255 = vunpack.c.h.b16 %v2216
      %v2256 = vunpack.c.l.b16 %v2217
      %v2257 = vunpack.c.h.b16 %v2217
      %v2258 = vunpack.c.l.b16 %v2218
      %v2259 = vunpack.c.h.b16 %v2218
      %v2260 = vunpack.c.l.b16 %v2219
      %v2261 = vunpack.c.h.b16 %v2219
      %v2262 = vunpack.c.l.b16 %v2220
      %v2263 = vunpack.c.h.b16 %v2220
      %v2264 = vunpack.c.l.b16 %v2221
      %v2265 = vunpack.c.h.b16 %v2221
      %v2266 = vunpack.c.l.b16 %v2222
      %v2267 = vunpack.c.h.b16 %v2222
      %v2268 = vunpack.c.l.b16 %v2223
      %v2269 = vunpack.c.h.b16 %v2223
      %v2270 = vunpack.c.l.b16 %v2224
      %v2271 = vunpack.c.h.b16 %v2224
      %v2272 = vunpack.c.l.b16 %v2225
      %v2273 = vunpack.c.h.b16 %v2225
      %v2274 = vpack.c.b16 %v2244, %v2242
      %v2275 = vpack.c.b16 %v2245, %v2243
      %v2276 = vpack.c.b16 %v2248, %v2246
      %v2277 = vpack.c.b16 %v2249, %v2247
      %v2278 = vpack.c.b16 %v2252, %v2250
      %v2279 = vpack.c.b16 %v2253, %v2251
      %v2280 = vpack.c.b16 %v2256, %v2254
      %v2281 = vpack.c.b16 %v2257, %v2255
      %v2282 = vpack.c.b16 %v2260, %v2258
      %v2283 = vpack.c.b16 %v2261, %v2259
      %v2284 = vpack.c.b16 %v2264, %v2262
      %v2285 = vpack.c.b16 %v2265, %v2263
      %v2286 = vpack.c.b16 %v2268, %v2266
      %v2287 = vpack.c.b16 %v2269, %v2267
      %v2288 = vpack.c.b16 %v2272, %v2270
      %v2289 = vpack.c.b16 %v2273, %v2271
      %2306 = vmatprep.subr.bf16.mxu0 %v2275
      %2307 = vmatpush1.bf16.msra.mxu0 %v2274
      %2308 = vmatprep.subr.bf16.mxu0 %v2277
      %2309 = vmatpush1.bf16.msra.mxu0 %v2276
      %2310 = vmatprep.subr.bf16.mxu0 %v2279
      %2311 = vmatpush1.bf16.msra.mxu0 %v2278
      %2312 = vmatprep.subr.bf16.mxu0 %v2281
      %2313 = vmatpush1.bf16.msra.mxu0 %v2280
      %2314 = vmatprep.subr.bf16.mxu0 %v2283
      %2315 = vmatpush1.bf16.msra.mxu0 %v2282
      %2316 = vmatprep.subr.bf16.mxu0 %v2285
      %2317 = vmatpush1.bf16.msra.mxu0 %v2284
      %2318 = vmatprep.subr.bf16.mxu0 %v2287
      %2319 = vmatpush1.bf16.msra.mxu0 %v2286
      %2320 = vmatprep.subr.bf16.mxu0 %v2289
      %2321 = vmatpush1.bf16.msra.mxu0 %v2288
      %2322 = vmatprep.subr.bf16.mxu0 0
      %2323 = vmatpush1.bf16.msra.mxu0 0
      %2324 = vmatprep.subr.bf16.mxu0 0
      %2325 = vmatpush1.bf16.msra.mxu0 0
      %2326 = vmatprep.subr.bf16.mxu0 0
      %2327 = vmatpush1.bf16.msra.mxu0 0
      %2328 = vmatprep.subr.bf16.mxu0 0
      %2329 = vmatpush1.bf16.msra.mxu0 0
      %2330 = vmatprep.subr.bf16.mxu0 0
      %2331 = vmatpush1.bf16.msra.mxu0 0
      %2332 = vmatprep.subr.bf16.mxu0 0
      %2333 = vmatpush1.bf16.msra.mxu0 0
      %2334 = vmatprep.subr.bf16.mxu0 0
      %2335 = vmatpush1.bf16.msra.mxu0 0
      %2336 = vmatprep.subr.bf16.mxu0 0
      %2337 = vmatpush1.bf16.msra.mxu0 0
      %2338 = vmatprep.mubr.bf16.mxu0 0
      %2339 = vmatmul.mubr.bf16.gmra.mrb[0].mxu0 %v2201
      %v2340 = vpop.f32.mrb[0].mxu0
      %v2341 = vadd.f32 0.0, %v2340
      %v2342 = vpop.f32.mrb[0].mxu0
      %v2343 = vadd.f32 0.0, %v2342
      %v2344 = vpop.f32.mrb[0].mxu0
      %v2345 = vadd.f32 0.0, %v2344
      %v2346 = vpop.f32.mrb[0].mxu0
      %v2347 = vadd.f32 0.0, %v2346
      %2348 = vmatprep.mubr.bf16.mxu0 0
      %2349 = vmatmul.mubr.bf16.gmra.mrb[0].mxu0 %v2202
      %v2350 = vpop.f32.mrb[0].mxu0
      %v2351 = vadd.f32 0.0, %v2350
      %v2352 = vpop.f32.mrb[0].mxu0
      %v2353 = vadd.f32 0.0, %v2352
      %v2354 = vpop.f32.mrb[0].mxu0
      %v2355 = vadd.f32 0.0, %v2354
      %v2356 = vpop.f32.mrb[0].mxu0
      %v2357 = vadd.f32 0.0, %v2356
      %2358 = vmatprep.mubr.bf16.mxu0 0
      %2359 = vmatmul.mubr.bf16.gmra.mrb[0].mxu0 %v2203
      %v2360 = vpop.f32.mrb[0].mxu0
      %v2361 = vadd.f32 0.0, %v2360
      %v2362 = vpop.f32.mrb[0].mxu0
      %v2363 = vadd.f32 0.0, %v2362
      %v2364 = vpop.f32.mrb[0].mxu0
      %v2365 = vadd.f32 0.0, %v2364
      %v2366 = vpop.f32.mrb[0].mxu0
      %v2367 = vadd.f32 0.0, %v2366
      %2368 = vmatprep.mubr.bf16.mxu0 0
      %2369 = vmatmul.mubr.bf16.gmra.mrb[0].mxu0 %v2204
      %v2370 = vpop.f32.mrb[0].mxu0
      %v2371 = vadd.f32 0.0, %v2370
      %v2372 = vpop.f32.mrb[0].mxu0
      %v2373 = vadd.f32 0.0, %v2372
      %v2374 = vpop.f32.mrb[0].mxu0
      %v2375 = vadd.f32 0.0, %v2374
      %v2376 = vpop.f32.mrb[0].mxu0
      %v2377 = vadd.f32 0.0, %v2376
      %2378 = vmatprep.mubr.bf16.mxu0 0
      %2379 = vmatmul.mubr.bf16.gmra.mrb[0].mxu0 %v2205
      %v2380 = vpop.f32.mrb[0].mxu0
      %v2381 = vadd.f32 0.0, %v2380
      %v2382 = vpop.f32.mrb[0].mxu0
      %v2383 = vadd.f32 0.0, %v2382
      %v2384 = vpop.f32.mrb[0].mxu0
      %v2385 = vadd.f32 0.0, %v2384
      %v2386 = vpop.f32.mrb[0].mxu0
      %v2387 = vadd.f32 0.0, %v2386
      %2388 = vmatprep.mubr.bf16.mxu0 0
      %2389 = vmatmul.mubr.bf16.gmra.mrb[0].mxu0 %v2206
      %v2390 = vpop.f32.mrb[0].mxu0
      %v2391 = vadd.f32 0.0, %v2390
      %v2392 = vpop.f32.mrb[0].mxu0
      %v2393 = vadd.f32 0.0, %v2392
      %v2394 = vpop.f32.mrb[0].mxu0
      %v2395 = vadd.f32 0.0, %v2394
      %v2396 = vpop.f32.mrb[0].mxu0
      %v2397 = vadd.f32 0.0, %v2396
      %2398 = vmatprep.mubr.bf16.mxu0 0
      %2399 = vmatmul.mubr.bf16.gmra.mrb[0].mxu0 %v2207
      %v2400 = vpop.f32.mrb[0].mxu0
      %v2401 = vadd.f32 0.0, %v2400
      %v2402 = vpop.f32.mrb[0].mxu0
      %v2403 = vadd.f32 0.0, %v2402
      %v2404 = vpop.f32.mrb[0].mxu0
      %v2405 = vadd.f32 0.0, %v2404
      %v2406 = vpop.f32.mrb[0].mxu0
      %v2407 = vadd.f32 0.0, %v2406
      %2408 = vmatprep.mubr.bf16.mxu0 0
      %2409 = vmatmul.mubr.bf16.gmra.mrb[0].mxu0 %v2208
      %v2410 = vpop.f32.mrb[0].mxu0
      %v2411 = vadd.f32 0.0, %v2410
      %v2412 = vpop.f32.mrb[0].mxu0
      %v2413 = vadd.f32 0.0, %v2412
      %v2414 = vpop.f32.mrb[0].mxu0
      %v2415 = vadd.f32 0.0, %v2414
      %v2416 = vpop.f32.mrb[0].mxu0
      %v2417 = vadd.f32 0.0, %v2416
      %2418 = vdwg.mxu0
      %v2435 = vunpack.c.l.b16 %v1839
      %v2436 = vunpack.c.h.b16 %v1839
      %v2437 = vunpack.c.l.b16 %v1840
      %v2438 = vunpack.c.h.b16 %v1840
      %v2439 = vunpack.c.l.b16 %v1841
      %v2440 = vunpack.c.h.b16 %v1841
      %v2441 = vunpack.c.l.b16 %v1842
      %v2442 = vunpack.c.h.b16 %v1842
      %v2443 = vunpack.c.l.b16 %v1843
      %v2444 = vunpack.c.h.b16 %v1843
      %v2445 = vunpack.c.l.b16 %v1844
      %v2446 = vunpack.c.h.b16 %v1844
      %v2447 = vunpack.c.l.b16 %v1845
      %v2448 = vunpack.c.h.b16 %v1845
      %v2449 = vunpack.c.l.b16 %v1846
      %v2450 = vunpack.c.h.b16 %v1846
      %v2451 = vunpack.c.l.b16 %v1847
      %v2452 = vunpack.c.h.b16 %v1847
      %v2453 = vunpack.c.l.b16 %v1848
      %v2454 = vunpack.c.h.b16 %v1848
      %v2455 = vunpack.c.l.b16 %v1849
      %v2456 = vunpack.c.h.b16 %v1849
      %v2457 = vunpack.c.l.b16 %v1850
      %v2458 = vunpack.c.h.b16 %v1850
      %v2459 = vunpack.c.l.b16 %v1851
      %v2460 = vunpack.c.h.b16 %v1851
      %v2461 = vunpack.c.l.b16 %v1852
      %v2462 = vunpack.c.h.b16 %v1852
      %v2463 = vunpack.c.l.b16 %v1853
      %v2464 = vunpack.c.h.b16 %v1853
      %v2465 = vunpack.c.l.b16 %v1854
      %v2466 = vunpack.c.h.b16 %v1854
      %v2467 = vpack.c.b16 %v2437, %v2435
      %v2468 = vpack.c.b16 %v2438, %v2436
      %v2469 = vpack.c.b16 %v2441, %v2439
      %v2470 = vpack.c.b16 %v2442, %v2440
      %v2471 = vpack.c.b16 %v2445, %v2443
      %v2472 = vpack.c.b16 %v2446, %v2444
      %v2473 = vpack.c.b16 %v2449, %v2447
      %v2474 = vpack.c.b16 %v2450, %v2448
      %v2475 = vpack.c.b16 %v2453, %v2451
      %v2476 = vpack.c.b16 %v2454, %v2452
      %v2477 = vpack.c.b16 %v2457, %v2455
      %v2478 = vpack.c.b16 %v2458, %v2456
      %v2479 = vpack.c.b16 %v2461, %v2459
      %v2480 = vpack.c.b16 %v2462, %v2460
      %v2481 = vpack.c.b16 %v2465, %v2463
      %v2482 = vpack.c.b16 %v2466, %v2464
      %2499 = vmatprep.subr.bf16.mxu0 %v2468
      %2500 = vmatpush1.bf16.msra.mxu0 %v2467
      %2501 = vmatprep.subr.bf16.mxu0 %v2470
      %2502 = vmatpush1.bf16.msra.mxu0 %v2469
      %2503 = vmatprep.subr.bf16.mxu0 %v2472
      %2504 = vmatpush1.bf16.msra.mxu0 %v2471
      %2505 = vmatprep.subr.bf16.mxu0 %v2474
      %2506 = vmatpush1.bf16.msra.mxu0 %v2473
      %2507 = vmatprep.subr.bf16.mxu0 %v2476
      %2508 = vmatpush1.bf16.msra.mxu0 %v2475
      %2509 = vmatprep.subr.bf16.mxu0 %v2478
      %2510 = vmatpush1.bf16.msra.mxu0 %v2477
      %2511 = vmatprep.subr.bf16.mxu0 %v2480
      %2512 = vmatpush1.bf16.msra.mxu0 %v2479
      %2513 = vmatprep.subr.bf16.mxu0 %v2482
      %2514 = vmatpush1.bf16.msra.mxu0 %v2481
      %2515 = vmatprep.subr.bf16.mxu0 0
      %2516 = vmatpush1.bf16.msra.mxu0 0
      %2517 = vmatprep.subr.bf16.mxu0 0
      %2518 = vmatpush1.bf16.msra.mxu0 0
      %2519 = vmatprep.subr.bf16.mxu0 0
      %2520 = vmatpush1.bf16.msra.mxu0 0
      %2521 = vmatprep.subr.bf16.mxu0 0
      %2522 = vmatpush1.bf16.msra.mxu0 0
      %2523 = vmatprep.subr.bf16.mxu0 0
      %2524 = vmatpush1.bf16.msra.mxu0 0
      %2525 = vmatprep.subr.bf16.mxu0 0
      %2526 = vmatpush1.bf16.msra.mxu0 0
      %2527 = vmatprep.subr.bf16.mxu0 0
      %2528 = vmatpush1.bf16.msra.mxu0 0
      %2529 = vmatprep.subr.bf16.mxu0 0
      %2530 = vmatpush1.bf16.msra.mxu0 0
      %2531 = vmatprep.mubr.bf16.mxu0 0
      %2532 = vmatmul.mubr.bf16.gmra.mrb[0].mxu0 %v1831
      %v2533 = vpop.f32.mrb[0].mxu0
      %v2534 = vadd.f32 %v2341, %v2533
      %v2535 = vpop.f32.mrb[0].mxu0
      %v2536 = vadd.f32 %v2343, %v2535
      %v2537 = vpop.f32.mrb[0].mxu0
      %v2538 = vadd.f32 %v2345, %v2537
      %v2539 = vpop.f32.mrb[0].mxu0
      %v2540 = vadd.f32 %v2347, %v2539
      %2541 = vmatprep.mubr.bf16.mxu0 0
      %2542 = vmatmul.mubr.bf16.gmra.mrb[0].mxu0 %v1832
      %v2543 = vpop.f32.mrb[0].mxu0
      %v2544 = vadd.f32 %v2351, %v2543
      %v2545 = vpop.f32.mrb[0].mxu0
      %v2546 = vadd.f32 %v2353, %v2545
      %v2547 = vpop.f32.mrb[0].mxu0
      %v2548 = vadd.f32 %v2355, %v2547
      %v2549 = vpop.f32.mrb[0].mxu0
      %v2550 = vadd.f32 %v2357, %v2549
      %2551 = vmatprep.mubr.bf16.mxu0 0
      %2552 = vmatmul.mubr.bf16.gmra.mrb[0].mxu0 %v1833
      %v2553 = vpop.f32.mrb[0].mxu0
      %v2554 = vadd.f32 %v2361, %v2553
      %v2555 = vpop.f32.mrb[0].mxu0
      %v2556 = vadd.f32 %v2363, %v2555
      %v2557 = vpop.f32.mrb[0].mxu0
      %v2558 = vadd.f32 %v2365, %v2557
      %v2559 = vpop.f32.mrb[0].mxu0
      %v2560 = vadd.f32 %v2367, %v2559
      %2561 = vmatprep.mubr.bf16.mxu0 0
      %2562 = vmatmul.mubr.bf16.gmra.mrb[0].mxu0 %v1834
      %v2563 = vpop.f32.mrb[0].mxu0
      %v2564 = vadd.f32 %v2371, %v2563
      %v2565 = vpop.f32.mrb[0].mxu0
      %v2566 = vadd.f32 %v2373, %v2565
      %v2567 = vpop.f32.mrb[0].mxu0
      %v2568 = vadd.f32 %v2375, %v2567
      %v2569 = vpop.f32.mrb[0].mxu0
      %v2570 = vadd.f32 %v2377, %v2569
      %2571 = vmatprep.mubr.bf16.mxu0 0
      %2572 = vmatmul.mubr.bf16.gmra.mrb[0].mxu0 %v1835
      %v2573 = vpop.f32.mrb[0].mxu0
      %v2574 = vadd.f32 %v2381, %v2573
      %v2575 = vpop.f32.mrb[0].mxu0
      %v2576 = vadd.f32 %v2383, %v2575
      %v2577 = vpop.f32.mrb[0].mxu0
      %v2578 = vadd.f32 %v2385, %v2577
      %v2579 = vpop.f32.mrb[0].mxu0
      %v2580 = vadd.f32 %v2387, %v2579
      %2581 = vmatprep.mubr.bf16.mxu0 0
      %2582 = vmatmul.mubr.bf16.gmra.mrb[0].mxu0 %v1836
      %v2583 = vpop.f32.mrb[0].mxu0
      %v2584 = vadd.f32 %v2391, %v2583
      %v2585 = vpop.f32.mrb[0].mxu0
      %v2586 = vadd.f32 %v2393, %v2585
      %v2587 = vpop.f32.mrb[0].mxu0
      %v2588 = vadd.f32 %v2395, %v2587
      %v2589 = vpop.f32.mrb[0].mxu0
      %v2590 = vadd.f32 %v2397, %v2589
      %2591 = vmatprep.mubr.bf16.mxu0 0
      %2592 = vmatmul.mubr.bf16.gmra.mrb[0].mxu0 %v1837
      %v2593 = vpop.f32.mrb[0].mxu0
      %v2594 = vadd.f32 %v2401, %v2593
      %v2595 = vpop.f32.mrb[0].mxu0
      %v2596 = vadd.f32 %v2403, %v2595
      %v2597 = vpop.f32.mrb[0].mxu0
      %v2598 = vadd.f32 %v2405, %v2597
      %v2599 = vpop.f32.mrb[0].mxu0
      %v2600 = vadd.f32 %v2407, %v2599
      %2601 = vmatprep.mubr.bf16.mxu0 0
      %2602 = vmatmul.mubr.bf16.gmra.mrb[0].mxu0 %v1838
      %v2603 = vpop.f32.mrb[0].mxu0
      %v2604 = vadd.f32 %v2411, %v2603
      %v2605 = vpop.f32.mrb[0].mxu0
      %v2606 = vadd.f32 %v2413, %v2605
      %v2607 = vpop.f32.mrb[0].mxu0
      %v2608 = vadd.f32 %v2415, %v2607
      %v2609 = vpop.f32.mrb[0].mxu0
      %v2610 = vadd.f32 %v2417, %v2609
      %2611 = vdwg.mxu0
      %v2612 = vld [vmem:[%s4] sm:$0x3]
      %v2614 = vlaneseq
      %v2615 = vshrl.u32 %v2614, 7
      %v2616 = vsub.s32 0, %v2615
      %v2617 = vrot.slane %v2612, %v2616
      %v2618 = vlaneseq
      %v2619 = vshrl.u32 %v2618, 7
      %v2620 = vsub.s32 1, %v2619
      %v2621 = vrot.slane %v2612, %v2620
      %v2624 = vadd.f32 %v2534, %v2617
      %v2625 = vadd.f32 %v2536, %v2621
      %v2626 = vadd.f32 %v2538, %v2617
      %v2627 = vadd.f32 %v2540, %v2621
      %v2628 = vadd.f32 %v2544, %v2617
      %v2629 = vadd.f32 %v2546, %v2621
      %v2630 = vadd.f32 %v2548, %v2617
      %v2631 = vadd.f32 %v2550, %v2621
      %v2632 = vadd.f32 %v2554, %v2617
      %v2633 = vadd.f32 %v2556, %v2621
      %v2634 = vadd.f32 %v2558, %v2617
      %v2635 = vadd.f32 %v2560, %v2621
      %v2636 = vadd.f32 %v2564, %v2617
      %v2637 = vadd.f32 %v2566, %v2621
      %v2638 = vadd.f32 %v2568, %v2617
      %v2639 = vadd.f32 %v2570, %v2621
      %v2640 = vadd.f32 %v2574, %v2617
      %v2641 = vadd.f32 %v2576, %v2621
      %v2642 = vadd.f32 %v2578, %v2617
      %v2643 = vadd.f32 %v2580, %v2621
      %v2644 = vadd.f32 %v2584, %v2617
      %v2645 = vadd.f32 %v2586, %v2621
      %v2646 = vadd.f32 %v2588, %v2617
      %v2647 = vadd.f32 %v2590, %v2621
      %v2648 = vadd.f32 %v2594, %v2617
      %v2649 = vadd.f32 %v2596, %v2621
      %v2650 = vadd.f32 %v2598, %v2617
      %v2651 = vadd.f32 %v2600, %v2621
      %v2652 = vadd.f32 %v2604, %v2617
      %v2653 = vadd.f32 %v2606, %v2621
      %v2654 = vadd.f32 %v2608, %v2617
      %v2655 = vadd.f32 %v2610, %v2621
      %v2656 = vadd.f32 %v442, %v2624
      %v2657 = vadd.f32 %v443, %v2625
      %v2658 = vadd.f32 %v444, %v2626
      %v2659 = vadd.f32 %v445, %v2627
      %v2660 = vadd.f32 %v446, %v2628
      %v2661 = vadd.f32 %v447, %v2629
      %v2662 = vadd.f32 %v448, %v2630
      %v2663 = vadd.f32 %v449, %v2631
      %v2664 = vadd.f32 %v450, %v2632
      %v2665 = vadd.f32 %v451, %v2633
      %v2666 = vadd.f32 %v452, %v2634
      %v2667 = vadd.f32 %v453, %v2635
      %v2668 = vadd.f32 %v454, %v2636
      %v2669 = vadd.f32 %v455, %v2637
      %v2670 = vadd.f32 %v456, %v2638
      %v2671 = vadd.f32 %v457, %v2639
      %v2672 = vadd.f32 %v458, %v2640
      %v2673 = vadd.f32 %v459, %v2641
      %v2674 = vadd.f32 %v460, %v2642
      %v2675 = vadd.f32 %v461, %v2643
      %v2676 = vadd.f32 %v462, %v2644
      %v2677 = vadd.f32 %v463, %v2645
      %v2678 = vadd.f32 %v464, %v2646
      %v2679 = vadd.f32 %v465, %v2647
      %v2680 = vadd.f32 %v466, %v2648
      %v2681 = vadd.f32 %v467, %v2649
      %v2682 = vadd.f32 %v468, %v2650
      %v2683 = vadd.f32 %v469, %v2651
      %v2684 = vadd.f32 %v470, %v2652
      %v2685 = vadd.f32 %v471, %v2653
      %v2686 = vadd.f32 %v472, %v2654
      %v2687 = vadd.f32 %v473, %v2655
      %v2688 = vld [vmem:[%s5] sm:$0x3]
      %v2689 = vld [vmem:[%s6] sm:$0x3]
      %v2690 = vadd.f32 %v2656, %v2657
      %2691 = vadd.xlane.f32.xlu0 %v2690
      %v2692 = vpop.xlane.xlu0 %2691
      %v2693 = vadd.f32 %v2658, %v2659
      %2694 = vadd.xlane.f32.xlu0 %v2693
      %v2695 = vpop.xlane.xlu0 %2694
      %v2696 = vadd.f32 %v2660, %v2661
      %2697 = vadd.xlane.f32.xlu0 %v2696
      %v2698 = vpop.xlane.xlu0 %2697
      %v2699 = vadd.f32 %v2662, %v2663
      %2700 = vadd.xlane.f32.xlu0 %v2699
      %v2701 = vpop.xlane.xlu0 %2700
      %v2702 = vadd.f32 %v2664, %v2665
      %2703 = vadd.xlane.f32.xlu0 %v2702
      %v2704 = vpop.xlane.xlu0 %2703
      %v2705 = vadd.f32 %v2666, %v2667
      %2706 = vadd.xlane.f32.xlu0 %v2705
      %v2707 = vpop.xlane.xlu0 %2706
      %v2708 = vadd.f32 %v2668, %v2669
      %2709 = vadd.xlane.f32.xlu0 %v2708
      %v2710 = vpop.xlane.xlu0 %2709
      %v2711 = vadd.f32 %v2670, %v2671
      %2712 = vadd.xlane.f32.xlu0 %v2711
      %v2713 = vpop.xlane.xlu0 %2712
      %v2714 = vadd.f32 %v2672, %v2673
      %2715 = vadd.xlane.f32.xlu0 %v2714
      %v2716 = vpop.xlane.xlu0 %2715
      %v2717 = vadd.f32 %v2674, %v2675
      %2718 = vadd.xlane.f32.xlu0 %v2717
      %v2719 = vpop.xlane.xlu0 %2718
      %v2720 = vadd.f32 %v2676, %v2677
      %2721 = vadd.xlane.f32.xlu0 %v2720
      %v2722 = vpop.xlane.xlu0 %2721
      %v2723 = vadd.f32 %v2678, %v2679
      %2724 = vadd.xlane.f32.xlu0 %v2723
      %v2725 = vpop.xlane.xlu0 %2724
      %v2726 = vadd.f32 %v2680, %v2681
      %2727 = vadd.xlane.f32.xlu0 %v2726
      %v2728 = vpop.xlane.xlu0 %2727
      %v2729 = vadd.f32 %v2682, %v2683
      %2730 = vadd.xlane.f32.xlu0 %v2729
      %v2731 = vpop.xlane.xlu0 %2730
      %v2732 = vadd.f32 %v2684, %v2685
      %2733 = vadd.xlane.f32.xlu0 %v2732
      %v2734 = vpop.xlane.xlu0 %2733
      %v2735 = vadd.f32 %v2686, %v2687
      %2736 = vadd.xlane.f32.xlu0 %v2735
      %v2737 = vpop.xlane.xlu0 %2736
      %v2738 = vrcp.pop 256.0
      %v2739 = vmul.f32 %v2692, %v2738
      %v2740 = vmul.f32 %v2695, %v2738
      %v2741 = vmul.f32 %v2698, %v2738
      %v2742 = vmul.f32 %v2701, %v2738
      %v2743 = vmul.f32 %v2704, %v2738
      %v2744 = vmul.f32 %v2707, %v2738
      %v2745 = vmul.f32 %v2710, %v2738
      %v2746 = vmul.f32 %v2713, %v2738
      %v2747 = vmul.f32 %v2716, %v2738
      %v2748 = vmul.f32 %v2719, %v2738
      %v2749 = vmul.f32 %v2722, %v2738
      %v2750 = vmul.f32 %v2725, %v2738
      %v2751 = vmul.f32 %v2728, %v2738
      %v2752 = vmul.f32 %v2731, %v2738
      %v2753 = vmul.f32 %v2734, %v2738
      %v2754 = vmul.f32 %v2737, %v2738
      %v2755 = vsub.f32 %v2656, %v2739
      %v2756 = vsub.f32 %v2657, %v2739
      %v2757 = vsub.f32 %v2658, %v2740
      %v2758 = vsub.f32 %v2659, %v2740
      %v2759 = vsub.f32 %v2660, %v2741
      %v2760 = vsub.f32 %v2661, %v2741
      %v2761 = vsub.f32 %v2662, %v2742
      %v2762 = vsub.f32 %v2663, %v2742
      %v2763 = vsub.f32 %v2664, %v2743
      %v2764 = vsub.f32 %v2665, %v2743
      %v2765 = vsub.f32 %v2666, %v2744
      %v2766 = vsub.f32 %v2667, %v2744
      %v2767 = vsub.f32 %v2668, %v2745
      %v2768 = vsub.f32 %v2669, %v2745
      %v2769 = vsub.f32 %v2670, %v2746
      %v2770 = vsub.f32 %v2671, %v2746
      %v2771 = vsub.f32 %v2672, %v2747
      %v2772 = vsub.f32 %v2673, %v2747
      %v2773 = vsub.f32 %v2674, %v2748
      %v2774 = vsub.f32 %v2675, %v2748
      %v2775 = vsub.f32 %v2676, %v2749
      %v2776 = vsub.f32 %v2677, %v2749
      %v2777 = vsub.f32 %v2678, %v2750
      %v2778 = vsub.f32 %v2679, %v2750
      %v2779 = vsub.f32 %v2680, %v2751
      %v2780 = vsub.f32 %v2681, %v2751
      %v2781 = vsub.f32 %v2682, %v2752
      %v2782 = vsub.f32 %v2683, %v2752
      %v2783 = vsub.f32 %v2684, %v2753
      %v2784 = vsub.f32 %v2685, %v2753
      %v2785 = vsub.f32 %v2686, %v2754
      %v2786 = vsub.f32 %v2687, %v2754
      %v2787 = vmul.f32 %v2755, %v2755
      %v2788 = vmul.f32 %v2756, %v2756
      %v2789 = vmul.f32 %v2757, %v2757
      %v2790 = vmul.f32 %v2758, %v2758
      %v2791 = vmul.f32 %v2759, %v2759
      %v2792 = vmul.f32 %v2760, %v2760
      %v2793 = vmul.f32 %v2761, %v2761
      %v2794 = vmul.f32 %v2762, %v2762
      %v2795 = vmul.f32 %v2763, %v2763
      %v2796 = vmul.f32 %v2764, %v2764
      %v2797 = vmul.f32 %v2765, %v2765
      %v2798 = vmul.f32 %v2766, %v2766
      %v2799 = vmul.f32 %v2767, %v2767
      %v2800 = vmul.f32 %v2768, %v2768
      %v2801 = vmul.f32 %v2769, %v2769
      %v2802 = vmul.f32 %v2770, %v2770
      %v2803 = vmul.f32 %v2771, %v2771
      %v2804 = vmul.f32 %v2772, %v2772
      %v2805 = vmul.f32 %v2773, %v2773
      %v2806 = vmul.f32 %v2774, %v2774
      %v2807 = vmul.f32 %v2775, %v2775
      %v2808 = vmul.f32 %v2776, %v2776
      %v2809 = vmul.f32 %v2777, %v2777
      %v2810 = vmul.f32 %v2778, %v2778
      %v2811 = vmul.f32 %v2779, %v2779
      %v2812 = vmul.f32 %v2780, %v2780
      %v2813 = vmul.f32 %v2781, %v2781
      %v2814 = vmul.f32 %v2782, %v2782
      %v2815 = vmul.f32 %v2783, %v2783
      %v2816 = vmul.f32 %v2784, %v2784
      %v2817 = vmul.f32 %v2785, %v2785
      %v2818 = vmul.f32 %v2786, %v2786
      %v2819 = vadd.f32 %v2787, %v2788
      %2820 = vadd.xlane.f32.xlu0 %v2819
      %v2821 = vpop.xlane.xlu0 %2820
      %v2822 = vadd.f32 %v2789, %v2790
      %2823 = vadd.xlane.f32.xlu0 %v2822
      %v2824 = vpop.xlane.xlu0 %2823
      %v2825 = vadd.f32 %v2791, %v2792
      %2826 = vadd.xlane.f32.xlu0 %v2825
      %v2827 = vpop.xlane.xlu0 %2826
      %v2828 = vadd.f32 %v2793, %v2794
      %2829 = vadd.xlane.f32.xlu0 %v2828
      %v2830 = vpop.xlane.xlu0 %2829
      %v2831 = vadd.f32 %v2795, %v2796
      %2832 = vadd.xlane.f32.xlu0 %v2831
      %v2833 = vpop.xlane.xlu0 %2832
      %v2834 = vadd.f32 %v2797, %v2798
      %2835 = vadd.xlane.f32.xlu0 %v2834
      %v2836 = vpop.xlane.xlu0 %2835
      %v2837 = vadd.f32 %v2799, %v2800
      %2838 = vadd.xlane.f32.xlu0 %v2837
      %v2839 = vpop.xlane.xlu0 %2838
      %v2840 = vadd.f32 %v2801, %v2802
      %2841 = vadd.xlane.f32.xlu0 %v2840
      %v2842 = vpop.xlane.xlu0 %2841
      %v2843 = vadd.f32 %v2803, %v2804
      %2844 = vadd.xlane.f32.xlu0 %v2843
      %v2845 = vpop.xlane.xlu0 %2844
      %v2846 = vadd.f32 %v2805, %v2806
      %2847 = vadd.xlane.f32.xlu0 %v2846
      %v2848 = vpop.xlane.xlu0 %2847
      %v2849 = vadd.f32 %v2807, %v2808
      %2850 = vadd.xlane.f32.xlu0 %v2849
      %v2851 = vpop.xlane.xlu0 %2850
      %v2852 = vadd.f32 %v2809, %v2810
      %2853 = vadd.xlane.f32.xlu0 %v2852
      %v2854 = vpop.xlane.xlu0 %2853
      %v2855 = vadd.f32 %v2811, %v2812
      %2856 = vadd.xlane.f32.xlu0 %v2855
      %v2857 = vpop.xlane.xlu0 %2856
      %v2858 = vadd.f32 %v2813, %v2814
      %2859 = vadd.xlane.f32.xlu0 %v2858
      %v2860 = vpop.xlane.xlu0 %2859
      %v2861 = vadd.f32 %v2815, %v2816
      %2862 = vadd.xlane.f32.xlu0 %v2861
      %v2863 = vpop.xlane.xlu0 %2862
      %v2864 = vadd.f32 %v2817, %v2818
      %2865 = vadd.xlane.f32.xlu0 %v2864
      %v2866 = vpop.xlane.xlu0 %2865
      %v2867 = vmul.f32 %v2821, %v2738
      %v2868 = vmul.f32 %v2824, %v2738
      %v2869 = vmul.f32 %v2827, %v2738
      %v2870 = vmul.f32 %v2830, %v2738
      %v2871 = vmul.f32 %v2833, %v2738
      %v2872 = vmul.f32 %v2836, %v2738
      %v2873 = vmul.f32 %v2839, %v2738
      %v2874 = vmul.f32 %v2842, %v2738
      %v2875 = vmul.f32 %v2845, %v2738
      %v2876 = vmul.f32 %v2848, %v2738
      %v2877 = vmul.f32 %v2851, %v2738
      %v2878 = vmul.f32 %v2854, %v2738
      %v2879 = vmul.f32 %v2857, %v2738
      %v2880 = vmul.f32 %v2860, %v2738
      %v2881 = vmul.f32 %v2863, %v2738
      %v2882 = vmul.f32 %v2866, %v2738
      %v2883 = vadd.f32 %v2867, 1e-05
      %v2884 = vadd.f32 %v2868, 1e-05
      %v2885 = vadd.f32 %v2869, 1e-05
      %v2886 = vadd.f32 %v2870, 1e-05
      %v2887 = vadd.f32 %v2871, 1e-05
      %v2888 = vadd.f32 %v2872, 1e-05
      %v2889 = vadd.f32 %v2873, 1e-05
      %v2890 = vadd.f32 %v2874, 1e-05
      %v2891 = vadd.f32 %v2875, 1e-05
      %v2892 = vadd.f32 %v2876, 1e-05
      %v2893 = vadd.f32 %v2877, 1e-05
      %v2894 = vadd.f32 %v2878, 1e-05
      %v2895 = vadd.f32 %v2879, 1e-05
      %v2896 = vadd.f32 %v2880, 1e-05
      %v2897 = vadd.f32 %v2881, 1e-05
      %v2898 = vadd.f32 %v2882, 1e-05
      %v2899 = vrsqrt.pop %v2883
      %v2900 = vrsqrt.pop %v2884
      %v2901 = vrsqrt.pop %v2885
      %v2902 = vrsqrt.pop %v2886
      %v2903 = vrsqrt.pop %v2887
      %v2904 = vrsqrt.pop %v2888
      %v2905 = vrsqrt.pop %v2889
      %v2906 = vrsqrt.pop %v2890
      %v2907 = vrsqrt.pop %v2891
      %v2908 = vrsqrt.pop %v2892
      %v2909 = vrsqrt.pop %v2893
      %v2910 = vrsqrt.pop %v2894
      %v2911 = vrsqrt.pop %v2895
      %v2912 = vrsqrt.pop %v2896
      %v2913 = vrsqrt.pop %v2897
      %v2914 = vrsqrt.pop %v2898
      %v2915 = vmul.f32 %v2755, %v2899
      %v2916 = vmul.f32 %v2756, %v2899
      %v2917 = vmul.f32 %v2757, %v2900
      %v2918 = vmul.f32 %v2758, %v2900
      %v2919 = vmul.f32 %v2759, %v2901
      %v2920 = vmul.f32 %v2760, %v2901
      %v2921 = vmul.f32 %v2761, %v2902
      %v2922 = vmul.f32 %v2762, %v2902
      %v2923 = vmul.f32 %v2763, %v2903
      %v2924 = vmul.f32 %v2764, %v2903
      %v2925 = vmul.f32 %v2765, %v2904
      %v2926 = vmul.f32 %v2766, %v2904
      %v2927 = vmul.f32 %v2767, %v2905
      %v2928 = vmul.f32 %v2768, %v2905
      %v2929 = vmul.f32 %v2769, %v2906
      %v2930 = vmul.f32 %v2770, %v2906
      %v2931 = vmul.f32 %v2771, %v2907
      %v2932 = vmul.f32 %v2772, %v2907
      %v2933 = vmul.f32 %v2773, %v2908
      %v2934 = vmul.f32 %v2774, %v2908
      %v2935 = vmul.f32 %v2775, %v2909
      %v2936 = vmul.f32 %v2776, %v2909
      %v2937 = vmul.f32 %v2777, %v2910
      %v2938 = vmul.f32 %v2778, %v2910
      %v2939 = vmul.f32 %v2779, %v2911
      %v2940 = vmul.f32 %v2780, %v2911
      %v2941 = vmul.f32 %v2781, %v2912
      %v2942 = vmul.f32 %v2782, %v2912
      %v2943 = vmul.f32 %v2783, %v2913
      %v2944 = vmul.f32 %v2784, %v2913
      %v2945 = vmul.f32 %v2785, %v2914
      %v2946 = vmul.f32 %v2786, %v2914
      %v2948 = vlaneseq
      %v2949 = vshrl.u32 %v2948, 7
      %v2950 = vsub.s32 0, %v2949
      %v2951 = vrot.slane %v2688, %v2950
      %v2952 = vlaneseq
      %v2953 = vshrl.u32 %v2952, 7
      %v2954 = vsub.s32 1, %v2953
      %v2955 = vrot.slane %v2688, %v2954
      %v2958 = vmul.f32 %v2915, %v2951
      %v2959 = vmul.f32 %v2916, %v2955
      %v2960 = vmul.f32 %v2917, %v2951
      %v2961 = vmul.f32 %v2918, %v2955
      %v2962 = vmul.f32 %v2919, %v2951
      %v2963 = vmul.f32 %v2920, %v2955
      %v2964 = vmul.f32 %v2921, %v2951
      %v2965 = vmul.f32 %v2922, %v2955
      %v2966 = vmul.f32 %v2923, %v2951
      %v2967 = vmul.f32 %v2924, %v2955
      %v2968 = vmul.f32 %v2925, %v2951
      %v2969 = vmul.f32 %v2926, %v2955
      %v2970 = vmul.f32 %v2927, %v2951
      %v2971 = vmul.f32 %v2928, %v2955
      %v2972 = vmul.f32 %v2929, %v2951
      %v2973 = vmul.f32 %v2930, %v2955
      %v2974 = vmul.f32 %v2931, %v2951
      %v2975 = vmul.f32 %v2932, %v2955
      %v2976 = vmul.f32 %v2933, %v2951
      %v2977 = vmul.f32 %v2934, %v2955
      %v2978 = vmul.f32 %v2935, %v2951
      %v2979 = vmul.f32 %v2936, %v2955
      %v2980 = vmul.f32 %v2937, %v2951
      %v2981 = vmul.f32 %v2938, %v2955
      %v2982 = vmul.f32 %v2939, %v2951
      %v2983 = vmul.f32 %v2940, %v2955
      %v2984 = vmul.f32 %v2941, %v2951
      %v2985 = vmul.f32 %v2942, %v2955
      %v2986 = vmul.f32 %v2943, %v2951
      %v2987 = vmul.f32 %v2944, %v2955
      %v2988 = vmul.f32 %v2945, %v2951
      %v2989 = vmul.f32 %v2946, %v2955
      %v2991 = vlaneseq
      %v2992 = vshrl.u32 %v2991, 7
      %v2993 = vsub.s32 0, %v2992
      %v2994 = vrot.slane %v2689, %v2993
      %v2995 = vlaneseq
      %v2996 = vshrl.u32 %v2995, 7
      %v2997 = vsub.s32 1, %v2996
      %v2998 = vrot.slane %v2689, %v2997
      %v3001 = vadd.f32 %v2958, %v2994
      %v3002 = vadd.f32 %v2959, %v2998
      %v3003 = vadd.f32 %v2960, %v2994
      %v3004 = vadd.f32 %v2961, %v2998
      %v3005 = vadd.f32 %v2962, %v2994
      %v3006 = vadd.f32 %v2963, %v2998
      %v3007 = vadd.f32 %v2964, %v2994
      %v3008 = vadd.f32 %v2965, %v2998
      %v3009 = vadd.f32 %v2966, %v2994
      %v3010 = vadd.f32 %v2967, %v2998
      %v3011 = vadd.f32 %v2968, %v2994
      %v3012 = vadd.f32 %v2969, %v2998
      %v3013 = vadd.f32 %v2970, %v2994
      %v3014 = vadd.f32 %v2971, %v2998
      %v3015 = vadd.f32 %v2972, %v2994
      %v3016 = vadd.f32 %v2973, %v2998
      %v3017 = vadd.f32 %v2974, %v2994
      %v3018 = vadd.f32 %v2975, %v2998
      %v3019 = vadd.f32 %v2976, %v2994
      %v3020 = vadd.f32 %v2977, %v2998
      %v3021 = vadd.f32 %v2978, %v2994
      %v3022 = vadd.f32 %v2979, %v2998
      %v3023 = vadd.f32 %v2980, %v2994
      %v3024 = vadd.f32 %v2981, %v2998
      %v3025 = vadd.f32 %v2982, %v2994
      %v3026 = vadd.f32 %v2983, %v2998
      %v3027 = vadd.f32 %v2984, %v2994
      %v3028 = vadd.f32 %v2985, %v2998
      %v3029 = vadd.f32 %v2986, %v2994
      %v3030 = vadd.f32 %v2987, %v2998
      %v3031 = vadd.f32 %v2988, %v2994
      %v3032 = vadd.f32 %v2989, %v2998
      %v3033 = vpack.c.bf16 %v3003, %v3001
      %v3034 = vpack.c.bf16 %v3004, %v3002
      %v3035 = vpack.c.bf16 %v3007, %v3005
      %v3036 = vpack.c.bf16 %v3008, %v3006
      %v3037 = vpack.c.bf16 %v3011, %v3009
      %v3038 = vpack.c.bf16 %v3012, %v3010
      %v3039 = vpack.c.bf16 %v3015, %v3013
      %v3040 = vpack.c.bf16 %v3016, %v3014
      %v3041 = vpack.c.bf16 %v3019, %v3017
      %v3042 = vpack.c.bf16 %v3020, %v3018
      %v3043 = vpack.c.bf16 %v3023, %v3021
      %v3044 = vpack.c.bf16 %v3024, %v3022
      %v3045 = vpack.c.bf16 %v3027, %v3025
      %v3046 = vpack.c.bf16 %v3028, %v3026
      %v3047 = vpack.c.bf16 %v3031, %v3029
      %v3048 = vpack.c.bf16 %v3032, %v3030
      %v3049 = vld [vmem:[%s7] sm:$0xff]
      %v3050 = vld [vmem:[%s7 + $0x8] sm:$0xff]
      %v3051 = vld [vmem:[%s7 + $0x10] sm:$0xff]
      %v3052 = vld [vmem:[%s7 + $0x18] sm:$0xff]
      %v3053 = vld [vmem:[%s7 + $0x20] sm:$0xff]
      %v3054 = vld [vmem:[%s7 + $0x28] sm:$0xff]
      %v3055 = vld [vmem:[%s7 + $0x30] sm:$0xff]
      %v3056 = vld [vmem:[%s7 + $0x38] sm:$0xff]
      %v3057 = vld [vmem:[%s7 + $0x40] sm:$0xff]
      %v3058 = vld [vmem:[%s7 + $0x48] sm:$0xff]
      %v3059 = vld [vmem:[%s7 + $0x50] sm:$0xff]
      %v3060 = vld [vmem:[%s7 + $0x58] sm:$0xff]
      %v3061 = vld [vmem:[%s7 + $0x60] sm:$0xff]
      %v3062 = vld [vmem:[%s7 + $0x68] sm:$0xff]
      %v3063 = vld [vmem:[%s7 + $0x70] sm:$0xff]
      %v3064 = vld [vmem:[%s7 + $0x78] sm:$0xff]
      %v3065 = vld [vmem:[%s7 + $0x80] sm:$0xff]
      %v3066 = vld [vmem:[%s7 + $0x88] sm:$0xff]
      %v3067 = vld [vmem:[%s7 + $0x90] sm:$0xff]
      %v3068 = vld [vmem:[%s7 + $0x98] sm:$0xff]
      %v3069 = vld [vmem:[%s7 + $0xa0] sm:$0xff]
      %v3070 = vld [vmem:[%s7 + $0xa8] sm:$0xff]
      %v3071 = vld [vmem:[%s7 + $0xb0] sm:$0xff]
      %v3072 = vld [vmem:[%s7 + $0xb8] sm:$0xff]
      %v3073 = vld [vmem:[%s7 + $0xc0] sm:$0xff]
      %v3074 = vld [vmem:[%s7 + $0xc8] sm:$0xff]
      %v3075 = vld [vmem:[%s7 + $0xd0] sm:$0xff]
      %v3076 = vld [vmem:[%s7 + $0xd8] sm:$0xff]
      %v3077 = vld [vmem:[%s7 + $0xe0] sm:$0xff]
      %v3078 = vld [vmem:[%s7 + $0xe8] sm:$0xff]
      %v3079 = vld [vmem:[%s7 + $0xf0] sm:$0xff]
      %v3080 = vld [vmem:[%s7 + $0xf8] sm:$0xff]
      %v3081 = vld [vmem:[%s7 + $0x100] sm:$0xff]
      %v3082 = vld [vmem:[%s7 + $0x108] sm:$0xff]
      %v3083 = vld [vmem:[%s7 + $0x110] sm:$0xff]
      %v3084 = vld [vmem:[%s7 + $0x118] sm:$0xff]
      %v3085 = vld [vmem:[%s7 + $0x120] sm:$0xff]
      %v3086 = vld [vmem:[%s7 + $0x128] sm:$0xff]
      %v3087 = vld [vmem:[%s7 + $0x130] sm:$0xff]
      %v3088 = vld [vmem:[%s7 + $0x138] sm:$0xff]
      %v3089 = vld [vmem:[%s7 + $0x140] sm:$0xff]
      %v3090 = vld [vmem:[%s7 + $0x148] sm:$0xff]
      %v3091 = vld [vmem:[%s7 + $0x150] sm:$0xff]
      %v3092 = vld [vmem:[%s7 + $0x158] sm:$0xff]
      %v3093 = vld [vmem:[%s7 + $0x160] sm:$0xff]
      %v3094 = vld [vmem:[%s7 + $0x168] sm:$0xff]
      %v3095 = vld [vmem:[%s7 + $0x170] sm:$0xff]
      %v3096 = vld [vmem:[%s7 + $0x178] sm:$0xff]
      %v3097 = vld [vmem:[%s7 + $0x180] sm:$0xff]
      %v3098 = vld [vmem:[%s7 + $0x188] sm:$0xff]
      %v3099 = vld [vmem:[%s7 + $0x190] sm:$0xff]
      %v3100 = vld [vmem:[%s7 + $0x198] sm:$0xff]
      %v3101 = vld [vmem:[%s7 + $0x1a0] sm:$0xff]
      %v3102 = vld [vmem:[%s7 + $0x1a8] sm:$0xff]
      %v3103 = vld [vmem:[%s7 + $0x1b0] sm:$0xff]
      %v3104 = vld [vmem:[%s7 + $0x1b8] sm:$0xff]
      %v3105 = vld [vmem:[%s7 + $0x1c0] sm:$0xff]
      %v3106 = vld [vmem:[%s7 + $0x1c8] sm:$0xff]
      %v3107 = vld [vmem:[%s7 + $0x1d0] sm:$0xff]
      %v3108 = vld [vmem:[%s7 + $0x1d8] sm:$0xff]
      %v3109 = vld [vmem:[%s7 + $0x1e0] sm:$0xff]
      %v3110 = vld [vmem:[%s7 + $0x1e8] sm:$0xff]
      %v3111 = vld [vmem:[%s7 + $0x1f0] sm:$0xff]
      %v3112 = vld [vmem:[%s7 + $0x1f8] sm:$0xff]
      %v3113 = vld [vmem:[%s8] sm:$0xf]
      %v3115 = vlaneseq
      %v3116 = vshrl.u32 %v3115, 7
      %v3117 = vsub.s32 0, %v3116
      %v3118 = vrot.slane %v3113, %v3117
      %v3119 = vlaneseq
      %v3120 = vshrl.u32 %v3119, 7
      %v3121 = vsub.s32 1, %v3120
      %v3122 = vrot.slane %v3113, %v3121
      %v3123 = vlaneseq
      %v3124 = vshrl.u32 %v3123, 7
      %v3125 = vsub.s32 2, %v3124
      %v3126 = vrot.slane %v3113, %v3125
      %v3127 = vlaneseq
      %v3128 = vshrl.u32 %v3127, 7
      %v3129 = vsub.s32 3, %v3128
      %v3130 = vrot.slane %v3113, %v3129
      %v3199 = vunpack.c.l.b16 %v3049
      %v3200 = vunpack.c.h.b16 %v3049
      %v3201 = vunpack.c.l.b16 %v3050
      %v3202 = vunpack.c.h.b16 %v3050
      %v3203 = vunpack.c.l.b16 %v3051
      %v3204 = vunpack.c.h.b16 %v3051
      %v3205 = vunpack.c.l.b16 %v3052
      %v3206 = vunpack.c.h.b16 %v3052
      %v3207 = vunpack.c.l.b16 %v3053
      %v3208 = vunpack.c.h.b16 %v3053
      %v3209 = vunpack.c.l.b16 %v3054
      %v3210 = vunpack.c.h.b16 %v3054
      %v3211 = vunpack.c.l.b16 %v3055
      %v3212 = vunpack.c.h.b16 %v3055
      %v3213 = vunpack.c.l.b16 %v3056
      %v3214 = vunpack.c.h.b16 %v3056
      %v3215 = vunpack.c.l.b16 %v3057
      %v3216 = vunpack.c.h.b16 %v3057
      %v3217 = vunpack.c.l.b16 %v3058
      %v3218 = vunpack.c.h.b16 %v3058
      %v3219 = vunpack.c.l.b16 %v3059
      %v3220 = vunpack.c.h.b16 %v3059
      %v3221 = vunpack.c.l.b16 %v3060
      %v3222 = vunpack.c.h.b16 %v3060
      %v3223 = vunpack.c.l.b16 %v3061
      %v3224 = vunpack.c.h.b16 %v3061
      %v3225 = vunpack.c.l.b16 %v3062
      %v3226 = vunpack.c.h.b16 %v3062
      %v3227 = vunpack.c.l.b16 %v3063
      %v3228 = vunpack.c.h.b16 %v3063
      %v3229 = vunpack.c.l.b16 %v3064
      %v3230 = vunpack.c.h.b16 %v3064
      %v3231 = vunpack.c.l.b16 %v3065
      %v3232 = vunpack.c.h.b16 %v3065
      %v3233 = vunpack.c.l.b16 %v3066
      %v3234 = vunpack.c.h.b16 %v3066
      %v3235 = vunpack.c.l.b16 %v3067
      %v3236 = vunpack.c.h.b16 %v3067
      %v3237 = vunpack.c.l.b16 %v3068
      %v3238 = vunpack.c.h.b16 %v3068
      %v3239 = vunpack.c.l.b16 %v3069
      %v3240 = vunpack.c.h.b16 %v3069
      %v3241 = vunpack.c.l.b16 %v3070
      %v3242 = vunpack.c.h.b16 %v3070
      %v3243 = vunpack.c.l.b16 %v3071
      %v3244 = vunpack.c.h.b16 %v3071
      %v3245 = vunpack.c.l.b16 %v3072
      %v3246 = vunpack.c.h.b16 %v3072
      %v3247 = vunpack.c.l.b16 %v3073
      %v3248 = vunpack.c.h.b16 %v3073
      %v3249 = vunpack.c.l.b16 %v3074
      %v3250 = vunpack.c.h.b16 %v3074
      %v3251 = vunpack.c.l.b16 %v3075
      %v3252 = vunpack.c.h.b16 %v3075
      %v3253 = vunpack.c.l.b16 %v3076
      %v3254 = vunpack.c.h.b16 %v3076
      %v3255 = vunpack.c.l.b16 %v3077
      %v3256 = vunpack.c.h.b16 %v3077
      %v3257 = vunpack.c.l.b16 %v3078
      %v3258 = vunpack.c.h.b16 %v3078
      %v3259 = vunpack.c.l.b16 %v3079
      %v3260 = vunpack.c.h.b16 %v3079
      %v3261 = vunpack.c.l.b16 %v3080
      %v3262 = vunpack.c.h.b16 %v3080
      %v3263 = vunpack.c.l.b16 %v3081
      %v3264 = vunpack.c.h.b16 %v3081
      %v3265 = vunpack.c.l.b16 %v3082
      %v3266 = vunpack.c.h.b16 %v3082
      %v3267 = vunpack.c.l.b16 %v3083
      %v3268 = vunpack.c.h.b16 %v3083
      %v3269 = vunpack.c.l.b16 %v3084
      %v3270 = vunpack.c.h.b16 %v3084
      %v3271 = vunpack.c.l.b16 %v3085
      %v3272 = vunpack.c.h.b16 %v3085
      %v3273 = vunpack.c.l.b16 %v3086
      %v3274 = vunpack.c.h.b16 %v3086
      %v3275 = vunpack.c.l.b16 %v3087
      %v3276 = vunpack.c.h.b16 %v3087
      %v3277 = vunpack.c.l.b16 %v3088
      %v3278 = vunpack.c.h.b16 %v3088
      %v3279 = vunpack.c.l.b16 %v3089
      %v3280 = vunpack.c.h.b16 %v3089
      %v3281 = vunpack.c.l.b16 %v3090
      %v3282 = vunpack.c.h.b16 %v3090
      %v3283 = vunpack.c.l.b16 %v3091
      %v3284 = vunpack.c.h.b16 %v3091
      %v3285 = vunpack.c.l.b16 %v3092
      %v3286 = vunpack.c.h.b16 %v3092
      %v3287 = vunpack.c.l.b16 %v3093
      %v3288 = vunpack.c.h.b16 %v3093
      %v3289 = vunpack.c.l.b16 %v3094
      %v3290 = vunpack.c.h.b16 %v3094
      %v3291 = vunpack.c.l.b16 %v3095
      %v3292 = vunpack.c.h.b16 %v3095
      %v3293 = vunpack.c.l.b16 %v3096
      %v3294 = vunpack.c.h.b16 %v3096
      %v3295 = vunpack.c.l.b16 %v3097
      %v3296 = vunpack.c.h.b16 %v3097
      %v3297 = vunpack.c.l.b16 %v3098
      %v3298 = vunpack.c.h.b16 %v3098
      %v3299 = vunpack.c.l.b16 %v3099
      %v3300 = vunpack.c.h.b16 %v3099
      %v3301 = vunpack.c.l.b16 %v3100
      %v3302 = vunpack.c.h.b16 %v3100
      %v3303 = vunpack.c.l.b16 %v3101
      %v3304 = vunpack.c.h.b16 %v3101
      %v3305 = vunpack.c.l.b16 %v3102
      %v3306 = vunpack.c.h.b16 %v3102
      %v3307 = vunpack.c.l.b16 %v3103
      %v3308 = vunpack.c.h.b16 %v3103
      %v3309 = vunpack.c.l.b16 %v3104
      %v3310 = vunpack.c.h.b16 %v3104
      %v3311 = vunpack.c.l.b16 %v3105
      %v3312 = vunpack.c.h.b16 %v3105
      %v3313 = vunpack.c.l.b16 %v3106
      %v3314 = vunpack.c.h.b16 %v3106
      %v3315 = vunpack.c.l.b16 %v3107
      %v3316 = vunpack.c.h.b16 %v3107
      %v3317 = vunpack.c.l.b16 %v3108
      %v3318 = vunpack.c.h.b16 %v3108
      %v3319 = vunpack.c.l.b16 %v3109
      %v3320 = vunpack.c.h.b16 %v3109
      %v3321 = vunpack.c.l.b16 %v3110
      %v3322 = vunpack.c.h.b16 %v3110
      %v3323 = vunpack.c.l.b16 %v3111
      %v3324 = vunpack.c.h.b16 %v3111
      %v3325 = vunpack.c.l.b16 %v3112
      %v3326 = vunpack.c.h.b16 %v3112
      %v3327 = vpack.c.b16 %v3203, %v3199
      %v3328 = vpack.c.b16 %v3204, %v3200
      %v3329 = vpack.c.b16 %v3205, %v3201
      %v3330 = vpack.c.b16 %v3206, %v3202
      %v3331 = vpack.c.b16 %v3211, %v3207
      %v3332 = vpack.c.b16 %v3212, %v3208
      %v3333 = vpack.c.b16 %v3213, %v3209
      %v3334 = vpack.c.b16 %v3214, %v3210
      %v3335 = vpack.c.b16 %v3219, %v3215
      %v3336 = vpack.c.b16 %v3220, %v3216
      %v3337 = vpack.c.b16 %v3221, %v3217
      %v3338 = vpack.c.b16 %v3222, %v3218
      %v3339 = vpack.c.b16 %v3227, %v3223
      %v3340 = vpack.c.b16 %v3228, %v3224
      %v3341 = vpack.c.b16 %v3229, %v3225
      %v3342 = vpack.c.b16 %v3230, %v3226
      %v3343 = vpack.c.b16 %v3235, %v3231
      %v3344 = vpack.c.b16 %v3236, %v3232
      %v3345 = vpack.c.b16 %v3237, %v3233
      %v3346 = vpack.c.b16 %v3238, %v3234
      %v3347 = vpack.c.b16 %v3243, %v3239
      %v3348 = vpack.c.b16 %v3244, %v3240
      %v3349 = vpack.c.b16 %v3245, %v3241
      %v3350 = vpack.c.b16 %v3246, %v3242
      %v3351 = vpack.c.b16 %v3251, %v3247
      %v3352 = vpack.c.b16 %v3252, %v3248
      %v3353 = vpack.c.b16 %v3253, %v3249
      %v3354 = vpack.c.b16 %v3254, %v3250
      %v3355 = vpack.c.b16 %v3259, %v3255
      %v3356 = vpack.c.b16 %v3260, %v3256
      %v3357 = vpack.c.b16 %v3261, %v3257
      %v3358 = vpack.c.b16 %v3262, %v3258
      %v3359 = vpack.c.b16 %v3267, %v3263
      %v3360 = vpack.c.b16 %v3268, %v3264
      %v3361 = vpack.c.b16 %v3269, %v3265
      %v3362 = vpack.c.b16 %v3270, %v3266
      %v3363 = vpack.c.b16 %v3275, %v3271
      %v3364 = vpack.c.b16 %v3276, %v3272
      %v3365 = vpack.c.b16 %v3277, %v3273
      %v3366 = vpack.c.b16 %v3278, %v3274
      %v3367 = vpack.c.b16 %v3283, %v3279
      %v3368 = vpack.c.b16 %v3284, %v3280
      %v3369 = vpack.c.b16 %v3285, %v3281
      %v3370 = vpack.c.b16 %v3286, %v3282
      %v3371 = vpack.c.b16 %v3291, %v3287
      %v3372 = vpack.c.b16 %v3292, %v3288
      %v3373 = vpack.c.b16 %v3293, %v3289
      %v3374 = vpack.c.b16 %v3294, %v3290
      %v3375 = vpack.c.b16 %v3299, %v3295
      %v3376 = vpack.c.b16 %v3300, %v3296
      %v3377 = vpack.c.b16 %v3301, %v3297
      %v3378 = vpack.c.b16 %v3302, %v3298
      %v3379 = vpack.c.b16 %v3307, %v3303
      %v3380 = vpack.c.b16 %v3308, %v3304
      %v3381 = vpack.c.b16 %v3309, %v3305
      %v3382 = vpack.c.b16 %v3310, %v3306
      %v3383 = vpack.c.b16 %v3315, %v3311
      %v3384 = vpack.c.b16 %v3316, %v3312
      %v3385 = vpack.c.b16 %v3317, %v3313
      %v3386 = vpack.c.b16 %v3318, %v3314
      %v3387 = vpack.c.b16 %v3323, %v3319
      %v3388 = vpack.c.b16 %v3324, %v3320
      %v3389 = vpack.c.b16 %v3325, %v3321
      %v3390 = vpack.c.b16 %v3326, %v3322
      %3455 = vmatprep.subr.bf16.mxu0 %v3328
      %3456 = vmatpush1.bf16.msra.mxu0 %v3327
      %3457 = vmatprep.subr.bf16.mxu0 %v3332
      %3458 = vmatpush1.bf16.msra.mxu0 %v3331
      %3459 = vmatprep.subr.bf16.mxu0 %v3336
      %3460 = vmatpush1.bf16.msra.mxu0 %v3335
      %3461 = vmatprep.subr.bf16.mxu0 %v3340
      %3462 = vmatpush1.bf16.msra.mxu0 %v3339
      %3463 = vmatprep.subr.bf16.mxu0 %v3344
      %3464 = vmatpush1.bf16.msra.mxu0 %v3343
      %3465 = vmatprep.subr.bf16.mxu0 %v3348
      %3466 = vmatpush1.bf16.msra.mxu0 %v3347
      %3467 = vmatprep.subr.bf16.mxu0 %v3352
      %3468 = vmatpush1.bf16.msra.mxu0 %v3351
      %3469 = vmatprep.subr.bf16.mxu0 %v3356
      %3470 = vmatpush1.bf16.msra.mxu0 %v3355
      %3471 = vmatprep.subr.bf16.mxu0 %v3360
      %3472 = vmatpush1.bf16.msra.mxu0 %v3359
      %3473 = vmatprep.subr.bf16.mxu0 %v3364
      %3474 = vmatpush1.bf16.msra.mxu0 %v3363
      %3475 = vmatprep.subr.bf16.mxu0 %v3368
      %3476 = vmatpush1.bf16.msra.mxu0 %v3367
      %3477 = vmatprep.subr.bf16.mxu0 %v3372
      %3478 = vmatpush1.bf16.msra.mxu0 %v3371
      %3479 = vmatprep.subr.bf16.mxu0 %v3376
      %3480 = vmatpush1.bf16.msra.mxu0 %v3375
      %3481 = vmatprep.subr.bf16.mxu0 %v3380
      %3482 = vmatpush1.bf16.msra.mxu0 %v3379
      %3483 = vmatprep.subr.bf16.mxu0 %v3384
      %3484 = vmatpush1.bf16.msra.mxu0 %v3383
      %3485 = vmatprep.subr.bf16.mxu0 %v3388
      %3486 = vmatpush1.bf16.msra.mxu0 %v3387
      %3487 = vmatprep.mubr.bf16.mxu0 %v3034
      %3488 = vmatmul.mubr.bf16.gmra.mrb[0].mxu0 %v3033
      %v3489 = vpop.f32.mrb[0].mxu0
      %v3490 = vadd.f32 %v3118, %v3489
      %v3491 = vpop.f32.mrb[0].mxu0
      %v3492 = vadd.f32 %v3122, %v3491
      %v3493 = vpop.f32.mrb[0].mxu0
      %v3494 = vadd.f32 %v3118, %v3493
      %v3495 = vpop.f32.mrb[0].mxu0
      %v3496 = vadd.f32 %v3122, %v3495
      %3497 = vmatprep.mubr.bf16.mxu0 %v3036
      %3498 = vmatmul.mubr.bf16.gmra.mrb[0].mxu0 %v3035
      %v3499 = vpop.f32.mrb[0].mxu0
      %v3500 = vadd.f32 %v3118, %v3499
      %v3501 = vpop.f32.mrb[0].mxu0
      %v3502 = vadd.f32 %v3122, %v3501
      %v3503 = vpop.f32.mrb[0].mxu0
      %v3504 = vadd.f32 %v3118, %v3503
      %v3505 = vpop.f32.mrb[0].mxu0
      %v3506 = vadd.f32 %v3122, %v3505
      %3507 = vmatprep.mubr.bf16.mxu0 %v3038
      %3508 = vmatmul.mubr.bf16.gmra.mrb[0].mxu0 %v3037
      %v3509 = vpop.f32.mrb[0].mxu0
      %v3510 = vadd.f32 %v3118, %v3509
      %v3511 = vpop.f32.mrb[0].mxu0
      %v3512 = vadd.f32 %v3122, %v3511
      %v3513 = vpop.f32.mrb[0].mxu0
      %v3514 = vadd.f32 %v3118, %v3513
      %v3515 = vpop.f32.mrb[0].mxu0
      %v3516 = vadd.f32 %v3122, %v3515
      %3517 = vmatprep.mubr.bf16.mxu0 %v3040
      %3518 = vmatmul.mubr.bf16.gmra.mrb[0].mxu0 %v3039
      %v3519 = vpop.f32.mrb[0].mxu0
      %v3520 = vadd.f32 %v3118, %v3519
      %v3521 = vpop.f32.mrb[0].mxu0
      %v3522 = vadd.f32 %v3122, %v3521
      %v3523 = vpop.f32.mrb[0].mxu0
      %v3524 = vadd.f32 %v3118, %v3523
      %v3525 = vpop.f32.mrb[0].mxu0
      %v3526 = vadd.f32 %v3122, %v3525
      %3527 = vmatprep.mubr.bf16.mxu0 %v3042
      %3528 = vmatmul.mubr.bf16.gmra.mrb[0].mxu0 %v3041
      %v3529 = vpop.f32.mrb[0].mxu0
      %v3530 = vadd.f32 %v3118, %v3529
      %v3531 = vpop.f32.mrb[0].mxu0
      %v3532 = vadd.f32 %v3122, %v3531
      %v3533 = vpop.f32.mrb[0].mxu0
      %v3534 = vadd.f32 %v3118, %v3533
      %v3535 = vpop.f32.mrb[0].mxu0
      %v3536 = vadd.f32 %v3122, %v3535
      %3537 = vmatprep.mubr.bf16.mxu0 %v3044
      %3538 = vmatmul.mubr.bf16.gmra.mrb[0].mxu0 %v3043
      %v3539 = vpop.f32.mrb[0].mxu0
      %v3540 = vadd.f32 %v3118, %v3539
      %v3541 = vpop.f32.mrb[0].mxu0
      %v3542 = vadd.f32 %v3122, %v3541
      %v3543 = vpop.f32.mrb[0].mxu0
      %v3544 = vadd.f32 %v3118, %v3543
      %v3545 = vpop.f32.mrb[0].mxu0
      %v3546 = vadd.f32 %v3122, %v3545
      %3547 = vmatprep.mubr.bf16.mxu0 %v3046
      %3548 = vmatmul.mubr.bf16.gmra.mrb[0].mxu0 %v3045
      %v3549 = vpop.f32.mrb[0].mxu0
      %v3550 = vadd.f32 %v3118, %v3549
      %v3551 = vpop.f32.mrb[0].mxu0
      %v3552 = vadd.f32 %v3122, %v3551
      %v3553 = vpop.f32.mrb[0].mxu0
      %v3554 = vadd.f32 %v3118, %v3553
      %v3555 = vpop.f32.mrb[0].mxu0
      %v3556 = vadd.f32 %v3122, %v3555
      %3557 = vmatprep.mubr.bf16.mxu0 %v3048
      %3558 = vmatmul.mubr.bf16.gmra.mrb[0].mxu0 %v3047
      %v3559 = vpop.f32.mrb[0].mxu0
      %v3560 = vadd.f32 %v3118, %v3559
      %v3561 = vpop.f32.mrb[0].mxu0
      %v3562 = vadd.f32 %v3122, %v3561
      %v3563 = vpop.f32.mrb[0].mxu0
      %v3564 = vadd.f32 %v3118, %v3563
      %v3565 = vpop.f32.mrb[0].mxu0
      %v3566 = vadd.f32 %v3122, %v3565
      %3567 = vdwg.mxu0
      %3568 = vmatprep.subr.bf16.mxu0 %v3330
      %3569 = vmatpush1.bf16.msra.mxu0 %v3329
      %3570 = vmatprep.subr.bf16.mxu0 %v3334
      %3571 = vmatpush1.bf16.msra.mxu0 %v3333
      %3572 = vmatprep.subr.bf16.mxu0 %v3338
      %3573 = vmatpush1.bf16.msra.mxu0 %v3337
      %3574 = vmatprep.subr.bf16.mxu0 %v3342
      %3575 = vmatpush1.bf16.msra.mxu0 %v3341
      %3576 = vmatprep.subr.bf16.mxu0 %v3346
      %3577 = vmatpush1.bf16.msra.mxu0 %v3345
      %3578 = vmatprep.subr.bf16.mxu0 %v3350
      %3579 = vmatpush1.bf16.msra.mxu0 %v3349
      %3580 = vmatprep.subr.bf16.mxu0 %v3354
      %3581 = vmatpush1.bf16.msra.mxu0 %v3353
      %3582 = vmatprep.subr.bf16.mxu0 %v3358
      %3583 = vmatpush1.bf16.msra.mxu0 %v3357
      %3584 = vmatprep.subr.bf16.mxu0 %v3362
      %3585 = vmatpush1.bf16.msra.mxu0 %v3361
      %3586 = vmatprep.subr.bf16.mxu0 %v3366
      %3587 = vmatpush1.bf16.msra.mxu0 %v3365
      %3588 = vmatprep.subr.bf16.mxu0 %v3370
      %3589 = vmatpush1.bf16.msra.mxu0 %v3369
      %3590 = vmatprep.subr.bf16.mxu0 %v3374
      %3591 = vmatpush1.bf16.msra.mxu0 %v3373
      %3592 = vmatprep.subr.bf16.mxu0 %v3378
      %3593 = vmatpush1.bf16.msra.mxu0 %v3377
      %3594 = vmatprep.subr.bf16.mxu0 %v3382
      %3595 = vmatpush1.bf16.msra.mxu0 %v3381
      %3596 = vmatprep.subr.bf16.mxu0 %v3386
      %3597 = vmatpush1.bf16.msra.mxu0 %v3385
      %3598 = vmatprep.subr.bf16.mxu0 %v3390
      %3599 = vmatpush1.bf16.msra.mxu0 %v3389
      %3600 = vmatprep.mubr.bf16.mxu0 %v3034
      %3601 = vmatmul.mubr.bf16.gmra.mrb[0].mxu0 %v3033
      %v3602 = vpop.f32.mrb[0].mxu0
      %v3603 = vadd.f32 %v3126, %v3602
      %v3604 = vpop.f32.mrb[0].mxu0
      %v3605 = vadd.f32 %v3130, %v3604
      %v3606 = vpop.f32.mrb[0].mxu0
      %v3607 = vadd.f32 %v3126, %v3606
      %v3608 = vpop.f32.mrb[0].mxu0
      %v3609 = vadd.f32 %v3130, %v3608
      %3610 = vmatprep.mubr.bf16.mxu0 %v3036
      %3611 = vmatmul.mubr.bf16.gmra.mrb[0].mxu0 %v3035
      %v3612 = vpop.f32.mrb[0].mxu0
      %v3613 = vadd.f32 %v3126, %v3612
      %v3614 = vpop.f32.mrb[0].mxu0
      %v3615 = vadd.f32 %v3130, %v3614
      %v3616 = vpop.f32.mrb[0].mxu0
      %v3617 = vadd.f32 %v3126, %v3616
      %v3618 = vpop.f32.mrb[0].mxu0
      %v3619 = vadd.f32 %v3130, %v3618
      %3620 = vmatprep.mubr.bf16.mxu0 %v3038
      %3621 = vmatmul.mubr.bf16.gmra.mrb[0].mxu0 %v3037
      %v3622 = vpop.f32.mrb[0].mxu0
      %v3623 = vadd.f32 %v3126, %v3622
      %v3624 = vpop.f32.mrb[0].mxu0
      %v3625 = vadd.f32 %v3130, %v3624
      %v3626 = vpop.f32.mrb[0].mxu0
      %v3627 = vadd.f32 %v3126, %v3626
      %v3628 = vpop.f32.mrb[0].mxu0
      %v3629 = vadd.f32 %v3130, %v3628
      %3630 = vmatprep.mubr.bf16.mxu0 %v3040
      %3631 = vmatmul.mubr.bf16.gmra.mrb[0].mxu0 %v3039
      %v3632 = vpop.f32.mrb[0].mxu0
      %v3633 = vadd.f32 %v3126, %v3632
      %v3634 = vpop.f32.mrb[0].mxu0
      %v3635 = vadd.f32 %v3130, %v3634
      %v3636 = vpop.f32.mrb[0].mxu0
      %v3637 = vadd.f32 %v3126, %v3636
      %v3638 = vpop.f32.mrb[0].mxu0
      %v3639 = vadd.f32 %v3130, %v3638
      %3640 = vmatprep.mubr.bf16.mxu0 %v3042
      %3641 = vmatmul.mubr.bf16.gmra.mrb[0].mxu0 %v3041
      %v3642 = vpop.f32.mrb[0].mxu0
      %v3643 = vadd.f32 %v3126, %v3642
      %v3644 = vpop.f32.mrb[0].mxu0
      %v3645 = vadd.f32 %v3130, %v3644
      %v3646 = vpop.f32.mrb[0].mxu0
      %v3647 = vadd.f32 %v3126, %v3646
      %v3648 = vpop.f32.mrb[0].mxu0
      %v3649 = vadd.f32 %v3130, %v3648
      %3650 = vmatprep.mubr.bf16.mxu0 %v3044
      %3651 = vmatmul.mubr.bf16.gmra.mrb[0].mxu0 %v3043
      %v3652 = vpop.f32.mrb[0].mxu0
      %v3653 = vadd.f32 %v3126, %v3652
      %v3654 = vpop.f32.mrb[0].mxu0
      %v3655 = vadd.f32 %v3130, %v3654
      %v3656 = vpop.f32.mrb[0].mxu0
      %v3657 = vadd.f32 %v3126, %v3656
      %v3658 = vpop.f32.mrb[0].mxu0
      %v3659 = vadd.f32 %v3130, %v3658
      %3660 = vmatprep.mubr.bf16.mxu0 %v3046
      %3661 = vmatmul.mubr.bf16.gmra.mrb[0].mxu0 %v3045
      %v3662 = vpop.f32.mrb[0].mxu0
      %v3663 = vadd.f32 %v3126, %v3662
      %v3664 = vpop.f32.mrb[0].mxu0
      %v3665 = vadd.f32 %v3130, %v3664
      %v3666 = vpop.f32.mrb[0].mxu0
      %v3667 = vadd.f32 %v3126, %v3666
      %v3668 = vpop.f32.mrb[0].mxu0
      %v3669 = vadd.f32 %v3130, %v3668
      %3670 = vmatprep.mubr.bf16.mxu0 %v3048
      %3671 = vmatmul.mubr.bf16.gmra.mrb[0].mxu0 %v3047
      %v3672 = vpop.f32.mrb[0].mxu0
      %v3673 = vadd.f32 %v3126, %v3672
      %v3674 = vpop.f32.mrb[0].mxu0
      %v3675 = vadd.f32 %v3130, %v3674
      %v3676 = vpop.f32.mrb[0].mxu0
      %v3677 = vadd.f32 %v3126, %v3676
      %v3678 = vpop.f32.mrb[0].mxu0
      %v3679 = vadd.f32 %v3130, %v3678
      %3680 = vdwg.mxu0
      %v3681 = vmax.f32 %v3490, 0.0
      %v3682 = vmax.f32 %v3492, 0.0
      %v3683 = vmax.f32 %v3603, 0.0
      %v3684 = vmax.f32 %v3605, 0.0
      %v3685 = vmax.f32 %v3494, 0.0
      %v3686 = vmax.f32 %v3496, 0.0
      %v3687 = vmax.f32 %v3607, 0.0
      %v3688 = vmax.f32 %v3609, 0.0
      %v3689 = vmax.f32 %v3500, 0.0
      %v3690 = vmax.f32 %v3502, 0.0
      %v3691 = vmax.f32 %v3613, 0.0
      %v3692 = vmax.f32 %v3615, 0.0
      %v3693 = vmax.f32 %v3504, 0.0
      %v3694 = vmax.f32 %v3506, 0.0
      %v3695 = vmax.f32 %v3617, 0.0
      %v3696 = vmax.f32 %v3619, 0.0
      %v3697 = vmax.f32 %v3510, 0.0
      %v3698 = vmax.f32 %v3512, 0.0
      %v3699 = vmax.f32 %v3623, 0.0
      %v3700 = vmax.f32 %v3625, 0.0
      %v3701 = vmax.f32 %v3514, 0.0
      %v3702 = vmax.f32 %v3516, 0.0
      %v3703 = vmax.f32 %v3627, 0.0
      %v3704 = vmax.f32 %v3629, 0.0
      %v3705 = vmax.f32 %v3520, 0.0
      %v3706 = vmax.f32 %v3522, 0.0
      %v3707 = vmax.f32 %v3633, 0.0
      %v3708 = vmax.f32 %v3635, 0.0
      %v3709 = vmax.f32 %v3524, 0.0
      %v3710 = vmax.f32 %v3526, 0.0
      %v3711 = vmax.f32 %v3637, 0.0
      %v3712 = vmax.f32 %v3639, 0.0
      %v3713 = vmax.f32 %v3530, 0.0
      %v3714 = vmax.f32 %v3532, 0.0
      %v3715 = vmax.f32 %v3643, 0.0
      %v3716 = vmax.f32 %v3645, 0.0
      %v3717 = vmax.f32 %v3534, 0.0
      %v3718 = vmax.f32 %v3536, 0.0
      %v3719 = vmax.f32 %v3647, 0.0
      %v3720 = vmax.f32 %v3649, 0.0
      %v3721 = vmax.f32 %v3540, 0.0
      %v3722 = vmax.f32 %v3542, 0.0
      %v3723 = vmax.f32 %v3653, 0.0
      %v3724 = vmax.f32 %v3655, 0.0
      %v3725 = vmax.f32 %v3544, 0.0
      %v3726 = vmax.f32 %v3546, 0.0
      %v3727 = vmax.f32 %v3657, 0.0
      %v3728 = vmax.f32 %v3659, 0.0
      %v3729 = vmax.f32 %v3550, 0.0
      %v3730 = vmax.f32 %v3552, 0.0
      %v3731 = vmax.f32 %v3663, 0.0
      %v3732 = vmax.f32 %v3665, 0.0
      %v3733 = vmax.f32 %v3554, 0.0
      %v3734 = vmax.f32 %v3556, 0.0
      %v3735 = vmax.f32 %v3667, 0.0
      %v3736 = vmax.f32 %v3669, 0.0
      %v3737 = vmax.f32 %v3560, 0.0
      %v3738 = vmax.f32 %v3562, 0.0
      %v3739 = vmax.f32 %v3673, 0.0
      %v3740 = vmax.f32 %v3675, 0.0
      %v3741 = vmax.f32 %v3564, 0.0
      %v3742 = vmax.f32 %v3566, 0.0
      %v3743 = vmax.f32 %v3677, 0.0
      %v3744 = vmax.f32 %v3679, 0.0
      %v3745 = vpack.c.bf16 %v3685, %v3681
      %v3746 = vpack.c.bf16 %v3686, %v3682
      %v3747 = vpack.c.bf16 %v3687, %v3683
      %v3748 = vpack.c.bf16 %v3688, %v3684
      %v3749 = vpack.c.bf16 %v3693, %v3689
      %v3750 = vpack.c.bf16 %v3694, %v3690
      %v3751 = vpack.c.bf16 %v3695, %v3691
      %v3752 = vpack.c.bf16 %v3696, %v3692
      %v3753 = vpack.c.bf16 %v3701, %v3697
      %v3754 = vpack.c.bf16 %v3702, %v3698
      %v3755 = vpack.c.bf16 %v3703, %v3699
      %v3756 = vpack.c.bf16 %v3704, %v3700
      %v3757 = vpack.c.bf16 %v3709, %v3705
      %v3758 = vpack.c.bf16 %v3710, %v3706
      %v3759 = vpack.c.bf16 %v3711, %v3707
      %v3760 = vpack.c.bf16 %v3712, %v3708
      %v3761 = vpack.c.bf16 %v3717, %v3713
      %v3762 = vpack.c.bf16 %v3718, %v3714
      %v3763 = vpack.c.bf16 %v3719, %v3715
      %v3764 = vpack.c.bf16 %v3720, %v3716
      %v3765 = vpack.c.bf16 %v3725, %v3721
      %v3766 = vpack.c.bf16 %v3726, %v3722
      %v3767 = vpack.c.bf16 %v3727, %v3723
      %v3768 = vpack.c.bf16 %v3728, %v3724
      %v3769 = vpack.c.bf16 %v3733, %v3729
      %v3770 = vpack.c.bf16 %v3734, %v3730
      %v3771 = vpack.c.bf16 %v3735, %v3731
      %v3772 = vpack.c.bf16 %v3736, %v3732
      %v3773 = vpack.c.bf16 %v3741, %v3737
      %v3774 = vpack.c.bf16 %v3742, %v3738
      %v3775 = vpack.c.bf16 %v3743, %v3739
      %v3776 = vpack.c.bf16 %v3744, %v3740
      %v3777 = vld [vmem:[%s9] sm:$0xff]
      %v3778 = vld [vmem:[%s9 + $0x8] sm:$0xff]
      %v3779 = vld [vmem:[%s9 + $0x10] sm:$0xff]
      %v3780 = vld [vmem:[%s9 + $0x18] sm:$0xff]
      %v3781 = vld [vmem:[%s9 + $0x20] sm:$0xff]
      %v3782 = vld [vmem:[%s9 + $0x28] sm:$0xff]
      %v3783 = vld [vmem:[%s9 + $0x30] sm:$0xff]
      %v3784 = vld [vmem:[%s9 + $0x38] sm:$0xff]
      %v3785 = vld [vmem:[%s9 + $0x40] sm:$0xff]
      %v3786 = vld [vmem:[%s9 + $0x48] sm:$0xff]
      %v3787 = vld [vmem:[%s9 + $0x50] sm:$0xff]
      %v3788 = vld [vmem:[%s9 + $0x58] sm:$0xff]
      %v3789 = vld [vmem:[%s9 + $0x60] sm:$0xff]
      %v3790 = vld [vmem:[%s9 + $0x68] sm:$0xff]
      %v3791 = vld [vmem:[%s9 + $0x70] sm:$0xff]
      %v3792 = vld [vmem:[%s9 + $0x78] sm:$0xff]
      %v3793 = vld [vmem:[%s9 + $0x80] sm:$0xff]
      %v3794 = vld [vmem:[%s9 + $0x88] sm:$0xff]
      %v3795 = vld [vmem:[%s9 + $0x90] sm:$0xff]
      %v3796 = vld [vmem:[%s9 + $0x98] sm:$0xff]
      %v3797 = vld [vmem:[%s9 + $0xa0] sm:$0xff]
      %v3798 = vld [vmem:[%s9 + $0xa8] sm:$0xff]
      %v3799 = vld [vmem:[%s9 + $0xb0] sm:$0xff]
      %v3800 = vld [vmem:[%s9 + $0xb8] sm:$0xff]
      %v3801 = vld [vmem:[%s9 + $0xc0] sm:$0xff]
      %v3802 = vld [vmem:[%s9 + $0xc8] sm:$0xff]
      %v3803 = vld [vmem:[%s9 + $0xd0] sm:$0xff]
      %v3804 = vld [vmem:[%s9 + $0xd8] sm:$0xff]
      %v3805 = vld [vmem:[%s9 + $0xe0] sm:$0xff]
      %v3806 = vld [vmem:[%s9 + $0xe8] sm:$0xff]
      %v3807 = vld [vmem:[%s9 + $0xf0] sm:$0xff]
      %v3808 = vld [vmem:[%s9 + $0xf8] sm:$0xff]
      %v3809 = vld [vmem:[%s9 + $0x100] sm:$0xff]
      %v3810 = vld [vmem:[%s9 + $0x108] sm:$0xff]
      %v3811 = vld [vmem:[%s9 + $0x110] sm:$0xff]
      %v3812 = vld [vmem:[%s9 + $0x118] sm:$0xff]
      %v3813 = vld [vmem:[%s9 + $0x120] sm:$0xff]
      %v3814 = vld [vmem:[%s9 + $0x128] sm:$0xff]
      %v3815 = vld [vmem:[%s9 + $0x130] sm:$0xff]
      %v3816 = vld [vmem:[%s9 + $0x138] sm:$0xff]
      %v3817 = vld [vmem:[%s9 + $0x140] sm:$0xff]
      %v3818 = vld [vmem:[%s9 + $0x148] sm:$0xff]
      %v3819 = vld [vmem:[%s9 + $0x150] sm:$0xff]
      %v3820 = vld [vmem:[%s9 + $0x158] sm:$0xff]
      %v3821 = vld [vmem:[%s9 + $0x160] sm:$0xff]
      %v3822 = vld [vmem:[%s9 + $0x168] sm:$0xff]
      %v3823 = vld [vmem:[%s9 + $0x170] sm:$0xff]
      %v3824 = vld [vmem:[%s9 + $0x178] sm:$0xff]
      %v3825 = vld [vmem:[%s9 + $0x180] sm:$0xff]
      %v3826 = vld [vmem:[%s9 + $0x188] sm:$0xff]
      %v3827 = vld [vmem:[%s9 + $0x190] sm:$0xff]
      %v3828 = vld [vmem:[%s9 + $0x198] sm:$0xff]
      %v3829 = vld [vmem:[%s9 + $0x1a0] sm:$0xff]
      %v3830 = vld [vmem:[%s9 + $0x1a8] sm:$0xff]
      %v3831 = vld [vmem:[%s9 + $0x1b0] sm:$0xff]
      %v3832 = vld [vmem:[%s9 + $0x1b8] sm:$0xff]
      %v3833 = vld [vmem:[%s9 + $0x1c0] sm:$0xff]
      %v3834 = vld [vmem:[%s9 + $0x1c8] sm:$0xff]
      %v3835 = vld [vmem:[%s9 + $0x1d0] sm:$0xff]
      %v3836 = vld [vmem:[%s9 + $0x1d8] sm:$0xff]
      %v3837 = vld [vmem:[%s9 + $0x1e0] sm:$0xff]
      %v3838 = vld [vmem:[%s9 + $0x1e8] sm:$0xff]
      %v3839 = vld [vmem:[%s9 + $0x1f0] sm:$0xff]
      %v3840 = vld [vmem:[%s9 + $0x1f8] sm:$0xff]
      %v3841 = vld [vmem:[%s10] sm:$0x3]
      %v3843 = vlaneseq
      %v3844 = vshrl.u32 %v3843, 7
      %v3845 = vsub.s32 0, %v3844
      %v3846 = vrot.slane %v3841, %v3845
      %v3847 = vlaneseq
      %v3848 = vshrl.u32 %v3847, 7
      %v3849 = vsub.s32 1, %v3848
      %v3850 = vrot.slane %v3841, %v3849
      %v3917 = vunpack.c.l.b16 %v3777
      %v3918 = vunpack.c.h.b16 %v3777
      %v3919 = vunpack.c.l.b16 %v3778
      %v3920 = vunpack.c.h.b16 %v3778
      %v3921 = vunpack.c.l.b16 %v3779
      %v3922 = vunpack.c.h.b16 %v3779
      %v3923 = vunpack.c.l.b16 %v3780
      %v3924 = vunpack.c.h.b16 %v3780
      %v3925 = vunpack.c.l.b16 %v3781
      %v3926 = vunpack.c.h.b16 %v3781
      %v3927 = vunpack.c.l.b16 %v3782
      %v3928 = vunpack.c.h.b16 %v3782
      %v3929 = vunpack.c.l.b16 %v3783
      %v3930 = vunpack.c.h.b16 %v3783
      %v3931 = vunpack.c.l.b16 %v3784
      %v3932 = vunpack.c.h.b16 %v3784
      %v3933 = vunpack.c.l.b16 %v3785
      %v3934 = vunpack.c.h.b16 %v3785
      %v3935 = vunpack.c.l.b16 %v3786
      %v3936 = vunpack.c.h.b16 %v3786
      %v3937 = vunpack.c.l.b16 %v3787
      %v3938 = vunpack.c.h.b16 %v3787
      %v3939 = vunpack.c.l.b16 %v3788
      %v3940 = vunpack.c.h.b16 %v3788
      %v3941 = vunpack.c.l.b16 %v3789
      %v3942 = vunpack.c.h.b16 %v3789
      %v3943 = vunpack.c.l.b16 %v3790
      %v3944 = vunpack.c.h.b16 %v3790
      %v3945 = vunpack.c.l.b16 %v3791
      %v3946 = vunpack.c.h.b16 %v3791
      %v3947 = vunpack.c.l.b16 %v3792
      %v3948 = vunpack.c.h.b16 %v3792
      %v3949 = vunpack.c.l.b16 %v3793
      %v3950 = vunpack.c.h.b16 %v3793
      %v3951 = vunpack.c.l.b16 %v3794
      %v3952 = vunpack.c.h.b16 %v3794
      %v3953 = vunpack.c.l.b16 %v3795
      %v3954 = vunpack.c.h.b16 %v3795
      %v3955 = vunpack.c.l.b16 %v3796
      %v3956 = vunpack.c.h.b16 %v3796
      %v3957 = vunpack.c.l.b16 %v3797
      %v3958 = vunpack.c.h.b16 %v3797
      %v3959 = vunpack.c.l.b16 %v3798
      %v3960 = vunpack.c.h.b16 %v3798
      %v3961 = vunpack.c.l.b16 %v3799
      %v3962 = vunpack.c.h.b16 %v3799
      %v3963 = vunpack.c.l.b16 %v3800
      %v3964 = vunpack.c.h.b16 %v3800
      %v3965 = vunpack.c.l.b16 %v3801
      %v3966 = vunpack.c.h.b16 %v3801
      %v3967 = vunpack.c.l.b16 %v3802
      %v3968 = vunpack.c.h.b16 %v3802
      %v3969 = vunpack.c.l.b16 %v3803
      %v3970 = vunpack.c.h.b16 %v3803
      %v3971 = vunpack.c.l.b16 %v3804
      %v3972 = vunpack.c.h.b16 %v3804
      %v3973 = vunpack.c.l.b16 %v3805
      %v3974 = vunpack.c.h.b16 %v3805
      %v3975 = vunpack.c.l.b16 %v3806
      %v3976 = vunpack.c.h.b16 %v3806
      %v3977 = vunpack.c.l.b16 %v3807
      %v3978 = vunpack.c.h.b16 %v3807
      %v3979 = vunpack.c.l.b16 %v3808
      %v3980 = vunpack.c.h.b16 %v3808
      %v3981 = vunpack.c.l.b16 %v3809
      %v3982 = vunpack.c.h.b16 %v3809
      %v3983 = vunpack.c.l.b16 %v3810
      %v3984 = vunpack.c.h.b16 %v3810
      %v3985 = vunpack.c.l.b16 %v3811
      %v3986 = vunpack.c.h.b16 %v3811
      %v3987 = vunpack.c.l.b16 %v3812
      %v3988 = vunpack.c.h.b16 %v3812
      %v3989 = vunpack.c.l.b16 %v3813
      %v3990 = vunpack.c.h.b16 %v3813
      %v3991 = vunpack.c.l.b16 %v3814
      %v3992 = vunpack.c.h.b16 %v3814
      %v3993 = vunpack.c.l.b16 %v3815
      %v3994 = vunpack.c.h.b16 %v3815
      %v3995 = vunpack.c.l.b16 %v3816
      %v3996 = vunpack.c.h.b16 %v3816
      %v3997 = vunpack.c.l.b16 %v3817
      %v3998 = vunpack.c.h.b16 %v3817
      %v3999 = vunpack.c.l.b16 %v3818
      %v4000 = vunpack.c.h.b16 %v3818
      %v4001 = vunpack.c.l.b16 %v3819
      %v4002 = vunpack.c.h.b16 %v3819
      %v4003 = vunpack.c.l.b16 %v3820
      %v4004 = vunpack.c.h.b16 %v3820
      %v4005 = vunpack.c.l.b16 %v3821
      %v4006 = vunpack.c.h.b16 %v3821
      %v4007 = vunpack.c.l.b16 %v3822
      %v4008 = vunpack.c.h.b16 %v3822
      %v4009 = vunpack.c.l.b16 %v3823
      %v4010 = vunpack.c.h.b16 %v3823
      %v4011 = vunpack.c.l.b16 %v3824
      %v4012 = vunpack.c.h.b16 %v3824
      %v4013 = vunpack.c.l.b16 %v3825
      %v4014 = vunpack.c.h.b16 %v3825
      %v4015 = vunpack.c.l.b16 %v3826
      %v4016 = vunpack.c.h.b16 %v3826
      %v4017 = vunpack.c.l.b16 %v3827
      %v4018 = vunpack.c.h.b16 %v3827
      %v4019 = vunpack.c.l.b16 %v3828
      %v4020 = vunpack.c.h.b16 %v3828
      %v4021 = vunpack.c.l.b16 %v3829
      %v4022 = vunpack.c.h.b16 %v3829
      %v4023 = vunpack.c.l.b16 %v3830
      %v4024 = vunpack.c.h.b16 %v3830
      %v4025 = vunpack.c.l.b16 %v3831
      %v4026 = vunpack.c.h.b16 %v3831
      %v4027 = vunpack.c.l.b16 %v3832
      %v4028 = vunpack.c.h.b16 %v3832
      %v4029 = vunpack.c.l.b16 %v3833
      %v4030 = vunpack.c.h.b16 %v3833
      %v4031 = vunpack.c.l.b16 %v3834
      %v4032 = vunpack.c.h.b16 %v3834
      %v4033 = vunpack.c.l.b16 %v3835
      %v4034 = vunpack.c.h.b16 %v3835
      %v4035 = vunpack.c.l.b16 %v3836
      %v4036 = vunpack.c.h.b16 %v3836
      %v4037 = vunpack.c.l.b16 %v3837
      %v4038 = vunpack.c.h.b16 %v3837
      %v4039 = vunpack.c.l.b16 %v3838
      %v4040 = vunpack.c.h.b16 %v3838
      %v4041 = vunpack.c.l.b16 %v3839
      %v4042 = vunpack.c.h.b16 %v3839
      %v4043 = vunpack.c.l.b16 %v3840
      %v4044 = vunpack.c.h.b16 %v3840
      %v4045 = vpack.c.b16 %v3919, %v3917
      %v4046 = vpack.c.b16 %v3920, %v3918
      %v4047 = vpack.c.b16 %v3923, %v3921
      %v4048 = vpack.c.b16 %v3924, %v3922
      %v4049 = vpack.c.b16 %v3927, %v3925
      %v4050 = vpack.c.b16 %v3928, %v3926
      %v4051 = vpack.c.b16 %v3931, %v3929
      %v4052 = vpack.c.b16 %v3932, %v3930
      %v4053 = vpack.c.b16 %v3935, %v3933
      %v4054 = vpack.c.b16 %v3936, %v3934
      %v4055 = vpack.c.b16 %v3939, %v3937
      %v4056 = vpack.c.b16 %v3940, %v3938
      %v4057 = vpack.c.b16 %v3943, %v3941
      %v4058 = vpack.c.b16 %v3944, %v3942
      %v4059 = vpack.c.b16 %v3947, %v3945
      %v4060 = vpack.c.b16 %v3948, %v3946
      %v4061 = vpack.c.b16 %v3951, %v3949
      %v4062 = vpack.c.b16 %v3952, %v3950
      %v4063 = vpack.c.b16 %v3955, %v3953
      %v4064 = vpack.c.b16 %v3956, %v3954
      %v4065 = vpack.c.b16 %v3959, %v3957
      %v4066 = vpack.c.b16 %v3960, %v3958
      %v4067 = vpack.c.b16 %v3963, %v3961
      %v4068 = vpack.c.b16 %v3964, %v3962
      %v4069 = vpack.c.b16 %v3967, %v3965
      %v4070 = vpack.c.b16 %v3968, %v3966
      %v4071 = vpack.c.b16 %v3971, %v3969
      %v4072 = vpack.c.b16 %v3972, %v3970
      %v4073 = vpack.c.b16 %v3975, %v3973
      %v4074 = vpack.c.b16 %v3976, %v3974
      %v4075 = vpack.c.b16 %v3979, %v3977
      %v4076 = vpack.c.b16 %v3980, %v3978
      %v4077 = vpack.c.b16 %v3983, %v3981
      %v4078 = vpack.c.b16 %v3984, %v3982
      %v4079 = vpack.c.b16 %v3987, %v3985
      %v4080 = vpack.c.b16 %v3988, %v3986
      %v4081 = vpack.c.b16 %v3991, %v3989
      %v4082 = vpack.c.b16 %v3992, %v3990
      %v4083 = vpack.c.b16 %v3995, %v3993
      %v4084 = vpack.c.b16 %v3996, %v3994
      %v4085 = vpack.c.b16 %v3999, %v3997
      %v4086 = vpack.c.b16 %v4000, %v3998
      %v4087 = vpack.c.b16 %v4003, %v4001
      %v4088 = vpack.c.b16 %v4004, %v4002
      %v4089 = vpack.c.b16 %v4007, %v4005
      %v4090 = vpack.c.b16 %v4008, %v4006
      %v4091 = vpack.c.b16 %v4011, %v4009
      %v4092 = vpack.c.b16 %v4012, %v4010
      %v4093 = vpack.c.b16 %v4015, %v4013
      %v4094 = vpack.c.b16 %v4016, %v4014
      %v4095 = vpack.c.b16 %v4019, %v4017
      %v4096 = vpack.c.b16 %v4020, %v4018
      %v4097 = vpack.c.b16 %v4023, %v4021
      %v4098 = vpack.c.b16 %v4024, %v4022
      %v4099 = vpack.c.b16 %v4027, %v4025
      %v4100 = vpack.c.b16 %v4028, %v4026
      %v4101 = vpack.c.b16 %v4031, %v4029
      %v4102 = vpack.c.b16 %v4032, %v4030
      %v4103 = vpack.c.b16 %v4035, %v4033
      %v4104 = vpack.c.b16 %v4036, %v4034
      %v4105 = vpack.c.b16 %v4039, %v4037
      %v4106 = vpack.c.b16 %v4040, %v4038
      %v4107 = vpack.c.b16 %v4043, %v4041
      %v4108 = vpack.c.b16 %v4044, %v4042
      %4173 = vmatprep.subr.bf16.mxu0 %v4046
      %4174 = vmatpush1.bf16.msra.mxu0 %v4045
      %4175 = vmatprep.subr.bf16.mxu0 %v4048
      %4176 = vmatpush1.bf16.msra.mxu0 %v4047
      %4177 = vmatprep.subr.bf16.mxu0 %v4050
      %4178 = vmatpush1.bf16.msra.mxu0 %v4049
      %4179 = vmatprep.subr.bf16.mxu0 %v4052
      %4180 = vmatpush1.bf16.msra.mxu0 %v4051
      %4181 = vmatprep.subr.bf16.mxu0 %v4054
      %4182 = vmatpush1.bf16.msra.mxu0 %v4053
      %4183 = vmatprep.subr.bf16.mxu0 %v4056
      %4184 = vmatpush1.bf16.msra.mxu0 %v4055
      %4185 = vmatprep.subr.bf16.mxu0 %v4058
      %4186 = vmatpush1.bf16.msra.mxu0 %v4057
      %4187 = vmatprep.subr.bf16.mxu0 %v4060
      %4188 = vmatpush1.bf16.msra.mxu0 %v4059
      %4189 = vmatprep.subr.bf16.mxu0 %v4062
      %4190 = vmatpush1.bf16.msra.mxu0 %v4061
      %4191 = vmatprep.subr.bf16.mxu0 %v4064
      %4192 = vmatpush1.bf16.msra.mxu0 %v4063
      %4193 = vmatprep.subr.bf16.mxu0 %v4066
      %4194 = vmatpush1.bf16.msra.mxu0 %v4065
      %4195 = vmatprep.subr.bf16.mxu0 %v4068
      %4196 = vmatpush1.bf16.msra.mxu0 %v4067
      %4197 = vmatprep.subr.bf16.mxu0 %v4070
      %4198 = vmatpush1.bf16.msra.mxu0 %v4069
      %4199 = vmatprep.subr.bf16.mxu0 %v4072
      %4200 = vmatpush1.bf16.msra.mxu0 %v4071
      %4201 = vmatprep.subr.bf16.mxu0 %v4074
      %4202 = vmatpush1.bf16.msra.mxu0 %v4073
      %4203 = vmatprep.subr.bf16.mxu0 %v4076
      %4204 = vmatpush1.bf16.msra.mxu0 %v4075
      %4205 = vmatprep.mubr.bf16.mxu0 %v3746
      %4206 = vmatmul.mubr.bf16.gmra.mrb[0].mxu0 %v3745
      %v4207 = vpop.f32.mrb[0].mxu0
      %v4208 = vadd.f32 %v3846, %v4207
      %v4209 = vpop.f32.mrb[0].mxu0
      %v4210 = vadd.f32 %v3850, %v4209
      %v4211 = vpop.f32.mrb[0].mxu0
      %v4212 = vadd.f32 %v3846, %v4211
      %v4213 = vpop.f32.mrb[0].mxu0
      %v4214 = vadd.f32 %v3850, %v4213
      %4215 = vmatprep.mubr.bf16.mxu0 %v3750
      %4216 = vmatmul.mubr.bf16.gmra.mrb[0].mxu0 %v3749
      %v4217 = vpop.f32.mrb[0].mxu0
      %v4218 = vadd.f32 %v3846, %v4217
      %v4219 = vpop.f32.mrb[0].mxu0
      %v4220 = vadd.f32 %v3850, %v4219
      %v4221 = vpop.f32.mrb[0].mxu0
      %v4222 = vadd.f32 %v3846, %v4221
      %v4223 = vpop.f32.mrb[0].mxu0
      %v4224 = vadd.f32 %v3850, %v4223
      %4225 = vmatprep.mubr.bf16.mxu0 %v3754
      %4226 = vmatmul.mubr.bf16.gmra.mrb[0].mxu0 %v3753
      %v4227 = vpop.f32.mrb[0].mxu0
      %v4228 = vadd.f32 %v3846, %v4227
      %v4229 = vpop.f32.mrb[0].mxu0
      %v4230 = vadd.f32 %v3850, %v4229
      %v4231 = vpop.f32.mrb[0].mxu0
      %v4232 = vadd.f32 %v3846, %v4231
      %v4233 = vpop.f32.mrb[0].mxu0
      %v4234 = vadd.f32 %v3850, %v4233
      %4235 = vmatprep.mubr.bf16.mxu0 %v3758
      %4236 = vmatmul.mubr.bf16.gmra.mrb[0].mxu0 %v3757
      %v4237 = vpop.f32.mrb[0].mxu0
      %v4238 = vadd.f32 %v3846, %v4237
      %v4239 = vpop.f32.mrb[0].mxu0
      %v4240 = vadd.f32 %v3850, %v4239
      %v4241 = vpop.f32.mrb[0].mxu0
      %v4242 = vadd.f32 %v3846, %v4241
      %v4243 = vpop.f32.mrb[0].mxu0
      %v4244 = vadd.f32 %v3850, %v4243
      %4245 = vmatprep.mubr.bf16.mxu0 %v3762
      %4246 = vmatmul.mubr.bf16.gmra.mrb[0].mxu0 %v3761
      %v4247 = vpop.f32.mrb[0].mxu0
      %v4248 = vadd.f32 %v3846, %v4247
      %v4249 = vpop.f32.mrb[0].mxu0
      %v4250 = vadd.f32 %v3850, %v4249
      %v4251 = vpop.f32.mrb[0].mxu0
      %v4252 = vadd.f32 %v3846, %v4251
      %v4253 = vpop.f32.mrb[0].mxu0
      %v4254 = vadd.f32 %v3850, %v4253
      %4255 = vmatprep.mubr.bf16.mxu0 %v3766
      %4256 = vmatmul.mubr.bf16.gmra.mrb[0].mxu0 %v3765
      %v4257 = vpop.f32.mrb[0].mxu0
      %v4258 = vadd.f32 %v3846, %v4257
      %v4259 = vpop.f32.mrb[0].mxu0
      %v4260 = vadd.f32 %v3850, %v4259
      %v4261 = vpop.f32.mrb[0].mxu0
      %v4262 = vadd.f32 %v3846, %v4261
      %v4263 = vpop.f32.mrb[0].mxu0
      %v4264 = vadd.f32 %v3850, %v4263
      %4265 = vmatprep.mubr.bf16.mxu0 %v3770
      %4266 = vmatmul.mubr.bf16.gmra.mrb[0].mxu0 %v3769
      %v4267 = vpop.f32.mrb[0].mxu0
      %v4268 = vadd.f32 %v3846, %v4267
      %v4269 = vpop.f32.mrb[0].mxu0
      %v4270 = vadd.f32 %v3850, %v4269
      %v4271 = vpop.f32.mrb[0].mxu0
      %v4272 = vadd.f32 %v3846, %v4271
      %v4273 = vpop.f32.mrb[0].mxu0
      %v4274 = vadd.f32 %v3850, %v4273
      %4275 = vmatprep.mubr.bf16.mxu0 %v3774
      %4276 = vmatmul.mubr.bf16.gmra.mrb[0].mxu0 %v3773
      %v4277 = vpop.f32.mrb[0].mxu0
      %v4278 = vadd.f32 %v3846, %v4277
      %v4279 = vpop.f32.mrb[0].mxu0
      %v4280 = vadd.f32 %v3850, %v4279
      %v4281 = vpop.f32.mrb[0].mxu0
      %v4282 = vadd.f32 %v3846, %v4281
      %v4283 = vpop.f32.mrb[0].mxu0
      %v4284 = vadd.f32 %v3850, %v4283
      %4285 = vdwg.mxu0
      %4286 = vmatprep.subr.bf16.mxu0 %v4078
      %4287 = vmatpush1.bf16.msra.mxu0 %v4077
      %4288 = vmatprep.subr.bf16.mxu0 %v4080
      %4289 = vmatpush1.bf16.msra.mxu0 %v4079
      %4290 = vmatprep.subr.bf16.mxu0 %v4082
      %4291 = vmatpush1.bf16.msra.mxu0 %v4081
      %4292 = vmatprep.subr.bf16.mxu0 %v4084
      %4293 = vmatpush1.bf16.msra.mxu0 %v4083
      %4294 = vmatprep.subr.bf16.mxu0 %v4086
      %4295 = vmatpush1.bf16.msra.mxu0 %v4085
      %4296 = vmatprep.subr.bf16.mxu0 %v4088
      %4297 = vmatpush1.bf16.msra.mxu0 %v4087
      %4298 = vmatprep.subr.bf16.mxu0 %v4090
      %4299 = vmatpush1.bf16.msra.mxu0 %v4089
      %4300 = vmatprep.subr.bf16.mxu0 %v4092
      %4301 = vmatpush1.bf16.msra.mxu0 %v4091
      %4302 = vmatprep.subr.bf16.mxu0 %v4094
      %4303 = vmatpush1.bf16.msra.mxu0 %v4093
      %4304 = vmatprep.subr.bf16.mxu0 %v4096
      %4305 = vmatpush1.bf16.msra.mxu0 %v4095
      %4306 = vmatprep.subr.bf16.mxu0 %v4098
      %4307 = vmatpush1.bf16.msra.mxu0 %v4097
      %4308 = vmatprep.subr.bf16.mxu0 %v4100
      %4309 = vmatpush1.bf16.msra.mxu0 %v4099
      %4310 = vmatprep.subr.bf16.mxu0 %v4102
      %4311 = vmatpush1.bf16.msra.mxu0 %v4101
      %4312 = vmatprep.subr.bf16.mxu0 %v4104
      %4313 = vmatpush1.bf16.msra.mxu0 %v4103
      %4314 = vmatprep.subr.bf16.mxu0 %v4106
      %4315 = vmatpush1.bf16.msra.mxu0 %v4105
      %4316 = vmatprep.subr.bf16.mxu0 %v4108
      %4317 = vmatpush1.bf16.msra.mxu0 %v4107
      %4318 = vmatprep.mubr.bf16.mxu0 %v3748
      %4319 = vmatmul.mubr.bf16.gmra.mrb[0].mxu0 %v3747
      %v4320 = vpop.f32.mrb[0].mxu0
      %v4321 = vadd.f32 %v4208, %v4320
      %v4322 = vpop.f32.mrb[0].mxu0
      %v4323 = vadd.f32 %v4210, %v4322
      %v4324 = vpop.f32.mrb[0].mxu0
      %v4325 = vadd.f32 %v4212, %v4324
      %v4326 = vpop.f32.mrb[0].mxu0
      %v4327 = vadd.f32 %v4214, %v4326
      %4328 = vmatprep.mubr.bf16.mxu0 %v3752
      %4329 = vmatmul.mubr.bf16.gmra.mrb[0].mxu0 %v3751
      %v4330 = vpop.f32.mrb[0].mxu0
      %v4331 = vadd.f32 %v4218, %v4330
      %v4332 = vpop.f32.mrb[0].mxu0
      %v4333 = vadd.f32 %v4220, %v4332
      %v4334 = vpop.f32.mrb[0].mxu0
      %v4335 = vadd.f32 %v4222, %v4334
      %v4336 = vpop.f32.mrb[0].mxu0
      %v4337 = vadd.f32 %v4224, %v4336
      %4338 = vmatprep.mubr.bf16.mxu0 %v3756
      %4339 = vmatmul.mubr.bf16.gmra.mrb[0].mxu0 %v3755
      %v4340 = vpop.f32.mrb[0].mxu0
      %v4341 = vadd.f32 %v4228, %v4340
      %v4342 = vpop.f32.mrb[0].mxu0
      %v4343 = vadd.f32 %v4230, %v4342
      %v4344 = vpop.f32.mrb[0].mxu0
      %v4345 = vadd.f32 %v4232, %v4344
      %v4346 = vpop.f32.mrb[0].mxu0
      %v4347 = vadd.f32 %v4234, %v4346
      %4348 = vmatprep.mubr.bf16.mxu0 %v3760
      %4349 = vmatmul.mubr.bf16.gmra.mrb[0].mxu0 %v3759
      %v4350 = vpop.f32.mrb[0].mxu0
      %v4351 = vadd.f32 %v4238, %v4350
      %v4352 = vpop.f32.mrb[0].mxu0
      %v4353 = vadd.f32 %v4240, %v4352
      %v4354 = vpop.f32.mrb[0].mxu0
      %v4355 = vadd.f32 %v4242, %v4354
      %v4356 = vpop.f32.mrb[0].mxu0
      %v4357 = vadd.f32 %v4244, %v4356
      %4358 = vmatprep.mubr.bf16.mxu0 %v3764
      %4359 = vmatmul.mubr.bf16.gmra.mrb[0].mxu0 %v3763
      %v4360 = vpop.f32.mrb[0].mxu0
      %v4361 = vadd.f32 %v4248, %v4360
      %v4362 = vpop.f32.mrb[0].mxu0
      %v4363 = vadd.f32 %v4250, %v4362
      %v4364 = vpop.f32.mrb[0].mxu0
      %v4365 = vadd.f32 %v4252, %v4364
      %v4366 = vpop.f32.mrb[0].mxu0
      %v4367 = vadd.f32 %v4254, %v4366
      %4368 = vmatprep.mubr.bf16.mxu0 %v3768
      %4369 = vmatmul.mubr.bf16.gmra.mrb[0].mxu0 %v3767
      %v4370 = vpop.f32.mrb[0].mxu0
      %v4371 = vadd.f32 %v4258, %v4370
      %v4372 = vpop.f32.mrb[0].mxu0
      %v4373 = vadd.f32 %v4260, %v4372
      %v4374 = vpop.f32.mrb[0].mxu0
      %v4375 = vadd.f32 %v4262, %v4374
      %v4376 = vpop.f32.mrb[0].mxu0
      %v4377 = vadd.f32 %v4264, %v4376
      %4378 = vmatprep.mubr.bf16.mxu0 %v3772
      %4379 = vmatmul.mubr.bf16.gmra.mrb[0].mxu0 %v3771
      %v4380 = vpop.f32.mrb[0].mxu0
      %v4381 = vadd.f32 %v4268, %v4380
      %v4382 = vpop.f32.mrb[0].mxu0
      %v4383 = vadd.f32 %v4270, %v4382
      %v4384 = vpop.f32.mrb[0].mxu0
      %v4385 = vadd.f32 %v4272, %v4384
      %v4386 = vpop.f32.mrb[0].mxu0
      %v4387 = vadd.f32 %v4274, %v4386
      %4388 = vmatprep.mubr.bf16.mxu0 %v3776
      %4389 = vmatmul.mubr.bf16.gmra.mrb[0].mxu0 %v3775
      %v4390 = vpop.f32.mrb[0].mxu0
      %v4391 = vadd.f32 %v4278, %v4390
      %v4392 = vpop.f32.mrb[0].mxu0
      %v4393 = vadd.f32 %v4280, %v4392
      %v4394 = vpop.f32.mrb[0].mxu0
      %v4395 = vadd.f32 %v4282, %v4394
      %v4396 = vpop.f32.mrb[0].mxu0
      %v4397 = vadd.f32 %v4284, %v4396
      %4398 = vdwg.mxu0
      %v4399 = vadd.f32 %v3001, %v4321
      %v4400 = vadd.f32 %v3002, %v4323
      %v4401 = vadd.f32 %v3003, %v4325
      %v4402 = vadd.f32 %v3004, %v4327
      %v4403 = vadd.f32 %v3005, %v4331
      %v4404 = vadd.f32 %v3006, %v4333
      %v4405 = vadd.f32 %v3007, %v4335
      %v4406 = vadd.f32 %v3008, %v4337
      %v4407 = vadd.f32 %v3009, %v4341
      %v4408 = vadd.f32 %v3010, %v4343
      %v4409 = vadd.f32 %v3011, %v4345
      %v4410 = vadd.f32 %v3012, %v4347
      %v4411 = vadd.f32 %v3013, %v4351
      %v4412 = vadd.f32 %v3014, %v4353
      %v4413 = vadd.f32 %v3015, %v4355
      %v4414 = vadd.f32 %v3016, %v4357
      %v4415 = vadd.f32 %v3017, %v4361
      %v4416 = vadd.f32 %v3018, %v4363
      %v4417 = vadd.f32 %v3019, %v4365
      %v4418 = vadd.f32 %v3020, %v4367
      %v4419 = vadd.f32 %v3021, %v4371
      %v4420 = vadd.f32 %v3022, %v4373
      %v4421 = vadd.f32 %v3023, %v4375
      %v4422 = vadd.f32 %v3024, %v4377
      %v4423 = vadd.f32 %v3025, %v4381
      %v4424 = vadd.f32 %v3026, %v4383
      %v4425 = vadd.f32 %v3027, %v4385
      %v4426 = vadd.f32 %v3028, %v4387
      %v4427 = vadd.f32 %v3029, %v4391
      %v4428 = vadd.f32 %v3030, %v4393
      %v4429 = vadd.f32 %v3031, %v4395
      %v4430 = vadd.f32 %v3032, %v4397
      %v4431 = vld [vmem:[%s11] sm:$0x3]
      %v4432 = vld [vmem:[%s12] sm:$0x3]
      %v4433 = vadd.f32 %v4399, %v4400
      %4434 = vadd.xlane.f32.xlu0 %v4433
      %v4435 = vpop.xlane.xlu0 %4434
      %v4436 = vadd.f32 %v4401, %v4402
      %4437 = vadd.xlane.f32.xlu0 %v4436
      %v4438 = vpop.xlane.xlu0 %4437
      %v4439 = vadd.f32 %v4403, %v4404
      %4440 = vadd.xlane.f32.xlu0 %v4439
      %v4441 = vpop.xlane.xlu0 %4440
      %v4442 = vadd.f32 %v4405, %v4406
      %4443 = vadd.xlane.f32.xlu0 %v4442
      %v4444 = vpop.xlane.xlu0 %4443
      %v4445 = vadd.f32 %v4407, %v4408
      %4446 = vadd.xlane.f32.xlu0 %v4445
      %v4447 = vpop.xlane.xlu0 %4446
      %v4448 = vadd.f32 %v4409, %v4410
      %4449 = vadd.xlane.f32.xlu0 %v4448
      %v4450 = vpop.xlane.xlu0 %4449
      %v4451 = vadd.f32 %v4411, %v4412
      %4452 = vadd.xlane.f32.xlu0 %v4451
      %v4453 = vpop.xlane.xlu0 %4452
      %v4454 = vadd.f32 %v4413, %v4414
      %4455 = vadd.xlane.f32.xlu0 %v4454
      %v4456 = vpop.xlane.xlu0 %4455
      %v4457 = vadd.f32 %v4415, %v4416
      %4458 = vadd.xlane.f32.xlu0 %v4457
      %v4459 = vpop.xlane.xlu0 %4458
      %v4460 = vadd.f32 %v4417, %v4418
      %4461 = vadd.xlane.f32.xlu0 %v4460
      %v4462 = vpop.xlane.xlu0 %4461
      %v4463 = vadd.f32 %v4419, %v4420
      %4464 = vadd.xlane.f32.xlu0 %v4463
      %v4465 = vpop.xlane.xlu0 %4464
      %v4466 = vadd.f32 %v4421, %v4422
      %4467 = vadd.xlane.f32.xlu0 %v4466
      %v4468 = vpop.xlane.xlu0 %4467
      %v4469 = vadd.f32 %v4423, %v4424
      %4470 = vadd.xlane.f32.xlu0 %v4469
      %v4471 = vpop.xlane.xlu0 %4470
      %v4472 = vadd.f32 %v4425, %v4426
      %4473 = vadd.xlane.f32.xlu0 %v4472
      %v4474 = vpop.xlane.xlu0 %4473
      %v4475 = vadd.f32 %v4427, %v4428
      %4476 = vadd.xlane.f32.xlu0 %v4475
      %v4477 = vpop.xlane.xlu0 %4476
      %v4478 = vadd.f32 %v4429, %v4430
      %4479 = vadd.xlane.f32.xlu0 %v4478
      %v4480 = vpop.xlane.xlu0 %4479
      %v4481 = vmul.f32 %v4435, %v2738
      %v4482 = vmul.f32 %v4438, %v2738
      %v4483 = vmul.f32 %v4441, %v2738
      %v4484 = vmul.f32 %v4444, %v2738
      %v4485 = vmul.f32 %v4447, %v2738
      %v4486 = vmul.f32 %v4450, %v2738
      %v4487 = vmul.f32 %v4453, %v2738
      %v4488 = vmul.f32 %v4456, %v2738
      %v4489 = vmul.f32 %v4459, %v2738
      %v4490 = vmul.f32 %v4462, %v2738
      %v4491 = vmul.f32 %v4465, %v2738
      %v4492 = vmul.f32 %v4468, %v2738
      %v4493 = vmul.f32 %v4471, %v2738
      %v4494 = vmul.f32 %v4474, %v2738
      %v4495 = vmul.f32 %v4477, %v2738
      %v4496 = vmul.f32 %v4480, %v2738
      %v4497 = vsub.f32 %v4399, %v4481
      %v4498 = vsub.f32 %v4400, %v4481
      %v4499 = vsub.f32 %v4401, %v4482
      %v4500 = vsub.f32 %v4402, %v4482
      %v4501 = vsub.f32 %v4403, %v4483
      %v4502 = vsub.f32 %v4404, %v4483
      %v4503 = vsub.f32 %v4405, %v4484
      %v4504 = vsub.f32 %v4406, %v4484
      %v4505 = vsub.f32 %v4407, %v4485
      %v4506 = vsub.f32 %v4408, %v4485
      %v4507 = vsub.f32 %v4409, %v4486
      %v4508 = vsub.f32 %v4410, %v4486
      %v4509 = vsub.f32 %v4411, %v4487
      %v4510 = vsub.f32 %v4412, %v4487
      %v4511 = vsub.f32 %v4413, %v4488
      %v4512 = vsub.f32 %v4414, %v4488
      %v4513 = vsub.f32 %v4415, %v4489
      %v4514 = vsub.f32 %v4416, %v4489
      %v4515 = vsub.f32 %v4417, %v4490
      %v4516 = vsub.f32 %v4418, %v4490
      %v4517 = vsub.f32 %v4419, %v4491
      %v4518 = vsub.f32 %v4420, %v4491
      %v4519 = vsub.f32 %v4421, %v4492
      %v4520 = vsub.f32 %v4422, %v4492
      %v4521 = vsub.f32 %v4423, %v4493
      %v4522 = vsub.f32 %v4424, %v4493
      %v4523 = vsub.f32 %v4425, %v4494
      %v4524 = vsub.f32 %v4426, %v4494
      %v4525 = vsub.f32 %v4427, %v4495
      %v4526 = vsub.f32 %v4428, %v4495
      %v4527 = vsub.f32 %v4429, %v4496
      %v4528 = vsub.f32 %v4430, %v4496
      %v4529 = vmul.f32 %v4497, %v4497
      %v4530 = vmul.f32 %v4498, %v4498
      %v4531 = vmul.f32 %v4499, %v4499
      %v4532 = vmul.f32 %v4500, %v4500
      %v4533 = vmul.f32 %v4501, %v4501
      %v4534 = vmul.f32 %v4502, %v4502
      %v4535 = vmul.f32 %v4503, %v4503
      %v4536 = vmul.f32 %v4504, %v4504
      %v4537 = vmul.f32 %v4505, %v4505
      %v4538 = vmul.f32 %v4506, %v4506
      %v4539 = vmul.f32 %v4507, %v4507
      %v4540 = vmul.f32 %v4508, %v4508
      %v4541 = vmul.f32 %v4509, %v4509
      %v4542 = vmul.f32 %v4510, %v4510
      %v4543 = vmul.f32 %v4511, %v4511
      %v4544 = vmul.f32 %v4512, %v4512
      %v4545 = vmul.f32 %v4513, %v4513
      %v4546 = vmul.f32 %v4514, %v4514
      %v4547 = vmul.f32 %v4515, %v4515
      %v4548 = vmul.f32 %v4516, %v4516
      %v4549 = vmul.f32 %v4517, %v4517
      %v4550 = vmul.f32 %v4518, %v4518
      %v4551 = vmul.f32 %v4519, %v4519
      %v4552 = vmul.f32 %v4520, %v4520
      %v4553 = vmul.f32 %v4521, %v4521
      %v4554 = vmul.f32 %v4522, %v4522
      %v4555 = vmul.f32 %v4523, %v4523
      %v4556 = vmul.f32 %v4524, %v4524
      %v4557 = vmul.f32 %v4525, %v4525
      %v4558 = vmul.f32 %v4526, %v4526
      %v4559 = vmul.f32 %v4527, %v4527
      %v4560 = vmul.f32 %v4528, %v4528
      %v4561 = vadd.f32 %v4529, %v4530
      %4562 = vadd.xlane.f32.xlu0 %v4561
      %v4563 = vpop.xlane.xlu0 %4562
      %v4564 = vadd.f32 %v4531, %v4532
      %4565 = vadd.xlane.f32.xlu0 %v4564
      %v4566 = vpop.xlane.xlu0 %4565
      %v4567 = vadd.f32 %v4533, %v4534
      %4568 = vadd.xlane.f32.xlu0 %v4567
      %v4569 = vpop.xlane.xlu0 %4568
      %v4570 = vadd.f32 %v4535, %v4536
      %4571 = vadd.xlane.f32.xlu0 %v4570
      %v4572 = vpop.xlane.xlu0 %4571
      %v4573 = vadd.f32 %v4537, %v4538
      %4574 = vadd.xlane.f32.xlu0 %v4573
      %v4575 = vpop.xlane.xlu0 %4574
      %v4576 = vadd.f32 %v4539, %v4540
      %4577 = vadd.xlane.f32.xlu0 %v4576
      %v4578 = vpop.xlane.xlu0 %4577
      %v4579 = vadd.f32 %v4541, %v4542
      %4580 = vadd.xlane.f32.xlu0 %v4579
      %v4581 = vpop.xlane.xlu0 %4580
      %v4582 = vadd.f32 %v4543, %v4544
      %4583 = vadd.xlane.f32.xlu0 %v4582
      %v4584 = vpop.xlane.xlu0 %4583
      %v4585 = vadd.f32 %v4545, %v4546
      %4586 = vadd.xlane.f32.xlu0 %v4585
      %v4587 = vpop.xlane.xlu0 %4586
      %v4588 = vadd.f32 %v4547, %v4548
      %4589 = vadd.xlane.f32.xlu0 %v4588
      %v4590 = vpop.xlane.xlu0 %4589
      %v4591 = vadd.f32 %v4549, %v4550
      %4592 = vadd.xlane.f32.xlu0 %v4591
      %v4593 = vpop.xlane.xlu0 %4592
      %v4594 = vadd.f32 %v4551, %v4552
      %4595 = vadd.xlane.f32.xlu0 %v4594
      %v4596 = vpop.xlane.xlu0 %4595
      %v4597 = vadd.f32 %v4553, %v4554
      %4598 = vadd.xlane.f32.xlu0 %v4597
      %v4599 = vpop.xlane.xlu0 %4598
      %v4600 = vadd.f32 %v4555, %v4556
      %4601 = vadd.xlane.f32.xlu0 %v4600
      %v4602 = vpop.xlane.xlu0 %4601
      %v4603 = vadd.f32 %v4557, %v4558
      %4604 = vadd.xlane.f32.xlu0 %v4603
      %v4605 = vpop.xlane.xlu0 %4604
      %v4606 = vadd.f32 %v4559, %v4560
      %4607 = vadd.xlane.f32.xlu0 %v4606
      %v4608 = vpop.xlane.xlu0 %4607
      %v4609 = vmul.f32 %v4563, %v2738
      %v4610 = vmul.f32 %v4566, %v2738
      %v4611 = vmul.f32 %v4569, %v2738
      %v4612 = vmul.f32 %v4572, %v2738
      %v4613 = vmul.f32 %v4575, %v2738
      %v4614 = vmul.f32 %v4578, %v2738
      %v4615 = vmul.f32 %v4581, %v2738
      %v4616 = vmul.f32 %v4584, %v2738
      %v4617 = vmul.f32 %v4587, %v2738
      %v4618 = vmul.f32 %v4590, %v2738
      %v4619 = vmul.f32 %v4593, %v2738
      %v4620 = vmul.f32 %v4596, %v2738
      %v4621 = vmul.f32 %v4599, %v2738
      %v4622 = vmul.f32 %v4602, %v2738
      %v4623 = vmul.f32 %v4605, %v2738
      %v4624 = vmul.f32 %v4608, %v2738
      %v4625 = vadd.f32 %v4609, 1e-05
      %v4626 = vadd.f32 %v4610, 1e-05
      %v4627 = vadd.f32 %v4611, 1e-05
      %v4628 = vadd.f32 %v4612, 1e-05
      %v4629 = vadd.f32 %v4613, 1e-05
      %v4630 = vadd.f32 %v4614, 1e-05
      %v4631 = vadd.f32 %v4615, 1e-05
      %v4632 = vadd.f32 %v4616, 1e-05
      %v4633 = vadd.f32 %v4617, 1e-05
      %v4634 = vadd.f32 %v4618, 1e-05
      %v4635 = vadd.f32 %v4619, 1e-05
      %v4636 = vadd.f32 %v4620, 1e-05
      %v4637 = vadd.f32 %v4621, 1e-05
      %v4638 = vadd.f32 %v4622, 1e-05
      %v4639 = vadd.f32 %v4623, 1e-05
      %v4640 = vadd.f32 %v4624, 1e-05
      %v4641 = vrsqrt.pop %v4625
      %v4642 = vrsqrt.pop %v4626
      %v4643 = vrsqrt.pop %v4627
      %v4644 = vrsqrt.pop %v4628
      %v4645 = vrsqrt.pop %v4629
      %v4646 = vrsqrt.pop %v4630
      %v4647 = vrsqrt.pop %v4631
      %v4648 = vrsqrt.pop %v4632
      %v4649 = vrsqrt.pop %v4633
      %v4650 = vrsqrt.pop %v4634
      %v4651 = vrsqrt.pop %v4635
      %v4652 = vrsqrt.pop %v4636
      %v4653 = vrsqrt.pop %v4637
      %v4654 = vrsqrt.pop %v4638
      %v4655 = vrsqrt.pop %v4639
      %v4656 = vrsqrt.pop %v4640
      %v4657 = vmul.f32 %v4497, %v4641
      %v4658 = vmul.f32 %v4498, %v4641
      %v4659 = vmul.f32 %v4499, %v4642
      %v4660 = vmul.f32 %v4500, %v4642
      %v4661 = vmul.f32 %v4501, %v4643
      %v4662 = vmul.f32 %v4502, %v4643
      %v4663 = vmul.f32 %v4503, %v4644
      %v4664 = vmul.f32 %v4504, %v4644
      %v4665 = vmul.f32 %v4505, %v4645
      %v4666 = vmul.f32 %v4506, %v4645
      %v4667 = vmul.f32 %v4507, %v4646
      %v4668 = vmul.f32 %v4508, %v4646
      %v4669 = vmul.f32 %v4509, %v4647
      %v4670 = vmul.f32 %v4510, %v4647
      %v4671 = vmul.f32 %v4511, %v4648
      %v4672 = vmul.f32 %v4512, %v4648
      %v4673 = vmul.f32 %v4513, %v4649
      %v4674 = vmul.f32 %v4514, %v4649
      %v4675 = vmul.f32 %v4515, %v4650
      %v4676 = vmul.f32 %v4516, %v4650
      %v4677 = vmul.f32 %v4517, %v4651
      %v4678 = vmul.f32 %v4518, %v4651
      %v4679 = vmul.f32 %v4519, %v4652
      %v4680 = vmul.f32 %v4520, %v4652
      %v4681 = vmul.f32 %v4521, %v4653
      %v4682 = vmul.f32 %v4522, %v4653
      %v4683 = vmul.f32 %v4523, %v4654
      %v4684 = vmul.f32 %v4524, %v4654
      %v4685 = vmul.f32 %v4525, %v4655
      %v4686 = vmul.f32 %v4526, %v4655
      %v4687 = vmul.f32 %v4527, %v4656
      %v4688 = vmul.f32 %v4528, %v4656
      %v4690 = vlaneseq
      %v4691 = vshrl.u32 %v4690, 7
      %v4692 = vsub.s32 0, %v4691
      %v4693 = vrot.slane %v4431, %v4692
      %v4694 = vlaneseq
      %v4695 = vshrl.u32 %v4694, 7
      %v4696 = vsub.s32 1, %v4695
      %v4697 = vrot.slane %v4431, %v4696
      %v4700 = vmul.f32 %v4657, %v4693
      %v4701 = vmul.f32 %v4658, %v4697
      %v4702 = vmul.f32 %v4659, %v4693
      %v4703 = vmul.f32 %v4660, %v4697
      %v4704 = vmul.f32 %v4661, %v4693
      %v4705 = vmul.f32 %v4662, %v4697
      %v4706 = vmul.f32 %v4663, %v4693
      %v4707 = vmul.f32 %v4664, %v4697
      %v4708 = vmul.f32 %v4665, %v4693
      %v4709 = vmul.f32 %v4666, %v4697
      %v4710 = vmul.f32 %v4667, %v4693
      %v4711 = vmul.f32 %v4668, %v4697
      %v4712 = vmul.f32 %v4669, %v4693
      %v4713 = vmul.f32 %v4670, %v4697
      %v4714 = vmul.f32 %v4671, %v4693
      %v4715 = vmul.f32 %v4672, %v4697
      %v4716 = vmul.f32 %v4673, %v4693
      %v4717 = vmul.f32 %v4674, %v4697
      %v4718 = vmul.f32 %v4675, %v4693
      %v4719 = vmul.f32 %v4676, %v4697
      %v4720 = vmul.f32 %v4677, %v4693
      %v4721 = vmul.f32 %v4678, %v4697
      %v4722 = vmul.f32 %v4679, %v4693
      %v4723 = vmul.f32 %v4680, %v4697
      %v4724 = vmul.f32 %v4681, %v4693
      %v4725 = vmul.f32 %v4682, %v4697
      %v4726 = vmul.f32 %v4683, %v4693
      %v4727 = vmul.f32 %v4684, %v4697
      %v4728 = vmul.f32 %v4685, %v4693
      %v4729 = vmul.f32 %v4686, %v4697
      %v4730 = vmul.f32 %v4687, %v4693
      %v4731 = vmul.f32 %v4688, %v4697
      %v4733 = vlaneseq
      %v4734 = vshrl.u32 %v4733, 7
      %v4735 = vsub.s32 0, %v4734
      %v4736 = vrot.slane %v4432, %v4735
      %v4737 = vlaneseq
      %v4738 = vshrl.u32 %v4737, 7
      %v4739 = vsub.s32 1, %v4738
      %v4740 = vrot.slane %v4432, %v4739
      %v4743 = vadd.f32 %v4700, %v4736
      %v4744 = vadd.f32 %v4701, %v4740
      %v4745 = vadd.f32 %v4702, %v4736
      %v4746 = vadd.f32 %v4703, %v4740
      %v4747 = vadd.f32 %v4704, %v4736
      %v4748 = vadd.f32 %v4705, %v4740
      %v4749 = vadd.f32 %v4706, %v4736
      %v4750 = vadd.f32 %v4707, %v4740
      %v4751 = vadd.f32 %v4708, %v4736
      %v4752 = vadd.f32 %v4709, %v4740
      %v4753 = vadd.f32 %v4710, %v4736
      %v4754 = vadd.f32 %v4711, %v4740
      %v4755 = vadd.f32 %v4712, %v4736
      %v4756 = vadd.f32 %v4713, %v4740
      %v4757 = vadd.f32 %v4714, %v4736
      %v4758 = vadd.f32 %v4715, %v4740
      %v4759 = vadd.f32 %v4716, %v4736
      %v4760 = vadd.f32 %v4717, %v4740
      %v4761 = vadd.f32 %v4718, %v4736
      %v4762 = vadd.f32 %v4719, %v4740
      %v4763 = vadd.f32 %v4720, %v4736
      %v4764 = vadd.f32 %v4721, %v4740
      %v4765 = vadd.f32 %v4722, %v4736
      %v4766 = vadd.f32 %v4723, %v4740
      %v4767 = vadd.f32 %v4724, %v4736
      %v4768 = vadd.f32 %v4725, %v4740
      %v4769 = vadd.f32 %v4726, %v4736
      %v4770 = vadd.f32 %v4727, %v4740
      %v4771 = vadd.f32 %v4728, %v4736
      %v4772 = vadd.f32 %v4729, %v4740
      %v4773 = vadd.f32 %v4730, %v4736
      %v4774 = vadd.f32 %v4731, %v4740
      %4775 = vst [vmem:[%s440] sm:$0xff] %v4743
      %4776 = vst [vmem:[%s440 + $0x8] sm:$0xff] %v4744
      %4777 = vst [vmem:[%s440 + $0x10] sm:$0xff] %v4745
      %4778 = vst [vmem:[%s440 + $0x18] sm:$0xff] %v4746
      %4779 = vst [vmem:[%s440 + $0x20] sm:$0xff] %v4747
      %4780 = vst [vmem:[%s440 + $0x28] sm:$0xff] %v4748
      %4781 = vst [vmem:[%s440 + $0x30] sm:$0xff] %v4749
      %4782 = vst [vmem:[%s440 + $0x38] sm:$0xff] %v4750
      %4783 = vst [vmem:[%s440 + $0x40] sm:$0xff] %v4751
      %4784 = vst [vmem:[%s440 + $0x48] sm:$0xff] %v4752
      %4785 = vst [vmem:[%s440 + $0x50] sm:$0xff] %v4753
      %4786 = vst [vmem:[%s440 + $0x58] sm:$0xff] %v4754
      %4787 = vst [vmem:[%s440 + $0x60] sm:$0xff] %v4755
      %4788 = vst [vmem:[%s440 + $0x68] sm:$0xff] %v4756
      %4789 = vst [vmem:[%s440 + $0x70] sm:$0xff] %v4757
      %4790 = vst [vmem:[%s440 + $0x78] sm:$0xff] %v4758
      %4791 = vst [vmem:[%s440 + $0x80] sm:$0xff] %v4759
      %4792 = vst [vmem:[%s440 + $0x88] sm:$0xff] %v4760
      %4793 = vst [vmem:[%s440 + $0x90] sm:$0xff] %v4761
      %4794 = vst [vmem:[%s440 + $0x98] sm:$0xff] %v4762
      %4795 = vst [vmem:[%s440 + $0xa0] sm:$0xff] %v4763
      %4796 = vst [vmem:[%s440 + $0xa8] sm:$0xff] %v4764
      %4797 = vst [vmem:[%s440 + $0xb0] sm:$0xff] %v4765
      %4798 = vst [vmem:[%s440 + $0xb8] sm:$0xff] %v4766
      %4799 = vst [vmem:[%s440 + $0xc0] sm:$0xff] %v4767
      %4800 = vst [vmem:[%s440 + $0xc8] sm:$0xff] %v4768
      %4801 = vst [vmem:[%s440 + $0xd0] sm:$0xff] %v4769
      %4802 = vst [vmem:[%s440 + $0xd8] sm:$0xff] %v4770
      %4803 = vst [vmem:[%s440 + $0xe0] sm:$0xff] %v4771
      %4804 = vst [vmem:[%s440 + $0xe8] sm:$0xff] %v4772
      %4805 = vst [vmem:[%s440 + $0xf0] sm:$0xff] %v4773
      %4806 = vst [vmem:[%s440 + $0xf8] sm:$0xff] %v4774
      %p4807 = scmp.lt.s32.totalorder %s24, 1
      %s4808 = scalar_select %p4807, %s24, 1
      %s4809 = smul.addr %s4808, 32
      %s4810 = smul.addr %s4809, 8
      %s4811 = scalar_lea.vmem %s13, %s4810
      // Predicated region
      $region73: #{transformer_encoder_layer.1} parent=71 // pred_check
        %p4812 = pneg %p320
      $region74: #{transformer_encoder_layer.1} parent=71 // pred_check_branch
        %4814 = sbr.rel (%p4812) target = $region76
      $region75: #{transformer_encoder_layer.1} parent=71 // pred_region
        _
      $region76: #{transformer_encoder_layer.1} parent=71 // pred_fallthru
        _
    $region72: #{transformer_encoder_layer.1} parent=5 // pred_fallthru
      _
    %p4815 = scmp.le.s32.totalorder 2, %s19
    // Predicated region
    $region77: #{transformer_encoder_layer.1} parent=5 // pred_check
      %p4816 = pneg %p4815
    $region78: #{transformer_encoder_layer.1} parent=5 // pred_check_branch
      %4818 = sbr.rel (%p4816) target = $region80
    $region79: #{transformer_encoder_layer.1} parent=5 // pred_region
      %s4819 = ssub.s32 %s19, 2
      // Predicated region
      $region81: #{transformer_encoder_layer.1} parent=79 // pred_check
        %p4820 = pneg %p326
      $region82: #{transformer_encoder_layer.1} parent=79 // pred_check_branch
        %4822 = sbr.rel (%p4820) target = $region84
      $region83: #{transformer_encoder_layer.1} parent=79 // pred_region
        %p4823 = scmp.lt.s32.totalorder %s25, 1
        %s4824 = scalar_select %p4823, %s25, 1
        %s4825 = smul.addr %s4824, 32
        %s4826 = smul.addr %s4825, 8
        %s4827 = scalar_lea.vmem %s13, %s4826
      $region84: #{transformer_encoder_layer.1} parent=79 // pred_fallthru
        _
    $region80: #{transformer_encoder_layer.1} parent=5 // pred_fallthru
      _
  $region6: #{transformer_encoder_layer.1} parent=0 // loop_footer
    %s23 = sadd.s32 1, %s19
  $region7: #{transformer_encoder_layer.1} parent=0 // loop_footer_branch
    %18 = sbr.rel target = $region3
  $region8: #{transformer_encoder_layer.1} parent=0 // loop_exit
    _

// kernel: transformer_encoder_layer.1
$region0: #{transformer_encoder_layer.1}
  #allocation0 [shape = 'u32[]', space=smem, size = 0x4, offset = 0x4, fixed_abs, tag = 'smem constant byte address 0x4 - core index']
  #allocation1 [shape = 'u32[144,128]{1,0:T(1,128)}', space=vmem, size = 0x12000, scoped, tag = 'internal scratch']
  %s0 = inlined_call_operand.vmem [shape: f32[2,128,256], index: 0, kind: input, shape index: {}]
  %s1 = inlined_call_operand.vmem [shape: bf16[256,768], index: 1, kind: input, shape index: {}]
  %s2 = inlined_call_operand.vmem [shape: f32[1,768], index: 2, kind: input, shape index: {}]
  %s3 = inlined_call_operand.vmem [shape: bf16[2,128,256], index: 3, kind: input, shape index: {}]
  %s4 = inlined_call_operand.vmem [shape: f32[1,256], index: 4, kind: input, shape index: {}]
  %s5 = inlined_call_operand.vmem [shape: f32[1,256], index: 5, kind: input, shape index: {}]
  %s6 = inlined_call_operand.vmem [shape: f32[1,256], index: 6, kind: input, shape index: {}]
  %s7 = inlined_call_operand.vmem [shape: bf16[256,512], index: 7, kind: input, shape index: {}]
  %s8 = inlined_call_operand.vmem [shape: f32[1,512], index: 8, kind: input, shape index: {}]
  %s9 = inlined_call_operand.vmem [shape: bf16[512,256], index: 9, kind: input, shape index: {}]
  %s10 = inlined_call_operand.vmem [shape: f32[1,256], index: 10, kind: input, shape index: {}]
  %s11 = inlined_call_operand.vmem [shape: f32[1,256], index: 11, kind: input, shape index: {}]
  %s12 = inlined_call_operand.vmem [shape: f32[1,256], index: 12, kind: input, shape index: {}]
  %s13 = inlined_call_operand.vmem [shape: f32[2,128,256], index: 13, kind: output, shape index: {}]
  %s14 = sld [smem:[#allocation0]]
  $region85: #{transformer_encoder_layer.1} parent=0
    _
  %s16 = ssub.s32 1, %s14
  %s17 = scalar_select 0, %s16, %s14
  loop: start=0, step=1, limit=4
  $region2: #{transformer_encoder_layer.1} parent=0 // loop_pre_header
    _
  $region3: #{transformer_encoder_layer.1} parent=0 // loop_header
    %s19 = sphi 0, %s23
    %p20 = scmp.ge.s32.totalorder %s19, 4
    %s29 = sphi 0, %s31
    %s32 = sphi 0, %s29
    %s33 = sphi 0, %s32
    %s49 = sphi 0, %s33
    %s53 = sphi 0, %s53
    %s55 = sphi 0, %s53
    %s56 = sphi 0, %s55
    %s70 = sphi 0, %s56
    %s74 = sphi 0, %s74
    %s76 = sphi 0, %s74
    %s77 = sphi 0, %s76
    %s91 = sphi 0, %s77
    %s95 = sphi 0, %s95
    %s97 = sphi 0, %s95
    %s98 = sphi 0, %s97
    %s112 = sphi 0, %s98
    %s116 = sphi 0, %s116
    %s118 = sphi 0, %s116
    %s119 = sphi 0, %s118
    %s133 = sphi 0, %s119
    %s137 = sphi 0, %s137
    %s139 = sphi 0, %s137
    %s140 = sphi 0, %s139
    %s154 = sphi 0, %s140
    %s158 = sphi 0, %s158
    %s160 = sphi 0, %s158
    %s161 = sphi 0, %s160
    %s175 = sphi 0, %s161
    %s179 = sphi 0, %s179
    %s181 = sphi 0, %s179
    %s182 = sphi 0, %s181
    %s196 = sphi 0, %s182
    %s200 = sphi 0, %s200
    %s202 = sphi 0, %s200
    %s203 = sphi 0, %s202
    %s217 = sphi 0, %s203
    %s221 = sphi 0, %s221
    %s223 = sphi 0, %s221
    %s224 = sphi 0, %s223
    %s238 = sphi 0, %s224
    %s242 = sphi 0, %s242
    %s244 = sphi 0, %s242
    %s245 = sphi 0, %s244
    %s259 = sphi 0, %s245
    %s263 = sphi 0, %s263
    %s265 = sphi 0, %s263
    %s266 = sphi 0, %s265
    %s280 = sphi 0, %s266
    %s284 = sphi 0, %s284
    %s286 = sphi 0, %s284
    %s287 = sphi 0, %s286
    %s301 = sphi 0, %s287
    %s307 = sphi 0, %s309
    %s310 = sphi 0, %s307
    %s311 = sphi 0, %s310
    %s327 = sphi 0, %s311
  $region4: #{transformer_encoder_layer.1} parent=0 // loop_header_branch
    %22 = sbr.rel (%p20) target = $region8
  $region5: #{transformer_encoder_layer.1} parent=0 // loop_body
    %s24 = ssub.s32 %s19, 1
    %s25 = ssub.s32 %s19, 2
    %s26 = sadd.s32 %s19, 1
    %s27 = ssub.s32 %s19, %s26
    %p28 = scmp.eq.s32.totalorder %s27, 0
    %s30 = sadd.s32 %s29, 1
    %s31 = scalar_select %p28, %s29, %s30
    %p34 = pneg %p28
    %p35 = scmp.eq.s32.totalorder %s19, 1
    %p36 = por %p34, %p35
    %p37 = scmp.ne.s32.totalorder %s29, %s32
    %p38 = scmp.eq.s32.totalorder %s19, 0
    %p39 = por %p37, %p38
    %p40 = scmp.ne.s32.totalorder %s29, %s32
    %p41 = scmp.eq.s32.totalorder %s24, 1
    %p42 = por %p40, %p41
    %p43 = scmp.ne.s32.totalorder %s32, %s33
    %p44 = scmp.eq.s32.totalorder %s24, 0
    %p45 = por %p43, %p44
    %p46 = scmp.ne.s32.totalorder %s32, %s33
    %p47 = scmp.eq.s32.totalorder %s25, 1
    %p48 = por %p46, %p47
    %p50 = scmp.ne.s32.totalorder %s33, %s49
    %p51 = scmp.eq.s32.totalorder %s25, 0
    %p52 = por %p50, %p51
    %s54 = sadd.s32 %s53, 1
    %p57 = scmp.eq.s32.totalorder %s19, 1
    %p58 = scmp.ne.s32.totalorder %s53, %s55
    %p59 = scmp.eq.s32.totalorder %s19, 0
    %p60 = por %p58, %p59
    %p61 = scmp.ne.s32.totalorder %s53, %s55
    %p62 = scmp.eq.s32.totalorder %s24, 1
    %p63 = por %p61, %p62
    %p64 = scmp.ne.s32.totalorder %s55, %s56
    %p65 = scmp.eq.s32.totalorder %s24, 0
    %p66 = por %p64, %p65
    %p67 = scmp.ne.s32.totalorder %s55, %s56
    %p68 = scmp.eq.s32.totalorder %s25, 1
    %p69 = por %p67, %p68
    %p71 = scmp.ne.s32.totalorder %s56, %s70
    %p72 = scmp.eq.s32.totalorder %s25, 0
    %p73 = por %p71, %p72
    %s75 = sadd.s32 %s74, 1
    %p78 = scmp.eq.s32.totalorder %s19, 1
    %p79 = scmp.ne.s32.totalorder %s74, %s76
    %p80 = scmp.eq.s32.totalorder %s19, 0
    %p81 = por %p79, %p80
    %p82 = scmp.ne.s32.totalorder %s74, %s76
    %p83 = scmp.eq.s32.totalorder %s24, 1
    %p84 = por %p82, %p83
    %p85 = scmp.ne.s32.totalorder %s76, %s77
    %p86 = scmp.eq.s32.totalorder %s24, 0
    %p87 = por %p85, %p86
    %p88 = scmp.ne.s32.totalorder %s76, %s77
    %p89 = scmp.eq.s32.totalorder %s25, 1
    %p90 = por %p88, %p89
    %p92 = scmp.ne.s32.totalorder %s77, %s91
    %p93 = scmp.eq.s32.totalorder %s25, 0
    %p94 = por %p92, %p93
    %s96 = sadd.s32 %s95, 1
    %p99 = scmp.eq.s32.totalorder %s19, 1
    %p100 = scmp.ne.s32.totalorder %s95, %s97
    %p101 = scmp.eq.s32.totalorder %s19, 0
    %p102 = por %p100, %p101
    %p103 = scmp.ne.s32.totalorder %s95, %s97
    %p104 = scmp.eq.s32.totalorder %s24, 1
    %p105 = por %p103, %p104
    %p106 = scmp.ne.s32.totalorder %s97, %s98
    %p107 = scmp.eq.s32.totalorder %s24, 0
    %p108 = por %p106, %p107
    %p109 = scmp.ne.s32.totalorder %s97, %s98
    %p110 = scmp.eq.s32.totalorder %s25, 1
    %p111 = por %p109, %p110
    %p113 = scmp.ne.s32.totalorder %s98, %s112
    %p114 = scmp.eq.s32.totalorder %s25, 0
    %p115 = por %p113, %p114
    %s117 = sadd.s32 %s116, 1
    %p120 = scmp.eq.s32.totalorder %s19, 1
    %p121 = scmp.ne.s32.totalorder %s116, %s118
    %p122 = scmp.eq.s32.totalorder %s19, 0
    %p123 = por %p121, %p122
    %p124 = scmp.ne.s32.totalorder %s116, %s118
    %p125 = scmp.eq.s32.totalorder %s24, 1
    %p126 = por %p124, %p125
    %p127 = scmp.ne.s32.totalorder %s118, %s119
    %p128 = scmp.eq.s32.totalorder %s24, 0
    %p129 = por %p127, %p128
    %p130 = scmp.ne.s32.totalorder %s118, %s119
    %p131 = scmp.eq.s32.totalorder %s25, 1
    %p132 = por %p130, %p131
    %p134 = scmp.ne.s32.totalorder %s119, %s133
    %p135 = scmp.eq.s32.totalorder %s25, 0
    %p136 = por %p134, %p135
    %s138 = sadd.s32 %s137, 1
    %p141 = scmp.eq.s32.totalorder %s19, 1
    %p142 = scmp.ne.s32.totalorder %s137, %s139
    %p143 = scmp.eq.s32.totalorder %s19, 0
    %p144 = por %p142, %p143
    %p145 = scmp.ne.s32.totalorder %s137, %s139
    %p146 = scmp.eq.s32.totalorder %s24, 1
    %p147 = por %p145, %p146
    %p148 = scmp.ne.s32.totalorder %s139, %s140
    %p149 = scmp.eq.s32.totalorder %s24, 0
    %p150 = por %p148, %p149
    %p151 = scmp.ne.s32.totalorder %s139, %s140
    %p152 = scmp.eq.s32.totalorder %s25, 1
    %p153 = por %p151, %p152
    %p155 = scmp.ne.s32.totalorder %s140, %s154
    %p156 = scmp.eq.s32.totalorder %s25, 0
    %p157 = por %p155, %p156
    %s159 = sadd.s32 %s158, 1
    %p162 = scmp.eq.s32.totalorder %s19, 1
    %p163 = scmp.ne.s32.totalorder %s158, %s160
    %p164 = scmp.eq.s32.totalorder %s19, 0
    %p165 = por %p163, %p164
    %p166 = scmp.ne.s32.totalorder %s158, %s160
    %p167 = scmp.eq.s32.totalorder %s24, 1
    %p168 = por %p166, %p167
    %p169 = scmp.ne.s32.totalorder %s160, %s161
    %p170 = scmp.eq.s32.totalorder %s24, 0
    %p171 = por %p169, %p170
    %p172 = scmp.ne.s32.totalorder %s160, %s161
    %p173 = scmp.eq.s32.totalorder %s25, 1
    %p174 = por %p172, %p173
    %p176 = scmp.ne.s32.totalorder %s161, %s175
    %p177 = scmp.eq.s32.totalorder %s25, 0
    %p178 = por %p176, %p177
    %s180 = sadd.s32 %s179, 1
    %p183 = scmp.eq.s32.totalorder %s19, 1
    %p184 = scmp.ne.s32.totalorder %s179, %s181
    %p185 = scmp.eq.s32.totalorder %s19, 0
    %p186 = por %p184, %p185
    %p187 = scmp.ne.s32.totalorder %s179, %s181
    %p188 = scmp.eq.s32.totalorder %s24, 1
    %p189 = por %p187, %p188
    %p190 = scmp.ne.s32.totalorder %s181, %s182
    %p191 = scmp.eq.s32.totalorder %s24, 0
    %p192 = por %p190, %p191
    %p193 = scmp.ne.s32.totalorder %s181, %s182
    %p194 = scmp.eq.s32.totalorder %s25, 1
    %p195 = por %p193, %p194
    %p197 = scmp.ne.s32.totalorder %s182, %s196
    %p198 = scmp.eq.s32.totalorder %s25, 0
    %p199 = por %p197, %p198
    %s201 = sadd.s32 %s200, 1
    %p204 = scmp.eq.s32.totalorder %s19, 1
    %p205 = scmp.ne.s32.totalorder %s200, %s202
    %p206 = scmp.eq.s32.totalorder %s19, 0
    %p207 = por %p205, %p206
    %p208 = scmp.ne.s32.totalorder %s200, %s202
    %p209 = scmp.eq.s32.totalorder %s24, 1
    %p210 = por %p208, %p209
    %p211 = scmp.ne.s32.totalorder %s202, %s203
    %p212 = scmp.eq.s32.totalorder %s24, 0
    %p213 = por %p211, %p212
    %p214 = scmp.ne.s32.totalorder %s202, %s203
    %p215 = scmp.eq.s32.totalorder %s25, 1
    %p216 = por %p214, %p215
    %p218 = scmp.ne.s32.totalorder %s203, %s217
    %p219 = scmp.eq.s32.totalorder %s25, 0
    %p220 = por %p218, %p219
    %s222 = sadd.s32 %s221, 1
    %p225 = scmp.eq.s32.totalorder %s19, 1
    %p226 = scmp.ne.s32.totalorder %s221, %s223
    %p227 = scmp.eq.s32.totalorder %s19, 0
    %p228 = por %p226, %p227
    %p229 = scmp.ne.s32.totalorder %s221, %s223
    %p230 = scmp.eq.s32.totalorder %s24, 1
    %p231 = por %p229, %p230
    %p232 = scmp.ne.s32.totalorder %s223, %s224
    %p233 = scmp.eq.s32.totalorder %s24, 0
    %p234 = por %p232, %p233
    %p235 = scmp.ne.s32.totalorder %s223, %s224
    %p236 = scmp.eq.s32.totalorder %s25, 1
    %p237 = por %p235, %p236
    %p239 = scmp.ne.s32.totalorder %s224, %s238
    %p240 = scmp.eq.s32.totalorder %s25, 0
    %p241 = por %p239, %p240
    %s243 = sadd.s32 %s242, 1
    %p246 = scmp.eq.s32.totalorder %s19, 1
    %p247 = scmp.ne.s32.totalorder %s242, %s244
    %p248 = scmp.eq.s32.totalorder %s19, 0
    %p249 = por %p247, %p248
    %p250 = scmp.ne.s32.totalorder %s242, %s244
    %p251 = scmp.eq.s32.totalorder %s24, 1
    %p252 = por %p250, %p251
    %p253 = scmp.ne.s32.totalorder %s244, %s245
    %p254 = scmp.eq.s32.totalorder %s24, 0
    %p255 = por %p253, %p254
    %p256 = scmp.ne.s32.totalorder %s244, %s245
    %p257 = scmp.eq.s32.totalorder %s25, 1
    %p258 = por %p256, %p257
    %p260 = scmp.ne.s32.totalorder %s245, %s259
    %p261 = scmp.eq.s32.totalorder %s25, 0
    %p262 = por %p260, %p261
    %s264 = sadd.s32 %s263, 1
    %p267 = scmp.eq.s32.totalorder %s19, 1
    %p268 = scmp.ne.s32.totalorder %s263, %s265
    %p269 = scmp.eq.s32.totalorder %s19, 0
    %p270 = por %p268, %p269
    %p271 = scmp.ne.s32.totalorder %s263, %s265
    %p272 = scmp.eq.s32.totalorder %s24, 1
    %p273 = por %p271, %p272
    %p274 = scmp.ne.s32.totalorder %s265, %s266
    %p275 = scmp.eq.s32.totalorder %s24, 0
    %p276 = por %p274, %p275
    %p277 = scmp.ne.s32.totalorder %s265, %s266
    %p278 = scmp.eq.s32.totalorder %s25, 1
    %p279 = por %p277, %p278
    %p281 = scmp.ne.s32.totalorder %s266, %s280
    %p282 = scmp.eq.s32.totalorder %s25, 0
    %p283 = por %p281, %p282
    %s285 = sadd.s32 %s284, 1
    %p288 = scmp.eq.s32.totalorder %s19, 1
    %p289 = scmp.ne.s32.totalorder %s284, %s286
    %p290 = scmp.eq.s32.totalorder %s19, 0
    %p291 = por %p289, %p290
    %p292 = scmp.ne.s32.totalorder %s284, %s286
    %p293 = scmp.eq.s32.totalorder %s24, 1
    %p294 = por %p292, %p293
    %p295 = scmp.ne.s32.totalorder %s286, %s287
    %p296 = scmp.eq.s32.totalorder %s24, 0
    %p297 = por %p295, %p296
    %p298 = scmp.ne.s32.totalorder %s286, %s287
    %p299 = scmp.eq.s32.totalorder %s25, 1
    %p300 = por %p298, %p299
    %p302 = scmp.ne.s32.totalorder %s287, %s301
    %p303 = scmp.eq.s32.totalorder %s25, 0
    %p304 = por %p302, %p303
    %s305 = ssub.s32 %s19, %s26
    %p306 = scmp.eq.s32.totalorder %s305, 0
    %s308 = sadd.s32 %s307, 1
    %s309 = scalar_select %p306, %s307, %s308
    %p312 = pneg %p306
    %p313 = scmp.eq.s32.totalorder %s19, 1
    %p314 = por %p312, %p313
    %p315 = scmp.ne.s32.totalorder %s307, %s310
    %p316 = scmp.eq.s32.totalorder %s19, 0
    %p317 = por %p315, %p316
    %p318 = scmp.ne.s32.totalorder %s307, %s310
    %p319 = scmp.eq.s32.totalorder %s24, 1
    %p320 = por %p318, %p319
    %p321 = scmp.ne.s32.totalorder %s310, %s311
    %p322 = scmp.eq.s32.totalorder %s24, 0
    %p323 = por %p321, %p322
    %p324 = scmp.ne.s32.totalorder %s310, %s311
    %p325 = scmp.eq.s32.totalorder %s25, 1
    %p326 = por %p324, %p325
    %p328 = scmp.ne.s32.totalorder %s311, %s327
    %p329 = scmp.eq.s32.totalorder %s25, 0
    %p330 = por %p328, %p329
    %p331 = scmp.le.s32.totalorder 1, %s19
    %p332 = scmp.lt.s32.totalorder %s19, 3
    %p333 = pnand %p331, %p332
    %p334 = pneg %p333
    // Predicated region
    $region9: #{transformer_encoder_layer.1} parent=5 // pred_check
      _
    $region10: #{transformer_encoder_layer.1} parent=5 // pred_check_branch
      %336 = sbr.rel (%p333) target = $region12
    $region11: #{transformer_encoder_layer.1} parent=5 // pred_region
      %s337 = ssub.s32 %s19, 1
      // Predicated region
      $region13: #{transformer_encoder_layer.1} parent=11 // pred_check
        %p338 = pneg %p66
      $region14: #{transformer_encoder_layer.1} parent=11 // pred_check_branch
        %340 = sbr.rel (%p338) target = $region16
      $region15: #{transformer_encoder_layer.1} parent=11 // pred_region
        _
      $region16: #{transformer_encoder_layer.1} parent=11 // pred_fallthru
        _
      // Predicated region
      $region17: #{transformer_encoder_layer.1} parent=11 // pred_check
        %p341 = pneg %p87
      $region18: #{transformer_encoder_layer.1} parent=11 // pred_check_branch
        %343 = sbr.rel (%p341) target = $region20
      $region19: #{transformer_encoder_layer.1} parent=11 // pred_region
        _
      $region20: #{transformer_encoder_layer.1} parent=11 // pred_fallthru
        _
      // Predicated region
      $region21: #{transformer_encoder_layer.1} parent=11 // pred_check
        %p344 = pneg %p108
      $region22: #{transformer_encoder_layer.1} parent=11 // pred_check_branch
        %346 = sbr.rel (%p344) target = $region24
      $region23: #{transformer_encoder_layer.1} parent=11 // pred_region
        _
      $region24: #{transformer_encoder_layer.1} parent=11 // pred_fallthru
        _
      // Predicated region
      $region25: #{transformer_encoder_layer.1} parent=11 // pred_check
        %p347 = pneg %p129
      $region26: #{transformer_encoder_layer.1} parent=11 // pred_check_branch
        %349 = sbr.rel (%p347) target = $region28
      $region27: #{transformer_encoder_layer.1} parent=11 // pred_region
        _
      $region28: #{transformer_encoder_layer.1} parent=11 // pred_fallthru
        _
      // Predicated region
      $region29: #{transformer_encoder_layer.1} parent=11 // pred_check
        %p350 = pneg %p150
      $region30: #{transformer_encoder_layer.1} parent=11 // pred_check_branch
        %352 = sbr.rel (%p350) target = $region32
      $region31: #{transformer_encoder_layer.1} parent=11 // pred_region
        _
      $region32: #{transformer_encoder_layer.1} parent=11 // pred_fallthru
        _
      // Predicated region
      $region33: #{transformer_encoder_layer.1} parent=11 // pred_check
        %p353 = pneg %p171
      $region34: #{transformer_encoder_layer.1} parent=11 // pred_check_branch
        %355 = sbr.rel (%p353) target = $region36
      $region35: #{transformer_encoder_layer.1} parent=11 // pred_region
        _
      $region36: #{transformer_encoder_layer.1} parent=11 // pred_fallthru
        _
      // Predicated region
      $region37: #{transformer_encoder_layer.1} parent=11 // pred_check
        %p356 = pneg %p192
      $region38: #{transformer_encoder_layer.1} parent=11 // pred_check_branch
        %358 = sbr.rel (%p356) target = $region40
      $region39: #{transformer_encoder_layer.1} parent=11 // pred_region
        _
      $region40: #{transformer_encoder_layer.1} parent=11 // pred_fallthru
        _
      // Predicated region
      $region41: #{transformer_encoder_layer.1} parent=11 // pred_check
        %p359 = pneg %p213
      $region42: #{transformer_encoder_layer.1} parent=11 // pred_check_branch
        %361 = sbr.rel (%p359) target = $region44
      $region43: #{transformer_encoder_layer.1} parent=11 // pred_region
        _
      $region44: #{transformer_encoder_layer.1} parent=11 // pred_fallthru
        _
      // Predicated region
      $region45: #{transformer_encoder_layer.1} parent=11 // pred_check
        %p362 = pneg %p234
      $region46: #{transformer_encoder_layer.1} parent=11 // pred_check_branch
        %364 = sbr.rel (%p362) target = $region48
      $region47: #{transformer_encoder_layer.1} parent=11 // pred_region
        _
      $region48: #{transformer_encoder_layer.1} parent=11 // pred_fallthru
        _
      // Predicated region
      $region49: #{transformer_encoder_layer.1} parent=11 // pred_check
        %p365 = pneg %p255
      $region50: #{transformer_encoder_layer.1} parent=11 // pred_check_branch
        %367 = sbr.rel (%p365) target = $region52
      $region51: #{transformer_encoder_layer.1} parent=11 // pred_region
        _
      $region52: #{transformer_encoder_layer.1} parent=11 // pred_fallthru
        _
      // Predicated region
      $region53: #{transformer_encoder_layer.1} parent=11 // pred_check
        %p368 = pneg %p276
      $region54: #{transformer_encoder_layer.1} parent=11 // pred_check_branch
        %370 = sbr.rel (%p368) target = $region56
      $region55: #{transformer_encoder_layer.1} parent=11 // pred_region
        _
      $region56: #{transformer_encoder_layer.1} parent=11 // pred_fallthru
        _
      // Predicated region
      $region57: #{transformer_encoder_layer.1} parent=11 // pred_check
        %p371 = pneg %p297
      $region58: #{transformer_encoder_layer.1} parent=11 // pred_check_branch
        %373 = sbr.rel (%p371) target = $region60
      $region59: #{transformer_encoder_layer.1} parent=11 // pred_region
        _
      $region60: #{transformer_encoder_layer.1} parent=11 // pred_fallthru
        _
    $region12: #{transformer_encoder_layer.1} parent=5 // pred_fallthru
      _
    %p374 = scmp.lt.s32.totalorder %s19, 2
    // Predicated region
    $region61: #{transformer_encoder_layer.1} parent=5 // pred_check
      %p375 = pneg %p374
    $region62: #{transformer_encoder_layer.1} parent=5 // pred_check_branch
      %377 = sbr.rel (%p375) target = $region64
    $region63: #{transformer_encoder_layer.1} parent=5 // pred_region
      // Predicated region
      $region65: #{transformer_encoder_layer.1} parent=63 // pred_check
        %p378 = pneg %p39
      $region66: #{transformer_encoder_layer.1} parent=63 // pred_check_branch
        %380 = sbr.rel (%p378) target = $region68
      $region67: #{transformer_encoder_layer.1} parent=63 // pred_region
        %p381 = scmp.lt.s32.totalorder %s19, 1
        %s382 = scalar_select %p381, %s19, 1
        %s383 = smul.addr %s382, 32
        %s384 = smul.addr %s383, 8
        %s385 = scalar_lea.vmem %s0, %s384
      $region68: #{transformer_encoder_layer.1} parent=63 // pred_fallthru
        _
    $region64: #{transformer_encoder_layer.1} parent=5 // pred_fallthru
      _
    %p386 = scmp.le.s32.totalorder 1, %s19
    %p387 = scmp.lt.s32.totalorder %s19, 3
    %p388 = pnand %p386, %p387
    %p389 = pneg %p388
    // Predicated region
    $region69: #{transformer_encoder_layer.1} parent=5 // pred_check
      _
    $region70: #{transformer_encoder_layer.1} parent=5 // pred_check_branch
      %391 = sbr.rel (%p388) target = $region72
    $region71: #{transformer_encoder_layer.1} parent=5 // pred_region
      %s392 = ssub.s32 %s19, 1
      %p393 = scmp.lt.s32.totalorder %s24, 1
      %s394 = scalar_select %p393, %s24, 1
      %s395 = smul.addr %s394, 32
      %s396 = smul.addr %s395, 8
      %s397 = scalar_lea.vmem %s0, %s396
      %p398 = pneg %p45
      %p399 = pneg %p42
      %p400 = pneg %p66
      %p401 = pneg %p63
      %p402 = pneg %p87
      %p403 = pneg %p84
      %p404 = pneg %p108
      %p405 = pneg %p105
      %p406 = pneg %p129
      %p407 = pneg %p126
      %p408 = pneg %p150
      %p409 = pneg %p147
      %p410 = pneg %p171
      %p411 = pneg %p168
      %p412 = pneg %p192
      %p413 = pneg %p189
      %p414 = pneg %p213
      %p415 = pneg %p210
      %p416 = pneg %p234
      %p417 = pneg %p231
      %p418 = pneg %p255
      %p419 = pneg %p252
      %p420 = pneg %p276
      %p421 = pneg %p273
      %p422 = pneg %p297
      %p423 = pneg %p294
      %p424 = pneg %p323
      %p425 = pneg %p320
      %p426 = scmp.lt.s32.totalorder %s24, 1
      %s427 = scalar_select %p426, %s24, 1
      %s428 = smul.addr %s427, 32
      %s429 = smul.addr %s428, 8
      %s430 = scalar_lea.vmem %s13, %s429
      %p431 = scmp.lt.s32.totalorder %s24, 1
      %s432 = scalar_select %p431, %s24, 1
      %s433 = smul.addr %s432, 32
      %s434 = smul.addr %s433, 8
      %s435 = scalar_lea.vmem %s0, %s434
      %p436 = scmp.lt.s32.totalorder %s24, 1
      %s437 = scalar_select %p436, %s24, 1
      %s438 = smul.addr %s437, 32
      %s439 = smul.addr %s438, 8
      %s440 = scalar_lea.vmem %s13, %s439
      %v442 = vld [vmem:[%s435] sm:$0xff]
      %v443 = vld [vmem:[%s435 + $0x8] sm:$0xff]
      %v444 = vld [vmem:[%s435 + $0x10] sm:$0xff]
      %v445 = vld [vmem:[%s435 + $0x18] sm:$0xff]
      %v446 = vld [vmem:[%s435 + $0x20] sm:$0xff]
      %v447 = vld [vmem:[%s435 + $0x28] sm:$0xff]
      %v448 = vld [vmem:[%s435 + $0x30] sm:$0xff]
      %v449 = vld [vmem:[%s435 + $0x38] sm:$0xff]
      %v450 = vld [vmem:[%s435 + $0x40] sm:$0xff]
      %v451 = vld [vmem:[%s435 + $0x48] sm:$0xff]
      %v452 = vld [vmem:[%s435 + $0x50] sm:$0xff]
      %v453 = vld [vmem:[%s435 + $0x58] sm:$0xff]
      %v454 = vld [vmem:[%s435 + $0x60] sm:$0xff]
      %v455 = vld [vmem:[%s435 + $0x68] sm:$0xff]
      %v456 = vld [vmem:[%s435 + $0x70] sm:$0xff]
      %v457 = vld [vmem:[%s435 + $0x78] sm:$0xff]
      %v458 = vld [vmem:[%s435 + $0x80] sm:$0xff]
      %v459 = vld [vmem:[%s435 + $0x88] sm:$0xff]
      %v460 = vld [vmem:[%s435 + $0x90] sm:$0xff]
      %v461 = vld [vmem:[%s435 + $0x98] sm:$0xff]
      %v462 = vld [vmem:[%s435 + $0xa0] sm:$0xff]
      %v463 = vld [vmem:[%s435 + $0xa8] sm:$0xff]
      %v464 = vld [vmem:[%s435 + $0xb0] sm:$0xff]
      %v465 = vld [vmem:[%s435 + $0xb8] sm:$0xff]
      %v466 = vld [vmem:[%s435 + $0xc0] sm:$0xff]
      %v467 = vld [vmem:[%s435 + $0xc8] sm:$0xff]
      %v468 = vld [vmem:[%s435 + $0xd0] sm:$0xff]
      %v469 = vld [vmem:[%s435 + $0xd8] sm:$0xff]
      %v470 = vld [vmem:[%s435 + $0xe0] sm:$0xff]
      %v471 = vld [vmem:[%s435 + $0xe8] sm:$0xff]
      %v472 = vld [vmem:[%s435 + $0xf0] sm:$0xff]
      %v473 = vld [vmem:[%s435 + $0xf8] sm:$0xff]
      %v474 = vpack.c.bf16 %v444, %v442
      %v475 = vpack.c.bf16 %v445, %v443
      %v476 = vpack.c.bf16 %v448, %v446
      %v477 = vpack.c.bf16 %v449, %v447
      %v478 = vpack.c.bf16 %v452, %v450
      %v479 = vpack.c.bf16 %v453, %v451
      %v480 = vpack.c.bf16 %v456, %v454
      %v481 = vpack.c.bf16 %v457, %v455
      %v482 = vpack.c.bf16 %v460, %v458
      %v483 = vpack.c.bf16 %v461, %v459
      %v484 = vpack.c.bf16 %v464, %v462
      %v485 = vpack.c.bf16 %v465, %v463
      %v486 = vpack.c.bf16 %v468, %v466
      %v487 = vpack.c.bf16 %v469, %v467
      %v488 = vpack.c.bf16 %v472, %v470
      %v489 = vpack.c.bf16 %v473, %v471
      %v490 = vld [vmem:[%s1] sm:$0xff]
      %v491 = vld [vmem:[%s1 + $0x8] sm:$0xff]
      %v492 = vld [vmem:[%s1 + $0x10] sm:$0xff]
      %v493 = vld [vmem:[%s1 + $0x18] sm:$0xff]
      %v494 = vld [vmem:[%s1 + $0x20] sm:$0xff]
      %v495 = vld [vmem:[%s1 + $0x28] sm:$0xff]
      %v496 = vld [vmem:[%s1 + $0x30] sm:$0xff]
      %v497 = vld [vmem:[%s1 + $0x38] sm:$0xff]
      %v498 = vld [vmem:[%s1 + $0x40] sm:$0xff]
      %v499 = vld [vmem:[%s1 + $0x48] sm:$0xff]
      %v500 = vld [vmem:[%s1 + $0x50] sm:$0xff]
      %v501 = vld [vmem:[%s1 + $0x58] sm:$0xff]
      %v502 = vld [vmem:[%s1 + $0x60] sm:$0xff]
      %v503 = vld [vmem:[%s1 + $0x68] sm:$0xff]
      %v504 = vld [vmem:[%s1 + $0x70] sm:$0xff]
      %v505 = vld [vmem:[%s1 + $0x78] sm:$0xff]
      %v506 = vld [vmem:[%s1 + $0x80] sm:$0xff]
      %v507 = vld [vmem:[%s1 + $0x88] sm:$0xff]
      %v508 = vld [vmem:[%s1 + $0x90] sm:$0xff]
      %v509 = vld [vmem:[%s1 + $0x98] sm:$0xff]
      %v510 = vld [vmem:[%s1 + $0xa0] sm:$0xff]
      %v511 = vld [vmem:[%s1 + $0xa8] sm:$0xff]
      %v512 = vld [vmem:[%s1 + $0xb0] sm:$0xff]
      %v513 = vld [vmem:[%s1 + $0xb8] sm:$0xff]
      %v514 = vld [vmem:[%s1 + $0xc0] sm:$0xff]
      %v515 = vld [vmem:[%s1 + $0xc8] sm:$0xff]
      %v516 = vld [vmem:[%s1 + $0xd0] sm:$0xff]
      %v517 = vld [vmem:[%s1 + $0xd8] sm:$0xff]
      %v518 = vld [vmem:[%s1 + $0xe0] sm:$0xff]
      %v519 = vld [vmem:[%s1 + $0xe8] sm:$0xff]
      %v520 = vld [vmem:[%s1 + $0xf0] sm:$0xff]
      %v521 = vld [vmem:[%s1 + $0xf8] sm:$0xff]
      %v522 = vld [vmem:[%s1 + $0x100] sm:$0xff]
      %v523 = vld [vmem:[%s1 + $0x108] sm:$0xff]
      %v524 = vld [vmem:[%s1 + $0x110] sm:$0xff]
      %v525 = vld [vmem:[%s1 + $0x118] sm:$0xff]
      %v526 = vld [vmem:[%s1 + $0x120] sm:$0xff]
      %v527 = vld [vmem:[%s1 + $0x128] sm:$0xff]
      %v528 = vld [vmem:[%s1 + $0x130] sm:$0xff]
      %v529 = vld [vmem:[%s1 + $0x138] sm:$0xff]
      %v530 = vld [vmem:[%s1 + $0x140] sm:$0xff]
      %v531 = vld [vmem:[%s1 + $0x148] sm:$0xff]
      %v532 = vld [vmem:[%s1 + $0x150] sm:$0xff]
      %v533 = vld [vmem:[%s1 + $0x158] sm:$0xff]
      %v534 = vld [vmem:[%s1 + $0x160] sm:$0xff]
      %v535 = vld [vmem:[%s1 + $0x168] sm:$0xff]
      %v536 = vld [vmem:[%s1 + $0x170] sm:$0xff]
      %v537 = vld [vmem:[%s1 + $0x178] sm:$0xff]
      %v538 = vld [vmem:[%s1 + $0x180] sm:$0xff]
      %v539 = vld [vmem:[%s1 + $0x188] sm:$0xff]
      %v540 = vld [vmem:[%s1 + $0x190] sm:$0xff]
      %v541 = vld [vmem:[%s1 + $0x198] sm:$0xff]
      %v542 = vld [vmem:[%s1 + $0x1a0] sm:$0xff]
      %v543 = vld [vmem:[%s1 + $0x1a8] sm:$0xff]
      %v544 = vld [vmem:[%s1 + $0x1b0] sm:$0xff]
      %v545 = vld [vmem:[%s1 + $0x1b8] sm:$0xff]
      %v546 = vld [vmem:[%s1 + $0x1c0] sm:$0xff]
      %v547 = vld [vmem:[%s1 + $0x1c8] sm:$0xff]
      %v548 = vld [vmem:[%s1 + $0x1d0] sm:$0xff]
      %v549 = vld [vmem:[%s1 + $0x1d8] sm:$0xff]
      %v550 = vld [vmem:[%s1 + $0x1e0] sm:$0xff]
      %v551 = vld [vmem:[%s1 + $0x1e8] sm:$0xff]
      %v552 = vld [vmem:[%s1 + $0x1f0] sm:$0xff]
      %v553 = vld [vmem:[%s1 + $0x1f8] sm:$0xff]
      %v554 = vld [vmem:[%s1 + $0x200] sm:$0xff]
      %v555 = vld [vmem:[%s1 + $0x208] sm:$0xff]
      %v556 = vld [vmem:[%s1 + $0x210] sm:$0xff]
      %v557 = vld [vmem:[%s1 + $0x218] sm:$0xff]
      %v558 = vld [vmem:[%s1 + $0x220] sm:$0xff]
      %v559 = vld [vmem:[%s1 + $0x228] sm:$0xff]
      %v560 = vld [vmem:[%s1 + $0x230] sm:$0xff]
      %v561 = vld [vmem:[%s1 + $0x238] sm:$0xff]
      %v562 = vld [vmem:[%s1 + $0x240] sm:$0xff]
      %v563 = vld [vmem:[%s1 + $0x248] sm:$0xff]
      %v564 = vld [vmem:[%s1 + $0x250] sm:$0xff]
      %v565 = vld [vmem:[%s1 + $0x258] sm:$0xff]
      %v566 = vld [vmem:[%s1 + $0x260] sm:$0xff]
      %v567 = vld [vmem:[%s1 + $0x268] sm:$0xff]
      %v568 = vld [vmem:[%s1 + $0x270] sm:$0xff]
      %v569 = vld [vmem:[%s1 + $0x278] sm:$0xff]
      %v570 = vld [vmem:[%s1 + $0x280] sm:$0xff]
      %v571 = vld [vmem:[%s1 + $0x288] sm:$0xff]
      %v572 = vld [vmem:[%s1 + $0x290] sm:$0xff]
      %v573 = vld [vmem:[%s1 + $0x298] sm:$0xff]
      %v574 = vld [vmem:[%s1 + $0x2a0] sm:$0xff]
      %v575 = vld [vmem:[%s1 + $0x2a8] sm:$0xff]
      %v576 = vld [vmem:[%s1 + $0x2b0] sm:$0xff]
      %v577 = vld [vmem:[%s1 + $0x2b8] sm:$0xff]
      %v578 = vld [vmem:[%s1 + $0x2c0] sm:$0xff]
      %v579 = vld [vmem:[%s1 + $0x2c8] sm:$0xff]
      %v580 = vld [vmem:[%s1 + $0x2d0] sm:$0xff]
      %v581 = vld [vmem:[%s1 + $0x2d8] sm:$0xff]
      %v582 = vld [vmem:[%s1 + $0x2e0] sm:$0xff]
      %v583 = vld [vmem:[%s1 + $0x2e8] sm:$0xff]
      %v584 = vld [vmem:[%s1 + $0x2f0] sm:$0xff]
      %v585 = vld [vmem:[%s1 + $0x2f8] sm:$0xff]
      %v586 = vld [vmem:[%s2] sm:$0x3f]
      %v588 = vlaneseq
      %v589 = vshrl.u32 %v588, 7
      %v590 = vsub.s32 0, %v589
      %v591 = vrot.slane %v586, %v590
      %v592 = vlaneseq
      %v593 = vshrl.u32 %v592, 7
      %v594 = vsub.s32 1, %v593
      %v595 = vrot.slane %v586, %v594
      %v596 = vlaneseq
      %v597 = vshrl.u32 %v596, 7
      %v598 = vsub.s32 2, %v597
      %v599 = vrot.slane %v586, %v598
      %v600 = vlaneseq
      %v601 = vshrl.u32 %v600, 7
      %v602 = vsub.s32 3, %v601
      %v603 = vrot.slane %v586, %v602
      %v604 = vlaneseq
      %v605 = vshrl.u32 %v604, 7
      %v606 = vsub.s32 4, %v605
      %v607 = vrot.slane %v586, %v606
      %v608 = vlaneseq
      %v609 = vshrl.u32 %v608, 7
      %v610 = vsub.s32 5, %v609
      %v611 = vrot.slane %v586, %v610
      %v714 = vunpack.c.l.b16 %v490
      %v715 = vunpack.c.h.b16 %v490
      %v716 = vunpack.c.l.b16 %v491
      %v717 = vunpack.c.h.b16 %v491
      %v718 = vunpack.c.l.b16 %v492
      %v719 = vunpack.c.h.b16 %v492
      %v720 = vunpack.c.l.b16 %v493
      %v721 = vunpack.c.h.b16 %v493
      %v722 = vunpack.c.l.b16 %v494
      %v723 = vunpack.c.h.b16 %v494
      %v724 = vunpack.c.l.b16 %v495
      %v725 = vunpack.c.h.b16 %v495
      %v726 = vunpack.c.l.b16 %v496
      %v727 = vunpack.c.h.b16 %v496
      %v728 = vunpack.c.l.b16 %v497
      %v729 = vunpack.c.h.b16 %v497
      %v730 = vunpack.c.l.b16 %v498
      %v731 = vunpack.c.h.b16 %v498
      %v732 = vunpack.c.l.b16 %v499
      %v733 = vunpack.c.h.b16 %v499
      %v734 = vunpack.c.l.b16 %v500
      %v735 = vunpack.c.h.b16 %v500
      %v736 = vunpack.c.l.b16 %v501
      %v737 = vunpack.c.h.b16 %v501
      %v738 = vunpack.c.l.b16 %v502
      %v739 = vunpack.c.h.b16 %v502
      %v740 = vunpack.c.l.b16 %v503
      %v741 = vunpack.c.h.b16 %v503
      %v742 = vunpack.c.l.b16 %v504
      %v743 = vunpack.c.h.b16 %v504
      %v744 = vunpack.c.l.b16 %v505
      %v745 = vunpack.c.h.b16 %v505
      %v746 = vunpack.c.l.b16 %v506
      %v747 = vunpack.c.h.b16 %v506
      %v748 = vunpack.c.l.b16 %v507
      %v749 = vunpack.c.h.b16 %v507
      %v750 = vunpack.c.l.b16 %v508
      %v751 = vunpack.c.h.b16 %v508
      %v752 = vunpack.c.l.b16 %v509
      %v753 = vunpack.c.h.b16 %v509
      %v754 = vunpack.c.l.b16 %v510
      %v755 = vunpack.c.h.b16 %v510
      %v756 = vunpack.c.l.b16 %v511
      %v757 = vunpack.c.h.b16 %v511
      %v758 = vunpack.c.l.b16 %v512
      %v759 = vunpack.c.h.b16 %v512
      %v760 = vunpack.c.l.b16 %v513
      %v761 = vunpack.c.h.b16 %v513
      %v762 = vunpack.c.l.b16 %v514
      %v763 = vunpack.c.h.b16 %v514
      %v764 = vunpack.c.l.b16 %v515
      %v765 = vunpack.c.h.b16 %v515
      %v766 = vunpack.c.l.b16 %v516
      %v767 = vunpack.c.h.b16 %v516
      %v768 = vunpack.c.l.b16 %v517
      %v769 = vunpack.c.h.b16 %v517
      %v770 = vunpack.c.l.b16 %v518
      %v771 = vunpack.c.h.b16 %v518
      %v772 = vunpack.c.l.b16 %v519
      %v773 = vunpack.c.h.b16 %v519
      %v774 = vunpack.c.l.b16 %v520
      %v775 = vunpack.c.h.b16 %v520
      %v776 = vunpack.c.l.b16 %v521
      %v777 = vunpack.c.h.b16 %v521
      %v778 = vunpack.c.l.b16 %v522
      %v779 = vunpack.c.h.b16 %v522
      %v780 = vunpack.c.l.b16 %v523
      %v781 = vunpack.c.h.b16 %v523
      %v782 = vunpack.c.l.b16 %v524
      %v783 = vunpack.c.h.b16 %v524
      %v784 = vunpack.c.l.b16 %v525
      %v785 = vunpack.c.h.b16 %v525
      %v786 = vunpack.c.l.b16 %v526
      %v787 = vunpack.c.h.b16 %v526
      %v788 = vunpack.c.l.b16 %v527
      %v789 = vunpack.c.h.b16 %v527
      %v790 = vunpack.c.l.b16 %v528
      %v791 = vunpack.c.h.b16 %v528
      %v792 = vunpack.c.l.b16 %v529
      %v793 = vunpack.c.h.b16 %v529
      %v794 = vunpack.c.l.b16 %v530
      %v795 = vunpack.c.h.b16 %v530
      %v796 = vunpack.c.l.b16 %v531
      %v797 = vunpack.c.h.b16 %v531
      %v798 = vunpack.c.l.b16 %v532
      %v799 = vunpack.c.h.b16 %v532
      %v800 = vunpack.c.l.b16 %v533
      %v801 = vunpack.c.h.b16 %v533
      %v802 = vunpack.c.l.b16 %v534
      %v803 = vunpack.c.h.b16 %v534
      %v804 = vunpack.c.l.b16 %v535
      %v805 = vunpack.c.h.b16 %v535
      %v806 = vunpack.c.l.b16 %v536
      %v807 = vunpack.c.h.b16 %v536
      %v808 = vunpack.c.l.b16 %v537
      %v809 = vunpack.c.h.b16 %v537
      %v810 = vunpack.c.l.b16 %v538
      %v811 = vunpack.c.h.b16 %v538
      %v812 = vunpack.c.l.b16 %v539
      %v813 = vunpack.c.h.b16 %v539
      %v814 = vunpack.c.l.b16 %v540
      %v815 = vunpack.c.h.b16 %v540
      %v816 = vunpack.c.l.b16 %v541
      %v817 = vunpack.c.h.b16 %v541
      %v818 = vunpack.c.l.b16 %v542
      %v819 = vunpack.c.h.b16 %v542
      %v820 = vunpack.c.l.b16 %v543
      %v821 = vunpack.c.h.b16 %v543
      %v822 = vunpack.c.l.b16 %v544
      %v823 = vunpack.c.h.b16 %v544
      %v824 = vunpack.c.l.b16 %v545
      %v825 = vunpack.c.h.b16 %v545
      %v826 = vunpack.c.l.b16 %v546
      %v827 = vunpack.c.h.b16 %v546
      %v828 = vunpack.c.l.b16 %v547
      %v829 = vunpack.c.h.b16 %v547
      %v830 = vunpack.c.l.b16 %v548
      %v831 = vunpack.c.h.b16 %v548
      %v832 = vunpack.c.l.b16 %v549
      %v833 = vunpack.c.h.b16 %v549
      %v834 = vunpack.c.l.b16 %v550
      %v835 = vunpack.c.h.b16 %v550
      %v836 = vunpack.c.l.b16 %v551
      %v837 = vunpack.c.h.b16 %v551
      %v838 = vunpack.c.l.b16 %v552
      %v839 = vunpack.c.h.b16 %v552
      %v840 = vunpack.c.l.b16 %v553
      %v841 = vunpack.c.h.b16 %v553
      %v842 = vunpack.c.l.b16 %v554
      %v843 = vunpack.c.h.b16 %v554
      %v844 = vunpack.c.l.b16 %v555
      %v845 = vunpack.c.h.b16 %v555
      %v846 = vunpack.c.l.b16 %v556
      %v847 = vunpack.c.h.b16 %v556
      %v848 = vunpack.c.l.b16 %v557
      %v849 = vunpack.c.h.b16 %v557
      %v850 = vunpack.c.l.b16 %v558
      %v851 = vunpack.c.h.b16 %v558
      %v852 = vunpack.c.l.b16 %v559
      %v853 = vunpack.c.h.b16 %v559
      %v854 = vunpack.c.l.b16 %v560
      %v855 = vunpack.c.h.b16 %v560
      %v856 = vunpack.c.l.b16 %v561
      %v857 = vunpack.c.h.b16 %v561
      %v858 = vunpack.c.l.b16 %v562
      %v859 = vunpack.c.h.b16 %v562
      %v860 = vunpack.c.l.b16 %v563
      %v861 = vunpack.c.h.b16 %v563
      %v862 = vunpack.c.l.b16 %v564
      %v863 = vunpack.c.h.b16 %v564
      %v864 = vunpack.c.l.b16 %v565
      %v865 = vunpack.c.h.b16 %v565
      %v866 = vunpack.c.l.b16 %v566
      %v867 = vunpack.c.h.b16 %v566
      %v868 = vunpack.c.l.b16 %v567
      %v869 = vunpack.c.h.b16 %v567
      %v870 = vunpack.c.l.b16 %v568
      %v871 = vunpack.c.h.b16 %v568
      %v872 = vunpack.c.l.b16 %v569
      %v873 = vunpack.c.h.b16 %v569
      %v874 = vunpack.c.l.b16 %v570
      %v875 = vunpack.c.h.b16 %v570
      %v876 = vunpack.c.l.b16 %v571
      %v877 = vunpack.c.h.b16 %v571
      %v878 = vunpack.c.l.b16 %v572
      %v879 = vunpack.c.h.b16 %v572
      %v880 = vunpack.c.l.b16 %v573
      %v881 = vunpack.c.h.b16 %v573
      %v882 = vunpack.c.l.b16 %v574
      %v883 = vunpack.c.h.b16 %v574
      %v884 = vunpack.c.l.b16 %v575
      %v885 = vunpack.c.h.b16 %v575
      %v886 = vunpack.c.l.b16 %v576
      %v887 = vunpack.c.h.b16 %v576
      %v888 = vunpack.c.l.b16 %v577
      %v889 = vunpack.c.h.b16 %v577
      %v890 = vunpack.c.l.b16 %v578
      %v891 = vunpack.c.h.b16 %v578
      %v892 = vunpack.c.l.b16 %v579
      %v893 = vunpack.c.h.b16 %v579
      %v894 = vunpack.c.l.b16 %v580
      %v895 = vunpack.c.h.b16 %v580
      %v896 = vunpack.c.l.b16 %v581
      %v897 = vunpack.c.h.b16 %v581
      %v898 = vunpack.c.l.b16 %v582
      %v899 = vunpack.c.h.b16 %v582
      %v900 = vunpack.c.l.b16 %v583
      %v901 = vunpack.c.h.b16 %v583
      %v902 = vunpack.c.l.b16 %v584
      %v903 = vunpack.c.h.b16 %v584
      %v904 = vunpack.c.l.b16 %v585
      %v905 = vunpack.c.h.b16 %v585
      %v906 = vpack.c.b16 %v720, %v714
      %v907 = vpack.c.b16 %v721, %v715
      %v908 = vpack.c.b16 %v722, %v716
      %v909 = vpack.c.b16 %v723, %v717
      %v910 = vpack.c.b16 %v724, %v718
      %v911 = vpack.c.b16 %v725, %v719
      %v912 = vpack.c.b16 %v732, %v726
      %v913 = vpack.c.b16 %v733, %v727
      %v914 = vpack.c.b16 %v734, %v728
      %v915 = vpack.c.b16 %v735, %v729
      %v916 = vpack.c.b16 %v736, %v730
      %v917 = vpack.c.b16 %v737, %v731
      %v918 = vpack.c.b16 %v744, %v738
      %v919 = vpack.c.b16 %v745, %v739
      %v920 = vpack.c.b16 %v746, %v740
      %v921 = vpack.c.b16 %v747, %v741
      %v922 = vpack.c.b16 %v748, %v742
      %v923 = vpack.c.b16 %v749, %v743
      %v924 = vpack.c.b16 %v756, %v750
      %v925 = vpack.c.b16 %v757, %v751
      %v926 = vpack.c.b16 %v758, %v752
      %v927 = vpack.c.b16 %v759, %v753
      %v928 = vpack.c.b16 %v760, %v754
      %v929 = vpack.c.b16 %v761, %v755
      %v930 = vpack.c.b16 %v768, %v762
      %v931 = vpack.c.b16 %v769, %v763
      %v932 = vpack.c.b16 %v770, %v764
      %v933 = vpack.c.b16 %v771, %v765
      %v934 = vpack.c.b16 %v772, %v766
      %v935 = vpack.c.b16 %v773, %v767
      %v936 = vpack.c.b16 %v780, %v774
      %v937 = vpack.c.b16 %v781, %v775
      %v938 = vpack.c.b16 %v782, %v776
      %v939 = vpack.c.b16 %v783, %v777
      %v940 = vpack.c.b16 %v784, %v778
      %v941 = vpack.c.b16 %v785, %v779
      %v942 = vpack.c.b16 %v792, %v786
      %v943 = vpack.c.b16 %v793, %v787
      %v944 = vpack.c.b16 %v794, %v788
      %v945 = vpack.c.b16 %v795, %v789
      %v946 = vpack.c.b16 %v796, %v790
      %v947 = vpack.c.b16 %v797, %v791
      %v948 = vpack.c.b16 %v804, %v798
      %v949 = vpack.c.b16 %v805, %v799
      %v950 = vpack.c.b16 %v806, %v800
      %v951 = vpack.c.b16 %v807, %v801
      %v952 = vpack.c.b16 %v808, %v802
      %v953 = vpack.c.b16 %v809, %v803
      %v954 = vpack.c.b16 %v816, %v810
      %v955 = vpack.c.b16 %v817, %v811
      %v956 = vpack.c.b16 %v818, %v812
      %v957 = vpack.c.b16 %v819, %v813
      %v958 = vpack.c.b16 %v820, %v814
      %v959 = vpack.c.b16 %v821, %v815
      %v960 = vpack.c.b16 %v828, %v822
      %v961 = vpack.c.b16 %v829, %v823
      %v962 = vpack.c.b16 %v830, %v824
      %v963 = vpack.c.b16 %v831, %v825
      %v964 = vpack.c.b16 %v832, %v826
      %v965 = vpack.c.b16 %v833, %v827
      %v966 = vpack.c.b16 %v840, %v834
      %v967 = vpack.c.b16 %v841, %v835
      %v968 = vpack.c.b16 %v842, %v836
      %v969 = vpack.c.b16 %v843, %v837
      %v970 = vpack.c.b16 %v844, %v838
      %v971 = vpack.c.b16 %v845, %v839
      %v972 = vpack.c.b16 %v852, %v846
      %v973 = vpack.c.b16 %v853, %v847
      %v974 = vpack.c.b16 %v854, %v848
      %v975 = vpack.c.b16 %v855, %v849
      %v976 = vpack.c.b16 %v856, %v850
      %v977 = vpack.c.b16 %v857, %v851
      %v978 = vpack.c.b16 %v864, %v858
      %v979 = vpack.c.b16 %v865, %v859
      %v980 = vpack.c.b16 %v866, %v860
      %v981 = vpack.c.b16 %v867, %v861
      %v982 = vpack.c.b16 %v868, %v862
      %v983 = vpack.c.b16 %v869, %v863
      %v984 = vpack.c.b16 %v876, %v870
      %v985 = vpack.c.b16 %v877, %v871
      %v986 = vpack.c.b16 %v878, %v872
      %v987 = vpack.c.b16 %v879, %v873
      %v988 = vpack.c.b16 %v880, %v874
      %v989 = vpack.c.b16 %v881, %v875
      %v990 = vpack.c.b16 %v888, %v882
      %v991 = vpack.c.b16 %v889, %v883
      %v992 = vpack.c.b16 %v890, %v884
      %v993 = vpack.c.b16 %v891, %v885
      %v994 = vpack.c.b16 %v892, %v886
      %v995 = vpack.c.b16 %v893, %v887
      %v996 = vpack.c.b16 %v900, %v894
      %v997 = vpack.c.b16 %v901, %v895
      %v998 = vpack.c.b16 %v902, %v896
      %v999 = vpack.c.b16 %v903, %v897
      %v1000 = vpack.c.b16 %v904, %v898
      %v1001 = vpack.c.b16 %v905, %v899
      %1098 = vmatprep.subr.bf16.mxu0 %v907
      %1099 = vmatpush1.bf16.msra.mxu0 %v906
      %1100 = vmatprep.subr.bf16.mxu0 %v913
      %1101 = vmatpush1.bf16.msra.mxu0 %v912
      %1102 = vmatprep.subr.bf16.mxu0 %v919
      %1103 = vmatpush1.bf16.msra.mxu0 %v918
      %1104 = vmatprep.subr.bf16.mxu0 %v925
      %1105 = vmatpush1.bf16.msra.mxu0 %v924
      %1106 = vmatprep.subr.bf16.mxu0 %v931
      %1107 = vmatpush1.bf16.msra.mxu0 %v930
      %1108 = vmatprep.subr.bf16.mxu0 %v937
      %1109 = vmatpush1.bf16.msra.mxu0 %v936
      %1110 = vmatprep.subr.bf16.mxu0 %v943
      %1111 = vmatpush1.bf16.msra.mxu0 %v942
      %1112 = vmatprep.subr.bf16.mxu0 %v949
      %1113 = vmatpush1.bf16.msra.mxu0 %v948
      %1114 = vmatprep.subr.bf16.mxu0 %v955
      %1115 = vmatpush1.bf16.msra.mxu0 %v954
      %1116 = vmatprep.subr.bf16.mxu0 %v961
      %1117 = vmatpush1.bf16.msra.mxu0 %v960
      %1118 = vmatprep.subr.bf16.mxu0 %v967
      %1119 = vmatpush1.bf16.msra.mxu0 %v966
      %1120 = vmatprep.subr.bf16.mxu0 %v973
      %1121 = vmatpush1.bf16.msra.mxu0 %v972
      %1122 = vmatprep.subr.bf16.mxu0 %v979
      %1123 = vmatpush1.bf16.msra.mxu0 %v978
      %1124 = vmatprep.subr.bf16.mxu0 %v985
      %1125 = vmatpush1.bf16.msra.mxu0 %v984
      %1126 = vmatprep.subr.bf16.mxu0 %v991
      %1127 = vmatpush1.bf16.msra.mxu0 %v990
      %1128 = vmatprep.subr.bf16.mxu0 %v997
      %1129 = vmatpush1.bf16.msra.mxu0 %v996
      %1130 = vmatprep.mubr.bf16.mxu0 %v475
      %1131 = vmatmul.mubr.bf16.gmra.mrb[0].mxu0 %v474
      %v1132 = vpop.f32.mrb[0].mxu0
      %v1133 = vadd.f32 %v591, %v1132
      %v1134 = vpop.f32.mrb[0].mxu0
      %v1135 = vadd.f32 %v595, %v1134
      %v1136 = vpop.f32.mrb[0].mxu0
      %v1137 = vadd.f32 %v591, %v1136
      %v1138 = vpop.f32.mrb[0].mxu0
      %v1139 = vadd.f32 %v595, %v1138
      %1140 = vmatprep.mubr.bf16.mxu0 %v477
      %1141 = vmatmul.mubr.bf16.gmra.mrb[0].mxu0 %v476
      %v1142 = vpop.f32.mrb[0].mxu0
      %v1143 = vadd.f32 %v591, %v1142
      %v1144 = vpop.f32.mrb[0].mxu0
      %v1145 = vadd.f32 %v595, %v1144
      %v1146 = vpop.f32.mrb[0].mxu0
      %v1147 = vadd.f32 %v591, %v1146
      %v1148 = vpop.f32.mrb[0].mxu0
      %v1149 = vadd.f32 %v595, %v1148
      %1150 = vmatprep.mubr.bf16.mxu0 %v479
      %1151 = vmatmul.mubr.bf16.gmra.mrb[0].mxu0 %v478
      %v1152 = vpop.f32.mrb[0].mxu0
      %v1153 = vadd.f32 %v591, %v1152
      %v1154 = vpop.f32.mrb[0].mxu0
      %v1155 = vadd.f32 %v595, %v1154
      %v1156 = vpop.f32.mrb[0].mxu0
      %v1157 = vadd.f32 %v591, %v1156
      %v1158 = vpop.f32.mrb[0].mxu0
      %v1159 = vadd.f32 %v595, %v1158
      %1160 = vmatprep.mubr.bf16.mxu0 %v481
      %1161 = vmatmul.mubr.bf16.gmra.mrb[0].mxu0 %v480
      %v1162 = vpop.f32.mrb[0].mxu0
      %v1163 = vadd.f32 %v591, %v1162
      %v1164 = vpop.f32.mrb[0].mxu0
      %v1165 = vadd.f32 %v595, %v1164
      %v1166 = vpop.f32.mrb[0].mxu0
      %v1167 = vadd.f32 %v591, %v1166
      %v1168 = vpop.f32.mrb[0].mxu0
      %v1169 = vadd.f32 %v595, %v1168
      %1170 = vmatprep.mubr.bf16.mxu0 %v483
      %1171 = vmatmul.mubr.bf16.gmra.mrb[0].mxu0 %v482
      %v1172 = vpop.f32.mrb[0].mxu0
      %v1173 = vadd.f32 %v591, %v1172
      %v1174 = vpop.f32.mrb[0].mxu0
      %v1175 = vadd.f32 %v595, %v1174
      %v1176 = vpop.f32.mrb[0].mxu0
      %v1177 = vadd.f32 %v591, %v1176
      %v1178 = vpop.f32.mrb[0].mxu0
      %v1179 = vadd.f32 %v595, %v1178
      %1180 = vmatprep.mubr.bf16.mxu0 %v485
      %1181 = vmatmul.mubr.bf16.gmra.mrb[0].mxu0 %v484
      %v1182 = vpop.f32.mrb[0].mxu0
      %v1183 = vadd.f32 %v591, %v1182
      %v1184 = vpop.f32.mrb[0].mxu0
      %v1185 = vadd.f32 %v595, %v1184
      %v1186 = vpop.f32.mrb[0].mxu0
      %v1187 = vadd.f32 %v591, %v1186
      %v1188 = vpop.f32.mrb[0].mxu0
      %v1189 = vadd.f32 %v595, %v1188
      %1190 = vmatprep.mubr.bf16.mxu0 %v487
      %1191 = vmatmul.mubr.bf16.gmra.mrb[0].mxu0 %v486
      %v1192 = vpop.f32.mrb[0].mxu0
      %v1193 = vadd.f32 %v591, %v1192
      %v1194 = vpop.f32.mrb[0].mxu0
      %v1195 = vadd.f32 %v595, %v1194
      %v1196 = vpop.f32.mrb[0].mxu0
      %v1197 = vadd.f32 %v591, %v1196
      %v1198 = vpop.f32.mrb[0].mxu0
      %v1199 = vadd.f32 %v595, %v1198
      %1200 = vmatprep.mubr.bf16.mxu0 %v489
      %1201 = vmatmul.mubr.bf16.gmra.mrb[0].mxu0 %v488
      %v1202 = vpop.f32.mrb[0].mxu0
      %v1203 = vadd.f32 %v591, %v1202
      %v1204 = vpop.f32.mrb[0].mxu0
      %v1205 = vadd.f32 %v595, %v1204
      %v1206 = vpop.f32.mrb[0].mxu0
      %v1207 = vadd.f32 %v591, %v1206
      %v1208 = vpop.f32.mrb[0].mxu0
      %v1209 = vadd.f32 %v595, %v1208
      %1210 = vdwg.mxu0
      %1211 = vmatprep.subr.bf16.mxu0 %v909
      %1212 = vmatpush1.bf16.msra.mxu0 %v908
      %1213 = vmatprep.subr.bf16.mxu0 %v915
      %1214 = vmatpush1.bf16.msra.mxu0 %v914
      %1215 = vmatprep.subr.bf16.mxu0 %v921
      %1216 = vmatpush1.bf16.msra.mxu0 %v920
      %1217 = vmatprep.subr.bf16.mxu0 %v927
      %1218 = vmatpush1.bf16.msra.mxu0 %v926
      %1219 = vmatprep.subr.bf16.mxu0 %v933
      %1220 = vmatpush1.bf16.msra.mxu0 %v932
      %1221 = vmatprep.subr.bf16.mxu0 %v939
      %1222 = vmatpush1.bf16.msra.mxu0 %v938
      %1223 = vmatprep.subr.bf16.mxu0 %v945
      %1224 = vmatpush1.bf16.msra.mxu0 %v944
      %1225 = vmatprep.subr.bf16.mxu0 %v951
      %1226 = vmatpush1.bf16.msra.mxu0 %v950
      %1227 = vmatprep.subr.bf16.mxu0 %v957
      %1228 = vmatpush1.bf16.msra.mxu0 %v956
      %1229 = vmatprep.subr.bf16.mxu0 %v963
      %1230 = vmatpush1.bf16.msra.mxu0 %v962
      %1231 = vmatprep.subr.bf16.mxu0 %v969
      %1232 = vmatpush1.bf16.msra.mxu0 %v968
      %1233 = vmatprep.subr.bf16.mxu0 %v975
      %1234 = vmatpush1.bf16.msra.mxu0 %v974
      %1235 = vmatprep.subr.bf16.mxu0 %v981
      %1236 = vmatpush1.bf16.msra.mxu0 %v980
      %1237 = vmatprep.subr.bf16.mxu0 %v987
      %1238 = vmatpush1.bf16.msra.mxu0 %v986
      %1239 = vmatprep.subr.bf16.mxu0 %v993
      %1240 = vmatpush1.bf16.msra.mxu0 %v992
      %1241 = vmatprep.subr.bf16.mxu0 %v999
      %1242 = vmatpush1.bf16.msra.mxu0 %v998
      %1243 = vmatprep.mubr.bf16.mxu0 %v475
      %1244 = vmatmul.mubr.bf16.gmra.mrb[0].mxu0 %v474
      %v1245 = vpop.f32.mrb[0].mxu0
      %v1246 = vadd.f32 %v599, %v1245
      %v1247 = vpop.f32.mrb[0].mxu0
      %v1248 = vadd.f32 %v603, %v1247
      %v1249 = vpop.f32.mrb[0].mxu0
      %v1250 = vadd.f32 %v599, %v1249
      %v1251 = vpop.f32.mrb[0].mxu0
      %v1252 = vadd.f32 %v603, %v1251
      %1253 = vmatprep.mubr.bf16.mxu0 %v477
      %1254 = vmatmul.mubr.bf16.gmra.mrb[0].mxu0 %v476
      %v1255 = vpop.f32.mrb[0].mxu0
      %v1256 = vadd.f32 %v599, %v1255
      %v1257 = vpop.f32.mrb[0].mxu0
      %v1258 = vadd.f32 %v603, %v1257
      %v1259 = vpop.f32.mrb[0].mxu0
      %v1260 = vadd.f32 %v599, %v1259
      %v1261 = vpop.f32.mrb[0].mxu0
      %v1262 = vadd.f32 %v603, %v1261
      %1263 = vmatprep.mubr.bf16.mxu0 %v479
      %1264 = vmatmul.mubr.bf16.gmra.mrb[0].mxu0 %v478
      %v1265 = vpop.f32.mrb[0].mxu0
      %v1266 = vadd.f32 %v599, %v1265
      %v1267 = vpop.f32.mrb[0].mxu0
      %v1268 = vadd.f32 %v603, %v1267
      %v1269 = vpop.f32.mrb[0].mxu0
      %v1270 = vadd.f32 %v599, %v1269
      %v1271 = vpop.f32.mrb[0].mxu0
      %v1272 = vadd.f32 %v603, %v1271
      %1273 = vmatprep.mubr.bf16.mxu0 %v481
      %1274 = vmatmul.mubr.bf16.gmra.mrb[0].mxu0 %v480
      %v1275 = vpop.f32.mrb[0].mxu0
      %v1276 = vadd.f32 %v599, %v1275
      %v1277 = vpop.f32.mrb[0].mxu0
      %v1278 = vadd.f32 %v603, %v1277
      %v1279 = vpop.f32.mrb[0].mxu0
      %v1280 = vadd.f32 %v599, %v1279
      %v1281 = vpop.f32.mrb[0].mxu0
      %v1282 = vadd.f32 %v603, %v1281
      %1283 = vmatprep.mubr.bf16.mxu0 %v483
      %1284 = vmatmul.mubr.bf16.gmra.mrb[0].mxu0 %v482
      %v1285 = vpop.f32.mrb[0].mxu0
      %v1286 = vadd.f32 %v599, %v1285
      %v1287 = vpop.f32.mrb[0].mxu0
      %v1288 = vadd.f32 %v603, %v1287
      %v1289 = vpop.f32.mrb[0].mxu0
      %v1290 = vadd.f32 %v599, %v1289
      %v1291 = vpop.f32.mrb[0].mxu0
      %v1292 = vadd.f32 %v603, %v1291
      %1293 = vmatprep.mubr.bf16.mxu0 %v485
      %1294 = vmatmul.mubr.bf16.gmra.mrb[0].mxu0 %v484
      %v1295 = vpop.f32.mrb[0].mxu0
      %v1296 = vadd.f32 %v599, %v1295
      %v1297 = vpop.f32.mrb[0].mxu0
      %v1298 = vadd.f32 %v603, %v1297
      %v1299 = vpop.f32.mrb[0].mxu0
      %v1300 = vadd.f32 %v599, %v1299
      %v1301 = vpop.f32.mrb[0].mxu0
      %v1302 = vadd.f32 %v603, %v1301
      %1303 = vmatprep.mubr.bf16.mxu0 %v487
      %1304 = vmatmul.mubr.bf16.gmra.mrb[0].mxu0 %v486
      %v1305 = vpop.f32.mrb[0].mxu0
      %v1306 = vadd.f32 %v599, %v1305
      %v1307 = vpop.f32.mrb[0].mxu0
      %v1308 = vadd.f32 %v603, %v1307
      %v1309 = vpop.f32.mrb[0].mxu0
      %v1310 = vadd.f32 %v599, %v1309
      %v1311 = vpop.f32.mrb[0].mxu0
      %v1312 = vadd.f32 %v603, %v1311
      %1313 = vmatprep.mubr.bf16.mxu0 %v489
      %1314 = vmatmul.mubr.bf16.gmra.mrb[0].mxu0 %v488
      %v1315 = vpop.f32.mrb[0].mxu0
      %v1316 = vadd.f32 %v599, %v1315
      %v1317 = vpop.f32.mrb[0].mxu0
      %v1318 = vadd.f32 %v603, %v1317
      %v1319 = vpop.f32.mrb[0].mxu0
      %v1320 = vadd.f32 %v599, %v1319
      %v1321 = vpop.f32.mrb[0].mxu0
      %v1322 = vadd.f32 %v603, %v1321
      %1323 = vdwg.mxu0
      %1324 = vmatprep.subr.bf16.mxu0 %v911
      %1325 = vmatpush1.bf16.msra.mxu0 %v910
      %1326 = vmatprep.subr.bf16.mxu0 %v917
      %1327 = vmatpush1.bf16.msra.mxu0 %v916
      %1328 = vmatprep.subr.bf16.mxu0 %v923
      %1329 = vmatpush1.bf16.msra.mxu0 %v922
      %1330 = vmatprep.subr.bf16.mxu0 %v929
      %1331 = vmatpush1.bf16.msra.mxu0 %v928
      %1332 = vmatprep.subr.bf16.mxu0 %v935
      %1333 = vmatpush1.bf16.msra.mxu0 %v934
      %1334 = vmatprep.subr.bf16.mxu0 %v941
      %1335 = vmatpush1.bf16.msra.mxu0 %v940
      %1336 = vmatprep.subr.bf16.mxu0 %v947
      %1337 = vmatpush1.bf16.msra.mxu0 %v946
      %1338 = vmatprep.subr.bf16.mxu0 %v953
      %1339 = vmatpush1.bf16.msra.mxu0 %v952
      %1340 = vmatprep.subr.bf16.mxu0 %v959
      %1341 = vmatpush1.bf16.msra.mxu0 %v958
      %1342 = vmatprep.subr.bf16.mxu0 %v965
      %1343 = vmatpush1.bf16.msra.mxu0 %v964
      %1344 = vmatprep.subr.bf16.mxu0 %v971
      %1345 = vmatpush1.bf16.msra.mxu0 %v970
      %1346 = vmatprep.subr.bf16.mxu0 %v977
      %1347 = vmatpush1.bf16.msra.mxu0 %v976
      %1348 = vmatprep.subr.bf16.mxu0 %v983
      %1349 = vmatpush1.bf16.msra.mxu0 %v982
      %1350 = vmatprep.subr.bf16.mxu0 %v989
      %1351 = vmatpush1.bf16.msra.mxu0 %v988
      %1352 = vmatprep.subr.bf16.mxu0 %v995
      %1353 = vmatpush1.bf16.msra.mxu0 %v994
      %1354 = vmatprep.subr.bf16.mxu0 %v1001
      %1355 = vmatpush1.bf16.msra.mxu0 %v1000
      %1356 = vmatprep.mubr.bf16.mxu0 %v475
      %1357 = vmatmul.mubr.bf16.gmra.mrb[0].mxu0 %v474
      %v1358 = vpop.f32.mrb[0].mxu0
      %v1359 = vadd.f32 %v607, %v1358
      %v1360 = vpop.f32.mrb[0].mxu0
      %v1361 = vadd.f32 %v611, %v1360
      %v1362 = vpop.f32.mrb[0].mxu0
      %v1363 = vadd.f32 %v607, %v1362
      %v1364 = vpop.f32.mrb[0].mxu0
      %v1365 = vadd.f32 %v611, %v1364
      %1366 = vmatprep.mubr.bf16.mxu0 %v477
      %1367 = vmatmul.mubr.bf16.gmra.mrb[0].mxu0 %v476
      %v1368 = vpop.f32.mrb[0].mxu0
      %v1369 = vadd.f32 %v607, %v1368
      %v1370 = vpop.f32.mrb[0].mxu0
      %v1371 = vadd.f32 %v611, %v1370
      %v1372 = vpop.f32.mrb[0].mxu0
      %v1373 = vadd.f32 %v607, %v1372
      %v1374 = vpop.f32.mrb[0].mxu0
      %v1375 = vadd.f32 %v611, %v1374
      %1376 = vmatprep.mubr.bf16.mxu0 %v479
      %1377 = vmatmul.mubr.bf16.gmra.mrb[0].mxu0 %v478
      %v1378 = vpop.f32.mrb[0].mxu0
      %v1379 = vadd.f32 %v607, %v1378
      %v1380 = vpop.f32.mrb[0].mxu0
      %v1381 = vadd.f32 %v611, %v1380
      %v1382 = vpop.f32.mrb[0].mxu0
      %v1383 = vadd.f32 %v607, %v1382
      %v1384 = vpop.f32.mrb[0].mxu0
      %v1385 = vadd.f32 %v611, %v1384
      %1386 = vmatprep.mubr.bf16.mxu0 %v481
      %1387 = vmatmul.mubr.bf16.gmra.mrb[0].mxu0 %v480
      %v1388 = vpop.f32.mrb[0].mxu0
      %v1389 = vadd.f32 %v607, %v1388
      %v1390 = vpop.f32.mrb[0].mxu0
      %v1391 = vadd.f32 %v611, %v1390
      %v1392 = vpop.f32.mrb[0].mxu0
      %v1393 = vadd.f32 %v607, %v1392
      %v1394 = vpop.f32.mrb[0].mxu0
      %v1395 = vadd.f32 %v611, %v1394
      %1396 = vmatprep.mubr.bf16.mxu0 %v483
      %1397 = vmatmul.mubr.bf16.gmra.mrb[0].mxu0 %v482
      %v1398 = vpop.f32.mrb[0].mxu0
      %v1399 = vadd.f32 %v607, %v1398
      %v1400 = vpop.f32.mrb[0].mxu0
      %v1401 = vadd.f32 %v611, %v1400
      %v1402 = vpop.f32.mrb[0].mxu0
      %v1403 = vadd.f32 %v607, %v1402
      %v1404 = vpop.f32.mrb[0].mxu0
      %v1405 = vadd.f32 %v611, %v1404
      %1406 = vmatprep.mubr.bf16.mxu0 %v485
      %1407 = vmatmul.mubr.bf16.gmra.mrb[0].mxu0 %v484
      %v1408 = vpop.f32.mrb[0].mxu0
      %v1409 = vadd.f32 %v607, %v1408
      %v1410 = vpop.f32.mrb[0].mxu0
      %v1411 = vadd.f32 %v611, %v1410
      %v1412 = vpop.f32.mrb[0].mxu0
      %v1413 = vadd.f32 %v607, %v1412
      %v1414 = vpop.f32.mrb[0].mxu0
      %v1415 = vadd.f32 %v611, %v1414
      %1416 = vmatprep.mubr.bf16.mxu0 %v487
      %1417 = vmatmul.mubr.bf16.gmra.mrb[0].mxu0 %v486
      %v1418 = vpop.f32.mrb[0].mxu0
      %v1419 = vadd.f32 %v607, %v1418
      %v1420 = vpop.f32.mrb[0].mxu0
      %v1421 = vadd.f32 %v611, %v1420
      %v1422 = vpop.f32.mrb[0].mxu0
      %v1423 = vadd.f32 %v607, %v1422
      %v1424 = vpop.f32.mrb[0].mxu0
      %v1425 = vadd.f32 %v611, %v1424
      %1426 = vmatprep.mubr.bf16.mxu0 %v489
      %1427 = vmatmul.mubr.bf16.gmra.mrb[0].mxu0 %v488
      %v1428 = vpop.f32.mrb[0].mxu0
      %v1429 = vadd.f32 %v607, %v1428
      %v1430 = vpop.f32.mrb[0].mxu0
      %v1431 = vadd.f32 %v611, %v1430
      %v1432 = vpop.f32.mrb[0].mxu0
      %v1433 = vadd.f32 %v607, %v1432
      %v1434 = vpop.f32.mrb[0].mxu0
      %v1435 = vadd.f32 %v611, %v1434
      %1436 = vdwg.mxu0
      %v1437 = vpack.c.bf16 %v1137, %v1133
      %v1438 = vpack.c.bf16 %v1139, %v1135
      %v1439 = vpack.c.bf16 %v1250, %v1246
      %v1440 = vpack.c.bf16 %v1252, %v1248
      %v1441 = vpack.c.bf16 %v1363, %v1359
      %v1442 = vpack.c.bf16 %v1365, %v1361
      %v1443 = vpack.c.bf16 %v1147, %v1143
      %v1444 = vpack.c.bf16 %v1149, %v1145
      %v1445 = vpack.c.bf16 %v1260, %v1256
      %v1446 = vpack.c.bf16 %v1262, %v1258
      %v1447 = vpack.c.bf16 %v1373, %v1369
      %v1448 = vpack.c.bf16 %v1375, %v1371
      %v1449 = vpack.c.bf16 %v1157, %v1153
      %v1450 = vpack.c.bf16 %v1159, %v1155
      %v1451 = vpack.c.bf16 %v1270, %v1266
      %v1452 = vpack.c.bf16 %v1272, %v1268
      %v1453 = vpack.c.bf16 %v1383, %v1379
      %v1454 = vpack.c.bf16 %v1385, %v1381
      %v1455 = vpack.c.bf16 %v1167, %v1163
      %v1456 = vpack.c.bf16 %v1169, %v1165
      %v1457 = vpack.c.bf16 %v1280, %v1276
      %v1458 = vpack.c.bf16 %v1282, %v1278
      %v1459 = vpack.c.bf16 %v1393, %v1389
      %v1460 = vpack.c.bf16 %v1395, %v1391
      %v1461 = vpack.c.bf16 %v1177, %v1173
      %v1462 = vpack.c.bf16 %v1179, %v1175
      %v1463 = vpack.c.bf16 %v1290, %v1286
      %v1464 = vpack.c.bf16 %v1292, %v1288
      %v1465 = vpack.c.bf16 %v1403, %v1399
      %v1466 = vpack.c.bf16 %v1405, %v1401
      %v1467 = vpack.c.bf16 %v1187, %v1183
      %v1468 = vpack.c.bf16 %v1189, %v1185
      %v1469 = vpack.c.bf16 %v1300, %v1296
      %v1470 = vpack.c.bf16 %v1302, %v1298
      %v1471 = vpack.c.bf16 %v1413, %v1409
      %v1472 = vpack.c.bf16 %v1415, %v1411
      %v1473 = vpack.c.bf16 %v1197, %v1193
      %v1474 = vpack.c.bf16 %v1199, %v1195
      %v1475 = vpack.c.bf16 %v1310, %v1306
      %v1476 = vpack.c.bf16 %v1312, %v1308
      %v1477 = vpack.c.bf16 %v1423, %v1419
      %v1478 = vpack.c.bf16 %v1425, %v1421
      %v1479 = vpack.c.bf16 %v1207, %v1203
      %v1480 = vpack.c.bf16 %v1209, %v1205
      %v1481 = vpack.c.bf16 %v1320, %v1316
      %v1482 = vpack.c.bf16 %v1322, %v1318
      %v1483 = vpack.c.bf16 %v1433, %v1429
      %v1484 = vpack.c.bf16 %v1435, %v1431
      %1485 = vmatprep.subr.bf16.mxu0 0
      %1486 = vmatpush1.bf16.xpose.msra.mxu0 %v1439
      %1487 = vmatprep.subr.bf16.mxu0 0
      %1488 = vmatpush1.bf16.xpose.msra.mxu0 %v1445
      %1489 = vmatprep.subr.bf16.mxu0 0
      %1490 = vmatpush1.bf16.xpose.msra.mxu0 %v1451
      %1491 = vmatprep.subr.bf16.mxu0 0
      %1492 = vmatpush1.bf16.xpose.msra.mxu0 %v1457
      %1493 = vmatprep.subr.bf16.mxu0 0
      %1494 = vmatpush1.bf16.xpose.msra.mxu0 %v1463
      %1495 = vmatprep.subr.bf16.mxu0 0
      %1496 = vmatpush1.bf16.xpose.msra.mxu0 %v1469
      %1497 = vmatprep.subr.bf16.mxu0 0
      %1498 = vmatpush1.bf16.xpose.msra.mxu0 %v1475
      %1499 = vmatprep.subr.bf16.mxu0 0
      %1500 = vmatpush1.bf16.xpose.msra.mxu0 %v1481
      %1501 = vmatprep.subr.bf16.mxu0 0
      %1502 = vmatpush1.bf16.xpose.msra.mxu0 0
      %1503 = vmatprep.subr.bf16.mxu0 0
      %1504 = vmatpush1.bf16.xpose.msra.mxu0 0
      %1505 = vmatprep.subr.bf16.mxu0 0
      %1506 = vmatpush1.bf16.xpose.msra.mxu0 0
      %1507 = vmatprep.subr.bf16.mxu0 0
      %1508 = vmatpush1.bf16.xpose.msra.mxu0 0
      %1509 = vmatprep.subr.bf16.mxu0 0
      %1510 = vmatpush1.bf16.xpose.msra.mxu0 0
      %1511 = vmatprep.subr.bf16.mxu0 0
      %1512 = vmatpush1.bf16.xpose.msra.mxu0 0
      %1513 = vmatprep.subr.bf16.mxu0 0
      %1514 = vmatpush1.bf16.xpose.msra.mxu0 0
      %1515 = vmatprep.subr.bf16.mxu0 0
      %1516 = vmatpush1.bf16.xpose.msra.mxu0 0
      %1517 = vmatprep.mubr.bf16.mxu0 0
      %1518 = vmatmul.mubr.bf16.gmra.mrb[0].mxu0 %v1437
      %v1519 = vpop.f32.mrb[0].mxu0
      %v1520 = vadd.f32 0.0, %v1519
      %v1521 = vpop.f32.mrb[0].mxu0
      %v1522 = vpop.f32.mrb[0].mxu0
      %v1523 = vadd.f32 0.0, %v1522
      %v1524 = vpop.f32.mrb[0].mxu0
      %1525 = vmatprep.mubr.bf16.mxu0 0
      %1526 = vmatmul.mubr.bf16.gmra.mrb[0].mxu0 %v1443
      %v1527 = vpop.f32.mrb[0].mxu0
      %v1528 = vadd.f32 0.0, %v1527
      %v1529 = vpop.f32.mrb[0].mxu0
      %v1530 = vpop.f32.mrb[0].mxu0
      %v1531 = vadd.f32 0.0, %v1530
      %v1532 = vpop.f32.mrb[0].mxu0
      %1533 = vmatprep.mubr.bf16.mxu0 0
      %1534 = vmatmul.mubr.bf16.gmra.mrb[0].mxu0 %v1449
      %v1535 = vpop.f32.mrb[0].mxu0
      %v1536 = vadd.f32 0.0, %v1535
      %v1537 = vpop.f32.mrb[0].mxu0
      %v1538 = vpop.f32.mrb[0].mxu0
      %v1539 = vadd.f32 0.0, %v1538
      %v1540 = vpop.f32.mrb[0].mxu0
      %1541 = vmatprep.mubr.bf16.mxu0 0
      %1542 = vmatmul.mubr.bf16.gmra.mrb[0].mxu0 %v1455
      %v1543 = vpop.f32.mrb[0].mxu0
      %v1544 = vadd.f32 0.0, %v1543
      %v1545 = vpop.f32.mrb[0].mxu0
      %v1546 = vpop.f32.mrb[0].mxu0
      %v1547 = vadd.f32 0.0, %v1546
      %v1548 = vpop.f32.mrb[0].mxu0
      %1549 = vmatprep.mubr.bf16.mxu0 0
      %1550 = vmatmul.mubr.bf16.gmra.mrb[0].mxu0 %v1461
      %v1551 = vpop.f32.mrb[0].mxu0
      %v1552 = vadd.f32 0.0, %v1551
      %v1553 = vpop.f32.mrb[0].mxu0
      %v1554 = vpop.f32.mrb[0].mxu0
      %v1555 = vadd.f32 0.0, %v1554
      %v1556 = vpop.f32.mrb[0].mxu0
      %1557 = vmatprep.mubr.bf16.mxu0 0
      %1558 = vmatmul.mubr.bf16.gmra.mrb[0].mxu0 %v1467
      %v1559 = vpop.f32.mrb[0].mxu0
      %v1560 = vadd.f32 0.0, %v1559
      %v1561 = vpop.f32.mrb[0].mxu0
      %v1562 = vpop.f32.mrb[0].mxu0
      %v1563 = vadd.f32 0.0, %v1562
      %v1564 = vpop.f32.mrb[0].mxu0
      %1565 = vmatprep.mubr.bf16.mxu0 0
      %1566 = vmatmul.mubr.bf16.gmra.mrb[0].mxu0 %v1473
      %v1567 = vpop.f32.mrb[0].mxu0
      %v1568 = vadd.f32 0.0, %v1567
      %v1569 = vpop.f32.mrb[0].mxu0
      %v1570 = vpop.f32.mrb[0].mxu0
      %v1571 = vadd.f32 0.0, %v1570
      %v1572 = vpop.f32.mrb[0].mxu0
      %1573 = vmatprep.mubr.bf16.mxu0 0
      %1574 = vmatmul.mubr.bf16.gmra.mrb[0].mxu0 %v1479
      %v1575 = vpop.f32.mrb[0].mxu0
      %v1576 = vadd.f32 0.0, %v1575
      %v1577 = vpop.f32.mrb[0].mxu0
      %v1578 = vpop.f32.mrb[0].mxu0
      %v1579 = vadd.f32 0.0, %v1578
      %v1580 = vpop.f32.mrb[0].mxu0
      %1581 = vdwg.mxu0
      %1582 = vmax.xlane.f32.xlu0 %v1520
      %v1583 = vpop.xlane.xlu0 %1582
      %1584 = vmax.xlane.f32.xlu0 %v1523
      %v1585 = vpop.xlane.xlu0 %1584
      %1586 = vmax.xlane.f32.xlu0 %v1528
      %v1587 = vpop.xlane.xlu0 %1586
      %1588 = vmax.xlane.f32.xlu0 %v1531
      %v1589 = vpop.xlane.xlu0 %1588
      %1590 = vmax.xlane.f32.xlu0 %v1536
      %v1591 = vpop.xlane.xlu0 %1590
      %1592 = vmax.xlane.f32.xlu0 %v1539
      %v1593 = vpop.xlane.xlu0 %1592
      %1594 = vmax.xlane.f32.xlu0 %v1544
      %v1595 = vpop.xlane.xlu0 %1594
      %1596 = vmax.xlane.f32.xlu0 %v1547
      %v1597 = vpop.xlane.xlu0 %1596
      %1598 = vmax.xlane.f32.xlu0 %v1552
      %v1599 = vpop.xlane.xlu0 %1598
      %1600 = vmax.xlane.f32.xlu0 %v1555
      %v1601 = vpop.xlane.xlu0 %1600
      %1602 = vmax.xlane.f32.xlu0 %v1560
      %v1603 = vpop.xlane.xlu0 %1602
      %1604 = vmax.xlane.f32.xlu0 %v1563
      %v1605 = vpop.xlane.xlu0 %1604
      %1606 = vmax.xlane.f32.xlu0 %v1568
      %v1607 = vpop.xlane.xlu0 %1606
      %1608 = vmax.xlane.f32.xlu0 %v1571
      %v1609 = vpop.xlane.xlu0 %1608
      %1610 = vmax.xlane.f32.xlu0 %v1576
      %v1611 = vpop.xlane.xlu0 %1610
      %1612 = vmax.xlane.f32.xlu0 %v1579
      %v1613 = vpop.xlane.xlu0 %1612
      %v1614 = vsub.f32 %v1520, %v1583
      %v1615 = vsub.f32 %v1523, %v1585
      %v1616 = vsub.f32 %v1528, %v1587
      %v1617 = vsub.f32 %v1531, %v1589
      %v1618 = vsub.f32 %v1536, %v1591
      %v1619 = vsub.f32 %v1539, %v1593
      %v1620 = vsub.f32 %v1544, %v1595
      %v1621 = vsub.f32 %v1547, %v1597
      %v1622 = vsub.f32 %v1552, %v1599
      %v1623 = vsub.f32 %v1555, %v1601
      %v1624 = vsub.f32 %v1560, %v1603
      %v1625 = vsub.f32 %v1563, %v1605
      %v1626 = vsub.f32 %v1568, %v1607
      %v1627 = vsub.f32 %v1571, %v1609
      %v1628 = vsub.f32 %v1576, %v1611
      %v1629 = vsub.f32 %v1579, %v1613
      %v1630 = vmul.f32 %v1614, 1.442695
      %v1631 = vpow.pop %v1630
      %v1632 = vmul.f32 %v1615, 1.442695
      %v1633 = vpow.pop %v1632
      %v1634 = vmul.f32 %v1616, 1.442695
      %v1635 = vpow.pop %v1634
      %v1636 = vmul.f32 %v1617, 1.442695
      %v1637 = vpow.pop %v1636
      %v1638 = vmul.f32 %v1618, 1.442695
      %v1639 = vpow.pop %v1638
      %v1640 = vmul.f32 %v1619, 1.442695
      %v1641 = vpow.pop %v1640
      %v1642 = vmul.f32 %v1620, 1.442695
      %v1643 = vpow.pop %v1642
      %v1644 = vmul.f32 %v1621, 1.442695
      %v1645 = vpow.pop %v1644
      %v1646 = vmul.f32 %v1622, 1.442695
      %v1647 = vpow.pop %v1646
      %v1648 = vmul.f32 %v1623, 1.442695
      %v1649 = vpow.pop %v1648
      %v1650 = vmul.f32 %v1624, 1.442695
      %v1651 = vpow.pop %v1650
      %v1652 = vmul.f32 %v1625, 1.442695
      %v1653 = vpow.pop %v1652
      %v1654 = vmul.f32 %v1626, 1.442695
      %v1655 = vpow.pop %v1654
      %v1656 = vmul.f32 %v1627, 1.442695
      %v1657 = vpow.pop %v1656
      %v1658 = vmul.f32 %v1628, 1.442695
      %v1659 = vpow.pop %v1658
      %v1660 = vmul.f32 %v1629, 1.442695
      %v1661 = vpow.pop %v1660
      %1662 = vadd.xlane.f32.xlu0 %v1631
      %v1663 = vpop.xlane.xlu0 %1662
      %1664 = vadd.xlane.f32.xlu0 %v1633
      %v1665 = vpop.xlane.xlu0 %1664
      %1666 = vadd.xlane.f32.xlu0 %v1635
      %v1667 = vpop.xlane.xlu0 %1666
      %1668 = vadd.xlane.f32.xlu0 %v1637
      %v1669 = vpop.xlane.xlu0 %1668
      %1670 = vadd.xlane.f32.xlu0 %v1639
      %v1671 = vpop.xlane.xlu0 %1670
      %1672 = vadd.xlane.f32.xlu0 %v1641
      %v1673 = vpop.xlane.xlu0 %1672
      %1674 = vadd.xlane.f32.xlu0 %v1643
      %v1675 = vpop.xlane.xlu0 %1674
      %1676 = vadd.xlane.f32.xlu0 %v1645
      %v1677 = vpop.xlane.xlu0 %1676
      %1678 = vadd.xlane.f32.xlu0 %v1647
      %v1679 = vpop.xlane.xlu0 %1678
      %1680 = vadd.xlane.f32.xlu0 %v1649
      %v1681 = vpop.xlane.xlu0 %1680
      %1682 = vadd.xlane.f32.xlu0 %v1651
      %v1683 = vpop.xlane.xlu0 %1682
      %1684 = vadd.xlane.f32.xlu0 %v1653
      %v1685 = vpop.xlane.xlu0 %1684
      %1686 = vadd.xlane.f32.xlu0 %v1655
      %v1687 = vpop.xlane.xlu0 %1686
      %1688 = vadd.xlane.f32.xlu0 %v1657
      %v1689 = vpop.xlane.xlu0 %1688
      %1690 = vadd.xlane.f32.xlu0 %v1659
      %v1691 = vpop.xlane.xlu0 %1690
      %1692 = vadd.xlane.f32.xlu0 %v1661
      %v1693 = vpop.xlane.xlu0 %1692
      %v1694 = vrcp.pop %v1663
      %v1695 = vrcp.pop %v1665
      %v1696 = vrcp.pop %v1667
      %v1697 = vrcp.pop %v1669
      %v1698 = vrcp.pop %v1671
      %v1699 = vrcp.pop %v1673
      %v1700 = vrcp.pop %v1675
      %v1701 = vrcp.pop %v1677
      %v1702 = vrcp.pop %v1679
      %v1703 = vrcp.pop %v1681
      %v1704 = vrcp.pop %v1683
      %v1705 = vrcp.pop %v1685
      %v1706 = vrcp.pop %v1687
      %v1707 = vrcp.pop %v1689
      %v1708 = vrcp.pop %v1691
      %v1709 = vrcp.pop %v1693
      %v1710 = vpack.c.bf16 %v1633, %v1631
      %v1711 = vpack.c.bf16 %v1637, %v1635
      %v1712 = vpack.c.bf16 %v1641, %v1639
      %v1713 = vpack.c.bf16 %v1645, %v1643
      %v1714 = vpack.c.bf16 %v1649, %v1647
      %v1715 = vpack.c.bf16 %v1653, %v1651
      %v1716 = vpack.c.bf16 %v1657, %v1655
      %v1717 = vpack.c.bf16 %v1661, %v1659
      %1718 = vmatprep.subr.bf16.mxu0 0
      %1719 = vmatpush1.bf16.msra.mxu0 %v1441
      %1720 = vmatprep.subr.bf16.mxu0 0
      %1721 = vmatpush1.bf16.msra.mxu0 %v1447
      %1722 = vmatprep.subr.bf16.mxu0 0
      %1723 = vmatpush1.bf16.msra.mxu0 %v1453
      %1724 = vmatprep.subr.bf16.mxu0 0
      %1725 = vmatpush1.bf16.msra.mxu0 %v1459
      %1726 = vmatprep.subr.bf16.mxu0 0
      %1727 = vmatpush1.bf16.msra.mxu0 %v1465
      %1728 = vmatprep.subr.bf16.mxu0 0
      %1729 = vmatpush1.bf16.msra.mxu0 %v1471
      %1730 = vmatprep.subr.bf16.mxu0 0
      %1731 = vmatpush1.bf16.msra.mxu0 %v1477
      %1732 = vmatprep.subr.bf16.mxu0 0
      %1733 = vmatpush1.bf16.msra.mxu0 %v1483
      %1734 = vmatprep.subr.bf16.mxu0 0
      %1735 = vmatpush1.bf16.msra.mxu0 0
      %1736 = vmatprep.subr.bf16.mxu0 0
      %1737 = vmatpush1.bf16.msra.mxu0 0
      %1738 = vmatprep.subr.bf16.mxu0 0
      %1739 = vmatpush1.bf16.msra.mxu0 0
      %1740 = vmatprep.subr.bf16.mxu0 0
      %1741 = vmatpush1.bf16.msra.mxu0 0
      %1742 = vmatprep.subr.bf16.mxu0 0
      %1743 = vmatpush1.bf16.msra.mxu0 0
      %1744 = vmatprep.subr.bf16.mxu0 0
      %1745 = vmatpush1.bf16.msra.mxu0 0
      %1746 = vmatprep.subr.bf16.mxu0 0
      %1747 = vmatpush1.bf16.msra.mxu0 0
      %1748 = vmatprep.subr.bf16.mxu0 0
      %1749 = vmatpush1.bf16.msra.mxu0 0
      %1750 = vmatprep.mubr.bf16.mxu0 0
      %1751 = vmatmul.mubr.bf16.gmra.mrb[0].mxu0 %v1710
      %v1752 = vpop.f32.mrb[0].mxu0
      %v1753 = vadd.f32 0.0, %v1752
      %v1754 = vpop.f32.mrb[0].mxu0
      %v1755 = vpop.f32.mrb[0].mxu0
      %v1756 = vadd.f32 0.0, %v1755
      %v1757 = vpop.f32.mrb[0].mxu0
      %1758 = vmatprep.mubr.bf16.mxu0 0
      %1759 = vmatmul.mubr.bf16.gmra.mrb[0].mxu0 %v1711
      %v1760 = vpop.f32.mrb[0].mxu0
      %v1761 = vadd.f32 0.0, %v1760
      %v1762 = vpop.f32.mrb[0].mxu0
      %v1763 = vpop.f32.mrb[0].mxu0
      %v1764 = vadd.f32 0.0, %v1763
      %v1765 = vpop.f32.mrb[0].mxu0
      %1766 = vmatprep.mubr.bf16.mxu0 0
      %1767 = vmatmul.mubr.bf16.gmra.mrb[0].mxu0 %v1712
      %v1768 = vpop.f32.mrb[0].mxu0
      %v1769 = vadd.f32 0.0, %v1768
      %v1770 = vpop.f32.mrb[0].mxu0
      %v1771 = vpop.f32.mrb[0].mxu0
      %v1772 = vadd.f32 0.0, %v1771
      %v1773 = vpop.f32.mrb[0].mxu0
      %1774 = vmatprep.mubr.bf16.mxu0 0
      %1775 = vmatmul.mubr.bf16.gmra.mrb[0].mxu0 %v1713
      %v1776 = vpop.f32.mrb[0].mxu0
      %v1777 = vadd.f32 0.0, %v1776
      %v1778 = vpop.f32.mrb[0].mxu0
      %v1779 = vpop.f32.mrb[0].mxu0
      %v1780 = vadd.f32 0.0, %v1779
      %v1781 = vpop.f32.mrb[0].mxu0
      %1782 = vmatprep.mubr.bf16.mxu0 0
      %1783 = vmatmul.mubr.bf16.gmra.mrb[0].mxu0 %v1714
      %v1784 = vpop.f32.mrb[0].mxu0
      %v1785 = vadd.f32 0.0, %v1784
      %v1786 = vpop.f32.mrb[0].mxu0
      %v1787 = vpop.f32.mrb[0].mxu0
      %v1788 = vadd.f32 0.0, %v1787
      %v1789 = vpop.f32.mrb[0].mxu0
      %1790 = vmatprep.mubr.bf16.mxu0 0
      %1791 = vmatmul.mubr.bf16.gmra.mrb[0].mxu0 %v1715
      %v1792 = vpop.f32.mrb[0].mxu0
      %v1793 = vadd.f32 0.0, %v1792
      %v1794 = vpop.f32.mrb[0].mxu0
      %v1795 = vpop.f32.mrb[0].mxu0
      %v1796 = vadd.f32 0.0, %v1795
      %v1797 = vpop.f32.mrb[0].mxu0
      %1798 = vmatprep.mubr.bf16.mxu0 0
      %1799 = vmatmul.mubr.bf16.gmra.mrb[0].mxu0 %v1716
      %v1800 = vpop.f32.mrb[0].mxu0
      %v1801 = vadd.f32 0.0, %v1800
      %v1802 = vpop.f32.mrb[0].mxu0
      %v1803 = vpop.f32.mrb[0].mxu0
      %v1804 = vadd.f32 0.0, %v1803
      %v1805 = vpop.f32.mrb[0].mxu0
      %1806 = vmatprep.mubr.bf16.mxu0 0
      %1807 = vmatmul.mubr.bf16.gmra.mrb[0].mxu0 %v1717
      %v1808 = vpop.f32.mrb[0].mxu0
      %v1809 = vadd.f32 0.0, %v1808
      %v1810 = vpop.f32.mrb[0].mxu0
      %v1811 = vpop.f32.mrb[0].mxu0
      %v1812 = vadd.f32 0.0, %v1811
      %v1813 = vpop.f32.mrb[0].mxu0
      %1814 = vdwg.mxu0
      %v1815 = vmul.f32 %v1753, %v1694
      %v1816 = vmul.f32 %v1756, %v1695
      %v1817 = vmul.f32 %v1761, %v1696
      %v1818 = vmul.f32 %v1764, %v1697
      %v1819 = vmul.f32 %v1769, %v1698
      %v1820 = vmul.f32 %v1772, %v1699
      %v1821 = vmul.f32 %v1777, %v1700
      %v1822 = vmul.f32 %v1780, %v1701
      %v1823 = vmul.f32 %v1785, %v1702
      %v1824 = vmul.f32 %v1788, %v1703
      %v1825 = vmul.f32 %v1793, %v1704
      %v1826 = vmul.f32 %v1796, %v1705
      %v1827 = vmul.f32 %v1801, %v1706
      %v1828 = vmul.f32 %v1804, %v1707
      %v1829 = vmul.f32 %v1809, %v1708
      %v1830 = vmul.f32 %v1812, %v1709
      %v1831 = vpack.c.bf16 %v1816, %v1815
      %v1832 = vpack.c.bf16 %v1818, %v1817
      %v1833 = vpack.c.bf16 %v1820, %v1819
      %v1834 = vpack.c.bf16 %v1822, %v1821
      %v1835 = vpack.c.bf16 %v1824, %v1823
      %v1836 = vpack.c.bf16 %v1826, %v1825
      %v1837 = vpack.c.bf16 %v1828, %v1827
      %v1838 = vpack.c.bf16 %v1830, %v1829
      %v1839 = vld [vmem:[%s3] sm:$0xff]
      %v1840 = vld [vmem:[%s3 + $0x8] sm:$0xff]
      %v1841 = vld [vmem:[%s3 + $0x10] sm:$0xff]
      %v1842 = vld [vmem:[%s3 + $0x18] sm:$0xff]
      %v1843 = vld [vmem:[%s3 + $0x20] sm:$0xff]
      %v1844 = vld [vmem:[%s3 + $0x28] sm:$0xff]
      %v1845 = vld [vmem:[%s3 + $0x30] sm:$0xff]
      %v1846 = vld [vmem:[%s3 + $0x38] sm:$0xff]
      %v1847 = vld [vmem:[%s3 + $0x40] sm:$0xff]
      %v1848 = vld [vmem:[%s3 + $0x48] sm:$0xff]
      %v1849 = vld [vmem:[%s3 + $0x50] sm:$0xff]
      %v1850 = vld [vmem:[%s3 + $0x58] sm:$0xff]
      %v1851 = vld [vmem:[%s3 + $0x60] sm:$0xff]
      %v1852 = vld [vmem:[%s3 + $0x68] sm:$0xff]
      %v1853 = vld [vmem:[%s3 + $0x70] sm:$0xff]
      %v1854 = vld [vmem:[%s3 + $0x78] sm:$0xff]
      %1855 = vmatprep.subr.bf16.mxu0 0
      %1856 = vmatpush1.bf16.xpose.msra.mxu0 %v1440
      %1857 = vmatprep.subr.bf16.mxu0 0
      %1858 = vmatpush1.bf16.xpose.msra.mxu0 %v1446
      %1859 = vmatprep.subr.bf16.mxu0 0
      %1860 = vmatpush1.bf16.xpose.msra.mxu0 %v1452
      %1861 = vmatprep.subr.bf16.mxu0 0
      %1862 = vmatpush1.bf16.xpose.msra.mxu0 %v1458
      %1863 = vmatprep.subr.bf16.mxu0 0
      %1864 = vmatpush1.bf16.xpose.msra.mxu0 %v1464
      %1865 = vmatprep.subr.bf16.mxu0 0
      %1866 = vmatpush1.bf16.xpose.msra.mxu0 %v1470
      %1867 = vmatprep.subr.bf16.mxu0 0
      %1868 = vmatpush1.bf16.xpose.msra.mxu0 %v1476
      %1869 = vmatprep.subr.bf16.mxu0 0
      %1870 = vmatpush1.bf16.xpose.msra.mxu0 %v1482
      %1871 = vmatprep.subr.bf16.mxu0 0
      %1872 = vmatpush1.bf16.xpose.msra.mxu0 0
      %1873 = vmatprep.subr.bf16.mxu0 0
      %1874 = vmatpush1.bf16.xpose.msra.mxu0 0
      %1875 = vmatprep.subr.bf16.mxu0 0
      %1876 = vmatpush1.bf16.xpose.msra.mxu0 0
      %1877 = vmatprep.subr.bf16.mxu0 0
      %1878 = vmatpush1.bf16.xpose.msra.mxu0 0
      %1879 = vmatprep.subr.bf16.mxu0 0
      %1880 = vmatpush1.bf16.xpose.msra.mxu0 0
      %1881 = vmatprep.subr.bf16.mxu0 0
      %1882 = vmatpush1.bf16.xpose.msra.mxu0 0
      %1883 = vmatprep.subr.bf16.mxu0 0
      %1884 = vmatpush1.bf16.xpose.msra.mxu0 0
      %1885 = vmatprep.subr.bf16.mxu0 0
      %1886 = vmatpush1.bf16.xpose.msra.mxu0 0
      %1887 = vmatprep.mubr.bf16.mxu0 0
      %1888 = vmatmul.mubr.bf16.gmra.mrb[0].mxu0 %v1438
      %v1889 = vpop.f32.mrb[0].mxu0
      %v1890 = vadd.f32 0.0, %v1889
      %v1891 = vpop.f32.mrb[0].mxu0
      %v1892 = vpop.f32.mrb[0].mxu0
      %v1893 = vadd.f32 0.0, %v1892
      %v1894 = vpop.f32.mrb[0].mxu0
      %1895 = vmatprep.mubr.bf16.mxu0 0
      %1896 = vmatmul.mubr.bf16.gmra.mrb[0].mxu0 %v1444
      %v1897 = vpop.f32.mrb[0].mxu0
      %v1898 = vadd.f32 0.0, %v1897
      %v1899 = vpop.f32.mrb[0].mxu0
      %v1900 = vpop.f32.mrb[0].mxu0
      %v1901 = vadd.f32 0.0, %v1900
      %v1902 = vpop.f32.mrb[0].mxu0
      %1903 = vmatprep.mubr.bf16.mxu0 0
      %1904 = vmatmul.mubr.bf16.gmra.mrb[0].mxu0 %v1450
      %v1905 = vpop.f32.mrb[0].mxu0
      %v1906 = vadd.f32 0.0, %v1905
      %v1907 = vpop.f32.mrb[0].mxu0
      %v1908 = vpop.f32.mrb[0].mxu0
      %v1909 = vadd.f32 0.0, %v1908
      %v1910 = vpop.f32.mrb[0].mxu0
      %1911 = vmatprep.mubr.bf16.mxu0 0
      %1912 = vmatmul.mubr.bf16.gmra.mrb[0].mxu0 %v1456
      %v1913 = vpop.f32.mrb[0].mxu0
      %v1914 = vadd.f32 0.0, %v1913
      %v1915 = vpop.f32.mrb[0].mxu0
      %v1916 = vpop.f32.mrb[0].mxu0
      %v1917 = vadd.f32 0.0, %v1916
      %v1918 = vpop.f32.mrb[0].mxu0
      %1919 = vmatprep.mubr.bf16.mxu0 0
      %1920 = vmatmul.mubr.bf16.gmra.mrb[0].mxu0 %v1462
      %v1921 = vpop.f32.mrb[0].mxu0
      %v1922 = vadd.f32 0.0, %v1921
      %v1923 = vpop.f32.mrb[0].mxu0
      %v1924 = vpop.f32.mrb[0].mxu0
      %v1925 = vadd.f32 0.0, %v1924
      %v1926 = vpop.f32.mrb[0].mxu0
      %1927 = vmatprep.mubr.bf16.mxu0 0
      %1928 = vmatmul.mubr.bf16.gmra.mrb[0].mxu0 %v1468
      %v1929 = vpop.f32.mrb[0].mxu0
      %v1930 = vadd.f32 0.0, %v1929
      %v1931 = vpop.f32.mrb[0].mxu0
      %v1932 = vpop.f32.mrb[0].mxu0
      %v1933 = vadd.f32 0.0, %v1932
      %v1934 = vpop.f32.mrb[0].mxu0
      %1935 = vmatprep.mubr.bf16.mxu0 0
      %1936 = vmatmul.mubr.bf16.gmra.mrb[0].mxu0 %v1474
      %v1937 = vpop.f32.mrb[0].mxu0
      %v1938 = vadd.f32 0.0, %v1937
      %v1939 = vpop.f32.mrb[0].mxu0
      %v1940 = vpop.f32.mrb[0].mxu0
      %v1941 = vadd.f32 0.0, %v1940
      %v1942 = vpop.f32.mrb[0].mxu0
      %1943 = vmatprep.mubr.bf16.mxu0 0
      %1944 = vmatmul.mubr.bf16.gmra.mrb[0].mxu0 %v1480
      %v1945 = vpop.f32.mrb[0].mxu0
      %v1946 = vadd.f32 0.0, %v1945
      %v1947 = vpop.f32.mrb[0].mxu0
      %v1948 = vpop.f32.mrb[0].mxu0
      %v1949 = vadd.f32 0.0, %v1948
      %v1950 = vpop.f32.mrb[0].mxu0
      %1951 = vdwg.mxu0
      %1952 = vmax.xlane.f32.xlu0 %v1890
      %v1953 = vpop.xlane.xlu0 %1952
      %1954 = vmax.xlane.f32.xlu0 %v1893
      %v1955 = vpop.xlane.xlu0 %1954
      %1956 = vmax.xlane.f32.xlu0 %v1898
      %v1957 = vpop.xlane.xlu0 %1956
      %1958 = vmax.xlane.f32.xlu0 %v1901
      %v1959 = vpop.xlane.xlu0 %1958
      %1960 = vmax.xlane.f32.xlu0 %v1906
      %v1961 = vpop.xlane.xlu0 %1960
      %1962 = vmax.xlane.f32.xlu0 %v1909
      %v1963 = vpop.xlane.xlu0 %1962
      %1964 = vmax.xlane.f32.xlu0 %v1914
      %v1965 = vpop.xlane.xlu0 %1964
      %1966 = vmax.xlane.f32.xlu0 %v1917
      %v1967 = vpop.xlane.xlu0 %1966
      %1968 = vmax.xlane.f32.xlu0 %v1922
      %v1969 = vpop.xlane.xlu0 %1968
      %1970 = vmax.xlane.f32.xlu0 %v1925
      %v1971 = vpop.xlane.xlu0 %1970
      %1972 = vmax.xlane.f32.xlu0 %v1930
      %v1973 = vpop.xlane.xlu0 %1972
      %1974 = vmax.xlane.f32.xlu0 %v1933
      %v1975 = vpop.xlane.xlu0 %1974
      %1976 = vmax.xlane.f32.xlu0 %v1938
      %v1977 = vpop.xlane.xlu0 %1976
      %1978 = vmax.xlane.f32.xlu0 %v1941
      %v1979 = vpop.xlane.xlu0 %1978
      %1980 = vmax.xlane.f32.xlu0 %v1946
      %v1981 = vpop.xlane.xlu0 %1980
      %1982 = vmax.xlane.f32.xlu0 %v1949
      %v1983 = vpop.xlane.xlu0 %1982
      %v1984 = vsub.f32 %v1890, %v1953
      %v1985 = vsub.f32 %v1893, %v1955
      %v1986 = vsub.f32 %v1898, %v1957
      %v1987 = vsub.f32 %v1901, %v1959
      %v1988 = vsub.f32 %v1906, %v1961
      %v1989 = vsub.f32 %v1909, %v1963
      %v1990 = vsub.f32 %v1914, %v1965
      %v1991 = vsub.f32 %v1917, %v1967
      %v1992 = vsub.f32 %v1922, %v1969
      %v1993 = vsub.f32 %v1925, %v1971
      %v1994 = vsub.f32 %v1930, %v1973
      %v1995 = vsub.f32 %v1933, %v1975
      %v1996 = vsub.f32 %v1938, %v1977
      %v1997 = vsub.f32 %v1941, %v1979
      %v1998 = vsub.f32 %v1946, %v1981
      %v1999 = vsub.f32 %v1949, %v1983
      %v2000 = vmul.f32 %v1984, 1.442695
      %v2001 = vpow.pop %v2000
      %v2002 = vmul.f32 %v1985, 1.442695
      %v2003 = vpow.pop %v2002
      %v2004 = vmul.f32 %v1986, 1.442695
      %v2005 = vpow.pop %v2004
      %v2006 = vmul.f32 %v1987, 1.442695
      %v2007 = vpow.pop %v2006
      %v2008 = vmul.f32 %v1988, 1.442695
      %v2009 = vpow.pop %v2008
      %v2010 = vmul.f32 %v1989, 1.442695
      %v2011 = vpow.pop %v2010
      %v2012 = vmul.f32 %v1990, 1.442695
      %v2013 = vpow.pop %v2012
      %v2014 = vmul.f32 %v1991, 1.442695
      %v2015 = vpow.pop %v2014
      %v2016 = vmul.f32 %v1992, 1.442695
      %v2017 = vpow.pop %v2016
      %v2018 = vmul.f32 %v1993, 1.442695
      %v2019 = vpow.pop %v2018
      %v2020 = vmul.f32 %v1994, 1.442695
      %v2021 = vpow.pop %v2020
      %v2022 = vmul.f32 %v1995, 1.442695
      %v2023 = vpow.pop %v2022
      %v2024 = vmul.f32 %v1996, 1.442695
      %v2025 = vpow.pop %v2024
      %v2026 = vmul.f32 %v1997, 1.442695
      %v2027 = vpow.pop %v2026
      %v2028 = vmul.f32 %v1998, 1.442695
      %v2029 = vpow.pop %v2028
      %v2030 = vmul.f32 %v1999, 1.442695
      %v2031 = vpow.pop %v2030
      %2032 = vadd.xlane.f32.xlu0 %v2001
      %v2033 = vpop.xlane.xlu0 %2032
      %2034 = vadd.xlane.f32.xlu0 %v2003
      %v2035 = vpop.xlane.xlu0 %2034
      %2036 = vadd.xlane.f32.xlu0 %v2005
      %v2037 = vpop.xlane.xlu0 %2036
      %2038 = vadd.xlane.f32.xlu0 %v2007
      %v2039 = vpop.xlane.xlu0 %2038
      %2040 = vadd.xlane.f32.xlu0 %v2009
      %v2041 = vpop.xlane.xlu0 %2040
      %2042 = vadd.xlane.f32.xlu0 %v2011
      %v2043 = vpop.xlane.xlu0 %2042
      %2044 = vadd.xlane.f32.xlu0 %v2013
      %v2045 = vpop.xlane.xlu0 %2044
      %2046 = vadd.xlane.f32.xlu0 %v2015
      %v2047 = vpop.xlane.xlu0 %2046
      %2048 = vadd.xlane.f32.xlu0 %v2017
      %v2049 = vpop.xlane.xlu0 %2048
      %2050 = vadd.xlane.f32.xlu0 %v2019
      %v2051 = vpop.xlane.xlu0 %2050
      %2052 = vadd.xlane.f32.xlu0 %v2021
      %v2053 = vpop.xlane.xlu0 %2052
      %2054 = vadd.xlane.f32.xlu0 %v2023
      %v2055 = vpop.xlane.xlu0 %2054
      %2056 = vadd.xlane.f32.xlu0 %v2025
      %v2057 = vpop.xlane.xlu0 %2056
      %2058 = vadd.xlane.f32.xlu0 %v2027
      %v2059 = vpop.xlane.xlu0 %2058
      %2060 = vadd.xlane.f32.xlu0 %v2029
      %v2061 = vpop.xlane.xlu0 %2060
      %2062 = vadd.xlane.f32.xlu0 %v2031
      %v2063 = vpop.xlane.xlu0 %2062
      %v2064 = vrcp.pop %v2033
      %v2065 = vrcp.pop %v2035
      %v2066 = vrcp.pop %v2037
      %v2067 = vrcp.pop %v2039
      %v2068 = vrcp.pop %v2041
      %v2069 = vrcp.pop %v2043
      %v2070 = vrcp.pop %v2045
      %v2071 = vrcp.pop %v2047
      %v2072 = vrcp.pop %v2049
      %v2073 = vrcp.pop %v2051
      %v2074 = vrcp.pop %v2053
      %v2075 = vrcp.pop %v2055
      %v2076 = vrcp.pop %v2057
      %v2077 = vrcp.pop %v2059
      %v2078 = vrcp.pop %v2061
      %v2079 = vrcp.pop %v2063
      %v2080 = vpack.c.bf16 %v2003, %v2001
      %v2081 = vpack.c.bf16 %v2007, %v2005
      %v2082 = vpack.c.bf16 %v2011, %v2009
      %v2083 = vpack.c.bf16 %v2015, %v2013
      %v2084 = vpack.c.bf16 %v2019, %v2017
      %v2085 = vpack.c.bf16 %v2023, %v2021
      %v2086 = vpack.c.bf16 %v2027, %v2025
      %v2087 = vpack.c.bf16 %v2031, %v2029
      %2088 = vmatprep.subr.bf16.mxu0 0
      %2089 = vmatpush1.bf16.msra.mxu0 %v1442
      %2090 = vmatprep.subr.bf16.mxu0 0
      %2091 = vmatpush1.bf16.msra.mxu0 %v1448
      %2092 = vmatprep.subr.bf16.mxu0 0
      %2093 = vmatpush1.bf16.msra.mxu0 %v1454
      %2094 = vmatprep.subr.bf16.mxu0 0
      %2095 = vmatpush1.bf16.msra.mxu0 %v1460
      %2096 = vmatprep.subr.bf16.mxu0 0
      %2097 = vmatpush1.bf16.msra.mxu0 %v1466
      %2098 = vmatprep.subr.bf16.mxu0 0
      %2099 = vmatpush1.bf16.msra.mxu0 %v1472
      %2100 = vmatprep.subr.bf16.mxu0 0
      %2101 = vmatpush1.bf16.msra.mxu0 %v1478
      %2102 = vmatprep.subr.bf16.mxu0 0
      %2103 = vmatpush1.bf16.msra.mxu0 %v1484
      %2104 = vmatprep.subr.bf16.mxu0 0
      %2105 = vmatpush1.bf16.msra.mxu0 0
      %2106 = vmatprep.subr.bf16.mxu0 0
      %2107 = vmatpush1.bf16.msra.mxu0 0
      %2108 = vmatprep.subr.bf16.mxu0 0
      %2109 = vmatpush1.bf16.msra.mxu0 0
      %2110 = vmatprep.subr.bf16.mxu0 0
      %2111 = vmatpush1.bf16.msra.mxu0 0
      %2112 = vmatprep.subr.bf16.mxu0 0
      %2113 = vmatpush1.bf16.msra.mxu0 0
      %2114 = vmatprep.subr.bf16.mxu0 0
      %2115 = vmatpush1.bf16.msra.mxu0 0
      %2116 = vmatprep.subr.bf16.mxu0 0
      %2117 = vmatpush1.bf16.msra.mxu0 0
      %2118 = vmatprep.subr.bf16.mxu0 0
      %2119 = vmatpush1.bf16.msra.mxu0 0
      %2120 = vmatprep.mubr.bf16.mxu0 0
      %2121 = vmatmul.mubr.bf16.gmra.mrb[0].mxu0 %v2080
      %v2122 = vpop.f32.mrb[0].mxu0
      %v2123 = vadd.f32 0.0, %v2122
      %v2124 = vpop.f32.mrb[0].mxu0
      %v2125 = vpop.f32.mrb[0].mxu0
      %v2126 = vadd.f32 0.0, %v2125
      %v2127 = vpop.f32.mrb[0].mxu0
      %2128 = vmatprep.mubr.bf16.mxu0 0
      %2129 = vmatmul.mubr.bf16.gmra.mrb[0].mxu0 %v2081
      %v2130 = vpop.f32.mrb[0].mxu0
      %v2131 = vadd.f32 0.0, %v2130
      %v2132 = vpop.f32.mrb[0].mxu0
      %v2133 = vpop.f32.mrb[0].mxu0
      %v2134 = vadd.f32 0.0, %v2133
      %v2135 = vpop.f32.mrb[0].mxu0
      %2136 = vmatprep.mubr.bf16.mxu0 0
      %2137 = vmatmul.mubr.bf16.gmra.mrb[0].mxu0 %v2082
      %v2138 = vpop.f32.mrb[0].mxu0
      %v2139 = vadd.f32 0.0, %v2138
      %v2140 = vpop.f32.mrb[0].mxu0
      %v2141 = vpop.f32.mrb[0].mxu0
      %v2142 = vadd.f32 0.0, %v2141
      %v2143 = vpop.f32.mrb[0].mxu0
      %2144 = vmatprep.mubr.bf16.mxu0 0
      %2145 = vmatmul.mubr.bf16.gmra.mrb[0].mxu0 %v2083
      %v2146 = vpop.f32.mrb[0].mxu0
      %v2147 = vadd.f32 0.0, %v2146
      %v2148 = vpop.f32.mrb[0].mxu0
      %v2149 = vpop.f32.mrb[0].mxu0
      %v2150 = vadd.f32 0.0, %v2149
      %v2151 = vpop.f32.mrb[0].mxu0
      %2152 = vmatprep.mubr.bf16.mxu0 0
      %2153 = vmatmul.mubr.bf16.gmra.mrb[0].mxu0 %v2084
      %v2154 = vpop.f32.mrb[0].mxu0
      %v2155 = vadd.f32 0.0, %v2154
      %v2156 = vpop.f32.mrb[0].mxu0
      %v2157 = vpop.f32.mrb[0].mxu0
      %v2158 = vadd.f32 0.0, %v2157
      %v2159 = vpop.f32.mrb[0].mxu0
      %2160 = vmatprep.mubr.bf16.mxu0 0
      %2161 = vmatmul.mubr.bf16.gmra.mrb[0].mxu0 %v2085
      %v2162 = vpop.f32.mrb[0].mxu0
      %v2163 = vadd.f32 0.0, %v2162
      %v2164 = vpop.f32.mrb[0].mxu0
      %v2165 = vpop.f32.mrb[0].mxu0
      %v2166 = vadd.f32 0.0, %v2165
      %v2167 = vpop.f32.mrb[0].mxu0
      %2168 = vmatprep.mubr.bf16.mxu0 0
      %2169 = vmatmul.mubr.bf16.gmra.mrb[0].mxu0 %v2086
      %v2170 = vpop.f32.mrb[0].mxu0
      %v2171 = vadd.f32 0.0, %v2170
      %v2172 = vpop.f32.mrb[0].mxu0
      %v2173 = vpop.f32.mrb[0].mxu0
      %v2174 = vadd.f32 0.0, %v2173
      %v2175 = vpop.f32.mrb[0].mxu0
      %2176 = vmatprep.mubr.bf16.mxu0 0
      %2177 = vmatmul.mubr.bf16.gmra.mrb[0].mxu0 %v2087
      %v2178 = vpop.f32.mrb[0].mxu0
      %v2179 = vadd.f32 0.0, %v2178
      %v2180 = vpop.f32.mrb[0].mxu0
      %v2181 = vpop.f32.mrb[0].mxu0
      %v2182 = vadd.f32 0.0, %v2181
      %v2183 = vpop.f32.mrb[0].mxu0
      %2184 = vdwg.mxu0
      %v2185 = vmul.f32 %v2123, %v2064
      %v2186 = vmul.f32 %v2126, %v2065
      %v2187 = vmul.f32 %v2131, %v2066
      %v2188 = vmul.f32 %v2134, %v2067
      %v2189 = vmul.f32 %v2139, %v2068
      %v2190 = vmul.f32 %v2142, %v2069
      %v2191 = vmul.f32 %v2147, %v2070
      %v2192 = vmul.f32 %v2150, %v2071
      %v2193 = vmul.f32 %v2155, %v2072
      %v2194 = vmul.f32 %v2158, %v2073
      %v2195 = vmul.f32 %v2163, %v2074
      %v2196 = vmul.f32 %v2166, %v2075
      %v2197 = vmul.f32 %v2171, %v2076
      %v2198 = vmul.f32 %v2174, %v2077
      %v2199 = vmul.f32 %v2179, %v2078
      %v2200 = vmul.f32 %v2182, %v2079
      %v2201 = vpack.c.bf16 %v2186, %v2185
      %v2202 = vpack.c.bf16 %v2188, %v2187
      %v2203 = vpack.c.bf16 %v2190, %v2189
      %v2204 = vpack.c.bf16 %v2192, %v2191
      %v2205 = vpack.c.bf16 %v2194, %v2193
      %v2206 = vpack.c.bf16 %v2196, %v2195
      %v2207 = vpack.c.bf16 %v2198, %v2197
      %v2208 = vpack.c.bf16 %v2200, %v2199
      %s2209 = scalar_lea.vmem %s3, 128
      %v2210 = vld [vmem:[%s2209] sm:$0xff]
      %v2211 = vld [vmem:[%s2209 + $0x8] sm:$0xff]
      %v2212 = vld [vmem:[%s2209 + $0x10] sm:$0xff]
      %v2213 = vld [vmem:[%s2209 + $0x18] sm:$0xff]
      %v2214 = vld [vmem:[%s2209 + $0x20] sm:$0xff]
      %v2215 = vld [vmem:[%s2209 + $0x28] sm:$0xff]
      %v2216 = vld [vmem:[%s2209 + $0x30] sm:$0xff]
      %v2217 = vld [vmem:[%s2209 + $0x38] sm:$0xff]
      %v2218 = vld [vmem:[%s2209 + $0x40] sm:$0xff]
      %v2219 = vld [vmem:[%s2209 + $0x48] sm:$0xff]
      %v2220 = vld [vmem:[%s2209 + $0x50] sm:$0xff]
      %v2221 = vld [vmem:[%s2209 + $0x58] sm:$0xff]
      %v2222 = vld [vmem:[%s2209 + $0x60] sm:$0xff]
      %v2223 = vld [vmem:[%s2209 + $0x68] sm:$0xff]
      %v2224 = vld [vmem:[%s2209 + $0x70] sm:$0xff]
      %v2225 = vld [vmem:[%s2209 + $0x78] sm:$0xff]
      %v2242 = vunpack.c.l.b16 %v2210
      %v2243 = vunpack.c.h.b16 %v2210
      %v2244 = vunpack.c.l.b16 %v2211
      %v2245 = vunpack.c.h.b16 %v2211
      %v2246 = vunpack.c.l.b16 %v2212
      %v2247 = vunpack.c.h.b16 %v2212
      %v2248 = vunpack.c.l.b16 %v2213
      %v2249 = vunpack.c.h.b16 %v2213
      %v2250 = vunpack.c.l.b16 %v2214
      %v2251 = vunpack.c.h.b16 %v2214
      %v2252 = vunpack.c.l.b16 %v2215
      %v2253 = vunpack.c.h.b16 %v2215
      %v2254 = vunpack.c.l.b16 %v2216
      %v2255 = vunpack.c.h.b16 %v2216
      %v2256 = vunpack.c.l.b16 %v2217
      %v2257 = vunpack.c.h.b16 %v2217
      %v2258 = vunpack.c.l.b16 %v2218
      %v2259 = vunpack.c.h.b16 %v2218
      %v2260 = vunpack.c.l.b16 %v2219
      %v2261 = vunpack.c.h.b16 %v2219
      %v2262 = vunpack.c.l.b16 %v2220
      %v2263 = vunpack.c.h.b16 %v2220
      %v2264 = vunpack.c.l.b16 %v2221
      %v2265 = vunpack.c.h.b16 %v2221
      %v2266 = vunpack.c.l.b16 %v2222
      %v2267 = vunpack.c.h.b16 %v2222
      %v2268 = vunpack.c.l.b16 %v2223
      %v2269 = vunpack.c.h.b16 %v2223
      %v2270 = vunpack.c.l.b16 %v2224
      %v2271 = vunpack.c.h.b16 %v2224
      %v2272 = vunpack.c.l.b16 %v2225
      %v2273 = vunpack.c.h.b16 %v2225
      %v2274 = vpack.c.b16 %v2244, %v2242
      %v2275 = vpack.c.b16 %v2245, %v2243
      %v2276 = vpack.c.b16 %v2248, %v2246
      %v2277 = vpack.c.b16 %v2249, %v2247
      %v2278 = vpack.c.b16 %v2252, %v2250
      %v2279 = vpack.c.b16 %v2253, %v2251
      %v2280 = vpack.c.b16 %v2256, %v2254
      %v2281 = vpack.c.b16 %v2257, %v2255
      %v2282 = vpack.c.b16 %v2260, %v2258
      %v2283 = vpack.c.b16 %v2261, %v2259
      %v2284 = vpack.c.b16 %v2264, %v2262
      %v2285 = vpack.c.b16 %v2265, %v2263
      %v2286 = vpack.c.b16 %v2268, %v2266
      %v2287 = vpack.c.b16 %v2269, %v2267
      %v2288 = vpack.c.b16 %v2272, %v2270
      %v2289 = vpack.c.b16 %v2273, %v2271
      %2306 = vmatprep.subr.bf16.mxu0 %v2275
      %2307 = vmatpush1.bf16.msra.mxu0 %v2274
      %2308 = vmatprep.subr.bf16.mxu0 %v2277
      %2309 = vmatpush1.bf16.msra.mxu0 %v2276
      %2310 = vmatprep.subr.bf16.mxu0 %v2279
      %2311 = vmatpush1.bf16.msra.mxu0 %v2278
      %2312 = vmatprep.subr.bf16.mxu0 %v2281
      %2313 = vmatpush1.bf16.msra.mxu0 %v2280
      %2314 = vmatprep.subr.bf16.mxu0 %v2283
      %2315 = vmatpush1.bf16.msra.mxu0 %v2282
      %2316 = vmatprep.subr.bf16.mxu0 %v2285
      %2317 = vmatpush1.bf16.msra.mxu0 %v2284
      %2318 = vmatprep.subr.bf16.mxu0 %v2287
      %2319 = vmatpush1.bf16.msra.mxu0 %v2286
      %2320 = vmatprep.subr.bf16.mxu0 %v2289
      %2321 = vmatpush1.bf16.msra.mxu0 %v2288
      %2322 = vmatprep.subr.bf16.mxu0 0
      %2323 = vmatpush1.bf16.msra.mxu0 0
      %2324 = vmatprep.subr.bf16.mxu0 0
      %2325 = vmatpush1.bf16.msra.mxu0 0
      %2326 = vmatprep.subr.bf16.mxu0 0
      %2327 = vmatpush1.bf16.msra.mxu0 0
      %2328 = vmatprep.subr.bf16.mxu0 0
      %2329 = vmatpush1.bf16.msra.mxu0 0
      %2330 = vmatprep.subr.bf16.mxu0 0
      %2331 = vmatpush1.bf16.msra.mxu0 0
      %2332 = vmatprep.subr.bf16.mxu0 0
      %2333 = vmatpush1.bf16.msra.mxu0 0
      %2334 = vmatprep.subr.bf16.mxu0 0
      %2335 = vmatpush1.bf16.msra.mxu0 0
      %2336 = vmatprep.subr.bf16.mxu0 0
      %2337 = vmatpush1.bf16.msra.mxu0 0
      %2338 = vmatprep.mubr.bf16.mxu0 0
      %2339 = vmatmul.mubr.bf16.gmra.mrb[0].mxu0 %v2201
      %v2340 = vpop.f32.mrb[0].mxu0
      %v2341 = vadd.f32 0.0, %v2340
      %v2342 = vpop.f32.mrb[0].mxu0
      %v2343 = vadd.f32 0.0, %v2342
      %v2344 = vpop.f32.mrb[0].mxu0
      %v2345 = vadd.f32 0.0, %v2344
      %v2346 = vpop.f32.mrb[0].mxu0
      %v2347 = vadd.f32 0.0, %v2346
      %2348 = vmatprep.mubr.bf16.mxu0 0
      %2349 = vmatmul.mubr.bf16.gmra.mrb[0].mxu0 %v2202
      %v2350 = vpop.f32.mrb[0].mxu0
      %v2351 = vadd.f32 0.0, %v2350
      %v2352 = vpop.f32.mrb[0].mxu0
      %v2353 = vadd.f32 0.0, %v2352
      %v2354 = vpop.f32.mrb[0].mxu0
      %v2355 = vadd.f32 0.0, %v2354
      %v2356 = vpop.f32.mrb[0].mxu0
      %v2357 = vadd.f32 0.0, %v2356
      %2358 = vmatprep.mubr.bf16.mxu0 0
      %2359 = vmatmul.mubr.bf16.gmra.mrb[0].mxu0 %v2203
      %v2360 = vpop.f32.mrb[0].mxu0
      %v2361 = vadd.f32 0.0, %v2360
      %v2362 = vpop.f32.mrb[0].mxu0
      %v2363 = vadd.f32 0.0, %v2362
      %v2364 = vpop.f32.mrb[0].mxu0
      %v2365 = vadd.f32 0.0, %v2364
      %v2366 = vpop.f32.mrb[0].mxu0
      %v2367 = vadd.f32 0.0, %v2366
      %2368 = vmatprep.mubr.bf16.mxu0 0
      %2369 = vmatmul.mubr.bf16.gmra.mrb[0].mxu0 %v2204
      %v2370 = vpop.f32.mrb[0].mxu0
      %v2371 = vadd.f32 0.0, %v2370
      %v2372 = vpop.f32.mrb[0].mxu0
      %v2373 = vadd.f32 0.0, %v2372
      %v2374 = vpop.f32.mrb[0].mxu0
      %v2375 = vadd.f32 0.0, %v2374
      %v2376 = vpop.f32.mrb[0].mxu0
      %v2377 = vadd.f32 0.0, %v2376
      %2378 = vmatprep.mubr.bf16.mxu0 0
      %2379 = vmatmul.mubr.bf16.gmra.mrb[0].mxu0 %v2205
      %v2380 = vpop.f32.mrb[0].mxu0
      %v2381 = vadd.f32 0.0, %v2380
      %v2382 = vpop.f32.mrb[0].mxu0
      %v2383 = vadd.f32 0.0, %v2382
      %v2384 = vpop.f32.mrb[0].mxu0
      %v2385 = vadd.f32 0.0, %v2384
      %v2386 = vpop.f32.mrb[0].mxu0
      %v2387 = vadd.f32 0.0, %v2386
      %2388 = vmatprep.mubr.bf16.mxu0 0
      %2389 = vmatmul.mubr.bf16.gmra.mrb[0].mxu0 %v2206
      %v2390 = vpop.f32.mrb[0].mxu0
      %v2391 = vadd.f32 0.0, %v2390
      %v2392 = vpop.f32.mrb[0].mxu0
      %v2393 = vadd.f32 0.0, %v2392
      %v2394 = vpop.f32.mrb[0].mxu0
      %v2395 = vadd.f32 0.0, %v2394
      %v2396 = vpop.f32.mrb[0].mxu0
      %v2397 = vadd.f32 0.0, %v2396
      %2398 = vmatprep.mubr.bf16.mxu0 0
      %2399 = vmatmul.mubr.bf16.gmra.mrb[0].mxu0 %v2207
      %v2400 = vpop.f32.mrb[0].mxu0
      %v2401 = vadd.f32 0.0, %v2400
      %v2402 = vpop.f32.mrb[0].mxu0
      %v2403 = vadd.f32 0.0, %v2402
      %v2404 = vpop.f32.mrb[0].mxu0
      %v2405 = vadd.f32 0.0, %v2404
      %v2406 = vpop.f32.mrb[0].mxu0
      %v2407 = vadd.f32 0.0, %v2406
      %2408 = vmatprep.mubr.bf16.mxu0 0
      %2409 = vmatmul.mubr.bf16.gmra.mrb[0].mxu0 %v2208
      %v2410 = vpop.f32.mrb[0].mxu0
      %v2411 = vadd.f32 0.0, %v2410
      %v2412 = vpop.f32.mrb[0].mxu0
      %v2413 = vadd.f32 0.0, %v2412
      %v2414 = vpop.f32.mrb[0].mxu0
      %v2415 = vadd.f32 0.0, %v2414
      %v2416 = vpop.f32.mrb[0].mxu0
      %v2417 = vadd.f32 0.0, %v2416
      %2418 = vdwg.mxu0
      %v2435 = vunpack.c.l.b16 %v1839
      %v2436 = vunpack.c.h.b16 %v1839
      %v2437 = vunpack.c.l.b16 %v1840
      %v2438 = vunpack.c.h.b16 %v1840
      %v2439 = vunpack.c.l.b16 %v1841
      %v2440 = vunpack.c.h.b16 %v1841
      %v2441 = vunpack.c.l.b16 %v1842
      %v2442 = vunpack.c.h.b16 %v1842
      %v2443 = vunpack.c.l.b16 %v1843
      %v2444 = vunpack.c.h.b16 %v1843
      %v2445 = vunpack.c.l.b16 %v1844
      %v2446 = vunpack.c.h.b16 %v1844
      %v2447 = vunpack.c.l.b16 %v1845
      %v2448 = vunpack.c.h.b16 %v1845
      %v2449 = vunpack.c.l.b16 %v1846
      %v2450 = vunpack.c.h.b16 %v1846
      %v2451 = vunpack.c.l.b16 %v1847
      %v2452 = vunpack.c.h.b16 %v1847
      %v2453 = vunpack.c.l.b16 %v1848
      %v2454 = vunpack.c.h.b16 %v1848
      %v2455 = vunpack.c.l.b16 %v1849
      %v2456 = vunpack.c.h.b16 %v1849
      %v2457 = vunpack.c.l.b16 %v1850
      %v2458 = vunpack.c.h.b16 %v1850
      %v2459 = vunpack.c.l.b16 %v1851
      %v2460 = vunpack.c.h.b16 %v1851
      %v2461 = vunpack.c.l.b16 %v1852
      %v2462 = vunpack.c.h.b16 %v1852
      %v2463 = vunpack.c.l.b16 %v1853
      %v2464 = vunpack.c.h.b16 %v1853
      %v2465 = vunpack.c.l.b16 %v1854
      %v2466 = vunpack.c.h.b16 %v1854
      %v2467 = vpack.c.b16 %v2437, %v2435
      %v2468 = vpack.c.b16 %v2438, %v2436
      %v2469 = vpack.c.b16 %v2441, %v2439
      %v2470 = vpack.c.b16 %v2442, %v2440
      %v2471 = vpack.c.b16 %v2445, %v2443
      %v2472 = vpack.c.b16 %v2446, %v2444
      %v2473 = vpack.c.b16 %v2449, %v2447
      %v2474 = vpack.c.b16 %v2450, %v2448
      %v2475 = vpack.c.b16 %v2453, %v2451
      %v2476 = vpack.c.b16 %v2454, %v2452
      %v2477 = vpack.c.b16 %v2457, %v2455
      %v2478 = vpack.c.b16 %v2458, %v2456
      %v2479 = vpack.c.b16 %v2461, %v2459
      %v2480 = vpack.c.b16 %v2462, %v2460
      %v2481 = vpack.c.b16 %v2465, %v2463
      %v2482 = vpack.c.b16 %v2466, %v2464
      %2499 = vmatprep.subr.bf16.mxu0 %v2468
      %2500 = vmatpush1.bf16.msra.mxu0 %v2467
      %2501 = vmatprep.subr.bf16.mxu0 %v2470
      %2502 = vmatpush1.bf16.msra.mxu0 %v2469
      %2503 = vmatprep.subr.bf16.mxu0 %v2472
      %2504 = vmatpush1.bf16.msra.mxu0 %v2471
      %2505 = vmatprep.subr.bf16.mxu0 %v2474
      %2506 = vmatpush1.bf16.msra.mxu0 %v2473
      %2507 = vmatprep.subr.bf16.mxu0 %v2476
      %2508 = vmatpush1.bf16.msra.mxu0 %v2475
      %2509 = vmatprep.subr.bf16.mxu0 %v2478
      %2510 = vmatpush1.bf16.msra.mxu0 %v2477
      %2511 = vmatprep.subr.bf16.mxu0 %v2480
      %2512 = vmatpush1.bf16.msra.mxu0 %v2479
      %2513 = vmatprep.subr.bf16.mxu0 %v2482
      %2514 = vmatpush1.bf16.msra.mxu0 %v2481
      %2515 = vmatprep.subr.bf16.mxu0 0
      %2516 = vmatpush1.bf16.msra.mxu0 0
      %2517 = vmatprep.subr.bf16.mxu0 0
      %2518 = vmatpush1.bf16.msra.mxu0 0
      %2519 = vmatprep.subr.bf16.mxu0 0
      %2520 = vmatpush1.bf16.msra.mxu0 0
      %2521 = vmatprep.subr.bf16.mxu0 0
      %2522 = vmatpush1.bf16.msra.mxu0 0
      %2523 = vmatprep.subr.bf16.mxu0 0
      %2524 = vmatpush1.bf16.msra.mxu0 0
      %2525 = vmatprep.subr.bf16.mxu0 0
      %2526 = vmatpush1.bf16.msra.mxu0 0
      %2527 = vmatprep.subr.bf16.mxu0 0
      %2528 = vmatpush1.bf16.msra.mxu0 0
      %2529 = vmatprep.subr.bf16.mxu0 0
      %2530 = vmatpush1.bf16.msra.mxu0 0
      %2531 = vmatprep.mubr.bf16.mxu0 0
      %2532 = vmatmul.mubr.bf16.gmra.mrb[0].mxu0 %v1831
      %v2533 = vpop.f32.mrb[0].mxu0
      %v2534 = vadd.f32 %v2341, %v2533
      %v2535 = vpop.f32.mrb[0].mxu0
      %v2536 = vadd.f32 %v2343, %v2535
      %v2537 = vpop.f32.mrb[0].mxu0
      %v2538 = vadd.f32 %v2345, %v2537
      %v2539 = vpop.f32.mrb[0].mxu0
      %v2540 = vadd.f32 %v2347, %v2539
      %2541 = vmatprep.mubr.bf16.mxu0 0
      %2542 = vmatmul.mubr.bf16.gmra.mrb[0].mxu0 %v1832
      %v2543 = vpop.f32.mrb[0].mxu0
      %v2544 = vadd.f32 %v2351, %v2543
      %v2545 = vpop.f32.mrb[0].mxu0
      %v2546 = vadd.f32 %v2353, %v2545
      %v2547 = vpop.f32.mrb[0].mxu0
      %v2548 = vadd.f32 %v2355, %v2547
      %v2549 = vpop.f32.mrb[0].mxu0
      %v2550 = vadd.f32 %v2357, %v2549
      %2551 = vmatprep.mubr.bf16.mxu0 0
      %2552 = vmatmul.mubr.bf16.gmra.mrb[0].mxu0 %v1833
      %v2553 = vpop.f32.mrb[0].mxu0
      %v2554 = vadd.f32 %v2361, %v2553
      %v2555 = vpop.f32.mrb[0].mxu0
      %v2556 = vadd.f32 %v2363, %v2555
      %v2557 = vpop.f32.mrb[0].mxu0
      %v2558 = vadd.f32 %v2365, %v2557
      %v2559 = vpop.f32.mrb[0].mxu0
      %v2560 = vadd.f32 %v2367, %v2559
      %2561 = vmatprep.mubr.bf16.mxu0 0
      %2562 = vmatmul.mubr.bf16.gmra.mrb[0].mxu0 %v1834
      %v2563 = vpop.f32.mrb[0].mxu0
      %v2564 = vadd.f32 %v2371, %v2563
      %v2565 = vpop.f32.mrb[0].mxu0
      %v2566 = vadd.f32 %v2373, %v2565
      %v2567 = vpop.f32.mrb[0].mxu0
      %v2568 = vadd.f32 %v2375, %v2567
      %v2569 = vpop.f32.mrb[0].mxu0
      %v2570 = vadd.f32 %v2377, %v2569
      %2571 = vmatprep.mubr.bf16.mxu0 0
      %2572 = vmatmul.mubr.bf16.gmra.mrb[0].mxu0 %v1835
      %v2573 = vpop.f32.mrb[0].mxu0
      %v2574 = vadd.f32 %v2381, %v2573
      %v2575 = vpop.f32.mrb[0].mxu0
      %v2576 = vadd.f32 %v2383, %v2575
      %v2577 = vpop.f32.mrb[0].mxu0
      %v2578 = vadd.f32 %v2385, %v2577
      %v2579 = vpop.f32.mrb[0].mxu0
      %v2580 = vadd.f32 %v2387, %v2579
      %2581 = vmatprep.mubr.bf16.mxu0 0
      %2582 = vmatmul.mubr.bf16.gmra.mrb[0].mxu0 %v1836
      %v2583 = vpop.f32.mrb[0].mxu0
      %v2584 = vadd.f32 %v2391, %v2583
      %v2585 = vpop.f32.mrb[0].mxu0
      %v2586 = vadd.f32 %v2393, %v2585
      %v2587 = vpop.f32.mrb[0].mxu0
      %v2588 = vadd.f32 %v2395, %v2587
      %v2589 = vpop.f32.mrb[0].mxu0
      %v2590 = vadd.f32 %v2397, %v2589
      %2591 = vmatprep.mubr.bf16.mxu0 0
      %2592 = vmatmul.mubr.bf16.gmra.mrb[0].mxu0 %v1837
      %v2593 = vpop.f32.mrb[0].mxu0
      %v2594 = vadd.f32 %v2401, %v2593
      %v2595 = vpop.f32.mrb[0].mxu0
      %v2596 = vadd.f32 %v2403, %v2595
      %v2597 = vpop.f32.mrb[0].mxu0
      %v2598 = vadd.f32 %v2405, %v2597
      %v2599 = vpop.f32.mrb[0].mxu0
      %v2600 = vadd.f32 %v2407, %v2599
      %2601 = vmatprep.mubr.bf16.mxu0 0
      %2602 = vmatmul.mubr.bf16.gmra.mrb[0].mxu0 %v1838
      %v2603 = vpop.f32.mrb[0].mxu0
      %v2604 = vadd.f32 %v2411, %v2603
      %v2605 = vpop.f32.mrb[0].mxu0
      %v2606 = vadd.f32 %v2413, %v2605
      %v2607 = vpop.f32.mrb[0].mxu0
      %v2608 = vadd.f32 %v2415, %v2607
      %v2609 = vpop.f32.mrb[0].mxu0
      %v2610 = vadd.f32 %v2417, %v2609
      %2611 = vdwg.mxu0
      %v2612 = vld [vmem:[%s4] sm:$0x3]
      %v2614 = vlaneseq
      %v2615 = vshrl.u32 %v2614, 7
      %v2616 = vsub.s32 0, %v2615
      %v2617 = vrot.slane %v2612, %v2616
      %v2618 = vlaneseq
      %v2619 = vshrl.u32 %v2618, 7
      %v2620 = vsub.s32 1, %v2619
      %v2621 = vrot.slane %v2612, %v2620
      %v2624 = vadd.f32 %v2534, %v2617
      %v2625 = vadd.f32 %v2536, %v2621
      %v2626 = vadd.f32 %v2538, %v2617
      %v2627 = vadd.f32 %v2540, %v2621
      %v2628 = vadd.f32 %v2544, %v2617
      %v2629 = vadd.f32 %v2546, %v2621
      %v2630 = vadd.f32 %v2548, %v2617
      %v2631 = vadd.f32 %v2550, %v2621
      %v2632 = vadd.f32 %v2554, %v2617
      %v2633 = vadd.f32 %v2556, %v2621
      %v2634 = vadd.f32 %v2558, %v2617
      %v2635 = vadd.f32 %v2560, %v2621
      %v2636 = vadd.f32 %v2564, %v2617
      %v2637 = vadd.f32 %v2566, %v2621
      %v2638 = vadd.f32 %v2568, %v2617
      %v2639 = vadd.f32 %v2570, %v2621
      %v2640 = vadd.f32 %v2574, %v2617
      %v2641 = vadd.f32 %v2576, %v2621
      %v2642 = vadd.f32 %v2578, %v2617
      %v2643 = vadd.f32 %v2580, %v2621
      %v2644 = vadd.f32 %v2584, %v2617
      %v2645 = vadd.f32 %v2586, %v2621
      %v2646 = vadd.f32 %v2588, %v2617
      %v2647 = vadd.f32 %v2590, %v2621
      %v2648 = vadd.f32 %v2594, %v2617
      %v2649 = vadd.f32 %v2596, %v2621
      %v2650 = vadd.f32 %v2598, %v2617
      %v2651 = vadd.f32 %v2600, %v2621
      %v2652 = vadd.f32 %v2604, %v2617
      %v2653 = vadd.f32 %v2606, %v2621
      %v2654 = vadd.f32 %v2608, %v2617
      %v2655 = vadd.f32 %v2610, %v2621
      %v2656 = vadd.f32 %v442, %v2624
      %v2657 = vadd.f32 %v443, %v2625
      %v2658 = vadd.f32 %v444, %v2626
      %v2659 = vadd.f32 %v445, %v2627
      %v2660 = vadd.f32 %v446, %v2628
      %v2661 = vadd.f32 %v447, %v2629
      %v2662 = vadd.f32 %v448, %v2630
      %v2663 = vadd.f32 %v449, %v2631
      %v2664 = vadd.f32 %v450, %v2632
      %v2665 = vadd.f32 %v451, %v2633
      %v2666 = vadd.f32 %v452, %v2634
      %v2667 = vadd.f32 %v453, %v2635
      %v2668 = vadd.f32 %v454, %v2636
      %v2669 = vadd.f32 %v455, %v2637
      %v2670 = vadd.f32 %v456, %v2638
      %v2671 = vadd.f32 %v457, %v2639
      %v2672 = vadd.f32 %v458, %v2640
      %v2673 = vadd.f32 %v459, %v2641
      %v2674 = vadd.f32 %v460, %v2642
      %v2675 = vadd.f32 %v461, %v2643
      %v2676 = vadd.f32 %v462, %v2644
      %v2677 = vadd.f32 %v463, %v2645
      %v2678 = vadd.f32 %v464, %v2646
      %v2679 = vadd.f32 %v465, %v2647
      %v2680 = vadd.f32 %v466, %v2648
      %v2681 = vadd.f32 %v467, %v2649
      %v2682 = vadd.f32 %v468, %v2650
      %v2683 = vadd.f32 %v469, %v2651
      %v2684 = vadd.f32 %v470, %v2652
      %v2685 = vadd.f32 %v471, %v2653
      %v2686 = vadd.f32 %v472, %v2654
      %v2687 = vadd.f32 %v473, %v2655
      %v2688 = vld [vmem:[%s5] sm:$0x3]
      %v2689 = vld [vmem:[%s6] sm:$0x3]
      %v2690 = vadd.f32 %v2656, %v2657
      %2691 = vadd.xlane.f32.xlu0 %v2690
      %v2692 = vpop.xlane.xlu0 %2691
      %v2693 = vadd.f32 %v2658, %v2659
      %2694 = vadd.xlane.f32.xlu0 %v2693
      %v2695 = vpop.xlane.xlu0 %2694
      %v2696 = vadd.f32 %v2660, %v2661
      %2697 = vadd.xlane.f32.xlu0 %v2696
      %v2698 = vpop.xlane.xlu0 %2697
      %v2699 = vadd.f32 %v2662, %v2663
      %2700 = vadd.xlane.f32.xlu0 %v2699
      %v2701 = vpop.xlane.xlu0 %2700
      %v2702 = vadd.f32 %v2664, %v2665
      %2703 = vadd.xlane.f32.xlu0 %v2702
      %v2704 = vpop.xlane.xlu0 %2703
      %v2705 = vadd.f32 %v2666, %v2667
      %2706 = vadd.xlane.f32.xlu0 %v2705
      %v2707 = vpop.xlane.xlu0 %2706
      %v2708 = vadd.f32 %v2668, %v2669
      %2709 = vadd.xlane.f32.xlu0 %v2708
      %v2710 = vpop.xlane.xlu0 %2709
      %v2711 = vadd.f32 %v2670, %v2671
      %2712 = vadd.xlane.f32.xlu0 %v2711
      %v2713 = vpop.xlane.xlu0 %2712
      %v2714 = vadd.f32 %v2672, %v2673
      %2715 = vadd.xlane.f32.xlu0 %v2714
      %v2716 = vpop.xlane.xlu0 %2715
      %v2717 = vadd.f32 %v2674, %v2675
      %2718 = vadd.xlane.f32.xlu0 %v2717
      %v2719 = vpop.xlane.xlu0 %2718
      %v2720 = vadd.f32 %v2676, %v2677
      %2721 = vadd.xlane.f32.xlu0 %v2720
      %v2722 = vpop.xlane.xlu0 %2721
      %v2723 = vadd.f32 %v2678, %v2679
      %2724 = vadd.xlane.f32.xlu0 %v2723
      %v2725 = vpop.xlane.xlu0 %2724
      %v2726 = vadd.f32 %v2680, %v2681
      %2727 = vadd.xlane.f32.xlu0 %v2726
      %v2728 = vpop.xlane.xlu0 %2727
      %v2729 = vadd.f32 %v2682, %v2683
      %2730 = vadd.xlane.f32.xlu0 %v2729
      %v2731 = vpop.xlane.xlu0 %2730
      %v2732 = vadd.f32 %v2684, %v2685
      %2733 = vadd.xlane.f32.xlu0 %v2732
      %v2734 = vpop.xlane.xlu0 %2733
      %v2735 = vadd.f32 %v2686, %v2687
      %2736 = vadd.xlane.f32.xlu0 %v2735
      %v2737 = vpop.xlane.xlu0 %2736
      %v2738 = vrcp.pop 256.0
      %v2739 = vmul.f32 %v2692, %v2738
      %v2740 = vmul.f32 %v2695, %v2738
      %v2741 = vmul.f32 %v2698, %v2738
      %v2742 = vmul.f32 %v2701, %v2738
      %v2743 = vmul.f32 %v2704, %v2738
      %v2744 = vmul.f32 %v2707, %v2738
      %v2745 = vmul.f32 %v2710, %v2738
      %v2746 = vmul.f32 %v2713, %v2738
      %v2747 = vmul.f32 %v2716, %v2738
      %v2748 = vmul.f32 %v2719, %v2738
      %v2749 = vmul.f32 %v2722, %v2738
      %v2750 = vmul.f32 %v2725, %v2738
      %v2751 = vmul.f32 %v2728, %v2738
      %v2752 = vmul.f32 %v2731, %v2738
      %v2753 = vmul.f32 %v2734, %v2738
      %v2754 = vmul.f32 %v2737, %v2738
      %v2755 = vsub.f32 %v2656, %v2739
      %v2756 = vsub.f32 %v2657, %v2739
      %v2757 = vsub.f32 %v2658, %v2740
      %v2758 = vsub.f32 %v2659, %v2740
      %v2759 = vsub.f32 %v2660, %v2741
      %v2760 = vsub.f32 %v2661, %v2741
      %v2761 = vsub.f32 %v2662, %v2742
      %v2762 = vsub.f32 %v2663, %v2742
      %v2763 = vsub.f32 %v2664, %v2743
      %v2764 = vsub.f32 %v2665, %v2743
      %v2765 = vsub.f32 %v2666, %v2744
      %v2766 = vsub.f32 %v2667, %v2744
      %v2767 = vsub.f32 %v2668, %v2745
      %v2768 = vsub.f32 %v2669, %v2745
      %v2769 = vsub.f32 %v2670, %v2746
      %v2770 = vsub.f32 %v2671, %v2746
      %v2771 = vsub.f32 %v2672, %v2747
      %v2772 = vsub.f32 %v2673, %v2747
      %v2773 = vsub.f32 %v2674, %v2748
      %v2774 = vsub.f32 %v2675, %v2748
      %v2775 = vsub.f32 %v2676, %v2749
      %v2776 = vsub.f32 %v2677, %v2749
      %v2777 = vsub.f32 %v2678, %v2750
      %v2778 = vsub.f32 %v2679, %v2750
      %v2779 = vsub.f32 %v2680, %v2751
      %v2780 = vsub.f32 %v2681, %v2751
      %v2781 = vsub.f32 %v2682, %v2752
      %v2782 = vsub.f32 %v2683, %v2752
      %v2783 = vsub.f32 %v2684, %v2753
      %v2784 = vsub.f32 %v2685, %v2753
      %v2785 = vsub.f32 %v2686, %v2754
      %v2786 = vsub.f32 %v2687, %v2754
      %v2787 = vmul.f32 %v2755, %v2755
      %v2788 = vmul.f32 %v2756, %v2756
      %v2789 = vmul.f32 %v2757, %v2757
      %v2790 = vmul.f32 %v2758, %v2758
      %v2791 = vmul.f32 %v2759, %v2759
      %v2792 = vmul.f32 %v2760, %v2760
      %v2793 = vmul.f32 %v2761, %v2761
      %v2794 = vmul.f32 %v2762, %v2762
      %v2795 = vmul.f32 %v2763, %v2763
      %v2796 = vmul.f32 %v2764, %v2764
      %v2797 = vmul.f32 %v2765, %v2765
      %v2798 = vmul.f32 %v2766, %v2766
      %v2799 = vmul.f32 %v2767, %v2767
      %v2800 = vmul.f32 %v2768, %v2768
      %v2801 = vmul.f32 %v2769, %v2769
      %v2802 = vmul.f32 %v2770, %v2770
      %v2803 = vmul.f32 %v2771, %v2771
      %v2804 = vmul.f32 %v2772, %v2772
      %v2805 = vmul.f32 %v2773, %v2773
      %v2806 = vmul.f32 %v2774, %v2774
      %v2807 = vmul.f32 %v2775, %v2775
      %v2808 = vmul.f32 %v2776, %v2776
      %v2809 = vmul.f32 %v2777, %v2777
      %v2810 = vmul.f32 %v2778, %v2778
      %v2811 = vmul.f32 %v2779, %v2779
      %v2812 = vmul.f32 %v2780, %v2780
      %v2813 = vmul.f32 %v2781, %v2781
      %v2814 = vmul.f32 %v2782, %v2782
      %v2815 = vmul.f32 %v2783, %v2783
      %v2816 = vmul.f32 %v2784, %v2784
      %v2817 = vmul.f32 %v2785, %v2785
      %v2818 = vmul.f32 %v2786, %v2786
      %v2819 = vadd.f32 %v2787, %v2788
      %2820 = vadd.xlane.f32.xlu0 %v2819
      %v2821 = vpop.xlane.xlu0 %2820
      %v2822 = vadd.f32 %v2789, %v2790
      %2823 = vadd.xlane.f32.xlu0 %v2822
      %v2824 = vpop.xlane.xlu0 %2823
      %v2825 = vadd.f32 %v2791, %v2792
      %2826 = vadd.xlane.f32.xlu0 %v2825
      %v2827 = vpop.xlane.xlu0 %2826
      %v2828 = vadd.f32 %v2793, %v2794
      %2829 = vadd.xlane.f32.xlu0 %v2828
      %v2830 = vpop.xlane.xlu0 %2829
      %v2831 = vadd.f32 %v2795, %v2796
      %2832 = vadd.xlane.f32.xlu0 %v2831
      %v2833 = vpop.xlane.xlu0 %2832
      %v2834 = vadd.f32 %v2797, %v2798
      %2835 = vadd.xlane.f32.xlu0 %v2834
      %v2836 = vpop.xlane.xlu0 %2835
      %v2837 = vadd.f32 %v2799, %v2800
      %2838 = vadd.xlane.f32.xlu0 %v2837
      %v2839 = vpop.xlane.xlu0 %2838
      %v2840 = vadd.f32 %v2801, %v2802
      %2841 = vadd.xlane.f32.xlu0 %v2840
      %v2842 = vpop.xlane.xlu0 %2841
      %v2843 = vadd.f32 %v2803, %v2804
      %2844 = vadd.xlane.f32.xlu0 %v2843
      %v2845 = vpop.xlane.xlu0 %2844
      %v2846 = vadd.f32 %v2805, %v2806
      %2847 = vadd.xlane.f32.xlu0 %v2846
      %v2848 = vpop.xlane.xlu0 %2847
      %v2849 = vadd.f32 %v2807, %v2808
      %2850 = vadd.xlane.f32.xlu0 %v2849
      %v2851 = vpop.xlane.xlu0 %2850
      %v2852 = vadd.f32 %v2809, %v2810
      %2853 = vadd.xlane.f32.xlu0 %v2852
      %v2854 = vpop.xlane.xlu0 %2853
      %v2855 = vadd.f32 %v2811, %v2812
      %2856 = vadd.xlane.f32.xlu0 %v2855
      %v2857 = vpop.xlane.xlu0 %2856
      %v2858 = vadd.f32 %v2813, %v2814
      %2859 = vadd.xlane.f32.xlu0 %v2858
      %v2860 = vpop.xlane.xlu0 %2859
      %v2861 = vadd.f32 %v2815, %v2816
      %2862 = vadd.xlane.f32.xlu0 %v2861
      %v2863 = vpop.xlane.xlu0 %2862
      %v2864 = vadd.f32 %v2817, %v2818
      %2865 = vadd.xlane.f32.xlu0 %v2864
      %v2866 = vpop.xlane.xlu0 %2865
      %v2867 = vmul.f32 %v2821, %v2738
      %v2868 = vmul.f32 %v2824, %v2738
      %v2869 = vmul.f32 %v2827, %v2738
      %v2870 = vmul.f32 %v2830, %v2738
      %v2871 = vmul.f32 %v2833, %v2738
      %v2872 = vmul.f32 %v2836, %v2738
      %v2873 = vmul.f32 %v2839, %v2738
      %v2874 = vmul.f32 %v2842, %v2738
      %v2875 = vmul.f32 %v2845, %v2738
      %v2876 = vmul.f32 %v2848, %v2738
      %v2877 = vmul.f32 %v2851, %v2738
      %v2878 = vmul.f32 %v2854, %v2738
      %v2879 = vmul.f32 %v2857, %v2738
      %v2880 = vmul.f32 %v2860, %v2738
      %v2881 = vmul.f32 %v2863, %v2738
      %v2882 = vmul.f32 %v2866, %v2738
      %v2883 = vadd.f32 %v2867, 1e-05
      %v2884 = vadd.f32 %v2868, 1e-05
      %v2885 = vadd.f32 %v2869, 1e-05
      %v2886 = vadd.f32 %v2870, 1e-05
      %v2887 = vadd.f32 %v2871, 1e-05
      %v2888 = vadd.f32 %v2872, 1e-05
      %v2889 = vadd.f32 %v2873, 1e-05
      %v2890 = vadd.f32 %v2874, 1e-05
      %v2891 = vadd.f32 %v2875, 1e-05
      %v2892 = vadd.f32 %v2876, 1e-05
      %v2893 = vadd.f32 %v2877, 1e-05
      %v2894 = vadd.f32 %v2878, 1e-05
      %v2895 = vadd.f32 %v2879, 1e-05
      %v2896 = vadd.f32 %v2880, 1e-05
      %v2897 = vadd.f32 %v2881, 1e-05
      %v2898 = vadd.f32 %v2882, 1e-05
      %v2899 = vrsqrt.pop %v2883
      %v2900 = vrsqrt.pop %v2884
      %v2901 = vrsqrt.pop %v2885
      %v2902 = vrsqrt.pop %v2886
      %v2903 = vrsqrt.pop %v2887
      %v2904 = vrsqrt.pop %v2888
      %v2905 = vrsqrt.pop %v2889
      %v2906 = vrsqrt.pop %v2890
      %v2907 = vrsqrt.pop %v2891
      %v2908 = vrsqrt.pop %v2892
      %v2909 = vrsqrt.pop %v2893
      %v2910 = vrsqrt.pop %v2894
      %v2911 = vrsqrt.pop %v2895
      %v2912 = vrsqrt.pop %v2896
      %v2913 = vrsqrt.pop %v2897
      %v2914 = vrsqrt.pop %v2898
      %v2915 = vmul.f32 %v2755, %v2899
      %v2916 = vmul.f32 %v2756, %v2899
      %v2917 = vmul.f32 %v2757, %v2900
      %v2918 = vmul.f32 %v2758, %v2900
      %v2919 = vmul.f32 %v2759, %v2901
      %v2920 = vmul.f32 %v2760, %v2901
      %v2921 = vmul.f32 %v2761, %v2902
      %v2922 = vmul.f32 %v2762, %v2902
      %v2923 = vmul.f32 %v2763, %v2903
      %v2924 = vmul.f32 %v2764, %v2903
      %v2925 = vmul.f32 %v2765, %v2904
      %v2926 = vmul.f32 %v2766, %v2904
      %v2927 = vmul.f32 %v2767, %v2905
      %v2928 = vmul.f32 %v2768, %v2905
      %v2929 = vmul.f32 %v2769, %v2906
      %v2930 = vmul.f32 %v2770, %v2906
      %v2931 = vmul.f32 %v2771, %v2907
      %v2932 = vmul.f32 %v2772, %v2907
      %v2933 = vmul.f32 %v2773, %v2908
      %v2934 = vmul.f32 %v2774, %v2908
      %v2935 = vmul.f32 %v2775, %v2909
      %v2936 = vmul.f32 %v2776, %v2909
      %v2937 = vmul.f32 %v2777, %v2910
      %v2938 = vmul.f32 %v2778, %v2910
      %v2939 = vmul.f32 %v2779, %v2911
      %v2940 = vmul.f32 %v2780, %v2911
      %v2941 = vmul.f32 %v2781, %v2912
      %v2942 = vmul.f32 %v2782, %v2912
      %v2943 = vmul.f32 %v2783, %v2913
      %v2944 = vmul.f32 %v2784, %v2913
      %v2945 = vmul.f32 %v2785, %v2914
      %v2946 = vmul.f32 %v2786, %v2914
      %v2948 = vlaneseq
      %v2949 = vshrl.u32 %v2948, 7
      %v2950 = vsub.s32 0, %v2949
      %v2951 = vrot.slane %v2688, %v2950
      %v2952 = vlaneseq
      %v2953 = vshrl.u32 %v2952, 7
      %v2954 = vsub.s32 1, %v2953
      %v2955 = vrot.slane %v2688, %v2954
      %v2958 = vmul.f32 %v2915, %v2951
      %v2959 = vmul.f32 %v2916, %v2955
      %v2960 = vmul.f32 %v2917, %v2951
      %v2961 = vmul.f32 %v2918, %v2955
      %v2962 = vmul.f32 %v2919, %v2951
      %v2963 = vmul.f32 %v2920, %v2955
      %v2964 = vmul.f32 %v2921, %v2951
      %v2965 = vmul.f32 %v2922, %v2955
      %v2966 = vmul.f32 %v2923, %v2951
      %v2967 = vmul.f32 %v2924, %v2955
      %v2968 = vmul.f32 %v2925, %v2951
      %v2969 = vmul.f32 %v2926, %v2955
      %v2970 = vmul.f32 %v2927, %v2951
      %v2971 = vmul.f32 %v2928, %v2955
      %v2972 = vmul.f32 %v2929, %v2951
      %v2973 = vmul.f32 %v2930, %v2955
      %v2974 = vmul.f32 %v2931, %v2951
      %v2975 = vmul.f32 %v2932, %v2955
      %v2976 = vmul.f32 %v2933, %v2951
      %v2977 = vmul.f32 %v2934, %v2955
      %v2978 = vmul.f32 %v2935, %v2951
      %v2979 = vmul.f32 %v2936, %v2955
      %v2980 = vmul.f32 %v2937, %v2951
      %v2981 = vmul.f32 %v2938, %v2955
      %v2982 = vmul.f32 %v2939, %v2951
      %v2983 = vmul.f32 %v2940, %v2955
      %v2984 = vmul.f32 %v2941, %v2951
      %v2985 = vmul.f32 %v2942, %v2955
      %v2986 = vmul.f32 %v2943, %v2951
      %v2987 = vmul.f32 %v2944, %v2955
      %v2988 = vmul.f32 %v2945, %v2951
      %v2989 = vmul.f32 %v2946, %v2955
      %v2991 = vlaneseq
      %v2992 = vshrl.u32 %v2991, 7
      %v2993 = vsub.s32 0, %v2992
      %v2994 = vrot.slane %v2689, %v2993
      %v2995 = vlaneseq
      %v2996 = vshrl.u32 %v2995, 7
      %v2997 = vsub.s32 1, %v2996
      %v2998 = vrot.slane %v2689, %v2997
      %v3001 = vadd.f32 %v2958, %v2994
      %v3002 = vadd.f32 %v2959, %v2998
      %v3003 = vadd.f32 %v2960, %v2994
      %v3004 = vadd.f32 %v2961, %v2998
      %v3005 = vadd.f32 %v2962, %v2994
      %v3006 = vadd.f32 %v2963, %v2998
      %v3007 = vadd.f32 %v2964, %v2994
      %v3008 = vadd.f32 %v2965, %v2998
      %v3009 = vadd.f32 %v2966, %v2994
      %v3010 = vadd.f32 %v2967, %v2998
      %v3011 = vadd.f32 %v2968, %v2994
      %v3012 = vadd.f32 %v2969, %v2998
      %v3013 = vadd.f32 %v2970, %v2994
      %v3014 = vadd.f32 %v2971, %v2998
      %v3015 = vadd.f32 %v2972, %v2994
      %v3016 = vadd.f32 %v2973, %v2998
      %v3017 = vadd.f32 %v2974, %v2994
      %v3018 = vadd.f32 %v2975, %v2998
      %v3019 = vadd.f32 %v2976, %v2994
      %v3020 = vadd.f32 %v2977, %v2998
      %v3021 = vadd.f32 %v2978, %v2994
      %v3022 = vadd.f32 %v2979, %v2998
      %v3023 = vadd.f32 %v2980, %v2994
      %v3024 = vadd.f32 %v2981, %v2998
      %v3025 = vadd.f32 %v2982, %v2994
      %v3026 = vadd.f32 %v2983, %v2998
      %v3027 = vadd.f32 %v2984, %v2994
      %v3028 = vadd.f32 %v2985, %v2998
      %v3029 = vadd.f32 %v2986, %v2994
      %v3030 = vadd.f32 %v2987, %v2998
      %v3031 = vadd.f32 %v2988, %v2994
      %v3032 = vadd.f32 %v2989, %v2998
      %v3033 = vpack.c.bf16 %v3003, %v3001
      %v3034 = vpack.c.bf16 %v3004, %v3002
      %v3035 = vpack.c.bf16 %v3007, %v3005
      %v3036 = vpack.c.bf16 %v3008, %v3006
      %v3037 = vpack.c.bf16 %v3011, %v3009
      %v3038 = vpack.c.bf16 %v3012, %v3010
      %v3039 = vpack.c.bf16 %v3015, %v3013
      %v3040 = vpack.c.bf16 %v3016, %v3014
      %v3041 = vpack.c.bf16 %v3019, %v3017
      %v3042 = vpack.c.bf16 %v3020, %v3018
      %v3043 = vpack.c.bf16 %v3023, %v3021
      %v3044 = vpack.c.bf16 %v3024, %v3022
      %v3045 = vpack.c.bf16 %v3027, %v3025
      %v3046 = vpack.c.bf16 %v3028, %v3026
      %v3047 = vpack.c.bf16 %v3031, %v3029
      %v3048 = vpack.c.bf16 %v3032, %v3030
      %v3049 = vld [vmem:[%s7] sm:$0xff]
      %v3050 = vld [vmem:[%s7 + $0x8] sm:$0xff]
      %v3051 = vld [vmem:[%s7 + $0x10] sm:$0xff]
      %v3052 = vld [vmem:[%s7 + $0x18] sm:$0xff]
      %v3053 = vld [vmem:[%s7 + $0x20] sm:$0xff]
      %v3054 = vld [vmem:[%s7 + $0x28] sm:$0xff]
      %v3055 = vld [vmem:[%s7 + $0x30] sm:$0xff]
      %v3056 = vld [vmem:[%s7 + $0x38] sm:$0xff]
      %v3057 = vld [vmem:[%s7 + $0x40] sm:$0xff]
      %v3058 = vld [vmem:[%s7 + $0x48] sm:$0xff]
      %v3059 = vld [vmem:[%s7 + $0x50] sm:$0xff]
      %v3060 = vld [vmem:[%s7 + $0x58] sm:$0xff]
      %v3061 = vld [vmem:[%s7 + $0x60] sm:$0xff]
      %v3062 = vld [vmem:[%s7 + $0x68] sm:$0xff]
      %v3063 = vld [vmem:[%s7 + $0x70] sm:$0xff]
      %v3064 = vld [vmem:[%s7 + $0x78] sm:$0xff]
      %v3065 = vld [vmem:[%s7 + $0x80] sm:$0xff]
      %v3066 = vld [vmem:[%s7 + $0x88] sm:$0xff]
      %v3067 = vld [vmem:[%s7 + $0x90] sm:$0xff]
      %v3068 = vld [vmem:[%s7 + $0x98] sm:$0xff]
      %v3069 = vld [vmem:[%s7 + $0xa0] sm:$0xff]
      %v3070 = vld [vmem:[%s7 + $0xa8] sm:$0xff]
      %v3071 = vld [vmem:[%s7 + $0xb0] sm:$0xff]
      %v3072 = vld [vmem:[%s7 + $0xb8] sm:$0xff]
      %v3073 = vld [vmem:[%s7 + $0xc0] sm:$0xff]
      %v3074 = vld [vmem:[%s7 + $0xc8] sm:$0xff]
      %v3075 = vld [vmem:[%s7 + $0xd0] sm:$0xff]
      %v3076 = vld [vmem:[%s7 + $0xd8] sm:$0xff]
      %v3077 = vld [vmem:[%s7 + $0xe0] sm:$0xff]
      %v3078 = vld [vmem:[%s7 + $0xe8] sm:$0xff]
      %v3079 = vld [vmem:[%s7 + $0xf0] sm:$0xff]
      %v3080 = vld [vmem:[%s7 + $0xf8] sm:$0xff]
      %v3081 = vld [vmem:[%s7 + $0x100] sm:$0xff]
      %v3082 = vld [vmem:[%s7 + $0x108] sm:$0xff]
      %v3083 = vld [vmem:[%s7 + $0x110] sm:$0xff]
      %v3084 = vld [vmem:[%s7 + $0x118] sm:$0xff]
      %v3085 = vld [vmem:[%s7 + $0x120] sm:$0xff]
      %v3086 = vld [vmem:[%s7 + $0x128] sm:$0xff]
      %v3087 = vld [vmem:[%s7 + $0x130] sm:$0xff]
      %v3088 = vld [vmem:[%s7 + $0x138] sm:$0xff]
      %v3089 = vld [vmem:[%s7 + $0x140] sm:$0xff]
      %v3090 = vld [vmem:[%s7 + $0x148] sm:$0xff]
      %v3091 = vld [vmem:[%s7 + $0x150] sm:$0xff]
      %v3092 = vld [vmem:[%s7 + $0x158] sm:$0xff]
      %v3093 = vld [vmem:[%s7 + $0x160] sm:$0xff]
      %v3094 = vld [vmem:[%s7 + $0x168] sm:$0xff]
      %v3095 = vld [vmem:[%s7 + $0x170] sm:$0xff]
      %v3096 = vld [vmem:[%s7 + $0x178] sm:$0xff]
      %v3097 = vld [vmem:[%s7 + $0x180] sm:$0xff]
      %v3098 = vld [vmem:[%s7 + $0x188] sm:$0xff]
      %v3099 = vld [vmem:[%s7 + $0x190] sm:$0xff]
      %v3100 = vld [vmem:[%s7 + $0x198] sm:$0xff]
      %v3101 = vld [vmem:[%s7 + $0x1a0] sm:$0xff]
      %v3102 = vld [vmem:[%s7 + $0x1a8] sm:$0xff]
      %v3103 = vld [vmem:[%s7 + $0x1b0] sm:$0xff]
      %v3104 = vld [vmem:[%s7 + $0x1b8] sm:$0xff]
      %v3105 = vld [vmem:[%s7 + $0x1c0] sm:$0xff]
      %v3106 = vld [vmem:[%s7 + $0x1c8] sm:$0xff]
      %v3107 = vld [vmem:[%s7 + $0x1d0] sm:$0xff]
      %v3108 = vld [vmem:[%s7 + $0x1d8] sm:$0xff]
      %v3109 = vld [vmem:[%s7 + $0x1e0] sm:$0xff]
      %v3110 = vld [vmem:[%s7 + $0x1e8] sm:$0xff]
      %v3111 = vld [vmem:[%s7 + $0x1f0] sm:$0xff]
      %v3112 = vld [vmem:[%s7 + $0x1f8] sm:$0xff]
      %v3113 = vld [vmem:[%s8] sm:$0xf]
      %v3115 = vlaneseq
      %v3116 = vshrl.u32 %v3115, 7
      %v3117 = vsub.s32 0, %v3116
      %v3118 = vrot.slane %v3113, %v3117
      %v3119 = vlaneseq
      %v3120 = vshrl.u32 %v3119, 7
      %v3121 = vsub.s32 1, %v3120
      %v3122 = vrot.slane %v3113, %v3121
      %v3123 = vlaneseq
      %v3124 = vshrl.u32 %v3123, 7
      %v3125 = vsub.s32 2, %v3124
      %v3126 = vrot.slane %v3113, %v3125
      %v3127 = vlaneseq
      %v3128 = vshrl.u32 %v3127, 7
      %v3129 = vsub.s32 3, %v3128
      %v3130 = vrot.slane %v3113, %v3129
      %v3199 = vunpack.c.l.b16 %v3049
      %v3200 = vunpack.c.h.b16 %v3049
      %v3201 = vunpack.c.l.b16 %v3050
      %v3202 = vunpack.c.h.b16 %v3050
      %v3203 = vunpack.c.l.b16 %v3051
      %v3204 = vunpack.c.h.b16 %v3051
      %v3205 = vunpack.c.l.b16 %v3052
      %v3206 = vunpack.c.h.b16 %v3052
      %v3207 = vunpack.c.l.b16 %v3053
      %v3208 = vunpack.c.h.b16 %v3053
      %v3209 = vunpack.c.l.b16 %v3054
      %v3210 = vunpack.c.h.b16 %v3054
      %v3211 = vunpack.c.l.b16 %v3055
      %v3212 = vunpack.c.h.b16 %v3055
      %v3213 = vunpack.c.l.b16 %v3056
      %v3214 = vunpack.c.h.b16 %v3056
      %v3215 = vunpack.c.l.b16 %v3057
      %v3216 = vunpack.c.h.b16 %v3057
      %v3217 = vunpack.c.l.b16 %v3058
      %v3218 = vunpack.c.h.b16 %v3058
      %v3219 = vunpack.c.l.b16 %v3059
      %v3220 = vunpack.c.h.b16 %v3059
      %v3221 = vunpack.c.l.b16 %v3060
      %v3222 = vunpack.c.h.b16 %v3060
      %v3223 = vunpack.c.l.b16 %v3061
      %v3224 = vunpack.c.h.b16 %v3061
      %v3225 = vunpack.c.l.b16 %v3062
      %v3226 = vunpack.c.h.b16 %v3062
      %v3227 = vunpack.c.l.b16 %v3063
      %v3228 = vunpack.c.h.b16 %v3063
      %v3229 = vunpack.c.l.b16 %v3064
      %v3230 = vunpack.c.h.b16 %v3064
      %v3231 = vunpack.c.l.b16 %v3065
      %v3232 = vunpack.c.h.b16 %v3065
      %v3233 = vunpack.c.l.b16 %v3066
      %v3234 = vunpack.c.h.b16 %v3066
      %v3235 = vunpack.c.l.b16 %v3067
      %v3236 = vunpack.c.h.b16 %v3067
      %v3237 = vunpack.c.l.b16 %v3068
      %v3238 = vunpack.c.h.b16 %v3068
      %v3239 = vunpack.c.l.b16 %v3069
      %v3240 = vunpack.c.h.b16 %v3069
      %v3241 = vunpack.c.l.b16 %v3070
      %v3242 = vunpack.c.h.b16 %v3070
      %v3243 = vunpack.c.l.b16 %v3071
      %v3244 = vunpack.c.h.b16 %v3071
      %v3245 = vunpack.c.l.b16 %v3072
      %v3246 = vunpack.c.h.b16 %v3072
      %v3247 = vunpack.c.l.b16 %v3073
      %v3248 = vunpack.c.h.b16 %v3073
      %v3249 = vunpack.c.l.b16 %v3074
      %v3250 = vunpack.c.h.b16 %v3074
      %v3251 = vunpack.c.l.b16 %v3075
      %v3252 = vunpack.c.h.b16 %v3075
      %v3253 = vunpack.c.l.b16 %v3076
      %v3254 = vunpack.c.h.b16 %v3076
      %v3255 = vunpack.c.l.b16 %v3077
      %v3256 = vunpack.c.h.b16 %v3077
      %v3257 = vunpack.c.l.b16 %v3078
      %v3258 = vunpack.c.h.b16 %v3078
      %v3259 = vunpack.c.l.b16 %v3079
      %v3260 = vunpack.c.h.b16 %v3079
      %v3261 = vunpack.c.l.b16 %v3080
      %v3262 = vunpack.c.h.b16 %v3080
      %v3263 = vunpack.c.l.b16 %v3081
      %v3264 = vunpack.c.h.b16 %v3081
      %v3265 = vunpack.c.l.b16 %v3082
      %v3266 = vunpack.c.h.b16 %v3082
      %v3267 = vunpack.c.l.b16 %v3083
      %v3268 = vunpack.c.h.b16 %v3083
      %v3269 = vunpack.c.l.b16 %v3084
      %v3270 = vunpack.c.h.b16 %v3084
      %v3271 = vunpack.c.l.b16 %v3085
      %v3272 = vunpack.c.h.b16 %v3085
      %v3273 = vunpack.c.l.b16 %v3086
      %v3274 = vunpack.c.h.b16 %v3086
      %v3275 = vunpack.c.l.b16 %v3087
      %v3276 = vunpack.c.h.b16 %v3087
      %v3277 = vunpack.c.l.b16 %v3088
      %v3278 = vunpack.c.h.b16 %v3088
      %v3279 = vunpack.c.l.b16 %v3089
      %v3280 = vunpack.c.h.b16 %v3089
      %v3281 = vunpack.c.l.b16 %v3090
      %v3282 = vunpack.c.h.b16 %v3090
      %v3283 = vunpack.c.l.b16 %v3091
      %v3284 = vunpack.c.h.b16 %v3091
      %v3285 = vunpack.c.l.b16 %v3092
      %v3286 = vunpack.c.h.b16 %v3092
      %v3287 = vunpack.c.l.b16 %v3093
      %v3288 = vunpack.c.h.b16 %v3093
      %v3289 = vunpack.c.l.b16 %v3094
      %v3290 = vunpack.c.h.b16 %v3094
      %v3291 = vunpack.c.l.b16 %v3095
      %v3292 = vunpack.c.h.b16 %v3095
      %v3293 = vunpack.c.l.b16 %v3096
      %v3294 = vunpack.c.h.b16 %v3096
      %v3295 = vunpack.c.l.b16 %v3097
      %v3296 = vunpack.c.h.b16 %v3097
      %v3297 = vunpack.c.l.b16 %v3098
      %v3298 = vunpack.c.h.b16 %v3098
      %v3299 = vunpack.c.l.b16 %v3099
      %v3300 = vunpack.c.h.b16 %v3099
      %v3301 = vunpack.c.l.b16 %v3100
      %v3302 = vunpack.c.h.b16 %v3100
      %v3303 = vunpack.c.l.b16 %v3101
      %v3304 = vunpack.c.h.b16 %v3101
      %v3305 = vunpack.c.l.b16 %v3102
      %v3306 = vunpack.c.h.b16 %v3102
      %v3307 = vunpack.c.l.b16 %v3103
      %v3308 = vunpack.c.h.b16 %v3103
      %v3309 = vunpack.c.l.b16 %v3104
      %v3310 = vunpack.c.h.b16 %v3104
      %v3311 = vunpack.c.l.b16 %v3105
      %v3312 = vunpack.c.h.b16 %v3105
      %v3313 = vunpack.c.l.b16 %v3106
      %v3314 = vunpack.c.h.b16 %v3106
      %v3315 = vunpack.c.l.b16 %v3107
      %v3316 = vunpack.c.h.b16 %v3107
      %v3317 = vunpack.c.l.b16 %v3108
      %v3318 = vunpack.c.h.b16 %v3108
      %v3319 = vunpack.c.l.b16 %v3109
      %v3320 = vunpack.c.h.b16 %v3109
      %v3321 = vunpack.c.l.b16 %v3110
      %v3322 = vunpack.c.h.b16 %v3110
      %v3323 = vunpack.c.l.b16 %v3111
      %v3324 = vunpack.c.h.b16 %v3111
      %v3325 = vunpack.c.l.b16 %v3112
      %v3326 = vunpack.c.h.b16 %v3112
      %v3327 = vpack.c.b16 %v3203, %v3199
      %v3328 = vpack.c.b16 %v3204, %v3200
      %v3329 = vpack.c.b16 %v3205, %v3201
      %v3330 = vpack.c.b16 %v3206, %v3202
      %v3331 = vpack.c.b16 %v3211, %v3207
      %v3332 = vpack.c.b16 %v3212, %v3208
      %v3333 = vpack.c.b16 %v3213, %v3209
      %v3334 = vpack.c.b16 %v3214, %v3210
      %v3335 = vpack.c.b16 %v3219, %v3215
      %v3336 = vpack.c.b16 %v3220, %v3216
      %v3337 = vpack.c.b16 %v3221, %v3217
      %v3338 = vpack.c.b16 %v3222, %v3218
      %v3339 = vpack.c.b16 %v3227, %v3223
      %v3340 = vpack.c.b16 %v3228, %v3224
      %v3341 = vpack.c.b16 %v3229, %v3225
      %v3342 = vpack.c.b16 %v3230, %v3226
      %v3343 = vpack.c.b16 %v3235, %v3231
      %v3344 = vpack.c.b16 %v3236, %v3232
      %v3345 = vpack.c.b16 %v3237, %v3233
      %v3346 = vpack.c.b16 %v3238, %v3234
      %v3347 = vpack.c.b16 %v3243, %v3239
      %v3348 = vpack.c.b16 %v3244, %v3240
      %v3349 = vpack.c.b16 %v3245, %v3241
      %v3350 = vpack.c.b16 %v3246, %v3242
      %v3351 = vpack.c.b16 %v3251, %v3247
      %v3352 = vpack.c.b16 %v3252, %v3248
      %v3353 = vpack.c.b16 %v3253, %v3249
      %v3354 = vpack.c.b16 %v3254, %v3250
      %v3355 = vpack.c.b16 %v3259, %v3255
      %v3356 = vpack.c.b16 %v3260, %v3256
      %v3357 = vpack.c.b16 %v3261, %v3257
      %v3358 = vpack.c.b16 %v3262, %v3258
      %v3359 = vpack.c.b16 %v3267, %v3263
      %v3360 = vpack.c.b16 %v3268, %v3264
      %v3361 = vpack.c.b16 %v3269, %v3265
      %v3362 = vpack.c.b16 %v3270, %v3266
      %v3363 = vpack.c.b16 %v3275, %v3271
      %v3364 = vpack.c.b16 %v3276, %v3272
      %v3365 = vpack.c.b16 %v3277, %v3273
      %v3366 = vpack.c.b16 %v3278, %v3274
      %v3367 = vpack.c.b16 %v3283, %v3279
      %v3368 = vpack.c.b16 %v3284, %v3280
      %v3369 = vpack.c.b16 %v3285, %v3281
      %v3370 = vpack.c.b16 %v3286, %v3282
      %v3371 = vpack.c.b16 %v3291, %v3287
      %v3372 = vpack.c.b16 %v3292, %v3288
      %v3373 = vpack.c.b16 %v3293, %v3289
      %v3374 = vpack.c.b16 %v3294, %v3290
      %v3375 = vpack.c.b16 %v3299, %v3295
      %v3376 = vpack.c.b16 %v3300, %v3296
      %v3377 = vpack.c.b16 %v3301, %v3297
      %v3378 = vpack.c.b16 %v3302, %v3298
      %v3379 = vpack.c.b16 %v3307, %v3303
      %v3380 = vpack.c.b16 %v3308, %v3304
      %v3381 = vpack.c.b16 %v3309, %v3305
      %v3382 = vpack.c.b16 %v3310, %v3306
      %v3383 = vpack.c.b16 %v3315, %v3311
      %v3384 = vpack.c.b16 %v3316, %v3312
      %v3385 = vpack.c.b16 %v3317, %v3313
      %v3386 = vpack.c.b16 %v3318, %v3314
      %v3387 = vpack.c.b16 %v3323, %v3319
      %v3388 = vpack.c.b16 %v3324, %v3320
      %v3389 = vpack.c.b16 %v3325, %v3321
      %v3390 = vpack.c.b16 %v3326, %v3322
      %3455 = vmatprep.subr.bf16.mxu0 %v3328
      %3456 = vmatpush1.bf16.msra.mxu0 %v3327
      %3457 = vmatprep.subr.bf16.mxu0 %v3332
      %3458 = vmatpush1.bf16.msra.mxu0 %v3331
      %3459 = vmatprep.subr.bf16.mxu0 %v3336
      %3460 = vmatpush1.bf16.msra.mxu0 %v3335
      %3461 = vmatprep.subr.bf16.mxu0 %v3340
      %3462 = vmatpush1.bf16.msra.mxu0 %v3339
      %3463 = vmatprep.subr.bf16.mxu0 %v3344
      %3464 = vmatpush1.bf16.msra.mxu0 %v3343
      %3465 = vmatprep.subr.bf16.mxu0 %v3348
      %3466 = vmatpush1.bf16.msra.mxu0 %v3347
      %3467 = vmatprep.subr.bf16.mxu0 %v3352
      %3468 = vmatpush1.bf16.msra.mxu0 %v3351
      %3469 = vmatprep.subr.bf16.mxu0 %v3356
      %3470 = vmatpush1.bf16.msra.mxu0 %v3355
      %3471 = vmatprep.subr.bf16.mxu0 %v3360
      %3472 = vmatpush1.bf16.msra.mxu0 %v3359
      %3473 = vmatprep.subr.bf16.mxu0 %v3364
      %3474 = vmatpush1.bf16.msra.mxu0 %v3363
      %3475 = vmatprep.subr.bf16.mxu0 %v3368
      %3476 = vmatpush1.bf16.msra.mxu0 %v3367
      %3477 = vmatprep.subr.bf16.mxu0 %v3372
      %3478 = vmatpush1.bf16.msra.mxu0 %v3371
      %3479 = vmatprep.subr.bf16.mxu0 %v3376
      %3480 = vmatpush1.bf16.msra.mxu0 %v3375
      %3481 = vmatprep.subr.bf16.mxu0 %v3380
      %3482 = vmatpush1.bf16.msra.mxu0 %v3379
      %3483 = vmatprep.subr.bf16.mxu0 %v3384
      %3484 = vmatpush1.bf16.msra.mxu0 %v3383
      %3485 = vmatprep.subr.bf16.mxu0 %v3388
      %3486 = vmatpush1.bf16.msra.mxu0 %v3387
      %3487 = vmatprep.mubr.bf16.mxu0 %v3034
      %3488 = vmatmul.mubr.bf16.gmra.mrb[0].mxu0 %v3033
      %v3489 = vpop.f32.mrb[0].mxu0
      %v3490 = vadd.f32 %v3118, %v3489
      %v3491 = vpop.f32.mrb[0].mxu0
      %v3492 = vadd.f32 %v3122, %v3491
      %v3493 = vpop.f32.mrb[0].mxu0
      %v3494 = vadd.f32 %v3118, %v3493
      %v3495 = vpop.f32.mrb[0].mxu0
      %v3496 = vadd.f32 %v3122, %v3495
      %3497 = vmatprep.mubr.bf16.mxu0 %v3036
      %3498 = vmatmul.mubr.bf16.gmra.mrb[0].mxu0 %v3035
      %v3499 = vpop.f32.mrb[0].mxu0
      %v3500 = vadd.f32 %v3118, %v3499
      %v3501 = vpop.f32.mrb[0].mxu0
      %v3502 = vadd.f32 %v3122, %v3501
      %v3503 = vpop.f32.mrb[0].mxu0
      %v3504 = vadd.f32 %v3118, %v3503
      %v3505 = vpop.f32.mrb[0].mxu0
      %v3506 = vadd.f32 %v3122, %v3505
      %3507 = vmatprep.mubr.bf16.mxu0 %v3038
      %3508 = vmatmul.mubr.bf16.gmra.mrb[0].mxu0 %v3037
      %v3509 = vpop.f32.mrb[0].mxu0
      %v3510 = vadd.f32 %v3118, %v3509
      %v3511 = vpop.f32.mrb[0].mxu0
      %v3512 = vadd.f32 %v3122, %v3511
      %v3513 = vpop.f32.mrb[0].mxu0
      %v3514 = vadd.f32 %v3118, %v3513
      %v3515 = vpop.f32.mrb[0].mxu0
      %v3516 = vadd.f32 %v3122, %v3515
      %3517 = vmatprep.mubr.bf16.mxu0 %v3040
      %3518 = vmatmul.mubr.bf16.gmra.mrb[0].mxu0 %v3039
      %v3519 = vpop.f32.mrb[0].mxu0
      %v3520 = vadd.f32 %v3118, %v3519
      %v3521 = vpop.f32.mrb[0].mxu0
      %v3522 = vadd.f32 %v3122, %v3521
      %v3523 = vpop.f32.mrb[0].mxu0
      %v3524 = vadd.f32 %v3118, %v3523
      %v3525 = vpop.f32.mrb[0].mxu0
      %v3526 = vadd.f32 %v3122, %v3525
      %3527 = vmatprep.mubr.bf16.mxu0 %v3042
      %3528 = vmatmul.mubr.bf16.gmra.mrb[0].mxu0 %v3041
      %v3529 = vpop.f32.mrb[0].mxu0
      %v3530 = vadd.f32 %v3118, %v3529
      %v3531 = vpop.f32.mrb[0].mxu0
      %v3532 = vadd.f32 %v3122, %v3531
      %v3533 = vpop.f32.mrb[0].mxu0
      %v3534 = vadd.f32 %v3118, %v3533
      %v3535 = vpop.f32.mrb[0].mxu0
      %v3536 = vadd.f32 %v3122, %v3535
      %3537 = vmatprep.mubr.bf16.mxu0 %v3044
      %3538 = vmatmul.mubr.bf16.gmra.mrb[0].mxu0 %v3043
      %v3539 = vpop.f32.mrb[0].mxu0
      %v3540 = vadd.f32 %v3118, %v3539
      %v3541 = vpop.f32.mrb[0].mxu0
      %v3542 = vadd.f32 %v3122, %v3541
      %v3543 = vpop.f32.mrb[0].mxu0
      %v3544 = vadd.f32 %v3118, %v3543
      %v3545 = vpop.f32.mrb[0].mxu0
      %v3546 = vadd.f32 %v3122, %v3545
      %3547 = vmatprep.mubr.bf16.mxu0 %v3046
      %3548 = vmatmul.mubr.bf16.gmra.mrb[0].mxu0 %v3045
      %v3549 = vpop.f32.mrb[0].mxu0
      %v3550 = vadd.f32 %v3118, %v3549
      %v3551 = vpop.f32.mrb[0].mxu0
      %v3552 = vadd.f32 %v3122, %v3551
      %v3553 = vpop.f32.mrb[0].mxu0
      %v3554 = vadd.f32 %v3118, %v3553
      %v3555 = vpop.f32.mrb[0].mxu0
      %v3556 = vadd.f32 %v3122, %v3555
      %3557 = vmatprep.mubr.bf16.mxu0 %v3048
      %3558 = vmatmul.mubr.bf16.gmra.mrb[0].mxu0 %v3047
      %v3559 = vpop.f32.mrb[0].mxu0
      %v3560 = vadd.f32 %v3118, %v3559
      %v3561 = vpop.f32.mrb[0].mxu0
      %v3562 = vadd.f32 %v3122, %v3561
      %v3563 = vpop.f32.mrb[0].mxu0
      %v3564 = vadd.f32 %v3118, %v3563
      %v3565 = vpop.f32.mrb[0].mxu0
      %v3566 = vadd.f32 %v3122, %v3565
      %3567 = vdwg.mxu0
      %3568 = vmatprep.subr.bf16.mxu0 %v3330
      %3569 = vmatpush1.bf16.msra.mxu0 %v3329
      %3570 = vmatprep.subr.bf16.mxu0 %v3334
      %3571 = vmatpush1.bf16.msra.mxu0 %v3333
      %3572 = vmatprep.subr.bf16.mxu0 %v3338
      %3573 = vmatpush1.bf16.msra.mxu0 %v3337
      %3574 = vmatprep.subr.bf16.mxu0 %v3342
      %3575 = vmatpush1.bf16.msra.mxu0 %v3341
      %3576 = vmatprep.subr.bf16.mxu0 %v3346
      %3577 = vmatpush1.bf16.msra.mxu0 %v3345
      %3578 = vmatprep.subr.bf16.mxu0 %v3350
      %3579 = vmatpush1.bf16.msra.mxu0 %v3349
      %3580 = vmatprep.subr.bf16.mxu0 %v3354
      %3581 = vmatpush1.bf16.msra.mxu0 %v3353
      %3582 = vmatprep.subr.bf16.mxu0 %v3358
      %3583 = vmatpush1.bf16.msra.mxu0 %v3357
      %3584 = vmatprep.subr.bf16.mxu0 %v3362
      %3585 = vmatpush1.bf16.msra.mxu0 %v3361
      %3586 = vmatprep.subr.bf16.mxu0 %v3366
      %3587 = vmatpush1.bf16.msra.mxu0 %v3365
      %3588 = vmatprep.subr.bf16.mxu0 %v3370
      %3589 = vmatpush1.bf16.msra.mxu0 %v3369
      %3590 = vmatprep.subr.bf16.mxu0 %v3374
      %3591 = vmatpush1.bf16.msra.mxu0 %v3373
      %3592 = vmatprep.subr.bf16.mxu0 %v3378
      %3593 = vmatpush1.bf16.msra.mxu0 %v3377
      %3594 = vmatprep.subr.bf16.mxu0 %v3382
      %3595 = vmatpush1.bf16.msra.mxu0 %v3381
      %3596 = vmatprep.subr.bf16.mxu0 %v3386
      %3597 = vmatpush1.bf16.msra.mxu0 %v3385
      %3598 = vmatprep.subr.bf16.mxu0 %v3390
      %3599 = vmatpush1.bf16.msra.mxu0 %v3389
      %3600 = vmatprep.mubr.bf16.mxu0 %v3034
      %3601 = vmatmul.mubr.bf16.gmra.mrb[0].mxu0 %v3033
      %v3602 = vpop.f32.mrb[0].mxu0
      %v3603 = vadd.f32 %v3126, %v3602
      %v3604 = vpop.f32.mrb[0].mxu0
      %v3605 = vadd.f32 %v3130, %v3604
      %v3606 = vpop.f32.mrb[0].mxu0
      %v3607 = vadd.f32 %v3126, %v3606
      %v3608 = vpop.f32.mrb[0].mxu0
      %v3609 = vadd.f32 %v3130, %v3608
      %3610 = vmatprep.mubr.bf16.mxu0 %v3036
      %3611 = vmatmul.mubr.bf16.gmra.mrb[0].mxu0 %v3035
      %v3612 = vpop.f32.mrb[0].mxu0
      %v3613 = vadd.f32 %v3126, %v3612
      %v3614 = vpop.f32.mrb[0].mxu0
      %v3615 = vadd.f32 %v3130, %v3614
      %v3616 = vpop.f32.mrb[0].mxu0
      %v3617 = vadd.f32 %v3126, %v3616
      %v3618 = vpop.f32.mrb[0].mxu0
      %v3619 = vadd.f32 %v3130, %v3618
      %3620 = vmatprep.mubr.bf16.mxu0 %v3038
      %3621 = vmatmul.mubr.bf16.gmra.mrb[0].mxu0 %v3037
      %v3622 = vpop.f32.mrb[0].mxu0
      %v3623 = vadd.f32 %v3126, %v3622
      %v3624 = vpop.f32.mrb[0].mxu0
      %v3625 = vadd.f32 %v3130, %v3624
      %v3626 = vpop.f32.mrb[0].mxu0
      %v3627 = vadd.f32 %v3126, %v3626
      %v3628 = vpop.f32.mrb[0].mxu0
      %v3629 = vadd.f32 %v3130, %v3628
      %3630 = vmatprep.mubr.bf16.mxu0 %v3040
      %3631 = vmatmul.mubr.bf16.gmra.mrb[0].mxu0 %v3039
      %v3632 = vpop.f32.mrb[0].mxu0
      %v3633 = vadd.f32 %v3126, %v3632
      %v3634 = vpop.f32.mrb[0].mxu0
      %v3635 = vadd.f32 %v3130, %v3634
      %v3636 = vpop.f32.mrb[0].mxu0
      %v3637 = vadd.f32 %v3126, %v3636
      %v3638 = vpop.f32.mrb[0].mxu0
      %v3639 = vadd.f32 %v3130, %v3638
      %3640 = vmatprep.mubr.bf16.mxu0 %v3042
      %3641 = vmatmul.mubr.bf16.gmra.mrb[0].mxu0 %v3041
      %v3642 = vpop.f32.mrb[0].mxu0
      %v3643 = vadd.f32 %v3126, %v3642
      %v3644 = vpop.f32.mrb[0].mxu0
      %v3645 = vadd.f32 %v3130, %v3644
      %v3646 = vpop.f32.mrb[0].mxu0
      %v3647 = vadd.f32 %v3126, %v3646
      %v3648 = vpop.f32.mrb[0].mxu0
      %v3649 = vadd.f32 %v3130, %v3648
      %3650 = vmatprep.mubr.bf16.mxu0 %v3044
      %3651 = vmatmul.mubr.bf16.gmra.mrb[0].mxu0 %v3043
      %v3652 = vpop.f32.mrb[0].mxu0
      %v3653 = vadd.f32 %v3126, %v3652
      %v3654 = vpop.f32.mrb[0].mxu0
      %v3655 = vadd.f32 %v3130, %v3654
      %v3656 = vpop.f32.mrb[0].mxu0
      %v3657 = vadd.f32 %v3126, %v3656
      %v3658 = vpop.f32.mrb[0].mxu0
      %v3659 = vadd.f32 %v3130, %v3658
      %3660 = vmatprep.mubr.bf16.mxu0 %v3046
      %3661 = vmatmul.mubr.bf16.gmra.mrb[0].mxu0 %v3045
      %v3662 = vpop.f32.mrb[0].mxu0
      %v3663 = vadd.f32 %v3126, %v3662
      %v3664 = vpop.f32.mrb[0].mxu0
      %v3665 = vadd.f32 %v3130, %v3664
      %v3666 = vpop.f32.mrb[0].mxu0
      %v3667 = vadd.f32 %v3126, %v3666
      %v3668 = vpop.f32.mrb[0].mxu0
      %v3669 = vadd.f32 %v3130, %v3668
      %3670 = vmatprep.mubr.bf16.mxu0 %v3048
      %3671 = vmatmul.mubr.bf16.gmra.mrb[0].mxu0 %v3047
      %v3672 = vpop.f32.mrb[0].mxu0
      %v3673 = vadd.f32 %v3126, %v3672
      %v3674 = vpop.f32.mrb[0].mxu0
      %v3675 = vadd.f32 %v3130, %v3674
      %v3676 = vpop.f32.mrb[0].mxu0
      %v3677 = vadd.f32 %v3126, %v3676
      %v3678 = vpop.f32.mrb[0].mxu0
      %v3679 = vadd.f32 %v3130, %v3678
      %3680 = vdwg.mxu0
      %v3681 = vmax.f32 %v3490, 0.0
      %v3682 = vmax.f32 %v3492, 0.0
      %v3683 = vmax.f32 %v3603, 0.0
      %v3684 = vmax.f32 %v3605, 0.0
      %v3685 = vmax.f32 %v3494, 0.0
      %v3686 = vmax.f32 %v3496, 0.0
      %v3687 = vmax.f32 %v3607, 0.0
      %v3688 = vmax.f32 %v3609, 0.0
      %v3689 = vmax.f32 %v3500, 0.0
      %v3690 = vmax.f32 %v3502, 0.0
      %v3691 = vmax.f32 %v3613, 0.0
      %v3692 = vmax.f32 %v3615, 0.0
      %v3693 = vmax.f32 %v3504, 0.0
      %v3694 = vmax.f32 %v3506, 0.0
      %v3695 = vmax.f32 %v3617, 0.0
      %v3696 = vmax.f32 %v3619, 0.0
      %v3697 = vmax.f32 %v3510, 0.0
      %v3698 = vmax.f32 %v3512, 0.0
      %v3699 = vmax.f32 %v3623, 0.0
      %v3700 = vmax.f32 %v3625, 0.0
      %v3701 = vmax.f32 %v3514, 0.0
      %v3702 = vmax.f32 %v3516, 0.0
      %v3703 = vmax.f32 %v3627, 0.0
      %v3704 = vmax.f32 %v3629, 0.0
      %v3705 = vmax.f32 %v3520, 0.0
      %v3706 = vmax.f32 %v3522, 0.0
      %v3707 = vmax.f32 %v3633, 0.0
      %v3708 = vmax.f32 %v3635, 0.0
      %v3709 = vmax.f32 %v3524, 0.0
      %v3710 = vmax.f32 %v3526, 0.0
      %v3711 = vmax.f32 %v3637, 0.0
      %v3712 = vmax.f32 %v3639, 0.0
      %v3713 = vmax.f32 %v3530, 0.0
      %v3714 = vmax.f32 %v3532, 0.0
      %v3715 = vmax.f32 %v3643, 0.0
      %v3716 = vmax.f32 %v3645, 0.0
      %v3717 = vmax.f32 %v3534, 0.0
      %v3718 = vmax.f32 %v3536, 0.0
      %v3719 = vmax.f32 %v3647, 0.0
      %v3720 = vmax.f32 %v3649, 0.0
      %v3721 = vmax.f32 %v3540, 0.0
      %v3722 = vmax.f32 %v3542, 0.0
      %v3723 = vmax.f32 %v3653, 0.0
      %v3724 = vmax.f32 %v3655, 0.0
      %v3725 = vmax.f32 %v3544, 0.0
      %v3726 = vmax.f32 %v3546, 0.0
      %v3727 = vmax.f32 %v3657, 0.0
      %v3728 = vmax.f32 %v3659, 0.0
      %v3729 = vmax.f32 %v3550, 0.0
      %v3730 = vmax.f32 %v3552, 0.0
      %v3731 = vmax.f32 %v3663, 0.0
      %v3732 = vmax.f32 %v3665, 0.0
      %v3733 = vmax.f32 %v3554, 0.0
      %v3734 = vmax.f32 %v3556, 0.0
      %v3735 = vmax.f32 %v3667, 0.0
      %v3736 = vmax.f32 %v3669, 0.0
      %v3737 = vmax.f32 %v3560, 0.0
      %v3738 = vmax.f32 %v3562, 0.0
      %v3739 = vmax.f32 %v3673, 0.0
      %v3740 = vmax.f32 %v3675, 0.0
      %v3741 = vmax.f32 %v3564, 0.0
      %v3742 = vmax.f32 %v3566, 0.0
      %v3743 = vmax.f32 %v3677, 0.0
      %v3744 = vmax.f32 %v3679, 0.0
      %v3745 = vpack.c.bf16 %v3685, %v3681
      %v3746 = vpack.c.bf16 %v3686, %v3682
      %v3747 = vpack.c.bf16 %v3687, %v3683
      %v3748 = vpack.c.bf16 %v3688, %v3684
      %v3749 = vpack.c.bf16 %v3693, %v3689
      %v3750 = vpack.c.bf16 %v3694, %v3690
      %v3751 = vpack.c.bf16 %v3695, %v3691
      %v3752 = vpack.c.bf16 %v3696, %v3692
      %v3753 = vpack.c.bf16 %v3701, %v3697
      %v3754 = vpack.c.bf16 %v3702, %v3698
      %v3755 = vpack.c.bf16 %v3703, %v3699
      %v3756 = vpack.c.bf16 %v3704, %v3700
      %v3757 = vpack.c.bf16 %v3709, %v3705
      %v3758 = vpack.c.bf16 %v3710, %v3706
      %v3759 = vpack.c.bf16 %v3711, %v3707
      %v3760 = vpack.c.bf16 %v3712, %v3708
      %v3761 = vpack.c.bf16 %v3717, %v3713
      %v3762 = vpack.c.bf16 %v3718, %v3714
      %v3763 = vpack.c.bf16 %v3719, %v3715
      %v3764 = vpack.c.bf16 %v3720, %v3716
      %v3765 = vpack.c.bf16 %v3725, %v3721
      %v3766 = vpack.c.bf16 %v3726, %v3722
      %v3767 = vpack.c.bf16 %v3727, %v3723
      %v3768 = vpack.c.bf16 %v3728, %v3724
      %v3769 = vpack.c.bf16 %v3733, %v3729
      %v3770 = vpack.c.bf16 %v3734, %v3730
      %v3771 = vpack.c.bf16 %v3735, %v3731
      %v3772 = vpack.c.bf16 %v3736, %v3732
      %v3773 = vpack.c.bf16 %v3741, %v3737
      %v3774 = vpack.c.bf16 %v3742, %v3738
      %v3775 = vpack.c.bf16 %v3743, %v3739
      %v3776 = vpack.c.bf16 %v3744, %v3740
      %v3777 = vld [vmem:[%s9] sm:$0xff]
      %v3778 = vld [vmem:[%s9 + $0x8] sm:$0xff]
      %v3779 = vld [vmem:[%s9 + $0x10] sm:$0xff]
      %v3780 = vld [vmem:[%s9 + $0x18] sm:$0xff]
      %v3781 = vld [vmem:[%s9 + $0x20] sm:$0xff]
      %v3782 = vld [vmem:[%s9 + $0x28] sm:$0xff]
      %v3783 = vld [vmem:[%s9 + $0x30] sm:$0xff]
      %v3784 = vld [vmem:[%s9 + $0x38] sm:$0xff]
      %v3785 = vld [vmem:[%s9 + $0x40] sm:$0xff]
      %v3786 = vld [vmem:[%s9 + $0x48] sm:$0xff]
      %v3787 = vld [vmem:[%s9 + $0x50] sm:$0xff]
      %v3788 = vld [vmem:[%s9 + $0x58] sm:$0xff]
      %v3789 = vld [vmem:[%s9 + $0x60] sm:$0xff]
      %v3790 = vld [vmem:[%s9 + $0x68] sm:$0xff]
      %v3791 = vld [vmem:[%s9 + $0x70] sm:$0xff]
      %v3792 = vld [vmem:[%s9 + $0x78] sm:$0xff]
      %v3793 = vld [vmem:[%s9 + $0x80] sm:$0xff]
      %v3794 = vld [vmem:[%s9 + $0x88] sm:$0xff]
      %v3795 = vld [vmem:[%s9 + $0x90] sm:$0xff]
      %v3796 = vld [vmem:[%s9 + $0x98] sm:$0xff]
      %v3797 = vld [vmem:[%s9 + $0xa0] sm:$0xff]
      %v3798 = vld [vmem:[%s9 + $0xa8] sm:$0xff]
      %v3799 = vld [vmem:[%s9 + $0xb0] sm:$0xff]
      %v3800 = vld [vmem:[%s9 + $0xb8] sm:$0xff]
      %v3801 = vld [vmem:[%s9 + $0xc0] sm:$0xff]
      %v3802 = vld [vmem:[%s9 + $0xc8] sm:$0xff]
      %v3803 = vld [vmem:[%s9 + $0xd0] sm:$0xff]
      %v3804 = vld [vmem:[%s9 + $0xd8] sm:$0xff]
      %v3805 = vld [vmem:[%s9 + $0xe0] sm:$0xff]
      %v3806 = vld [vmem:[%s9 + $0xe8] sm:$0xff]
      %v3807 = vld [vmem:[%s9 + $0xf0] sm:$0xff]
      %v3808 = vld [vmem:[%s9 + $0xf8] sm:$0xff]
      %v3809 = vld [vmem:[%s9 + $0x100] sm:$0xff]
      %v3810 = vld [vmem:[%s9 + $0x108] sm:$0xff]
      %v3811 = vld [vmem:[%s9 + $0x110] sm:$0xff]
      %v3812 = vld [vmem:[%s9 + $0x118] sm:$0xff]
      %v3813 = vld [vmem:[%s9 + $0x120] sm:$0xff]
      %v3814 = vld [vmem:[%s9 + $0x128] sm:$0xff]
      %v3815 = vld [vmem:[%s9 + $0x130] sm:$0xff]
      %v3816 = vld [vmem:[%s9 + $0x138] sm:$0xff]
      %v3817 = vld [vmem:[%s9 + $0x140] sm:$0xff]
      %v3818 = vld [vmem:[%s9 + $0x148] sm:$0xff]
      %v3819 = vld [vmem:[%s9 + $0x150] sm:$0xff]
      %v3820 = vld [vmem:[%s9 + $0x158] sm:$0xff]
      %v3821 = vld [vmem:[%s9 + $0x160] sm:$0xff]
      %v3822 = vld [vmem:[%s9 + $0x168] sm:$0xff]
      %v3823 = vld [vmem:[%s9 + $0x170] sm:$0xff]
      %v3824 = vld [vmem:[%s9 + $0x178] sm:$0xff]
      %v3825 = vld [vmem:[%s9 + $0x180] sm:$0xff]
      %v3826 = vld [vmem:[%s9 + $0x188] sm:$0xff]
      %v3827 = vld [vmem:[%s9 + $0x190] sm:$0xff]
      %v3828 = vld [vmem:[%s9 + $0x198] sm:$0xff]
      %v3829 = vld [vmem:[%s9 + $0x1a0] sm:$0xff]
      %v3830 = vld [vmem:[%s9 + $0x1a8] sm:$0xff]
      %v3831 = vld [vmem:[%s9 + $0x1b0] sm:$0xff]
      %v3832 = vld [vmem:[%s9 + $0x1b8] sm:$0xff]
      %v3833 = vld [vmem:[%s9 + $0x1c0] sm:$0xff]
      %v3834 = vld [vmem:[%s9 + $0x1c8] sm:$0xff]
      %v3835 = vld [vmem:[%s9 + $0x1d0] sm:$0xff]
      %v3836 = vld [vmem:[%s9 + $0x1d8] sm:$0xff]
      %v3837 = vld [vmem:[%s9 + $0x1e0] sm:$0xff]
      %v3838 = vld [vmem:[%s9 + $0x1e8] sm:$0xff]
      %v3839 = vld [vmem:[%s9 + $0x1f0] sm:$0xff]
      %v3840 = vld [vmem:[%s9 + $0x1f8] sm:$0xff]
      %v3841 = vld [vmem:[%s10] sm:$0x3]
      %v3843 = vlaneseq
      %v3844 = vshrl.u32 %v3843, 7
      %v3845 = vsub.s32 0, %v3844
      %v3846 = vrot.slane %v3841, %v3845
      %v3847 = vlaneseq
      %v3848 = vshrl.u32 %v3847, 7
      %v3849 = vsub.s32 1, %v3848
      %v3850 = vrot.slane %v3841, %v3849
      %v3917 = vunpack.c.l.b16 %v3777
      %v3918 = vunpack.c.h.b16 %v3777
      %v3919 = vunpack.c.l.b16 %v3778
      %v3920 = vunpack.c.h.b16 %v3778
      %v3921 = vunpack.c.l.b16 %v3779
      %v3922 = vunpack.c.h.b16 %v3779
      %v3923 = vunpack.c.l.b16 %v3780
      %v3924 = vunpack.c.h.b16 %v3780
      %v3925 = vunpack.c.l.b16 %v3781
      %v3926 = vunpack.c.h.b16 %v3781
      %v3927 = vunpack.c.l.b16 %v3782
      %v3928 = vunpack.c.h.b16 %v3782
      %v3929 = vunpack.c.l.b16 %v3783
      %v3930 = vunpack.c.h.b16 %v3783
      %v3931 = vunpack.c.l.b16 %v3784
      %v3932 = vunpack.c.h.b16 %v3784
      %v3933 = vunpack.c.l.b16 %v3785
      %v3934 = vunpack.c.h.b16 %v3785
      %v3935 = vunpack.c.l.b16 %v3786
      %v3936 = vunpack.c.h.b16 %v3786
      %v3937 = vunpack.c.l.b16 %v3787
      %v3938 = vunpack.c.h.b16 %v3787
      %v3939 = vunpack.c.l.b16 %v3788
      %v3940 = vunpack.c.h.b16 %v3788
      %v3941 = vunpack.c.l.b16 %v3789
      %v3942 = vunpack.c.h.b16 %v3789
      %v3943 = vunpack.c.l.b16 %v3790
      %v3944 = vunpack.c.h.b16 %v3790
      %v3945 = vunpack.c.l.b16 %v3791
      %v3946 = vunpack.c.h.b16 %v3791
      %v3947 = vunpack.c.l.b16 %v3792
      %v3948 = vunpack.c.h.b16 %v3792
      %v3949 = vunpack.c.l.b16 %v3793
      %v3950 = vunpack.c.h.b16 %v3793
      %v3951 = vunpack.c.l.b16 %v3794
      %v3952 = vunpack.c.h.b16 %v3794
      %v3953 = vunpack.c.l.b16 %v3795
      %v3954 = vunpack.c.h.b16 %v3795
      %v3955 = vunpack.c.l.b16 %v3796
      %v3956 = vunpack.c.h.b16 %v3796
      %v3957 = vunpack.c.l.b16 %v3797
      %v3958 = vunpack.c.h.b16 %v3797
      %v3959 = vunpack.c.l.b16 %v3798
      %v3960 = vunpack.c.h.b16 %v3798
      %v3961 = vunpack.c.l.b16 %v3799
      %v3962 = vunpack.c.h.b16 %v3799
      %v3963 = vunpack.c.l.b16 %v3800
      %v3964 = vunpack.c.h.b16 %v3800
      %v3965 = vunpack.c.l.b16 %v3801
      %v3966 = vunpack.c.h.b16 %v3801
      %v3967 = vunpack.c.l.b16 %v3802
      %v3968 = vunpack.c.h.b16 %v3802
      %v3969 = vunpack.c.l.b16 %v3803
      %v3970 = vunpack.c.h.b16 %v3803
      %v3971 = vunpack.c.l.b16 %v3804
      %v3972 = vunpack.c.h.b16 %v3804
      %v3973 = vunpack.c.l.b16 %v3805
      %v3974 = vunpack.c.h.b16 %v3805
      %v3975 = vunpack.c.l.b16 %v3806
      %v3976 = vunpack.c.h.b16 %v3806
      %v3977 = vunpack.c.l.b16 %v3807
      %v3978 = vunpack.c.h.b16 %v3807
      %v3979 = vunpack.c.l.b16 %v3808
      %v3980 = vunpack.c.h.b16 %v3808
      %v3981 = vunpack.c.l.b16 %v3809
      %v3982 = vunpack.c.h.b16 %v3809
      %v3983 = vunpack.c.l.b16 %v3810
      %v3984 = vunpack.c.h.b16 %v3810
      %v3985 = vunpack.c.l.b16 %v3811
      %v3986 = vunpack.c.h.b16 %v3811
      %v3987 = vunpack.c.l.b16 %v3812
      %v3988 = vunpack.c.h.b16 %v3812
      %v3989 = vunpack.c.l.b16 %v3813
      %v3990 = vunpack.c.h.b16 %v3813
      %v3991 = vunpack.c.l.b16 %v3814
      %v3992 = vunpack.c.h.b16 %v3814
      %v3993 = vunpack.c.l.b16 %v3815
      %v3994 = vunpack.c.h.b16 %v3815
      %v3995 = vunpack.c.l.b16 %v3816
      %v3996 = vunpack.c.h.b16 %v3816
      %v3997 = vunpack.c.l.b16 %v3817
      %v3998 = vunpack.c.h.b16 %v3817
      %v3999 = vunpack.c.l.b16 %v3818
      %v4000 = vunpack.c.h.b16 %v3818
      %v4001 = vunpack.c.l.b16 %v3819
      %v4002 = vunpack.c.h.b16 %v3819
      %v4003 = vunpack.c.l.b16 %v3820
      %v4004 = vunpack.c.h.b16 %v3820
      %v4005 = vunpack.c.l.b16 %v3821
      %v4006 = vunpack.c.h.b16 %v3821
      %v4007 = vunpack.c.l.b16 %v3822
      %v4008 = vunpack.c.h.b16 %v3822
      %v4009 = vunpack.c.l.b16 %v3823
      %v4010 = vunpack.c.h.b16 %v3823
      %v4011 = vunpack.c.l.b16 %v3824
      %v4012 = vunpack.c.h.b16 %v3824
      %v4013 = vunpack.c.l.b16 %v3825
      %v4014 = vunpack.c.h.b16 %v3825
      %v4015 = vunpack.c.l.b16 %v3826
      %v4016 = vunpack.c.h.b16 %v3826
      %v4017 = vunpack.c.l.b16 %v3827
      %v4018 = vunpack.c.h.b16 %v3827
      %v4019 = vunpack.c.l.b16 %v3828
      %v4020 = vunpack.c.h.b16 %v3828
      %v4021 = vunpack.c.l.b16 %v3829
      %v4022 = vunpack.c.h.b16 %v3829
      %v4023 = vunpack.c.l.b16 %v3830
      %v4024 = vunpack.c.h.b16 %v3830
      %v4025 = vunpack.c.l.b16 %v3831
      %v4026 = vunpack.c.h.b16 %v3831
      %v4027 = vunpack.c.l.b16 %v3832
      %v4028 = vunpack.c.h.b16 %v3832
      %v4029 = vunpack.c.l.b16 %v3833
      %v4030 = vunpack.c.h.b16 %v3833
      %v4031 = vunpack.c.l.b16 %v3834
      %v4032 = vunpack.c.h.b16 %v3834
      %v4033 = vunpack.c.l.b16 %v3835
      %v4034 = vunpack.c.h.b16 %v3835
      %v4035 = vunpack.c.l.b16 %v3836
      %v4036 = vunpack.c.h.b16 %v3836
      %v4037 = vunpack.c.l.b16 %v3837
      %v4038 = vunpack.c.h.b16 %v3837
      %v4039 = vunpack.c.l.b16 %v3838
      %v4040 = vunpack.c.h.b16 %v3838
      %v4041 = vunpack.c.l.b16 %v3839
      %v4042 = vunpack.c.h.b16 %v3839
      %v4043 = vunpack.c.l.b16 %v3840
      %v4044 = vunpack.c.h.b16 %v3840
      %v4045 = vpack.c.b16 %v3919, %v3917
      %v4046 = vpack.c.b16 %v3920, %v3918
      %v4047 = vpack.c.b16 %v3923, %v3921
      %v4048 = vpack.c.b16 %v3924, %v3922
      %v4049 = vpack.c.b16 %v3927, %v3925
      %v4050 = vpack.c.b16 %v3928, %v3926
      %v4051 = vpack.c.b16 %v3931, %v3929
      %v4052 = vpack.c.b16 %v3932, %v3930
      %v4053 = vpack.c.b16 %v3935, %v3933
      %v4054 = vpack.c.b16 %v3936, %v3934
      %v4055 = vpack.c.b16 %v3939, %v3937
      %v4056 = vpack.c.b16 %v3940, %v3938
      %v4057 = vpack.c.b16 %v3943, %v3941
      %v4058 = vpack.c.b16 %v3944, %v3942
      %v4059 = vpack.c.b16 %v3947, %v3945
      %v4060 = vpack.c.b16 %v3948, %v3946
      %v4061 = vpack.c.b16 %v3951, %v3949
      %v4062 = vpack.c.b16 %v3952, %v3950
      %v4063 = vpack.c.b16 %v3955, %v3953
      %v4064 = vpack.c.b16 %v3956, %v3954
      %v4065 = vpack.c.b16 %v3959, %v3957
      %v4066 = vpack.c.b16 %v3960, %v3958
      %v4067 = vpack.c.b16 %v3963, %v3961
      %v4068 = vpack.c.b16 %v3964, %v3962
      %v4069 = vpack.c.b16 %v3967, %v3965
      %v4070 = vpack.c.b16 %v3968, %v3966
      %v4071 = vpack.c.b16 %v3971, %v3969
      %v4072 = vpack.c.b16 %v3972, %v3970
      %v4073 = vpack.c.b16 %v3975, %v3973
      %v4074 = vpack.c.b16 %v3976, %v3974
      %v4075 = vpack.c.b16 %v3979, %v3977
      %v4076 = vpack.c.b16 %v3980, %v3978
      %v4077 = vpack.c.b16 %v3983, %v3981
      %v4078 = vpack.c.b16 %v3984, %v3982
      %v4079 = vpack.c.b16 %v3987, %v3985
      %v4080 = vpack.c.b16 %v3988, %v3986
      %v4081 = vpack.c.b16 %v3991, %v3989
      %v4082 = vpack.c.b16 %v3992, %v3990
      %v4083 = vpack.c.b16 %v3995, %v3993
      %v4084 = vpack.c.b16 %v3996, %v3994
      %v4085 = vpack.c.b16 %v3999, %v3997
      %v4086 = vpack.c.b16 %v4000, %v3998
      %v4087 = vpack.c.b16 %v4003, %v4001
      %v4088 = vpack.c.b16 %v4004, %v4002
      %v4089 = vpack.c.b16 %v4007, %v4005
      %v4090 = vpack.c.b16 %v4008, %v4006
      %v4091 = vpack.c.b16 %v4011, %v4009
      %v4092 = vpack.c.b16 %v4012, %v4010
      %v4093 = vpack.c.b16 %v4015, %v4013
      %v4094 = vpack.c.b16 %v4016, %v4014
      %v4095 = vpack.c.b16 %v4019, %v4017
      %v4096 = vpack.c.b16 %v4020, %v4018
      %v4097 = vpack.c.b16 %v4023, %v4021
      %v4098 = vpack.c.b16 %v4024, %v4022
      %v4099 = vpack.c.b16 %v4027, %v4025
      %v4100 = vpack.c.b16 %v4028, %v4026
      %v4101 = vpack.c.b16 %v4031, %v4029
      %v4102 = vpack.c.b16 %v4032, %v4030
      %v4103 = vpack.c.b16 %v4035, %v4033
      %v4104 = vpack.c.b16 %v4036, %v4034
      %v4105 = vpack.c.b16 %v4039, %v4037
      %v4106 = vpack.c.b16 %v4040, %v4038
      %v4107 = vpack.c.b16 %v4043, %v4041
      %v4108 = vpack.c.b16 %v4044, %v4042
      %4173 = vmatprep.subr.bf16.mxu0 %v4046
      %4174 = vmatpush1.bf16.msra.mxu0 %v4045
      %4175 = vmatprep.subr.bf16.mxu0 %v4048
      %4176 = vmatpush1.bf16.msra.mxu0 %v4047
      %4177 = vmatprep.subr.bf16.mxu0 %v4050
      %4178 = vmatpush1.bf16.msra.mxu0 %v4049
      %4179 = vmatprep.subr.bf16.mxu0 %v4052
      %4180 = vmatpush1.bf16.msra.mxu0 %v4051
      %4181 = vmatprep.subr.bf16.mxu0 %v4054
      %4182 = vmatpush1.bf16.msra.mxu0 %v4053
      %4183 = vmatprep.subr.bf16.mxu0 %v4056
      %4184 = vmatpush1.bf16.msra.mxu0 %v4055
      %4185 = vmatprep.subr.bf16.mxu0 %v4058
      %4186 = vmatpush1.bf16.msra.mxu0 %v4057
      %4187 = vmatprep.subr.bf16.mxu0 %v4060
      %4188 = vmatpush1.bf16.msra.mxu0 %v4059
      %4189 = vmatprep.subr.bf16.mxu0 %v4062
      %4190 = vmatpush1.bf16.msra.mxu0 %v4061
      %4191 = vmatprep.subr.bf16.mxu0 %v4064
      %4192 = vmatpush1.bf16.msra.mxu0 %v4063
      %4193 = vmatprep.subr.bf16.mxu0 %v4066
      %4194 = vmatpush1.bf16.msra.mxu0 %v4065
      %4195 = vmatprep.subr.bf16.mxu0 %v4068
      %4196 = vmatpush1.bf16.msra.mxu0 %v4067
      %4197 = vmatprep.subr.bf16.mxu0 %v4070
      %4198 = vmatpush1.bf16.msra.mxu0 %v4069
      %4199 = vmatprep.subr.bf16.mxu0 %v4072
      %4200 = vmatpush1.bf16.msra.mxu0 %v4071
      %4201 = vmatprep.subr.bf16.mxu0 %v4074
      %4202 = vmatpush1.bf16.msra.mxu0 %v4073
      %4203 = vmatprep.subr.bf16.mxu0 %v4076
      %4204 = vmatpush1.bf16.msra.mxu0 %v4075
      %4205 = vmatprep.mubr.bf16.mxu0 %v3746
      %4206 = vmatmul.mubr.bf16.gmra.mrb[0].mxu0 %v3745
      %v4207 = vpop.f32.mrb[0].mxu0
      %v4208 = vadd.f32 %v3846, %v4207
      %v4209 = vpop.f32.mrb[0].mxu0
      %v4210 = vadd.f32 %v3850, %v4209
      %v4211 = vpop.f32.mrb[0].mxu0
      %v4212 = vadd.f32 %v3846, %v4211
      %v4213 = vpop.f32.mrb[0].mxu0
      %v4214 = vadd.f32 %v3850, %v4213
      %4215 = vmatprep.mubr.bf16.mxu0 %v3750
      %4216 = vmatmul.mubr.bf16.gmra.mrb[0].mxu0 %v3749
      %v4217 = vpop.f32.mrb[0].mxu0
      %v4218 = vadd.f32 %v3846, %v4217
      %v4219 = vpop.f32.mrb[0].mxu0
      %v4220 = vadd.f32 %v3850, %v4219
      %v4221 = vpop.f32.mrb[0].mxu0
      %v4222 = vadd.f32 %v3846, %v4221
      %v4223 = vpop.f32.mrb[0].mxu0
      %v4224 = vadd.f32 %v3850, %v4223
      %4225 = vmatprep.mubr.bf16.mxu0 %v3754
      %4226 = vmatmul.mubr.bf16.gmra.mrb[0].mxu0 %v3753
      %v4227 = vpop.f32.mrb[0].mxu0
      %v4228 = vadd.f32 %v3846, %v4227
      %v4229 = vpop.f32.mrb[0].mxu0
      %v4230 = vadd.f32 %v3850, %v4229
      %v4231 = vpop.f32.mrb[0].mxu0
      %v4232 = vadd.f32 %v3846, %v4231
      %v4233 = vpop.f32.mrb[0].mxu0
      %v4234 = vadd.f32 %v3850, %v4233
      %4235 = vmatprep.mubr.bf16.mxu0 %v3758
      %4236 = vmatmul.mubr.bf16.gmra.mrb[0].mxu0 %v3757
      %v4237 = vpop.f32.mrb[0].mxu0
      %v4238 = vadd.f32 %v3846, %v4237
      %v4239 = vpop.f32.mrb[0].mxu0
      %v4240 = vadd.f32 %v3850, %v4239
      %v4241 = vpop.f32.mrb[0].mxu0
      %v4242 = vadd.f32 %v3846, %v4241
      %v4243 = vpop.f32.mrb[0].mxu0
      %v4244 = vadd.f32 %v3850, %v4243
      %4245 = vmatprep.mubr.bf16.mxu0 %v3762
      %4246 = vmatmul.mubr.bf16.gmra.mrb[0].mxu0 %v3761
      %v4247 = vpop.f32.mrb[0].mxu0
      %v4248 = vadd.f32 %v3846, %v4247
      %v4249 = vpop.f32.mrb[0].mxu0
      %v4250 = vadd.f32 %v3850, %v4249
      %v4251 = vpop.f32.mrb[0].mxu0
      %v4252 = vadd.f32 %v3846, %v4251
      %v4253 = vpop.f32.mrb[0].mxu0
      %v4254 = vadd.f32 %v3850, %v4253
      %4255 = vmatprep.mubr.bf16.mxu0 %v3766
      %4256 = vmatmul.mubr.bf16.gmra.mrb[0].mxu0 %v3765
      %v4257 = vpop.f32.mrb[0].mxu0
      %v4258 = vadd.f32 %v3846, %v4257
      %v4259 = vpop.f32.mrb[0].mxu0
      %v4260 = vadd.f32 %v3850, %v4259
      %v4261 = vpop.f32.mrb[0].mxu0
      %v4262 = vadd.f32 %v3846, %v4261
      %v4263 = vpop.f32.mrb[0].mxu0
      %v4264 = vadd.f32 %v3850, %v4263
      %4265 = vmatprep.mubr.bf16.mxu0 %v3770
      %4266 = vmatmul.mubr.bf16.gmra.mrb[0].mxu0 %v3769
      %v4267 = vpop.f32.mrb[0].mxu0
      %v4268 = vadd.f32 %v3846, %v4267
      %v4269 = vpop.f32.mrb[0].mxu0
      %v4270 = vadd.f32 %v3850, %v4269
      %v4271 = vpop.f32.mrb[0].mxu0
      %v4272 = vadd.f32 %v3846, %v4271
      %v4273 = vpop.f32.mrb[0].mxu0
      %v4274 = vadd.f32 %v3850, %v4273
      %4275 = vmatprep.mubr.bf16.mxu0 %v3774
      %4276 = vmatmul.mubr.bf16.gmra.mrb[0].mxu0 %v3773
      %v4277 = vpop.f32.mrb[0].mxu0
      %v4278 = vadd.f32 %v3846, %v4277
      %v4279 = vpop.f32.mrb[0].mxu0
      %v4280 = vadd.f32 %v3850, %v4279
      %v4281 = vpop.f32.mrb[0].mxu0
      %v4282 = vadd.f32 %v3846, %v4281
      %v4283 = vpop.f32.mrb[0].mxu0
      %v4284 = vadd.f32 %v3850, %v4283
      %4285 = vdwg.mxu0
      %4286 = vmatprep.subr.bf16.mxu0 %v4078
      %4287 = vmatpush1.bf16.msra.mxu0 %v4077
      %4288 = vmatprep.subr.bf16.mxu0 %v4080
      %4289 = vmatpush1.bf16.msra.mxu0 %v4079
      %4290 = vmatprep.subr.bf16.mxu0 %v4082
      %4291 = vmatpush1.bf16.msra.mxu0 %v4081
      %4292 = vmatprep.subr.bf16.mxu0 %v4084
      %4293 = vmatpush1.bf16.msra.mxu0 %v4083
      %4294 = vmatprep.subr.bf16.mxu0 %v4086
      %4295 = vmatpush1.bf16.msra.mxu0 %v4085
      %4296 = vmatprep.subr.bf16.mxu0 %v4088
      %4297 = vmatpush1.bf16.msra.mxu0 %v4087
      %4298 = vmatprep.subr.bf16.mxu0 %v4090
      %4299 = vmatpush1.bf16.msra.mxu0 %v4089
      %4300 = vmatprep.subr.bf16.mxu0 %v4092
      %4301 = vmatpush1.bf16.msra.mxu0 %v4091
      %4302 = vmatprep.subr.bf16.mxu0 %v4094
      %4303 = vmatpush1.bf16.msra.mxu0 %v4093
      %4304 = vmatprep.subr.bf16.mxu0 %v4096
      %4305 = vmatpush1.bf16.msra.mxu0 %v4095
      %4306 = vmatprep.subr.bf16.mxu0 %v4098
      %4307 = vmatpush1.bf16.msra.mxu0 %v4097
      %4308 = vmatprep.subr.bf16.mxu0 %v4100
      %4309 = vmatpush1.bf16.msra.mxu0 %v4099
      %4310 = vmatprep.subr.bf16.mxu0 %v4102
      %4311 = vmatpush1.bf16.msra.mxu0 %v4101
      %4312 = vmatprep.subr.bf16.mxu0 %v4104
      %4313 = vmatpush1.bf16.msra.mxu0 %v4103
      %4314 = vmatprep.subr.bf16.mxu0 %v4106
      %4315 = vmatpush1.bf16.msra.mxu0 %v4105
      %4316 = vmatprep.subr.bf16.mxu0 %v4108
      %4317 = vmatpush1.bf16.msra.mxu0 %v4107
      %4318 = vmatprep.mubr.bf16.mxu0 %v3748
      %4319 = vmatmul.mubr.bf16.gmra.mrb[0].mxu0 %v3747
      %v4320 = vpop.f32.mrb[0].mxu0
      %v4321 = vadd.f32 %v4208, %v4320
      %v4322 = vpop.f32.mrb[0].mxu0
      %v4323 = vadd.f32 %v4210, %v4322
      %v4324 = vpop.f32.mrb[0].mxu0
      %v4325 = vadd.f32 %v4212, %v4324
      %v4326 = vpop.f32.mrb[0].mxu0
      %v4327 = vadd.f32 %v4214, %v4326
      %4328 = vmatprep.mubr.bf16.mxu0 %v3752
      %4329 = vmatmul.mubr.bf16.gmra.mrb[0].mxu0 %v3751
      %v4330 = vpop.f32.mrb[0].mxu0
      %v4331 = vadd.f32 %v4218, %v4330
      %v4332 = vpop.f32.mrb[0].mxu0
      %v4333 = vadd.f32 %v4220, %v4332
      %v4334 = vpop.f32.mrb[0].mxu0
      %v4335 = vadd.f32 %v4222, %v4334
      %v4336 = vpop.f32.mrb[0].mxu0
      %v4337 = vadd.f32 %v4224, %v4336
      %4338 = vmatprep.mubr.bf16.mxu0 %v3756
      %4339 = vmatmul.mubr.bf16.gmra.mrb[0].mxu0 %v3755
      %v4340 = vpop.f32.mrb[0].mxu0
      %v4341 = vadd.f32 %v4228, %v4340
      %v4342 = vpop.f32.mrb[0].mxu0
      %v4343 = vadd.f32 %v4230, %v4342
      %v4344 = vpop.f32.mrb[0].mxu0
      %v4345 = vadd.f32 %v4232, %v4344
      %v4346 = vpop.f32.mrb[0].mxu0
      %v4347 = vadd.f32 %v4234, %v4346
      %4348 = vmatprep.mubr.bf16.mxu0 %v3760
      %4349 = vmatmul.mubr.bf16.gmra.mrb[0].mxu0 %v3759
      %v4350 = vpop.f32.mrb[0].mxu0
      %v4351 = vadd.f32 %v4238, %v4350
      %v4352 = vpop.f32.mrb[0].mxu0
      %v4353 = vadd.f32 %v4240, %v4352
      %v4354 = vpop.f32.mrb[0].mxu0
      %v4355 = vadd.f32 %v4242, %v4354
      %v4356 = vpop.f32.mrb[0].mxu0
      %v4357 = vadd.f32 %v4244, %v4356
      %4358 = vmatprep.mubr.bf16.mxu0 %v3764
      %4359 = vmatmul.mubr.bf16.gmra.mrb[0].mxu0 %v3763
      %v4360 = vpop.f32.mrb[0].mxu0
      %v4361 = vadd.f32 %v4248, %v4360
      %v4362 = vpop.f32.mrb[0].mxu0
      %v4363 = vadd.f32 %v4250, %v4362
      %v4364 = vpop.f32.mrb[0].mxu0
      %v4365 = vadd.f32 %v4252, %v4364
      %v4366 = vpop.f32.mrb[0].mxu0
      %v4367 = vadd.f32 %v4254, %v4366
      %4368 = vmatprep.mubr.bf16.mxu0 %v3768
      %4369 = vmatmul.mubr.bf16.gmra.mrb[0].mxu0 %v3767
      %v4370 = vpop.f32.mrb[0].mxu0
      %v4371 = vadd.f32 %v4258, %v4370
      %v4372 = vpop.f32.mrb[0].mxu0
      %v4373 = vadd.f32 %v4260, %v4372
      %v4374 = vpop.f32.mrb[0].mxu0
      %v4375 = vadd.f32 %v4262, %v4374
      %v4376 = vpop.f32.mrb[0].mxu0
      %v4377 = vadd.f32 %v4264, %v4376
      %4378 = vmatprep.mubr.bf16.mxu0 %v3772
      %4379 = vmatmul.mubr.bf16.gmra.mrb[0].mxu0 %v3771
      %v4380 = vpop.f32.mrb[0].mxu0
      %v4381 = vadd.f32 %v4268, %v4380
      %v4382 = vpop.f32.mrb[0].mxu0
      %v4383 = vadd.f32 %v4270, %v4382
      %v4384 = vpop.f32.mrb[0].mxu0
      %v4385 = vadd.f32 %v4272, %v4384
      %v4386 = vpop.f32.mrb[0].mxu0
      %v4387 = vadd.f32 %v4274, %v4386
      %4388 = vmatprep.mubr.bf16.mxu0 %v3776
      %4389 = vmatmul.mubr.bf16.gmra.mrb[0].mxu0 %v3775
      %v4390 = vpop.f32.mrb[0].mxu0
      %v4391 = vadd.f32 %v4278, %v4390
      %v4392 = vpop.f32.mrb[0].mxu0
      %v4393 = vadd.f32 %v4280, %v4392
      %v4394 = vpop.f32.mrb[0].mxu0
      %v4395 = vadd.f32 %v4282, %v4394
      %v4396 = vpop.f32.mrb[0].mxu0
      %v4397 = vadd.f32 %v4284, %v4396
      %4398 = vdwg.mxu0
      %v4399 = vadd.f32 %v3001, %v4321
      %v4400 = vadd.f32 %v3002, %v4323
      %v4401 = vadd.f32 %v3003, %v4325
      %v4402 = vadd.f32 %v3004, %v4327
      %v4403 = vadd.f32 %v3005, %v4331
      %v4404 = vadd.f32 %v3006, %v4333
      %v4405 = vadd.f32 %v3007, %v4335
      %v4406 = vadd.f32 %v3008, %v4337
      %v4407 = vadd.f32 %v3009, %v4341
      %v4408 = vadd.f32 %v3010, %v4343
      %v4409 = vadd.f32 %v3011, %v4345
      %v4410 = vadd.f32 %v3012, %v4347
      %v4411 = vadd.f32 %v3013, %v4351
      %v4412 = vadd.f32 %v3014, %v4353
      %v4413 = vadd.f32 %v3015, %v4355
      %v4414 = vadd.f32 %v3016, %v4357
      %v4415 = vadd.f32 %v3017, %v4361
      %v4416 = vadd.f32 %v3018, %v4363
      %v4417 = vadd.f32 %v3019, %v4365
      %v4418 = vadd.f32 %v3020, %v4367
      %v4419 = vadd.f32 %v3021, %v4371
      %v4420 = vadd.f32 %v3022, %v4373
      %v4421 = vadd.f32 %v3023, %v4375
      %v4422 = vadd.f32 %v3024, %v4377
      %v4423 = vadd.f32 %v3025, %v4381
      %v4424 = vadd.f32 %v3026, %v4383
      %v4425 = vadd.f32 %v3027, %v4385
      %v4426 = vadd.f32 %v3028, %v4387
      %v4427 = vadd.f32 %v3029, %v4391
      %v4428 = vadd.f32 %v3030, %v4393
      %v4429 = vadd.f32 %v3031, %v4395
      %v4430 = vadd.f32 %v3032, %v4397
      %v4431 = vld [vmem:[%s11] sm:$0x3]
      %v4432 = vld [vmem:[%s12] sm:$0x3]
      %v4433 = vadd.f32 %v4399, %v4400
      %4434 = vadd.xlane.f32.xlu0 %v4433
      %v4435 = vpop.xlane.xlu0 %4434
      %v4436 = vadd.f32 %v4401, %v4402
      %4437 = vadd.xlane.f32.xlu0 %v4436
      %v4438 = vpop.xlane.xlu0 %4437
      %v4439 = vadd.f32 %v4403, %v4404
      %4440 = vadd.xlane.f32.xlu0 %v4439
      %v4441 = vpop.xlane.xlu0 %4440
      %v4442 = vadd.f32 %v4405, %v4406
      %4443 = vadd.xlane.f32.xlu0 %v4442
      %v4444 = vpop.xlane.xlu0 %4443
      %v4445 = vadd.f32 %v4407, %v4408
      %4446 = vadd.xlane.f32.xlu0 %v4445
      %v4447 = vpop.xlane.xlu0 %4446
      %v4448 = vadd.f32 %v4409, %v4410
      %4449 = vadd.xlane.f32.xlu0 %v4448
      %v4450 = vpop.xlane.xlu0 %4449
      %v4451 = vadd.f32 %v4411, %v4412
      %4452 = vadd.xlane.f32.xlu0 %v4451
      %v4453 = vpop.xlane.xlu0 %4452
      %v4454 = vadd.f32 %v4413, %v4414
      %4455 = vadd.xlane.f32.xlu0 %v4454
      %v4456 = vpop.xlane.xlu0 %4455
      %v4457 = vadd.f32 %v4415, %v4416
      %4458 = vadd.xlane.f32.xlu0 %v4457
      %v4459 = vpop.xlane.xlu0 %4458
      %v4460 = vadd.f32 %v4417, %v4418
      %4461 = vadd.xlane.f32.xlu0 %v4460
      %v4462 = vpop.xlane.xlu0 %4461
      %v4463 = vadd.f32 %v4419, %v4420
      %4464 = vadd.xlane.f32.xlu0 %v4463
      %v4465 = vpop.xlane.xlu0 %4464
      %v4466 = vadd.f32 %v4421, %v4422
      %4467 = vadd.xlane.f32.xlu0 %v4466
      %v4468 = vpop.xlane.xlu0 %4467
      %v4469 = vadd.f32 %v4423, %v4424
      %4470 = vadd.xlane.f32.xlu0 %v4469
      %v4471 = vpop.xlane.xlu0 %4470
      %v4472 = vadd.f32 %v4425, %v4426
      %4473 = vadd.xlane.f32.xlu0 %v4472
      %v4474 = vpop.xlane.xlu0 %4473
      %v4475 = vadd.f32 %v4427, %v4428
      %4476 = vadd.xlane.f32.xlu0 %v4475
      %v4477 = vpop.xlane.xlu0 %4476
      %v4478 = vadd.f32 %v4429, %v4430
      %4479 = vadd.xlane.f32.xlu0 %v4478
      %v4480 = vpop.xlane.xlu0 %4479
      %v4481 = vmul.f32 %v4435, %v2738
      %v4482 = vmul.f32 %v4438, %v2738
      %v4483 = vmul.f32 %v4441, %v2738
      %v4484 = vmul.f32 %v4444, %v2738
      %v4485 = vmul.f32 %v4447, %v2738
      %v4486 = vmul.f32 %v4450, %v2738
      %v4487 = vmul.f32 %v4453, %v2738
      %v4488 = vmul.f32 %v4456, %v2738
      %v4489 = vmul.f32 %v4459, %v2738
      %v4490 = vmul.f32 %v4462, %v2738
      %v4491 = vmul.f32 %v4465, %v2738
      %v4492 = vmul.f32 %v4468, %v2738
      %v4493 = vmul.f32 %v4471, %v2738
      %v4494 = vmul.f32 %v4474, %v2738
      %v4495 = vmul.f32 %v4477, %v2738
      %v4496 = vmul.f32 %v4480, %v2738
      %v4497 = vsub.f32 %v4399, %v4481
      %v4498 = vsub.f32 %v4400, %v4481
      %v4499 = vsub.f32 %v4401, %v4482
      %v4500 = vsub.f32 %v4402, %v4482
      %v4501 = vsub.f32 %v4403, %v4483
      %v4502 = vsub.f32 %v4404, %v4483
      %v4503 = vsub.f32 %v4405, %v4484
      %v4504 = vsub.f32 %v4406, %v4484
      %v4505 = vsub.f32 %v4407, %v4485
      %v4506 = vsub.f32 %v4408, %v4485
      %v4507 = vsub.f32 %v4409, %v4486
      %v4508 = vsub.f32 %v4410, %v4486
      %v4509 = vsub.f32 %v4411, %v4487
      %v4510 = vsub.f32 %v4412, %v4487
      %v4511 = vsub.f32 %v4413, %v4488
      %v4512 = vsub.f32 %v4414, %v4488
      %v4513 = vsub.f32 %v4415, %v4489
      %v4514 = vsub.f32 %v4416, %v4489
      %v4515 = vsub.f32 %v4417, %v4490
      %v4516 = vsub.f32 %v4418, %v4490
      %v4517 = vsub.f32 %v4419, %v4491
      %v4518 = vsub.f32 %v4420, %v4491
      %v4519 = vsub.f32 %v4421, %v4492
      %v4520 = vsub.f32 %v4422, %v4492
      %v4521 = vsub.f32 %v4423, %v4493
      %v4522 = vsub.f32 %v4424, %v4493
      %v4523 = vsub.f32 %v4425, %v4494
      %v4524 = vsub.f32 %v4426, %v4494
      %v4525 = vsub.f32 %v4427, %v4495
      %v4526 = vsub.f32 %v4428, %v4495
      %v4527 = vsub.f32 %v4429, %v4496
      %v4528 = vsub.f32 %v4430, %v4496
      %v4529 = vmul.f32 %v4497, %v4497
      %v4530 = vmul.f32 %v4498, %v4498
      %v4531 = vmul.f32 %v4499, %v4499
      %v4532 = vmul.f32 %v4500, %v4500
      %v4533 = vmul.f32 %v4501, %v4501
      %v4534 = vmul.f32 %v4502, %v4502
      %v4535 = vmul.f32 %v4503, %v4503
      %v4536 = vmul.f32 %v4504, %v4504
      %v4537 = vmul.f32 %v4505, %v4505
      %v4538 = vmul.f32 %v4506, %v4506
      %v4539 = vmul.f32 %v4507, %v4507
      %v4540 = vmul.f32 %v4508, %v4508
      %v4541 = vmul.f32 %v4509, %v4509
      %v4542 = vmul.f32 %v4510, %v4510
      %v4543 = vmul.f32 %v4511, %v4511
      %v4544 = vmul.f32 %v4512, %v4512
      %v4545 = vmul.f32 %v4513, %v4513
      %v4546 = vmul.f32 %v4514, %v4514
      %v4547 = vmul.f32 %v4515, %v4515
      %v4548 = vmul.f32 %v4516, %v4516
      %v4549 = vmul.f32 %v4517, %v4517
      %v4550 = vmul.f32 %v4518, %v4518
      %v4551 = vmul.f32 %v4519, %v4519
      %v4552 = vmul.f32 %v4520, %v4520
      %v4553 = vmul.f32 %v4521, %v4521
      %v4554 = vmul.f32 %v4522, %v4522
      %v4555 = vmul.f32 %v4523, %v4523
      %v4556 = vmul.f32 %v4524, %v4524
      %v4557 = vmul.f32 %v4525, %v4525
      %v4558 = vmul.f32 %v4526, %v4526
      %v4559 = vmul.f32 %v4527, %v4527
      %v4560 = vmul.f32 %v4528, %v4528
      %v4561 = vadd.f32 %v4529, %v4530
      %4562 = vadd.xlane.f32.xlu0 %v4561
      %v4563 = vpop.xlane.xlu0 %4562
      %v4564 = vadd.f32 %v4531, %v4532
      %4565 = vadd.xlane.f32.xlu0 %v4564
      %v4566 = vpop.xlane.xlu0 %4565
      %v4567 = vadd.f32 %v4533, %v4534
      %4568 = vadd.xlane.f32.xlu0 %v4567
      %v4569 = vpop.xlane.xlu0 %4568
      %v4570 = vadd.f32 %v4535, %v4536
      %4571 = vadd.xlane.f32.xlu0 %v4570
      %v4572 = vpop.xlane.xlu0 %4571
      %v4573 = vadd.f32 %v4537, %v4538
      %4574 = vadd.xlane.f32.xlu0 %v4573
      %v4575 = vpop.xlane.xlu0 %4574
      %v4576 = vadd.f32 %v4539, %v4540
      %4577 = vadd.xlane.f32.xlu0 %v4576
      %v4578 = vpop.xlane.xlu0 %4577
      %v4579 = vadd.f32 %v4541, %v4542
      %4580 = vadd.xlane.f32.xlu0 %v4579
      %v4581 = vpop.xlane.xlu0 %4580
      %v4582 = vadd.f32 %v4543, %v4544
      %4583 = vadd.xlane.f32.xlu0 %v4582
      %v4584 = vpop.xlane.xlu0 %4583
      %v4585 = vadd.f32 %v4545, %v4546
      %4586 = vadd.xlane.f32.xlu0 %v4585
      %v4587 = vpop.xlane.xlu0 %4586
      %v4588 = vadd.f32 %v4547, %v4548
      %4589 = vadd.xlane.f32.xlu0 %v4588
      %v4590 = vpop.xlane.xlu0 %4589
      %v4591 = vadd.f32 %v4549, %v4550
      %4592 = vadd.xlane.f32.xlu0 %v4591
      %v4593 = vpop.xlane.xlu0 %4592
      %v4594 = vadd.f32 %v4551, %v4552
      %4595 = vadd.xlane.f32.xlu0 %v4594
      %v4596 = vpop.xlane.xlu0 %4595
      %v4597 = vadd.f32 %v4553, %v4554
      %4598 = vadd.xlane.f32.xlu0 %v4597
      %v4599 = vpop.xlane.xlu0 %4598
      %v4600 = vadd.f32 %v4555, %v4556
      %4601 = vadd.xlane.f32.xlu0 %v4600
      %v4602 = vpop.xlane.xlu0 %4601
      %v4603 = vadd.f32 %v4557, %v4558
      %4604 = vadd.xlane.f32.xlu0 %v4603
      %v4605 = vpop.xlane.xlu0 %4604
      %v4606 = vadd.f32 %v4559, %v4560
      %4607 = vadd.xlane.f32.xlu0 %v4606
      %v4608 = vpop.xlane.xlu0 %4607
      %v4609 = vmul.f32 %v4563, %v2738
      %v4610 = vmul.f32 %v4566, %v2738
      %v4611 = vmul.f32 %v4569, %v2738
      %v4612 = vmul.f32 %v4572, %v2738
      %v4613 = vmul.f32 %v4575, %v2738
      %v4614 = vmul.f32 %v4578, %v2738
      %v4615 = vmul.f32 %v4581, %v2738
      %v4616 = vmul.f32 %v4584, %v2738
      %v4617 = vmul.f32 %v4587, %v2738
      %v4618 = vmul.f32 %v4590, %v2738
      %v4619 = vmul.f32 %v4593, %v2738
      %v4620 = vmul.f32 %v4596, %v2738
      %v4621 = vmul.f32 %v4599, %v2738
      %v4622 = vmul.f32 %v4602, %v2738
      %v4623 = vmul.f32 %v4605, %v2738
      %v4624 = vmul.f32 %v4608, %v2738
      %v4625 = vadd.f32 %v4609, 1e-05
      %v4626 = vadd.f32 %v4610, 1e-05
      %v4627 = vadd.f32 %v4611, 1e-05
      %v4628 = vadd.f32 %v4612, 1e-05
      %v4629 = vadd.f32 %v4613, 1e-05
      %v4630 = vadd.f32 %v4614, 1e-05
      %v4631 = vadd.f32 %v4615, 1e-05
      %v4632 = vadd.f32 %v4616, 1e-05
      %v4633 = vadd.f32 %v4617, 1e-05
      %v4634 = vadd.f32 %v4618, 1e-05
      %v4635 = vadd.f32 %v4619, 1e-05
      %v4636 = vadd.f32 %v4620, 1e-05
      %v4637 = vadd.f32 %v4621, 1e-05
      %v4638 = vadd.f32 %v4622, 1e-05
      %v4639 = vadd.f32 %v4623, 1e-05
      %v4640 = vadd.f32 %v4624, 1e-05
      %v4641 = vrsqrt.pop %v4625
      %v4642 = vrsqrt.pop %v4626
      %v4643 = vrsqrt.pop %v4627
      %v4644 = vrsqrt.pop %v4628
      %v4645 = vrsqrt.pop %v4629
      %v4646 = vrsqrt.pop %v4630
      %v4647 = vrsqrt.pop %v4631
      %v4648 = vrsqrt.pop %v4632
      %v4649 = vrsqrt.pop %v4633
      %v4650 = vrsqrt.pop %v4634
      %v4651 = vrsqrt.pop %v4635
      %v4652 = vrsqrt.pop %v4636
      %v4653 = vrsqrt.pop %v4637
      %v4654 = vrsqrt.pop %v4638
      %v4655 = vrsqrt.pop %v4639
      %v4656 = vrsqrt.pop %v4640
      %v4657 = vmul.f32 %v4497, %v4641
      %v4658 = vmul.f32 %v4498, %v4641
      %v4659 = vmul.f32 %v4499, %v4642
      %v4660 = vmul.f32 %v4500, %v4642
      %v4661 = vmul.f32 %v4501, %v4643
      %v4662 = vmul.f32 %v4502, %v4643
      %v4663 = vmul.f32 %v4503, %v4644
      %v4664 = vmul.f32 %v4504, %v4644
      %v4665 = vmul.f32 %v4505, %v4645
      %v4666 = vmul.f32 %v4506, %v4645
      %v4667 = vmul.f32 %v4507, %v4646
      %v4668 = vmul.f32 %v4508, %v4646
      %v4669 = vmul.f32 %v4509, %v4647
      %v4670 = vmul.f32 %v4510, %v4647
      %v4671 = vmul.f32 %v4511, %v4648
      %v4672 = vmul.f32 %v4512, %v4648
      %v4673 = vmul.f32 %v4513, %v4649
      %v4674 = vmul.f32 %v4514, %v4649
      %v4675 = vmul.f32 %v4515, %v4650
      %v4676 = vmul.f32 %v4516, %v4650
      %v4677 = vmul.f32 %v4517, %v4651
      %v4678 = vmul.f32 %v4518, %v4651
      %v4679 = vmul.f32 %v4519, %v4652
      %v4680 = vmul.f32 %v4520, %v4652
      %v4681 = vmul.f32 %v4521, %v4653
      %v4682 = vmul.f32 %v4522, %v4653
      %v4683 = vmul.f32 %v4523, %v4654
      %v4684 = vmul.f32 %v4524, %v4654
      %v4685 = vmul.f32 %v4525, %v4655
      %v4686 = vmul.f32 %v4526, %v4655
      %v4687 = vmul.f32 %v4527, %v4656
      %v4688 = vmul.f32 %v4528, %v4656
      %v4690 = vlaneseq
      %v4691 = vshrl.u32 %v4690, 7
      %v4692 = vsub.s32 0, %v4691
      %v4693 = vrot.slane %v4431, %v4692
      %v4694 = vlaneseq
      %v4695 = vshrl.u32 %v4694, 7
      %v4696 = vsub.s32 1, %v4695
      %v4697 = vrot.slane %v4431, %v4696
      %v4700 = vmul.f32 %v4657, %v4693
      %v4701 = vmul.f32 %v4658, %v4697
      %v4702 = vmul.f32 %v4659, %v4693
      %v4703 = vmul.f32 %v4660, %v4697
      %v4704 = vmul.f32 %v4661, %v4693
      %v4705 = vmul.f32 %v4662, %v4697
      %v4706 = vmul.f32 %v4663, %v4693
      %v4707 = vmul.f32 %v4664, %v4697
      %v4708 = vmul.f32 %v4665, %v4693
      %v4709 = vmul.f32 %v4666, %v4697
      %v4710 = vmul.f32 %v4667, %v4693
      %v4711 = vmul.f32 %v4668, %v4697
      %v4712 = vmul.f32 %v4669, %v4693
      %v4713 = vmul.f32 %v4670, %v4697
      %v4714 = vmul.f32 %v4671, %v4693
      %v4715 = vmul.f32 %v4672, %v4697
      %v4716 = vmul.f32 %v4673, %v4693
      %v4717 = vmul.f32 %v4674, %v4697
      %v4718 = vmul.f32 %v4675, %v4693
      %v4719 = vmul.f32 %v4676, %v4697
      %v4720 = vmul.f32 %v4677, %v4693
      %v4721 = vmul.f32 %v4678, %v4697
      %v4722 = vmul.f32 %v4679, %v4693
      %v4723 = vmul.f32 %v4680, %v4697
      %v4724 = vmul.f32 %v4681, %v4693
      %v4725 = vmul.f32 %v4682, %v4697
      %v4726 = vmul.f32 %v4683, %v4693
      %v4727 = vmul.f32 %v4684, %v4697
      %v4728 = vmul.f32 %v4685, %v4693
      %v4729 = vmul.f32 %v4686, %v4697
      %v4730 = vmul.f32 %v4687, %v4693
      %v4731 = vmul.f32 %v4688, %v4697
      %v4733 = vlaneseq
      %v4734 = vshrl.u32 %v4733, 7
      %v4735 = vsub.s32 0, %v4734
      %v4736 = vrot.slane %v4432, %v4735
      %v4737 = vlaneseq
      %v4738 = vshrl.u32 %v4737, 7
      %v4739 = vsub.s32 1, %v4738
      %v4740 = vrot.slane %v4432, %v4739
      %v4743 = vadd.f32 %v4700, %v4736
      %v4744 = vadd.f32 %v4701, %v4740
      %v4745 = vadd.f32 %v4702, %v4736
      %v4746 = vadd.f32 %v4703, %v4740
      %v4747 = vadd.f32 %v4704, %v4736
      %v4748 = vadd.f32 %v4705, %v4740
      %v4749 = vadd.f32 %v4706, %v4736
      %v4750 = vadd.f32 %v4707, %v4740
      %v4751 = vadd.f32 %v4708, %v4736
      %v4752 = vadd.f32 %v4709, %v4740
      %v4753 = vadd.f32 %v4710, %v4736
      %v4754 = vadd.f32 %v4711, %v4740
      %v4755 = vadd.f32 %v4712, %v4736
      %v4756 = vadd.f32 %v4713, %v4740
      %v4757 = vadd.f32 %v4714, %v4736
      %v4758 = vadd.f32 %v4715, %v4740
      %v4759 = vadd.f32 %v4716, %v4736
      %v4760 = vadd.f32 %v4717, %v4740
      %v4761 = vadd.f32 %v4718, %v4736
      %v4762 = vadd.f32 %v4719, %v4740
      %v4763 = vadd.f32 %v4720, %v4736
      %v4764 = vadd.f32 %v4721, %v4740
      %v4765 = vadd.f32 %v4722, %v4736
      %v4766 = vadd.f32 %v4723, %v4740
      %v4767 = vadd.f32 %v4724, %v4736
      %v4768 = vadd.f32 %v4725, %v4740
      %v4769 = vadd.f32 %v4726, %v4736
      %v4770 = vadd.f32 %v4727, %v4740
      %v4771 = vadd.f32 %v4728, %v4736
      %v4772 = vadd.f32 %v4729, %v4740
      %v4773 = vadd.f32 %v4730, %v4736
      %v4774 = vadd.f32 %v4731, %v4740
      %4775 = vst [vmem:[%s440] sm:$0xff] %v4743
      %4776 = vst [vmem:[%s440 + $0x8] sm:$0xff] %v4744
      %4777 = vst [vmem:[%s440 + $0x10] sm:$0xff] %v4745
      %4778 = vst [vmem:[%s440 + $0x18] sm:$0xff] %v4746
      %4779 = vst [vmem:[%s440 + $0x20] sm:$0xff] %v4747
      %4780 = vst [vmem:[%s440 + $0x28] sm:$0xff] %v4748
      %4781 = vst [vmem:[%s440 + $0x30] sm:$0xff] %v4749
      %4782 = vst [vmem:[%s440 + $0x38] sm:$0xff] %v4750
      %4783 = vst [vmem:[%s440 + $0x40] sm:$0xff] %v4751
      %4784 = vst [vmem:[%s440 + $0x48] sm:$0xff] %v4752
      %4785 = vst [vmem:[%s440 + $0x50] sm:$0xff] %v4753
      %4786 = vst [vmem:[%s440 + $0x58] sm:$0xff] %v4754
      %4787 = vst [vmem:[%s440 + $0x60] sm:$0xff] %v4755
      %4788 = vst [vmem:[%s440 + $0x68] sm:$0xff] %v4756
      %4789 = vst [vmem:[%s440 + $0x70] sm:$0xff] %v4757
      %4790 = vst [vmem:[%s440 + $0x78] sm:$0xff] %v4758
      %4791 = vst [vmem:[%s440 + $0x80] sm:$0xff] %v4759
      %4792 = vst [vmem:[%s440 + $0x88] sm:$0xff] %v4760
      %4793 = vst [vmem:[%s440 + $0x90] sm:$0xff] %v4761
      %4794 = vst [vmem:[%s440 + $0x98] sm:$0xff] %v4762
      %4795 = vst [vmem:[%s440 + $0xa0] sm:$0xff] %v4763
      %4796 = vst [vmem:[%s440 + $0xa8] sm:$0xff] %v4764
      %4797 = vst [vmem:[%s440 + $0xb0] sm:$0xff] %v4765
      %4798 = vst [vmem:[%s440 + $0xb8] sm:$0xff] %v4766
      %4799 = vst [vmem:[%s440 + $0xc0] sm:$0xff] %v4767
      %4800 = vst [vmem:[%s440 + $0xc8] sm:$0xff] %v4768
      %4801 = vst [vmem:[%s440 + $0xd0] sm:$0xff] %v4769
      %4802 = vst [vmem:[%s440 + $0xd8] sm:$0xff] %v4770
      %4803 = vst [vmem:[%s440 + $0xe0] sm:$0xff] %v4771
      %4804 = vst [vmem:[%s440 + $0xe8] sm:$0xff] %v4772
      %4805 = vst [vmem:[%s440 + $0xf0] sm:$0xff] %v4773
      %4806 = vst [vmem:[%s440 + $0xf8] sm:$0xff] %v4774
      %p4807 = scmp.lt.s32.totalorder %s24, 1
      %s4808 = scalar_select %p4807, %s24, 1
      %s4809 = smul.addr %s4808, 32
      %s4810 = smul.addr %s4809, 8
      %s4811 = scalar_lea.vmem %s13, %s4810
      // Predicated region
      $region73: #{transformer_encoder_layer.1} parent=71 // pred_check
        %p4812 = pneg %p320
      $region74: #{transformer_encoder_layer.1} parent=71 // pred_check_branch
        %4814 = sbr.rel (%p4812) target = $region76
      $region75: #{transformer_encoder_layer.1} parent=71 // pred_region
        _
      $region76: #{transformer_encoder_layer.1} parent=71 // pred_fallthru
        _
    $region72: #{transformer_encoder_layer.1} parent=5 // pred_fallthru
      _
    %p4815 = scmp.le.s32.totalorder 2, %s19
    // Predicated region
    $region77: #{transformer_encoder_layer.1} parent=5 // pred_check
      %p4816 = pneg %p4815
    $region78: #{transformer_encoder_layer.1} parent=5 // pred_check_branch
      %4818 = sbr.rel (%p4816) target = $region80
    $region79: #{transformer_encoder_layer.1} parent=5 // pred_region
      %s4819 = ssub.s32 %s19, 2
      // Predicated region
      $region81: #{transformer_encoder_layer.1} parent=79 // pred_check
        %p4820 = pneg %p326
      $region82: #{transformer_encoder_layer.1} parent=79 // pred_check_branch
        %4822 = sbr.rel (%p4820) target = $region84
      $region83: #{transformer_encoder_layer.1} parent=79 // pred_region
        %p4823 = scmp.lt.s32.totalorder %s25, 1
        %s4824 = scalar_select %p4823, %s25, 1
        %s4825 = smul.addr %s4824, 32
        %s4826 = smul.addr %s4825, 8
        %s4827 = scalar_lea.vmem %s13, %s4826
      $region84: #{transformer_encoder_layer.1} parent=79 // pred_fallthru
        _
    $region80: #{transformer_encoder_layer.1} parent=5 // pred_fallthru
      _
  $region6: #{transformer_encoder_layer.1} parent=0 // loop_footer
    %s23 = sadd.s32 1, %s19
  $region7: #{transformer_encoder_layer.1} parent=0 // loop_footer_branch
    %18 = sbr.rel target = $region3
  $region8: #{transformer_encoder_layer.1} parent=0 // loop_exit
    _

</llo_original>
